<compile_context>
chip_gen: v5e
topology: v5e:2x2
jax: 0.10.0
libtpu: 0.0.40
codegen_flags: <defaults>
</compile_context>

<pallas_src>
import jax
import jax.numpy as jnp
from jax.experimental import pallas as pl
from jax.experimental.pallas import tpu as pltpu

EPS = 1e-5                   # PyTorch BatchNorm default
KH = KW = 4                  # conv2 / conv3 kernel size
PAD_LO, PAD_HI = 1, 2        # PyTorch padding='same' for k=4, stride 1
_MATMUL_DTYPE = jnp.bfloat16  # MXU-native operand dtype; accumulation stays f32

_VMEM = pl.BlockSpec(memory_space=pltpu.MemorySpace.VMEM)


def _bn_rows(y, gamma, beta):
    """Training-mode batch-norm over rows (biased variance), per column. f32."""
    m = y.shape[0]
    mean = jnp.sum(y, axis=0, keepdims=True) * (1.0 / m)
    d = y - mean
    var = jnp.sum(d * d, axis=0, keepdims=True) * (1.0 / m)
    return d * jax.lax.rsqrt(var + EPS) * gamma + beta


def _zero_halo(ref, h, w):
    """Zero only the 1+2 halo rows/columns of an (N, H+3, W+3, C) scratch."""
    n, hp, wp, c = ref.shape
    ref[:, 0:PAD_LO, :, :] = jnp.zeros((n, PAD_LO, wp, c), ref.dtype)
    ref[:, PAD_LO + h:hp, :, :] = jnp.zeros((n, PAD_HI, wp, c), ref.dtype)
    ref[:, :, 0:PAD_LO, :] = jnp.zeros((n, hp, PAD_LO, c), ref.dtype)
    ref[:, :, PAD_LO + w:wp, :] = jnp.zeros((n, hp, PAD_HI, c), ref.dtype)


def _fused_conv_kernel(x_ref,
                       w1_ref, b1_ref, g1_ref, be1_ref,
                       w2_ref, b2_ref, g2_ref, be2_ref,
                       w3_ref, b3_ref, g3_ref, be3_ref,
                       o_ref, pad1_ref, pad3_ref, slab2_ref):
    n, hp, wp, c1 = pad1_ref.shape
    h = hp - (PAD_LO + PAD_HI)
    w = wp - (PAD_LO + PAD_HI)
    c2 = pad3_ref.shape[-1]
    c3 = o_ref.shape[-1]
    nhw = n * h * w

    # --- conv1 (1x1, Cin=1 -> 3) + ReLU + BN.  Lane-sparse (3 channels) but
    # this stage is O(nhw*3) and negligible next to conv3.
    y = jnp.maximum(x_ref[...] * w1_ref[...] + b1_ref[...], 0.0)        # (nhw, 3)
    y = _bn_rows(y, g1_ref[...], be1_ref[...])

    _zero_halo(pad1_ref, h, w)
    pad1_ref[:, PAD_LO:PAD_LO + h, PAD_LO:PAD_LO + w, :] = y.reshape(n, h, w, c1)

    # --- conv2 (4x4, 3 -> 128): one im2col matmul with K = 16*3 = 48.
    for i in range(KH):
        for j in range(KW):
            t = i * KW + j
            slab2_ref[:, t * c1:(t + 1) * c1] = (
                pad1_ref[:, i:i + h, j:j + w, :].reshape(nhw, c1))
    y = jnp.dot(slab2_ref[...].astype(_MATMUL_DTYPE), w2_ref[...],
                preferred_element_type=jnp.float32)
    y = jnp.maximum(y + b2_ref[...], 0.0)
    y = _bn_rows(y, g2_ref[...], be2_ref[...])

    _zero_halo(pad3_ref, h, w)
    pad3_ref[:, PAD_LO:PAD_LO + h, PAD_LO:PAD_LO + w, :] = y.reshape(n, h, w, c2)

    # --- conv3 (4x4, 128 -> 128): 4 row-grouped matmuls with K = 4*128 = 512.
    # Each bf16 slab is consumed by its dot before the next is built, so the
    # unrolled 4-iteration loop keeps at most one (nhw, 512) operand live.
    acc = jnp.zeros((nhw, c3), jnp.float32)
    for i in range(KH):
        slab = jnp.concatenate(
            [pad3_ref[:, i:i + h, j:j + w, :].reshape(nhw, c2).astype(_MATMUL_DTYPE)
             for j in range(KW)], axis=-1)                               # (nhw, 4*c2)
        acc = acc + jnp.dot(slab, w3_ref[i], preferred_element_type=jnp.float32)
    y = jnp.maximum(acc + b3_ref[...], 0.0)
    y = _bn_rows(y, g3_ref[...], be3_ref[...])
    o_ref[...] = y.astype(o_ref.dtype)   # bf16 intermediate -> half the HBM traffic


def _head_kernel(x_ref, w_ref, b_ref, g_ref, be_ref, o_ref):
    # Flatten->Linear->ReLU->BN head.  x/w are bf16, accumulation f32.
    # TODO(synk): if num_features grows, pad the output dim to a multiple of
    # 128 in-kernel to avoid masked vst stores.
    y = jnp.dot(x_ref[...], w_ref[...], preferred_element_type=jnp.float32)
    y = jnp.maximum(y + b_ref[...], 0.0)
    o_ref[...] = _bn_rows(y, g_ref[...], be_ref[...])


def _compiler_params(vmem_bytes_estimate):
    # Never request v7x's full 64 MiB per-core VMEM; leave Mosaic headroom.
    limit = int(min(48 * 1024 * 1024, max(32 * 1024 * 1024, 2 * vmem_bytes_estimate)))
    return pltpu.CompilerParams(vmem_limit_bytes=limit)


def _conv_vmem_estimate(n, h, w, c1, c2, c3):
    hp, wp, nhw = h + PAD_LO + PAD_HI, w + PAD_LO + PAD_HI, n * h * w
    scratch = 4 * (n * hp * wp * c1 + n * hp * wp * c2 + nhw * KH * KW * c1)
    io = 4 * nhw + 2 * nhw * c3
    weights = 2 * (KH * KW * c1 * c2 + KH * KW * c2 * c3)
    temps = 4 * nhw * (c2 + c3) + 2 * nhw * KW * c2
    return scratch + io + weights + temps


def _head_vmem_estimate(n, h, w, c3, f):
    return 2 * n * h * w * c3 + 2 * h * w * c3 * f + 8 * n * f


def prepare_params(torch_layout_params, rows, cols):
    """One-time (outside jit) re-layout of PyTorch-layout params for the kernels."""
    def row(v):
        return jnp.asarray(v, jnp.float32).reshape(1, -1)

    p1 = torch_layout_params["conv1"]
    p2 = torch_layout_params["conv2"]
    p3 = torch_layout_params["conv3"]
    pln = torch_layout_params["linear"]
    c3 = p3["w"].shape[0]
    f = pln["w"].shape[0]

    # conv2: (Cout, Cin, KH, KW) -> im2col weight (KH*KW*Cin, Cout); row index
    # (i*KW + j)*Cin + cin matches the in-kernel slab column order.
    w2 = jnp.transpose(p2["w"], (2, 3, 1, 0)).reshape(
        KH * KW * p2["w"].shape[1], p2["w"].shape[0])
    # conv3: (Cout, Cin, KH, KW) -> row-grouped (KH, KW*Cin, Cout); row index
    # within group i is j*Cin + cin.
    w3 = jnp.transpose(p3["w"], (2, 3, 1, 0)).reshape(
        KH, KW * p3["w"].shape[1], p3["w"].shape[0])
    # linear: permute columns from PyTorch NCHW-flatten order to NHWC order so
    # the conv output feeds the head via a free reshape (no activation transpose).
    wl = jnp.transpose(pln["w"].reshape(f, c3, rows, cols),
                       (2, 3, 1, 0)).reshape(rows * cols * c3, f)

    return {
        "conv1": dict(w=jnp.asarray(p1["w"], jnp.float32).reshape(1, -1),
                      b=row(p1["b"]), gamma=row(p1["gamma"]), beta=row(p1["beta"])),
        "conv2": dict(w=w2.astype(_MATMUL_DTYPE),
                      b=row(p2["b"]), gamma=row(p2["gamma"]), beta=row(p2["beta"])),
        "conv3": dict(w=w3.astype(_MATMUL_DTYPE),
                      b=row(p3["b"]), gamma=row(p3["gamma"]), beta=row(p3["beta"])),
        "linear": dict(w=wl.astype(_MATMUL_DTYPE),
                       b=row(pln["b"]), gamma=row(pln["gamma"]), beta=row(pln["beta"])),
    }


def model_forward(params, x_nchw):
    """Forward pass.  `params` must be the output of prepare_params()."""
    n, _, h, w = x_nchw.shape
    nhw = n * h * w
    c1 = params["conv1"]["w"].shape[-1]
    c2 = params["conv2"]["w"].shape[-1]
    c3 = params["conv3"]["w"].shape[-1]
    f = params["linear"]["w"].shape[-1]
    hp = h + PAD_LO + PAD_HI
    wp = w + PAD_LO + PAD_HI

    # Cin == 1 so NCHW and NHWC coincide; this reshape is free.
    x2d = x_nchw.reshape(nhw, 1)

    p1, p2, p3, pln = params["conv1"], params["conv2"], params["conv3"], params["linear"]

    conv_out = pl.pallas_call(
        _fused_conv_kernel,
        out_shape=jax.ShapeDtypeStruct((nhw, c3), jnp.bfloat16),
        in_specs=[_VMEM] * 13,
        out_specs=_VMEM,
        scratch_shapes=[
            pltpu.VMEM((n, hp, wp, c1), jnp.float32),        # padded conv1 activations
            pltpu.VMEM((n, hp, wp, c2), jnp.float32),        # padded conv2 activations
            pltpu.VMEM((nhw, KH * KW * c1), jnp.float32),    # conv2 im2col slab (K=48)
        ],
        compiler_params=_compiler_params(_conv_vmem_estimate(n, h, w, c1, c2, c3)),
    )(x2d,
      p1["w"], p1["b"], p1["gamma"], p1["beta"],
      p2["w"], p2["b"], p2["gamma"], p2["beta"],
      p3["w"], p3["b"], p3["gamma"], p3["beta"])

    # Rows of conv_out are already (n, y, x)-ordered with channels last, so the
    # NHWC flatten is a layout-preserving reshape; the Linear weight columns
    # were permuted once in prepare_params().
    flat = conv_out.reshape(n, h * w * c3)

    out = pl.pallas_call(
        _head_kernel,
        out_shape=jax.ShapeDtypeStruct((n, f), jnp.float32),
        in_specs=[_VMEM] * 5,
        out_specs=_VMEM,
        compiler_params=_compiler_params(_head_vmem_estimate(n, h, w, c3, f)),
    )(flat, pln["w"], pln["b"], pln["gamma"], pln["beta"])

    return out


def init_params(key, rows, cols, num_features):
    """PyTorch-layout parameters (OIHW conv weights, NCHW-flatten Linear weight)."""
    ks = jax.random.split(key, 8)

    def nrm(k, shape, scale):
        return (scale * jax.random.normal(k, shape)).astype(jnp.float32)

    def bn(c):
        return dict(gamma=jnp.ones((c,), jnp.float32),
                    beta=jnp.zeros((c,), jnp.float32))

    return {
        "conv1": dict(w=nrm(ks[0], (3, 1, 1, 1), 1.0),
                      b=nrm(ks[1], (3,), 0.1), **bn(3)),
        "conv2": dict(w=nrm(ks[2], (128, 3, 4, 4), 0.15),
                      b=nrm(ks[3], (128,), 0.1), **bn(128)),
        "conv3": dict(w=nrm(ks[4], (128, 128, 4, 4), 0.03),
                      b=nrm(ks[5], (128,), 0.1), **bn(128)),
        "linear": dict(w=nrm(ks[6], (num_features, 128 * rows * cols), 0.02),
                       b=nrm(ks[7], (num_features,), 0.1), **bn(num_features)),
    }


if __name__ == "__main__":
    rows, cols, num_features, batch = 8, 8, 32, 2
    key = jax.random.PRNGKey(0)
    kx, kp = jax.random.split(key)
    x = jax.random.normal(kx, (batch, 1, rows, cols), dtype=jnp.float32)

    torch_params = init_params(kp, rows, cols, num_features)
    # Weight re-layouts happen exactly once, outside the jitted forward.
    params = prepare_params(torch_params, rows, cols)

    out = jax.jit(model_forward)(params, x)
    out = jax.block_until_ready(out)
    assert out.shape == (batch, num_features)
    assert bool(jnp.all(jnp.isfinite(out)))
    print("KERNEL_OK")
</pallas_src>

<mosaic_0001>
module attributes {stable_mosaic.version = 11 : i64} {
  func.func @_fused_conv_kernel(%arg0: memref<128x1xf32, #tpu.memory_space<vmem>>, %arg1: memref<1x3xf32, #tpu.memory_space<vmem>>, %arg2: memref<1x3xf32, #tpu.memory_space<vmem>>, %arg3: memref<1x3xf32, #tpu.memory_space<vmem>>, %arg4: memref<1x3xf32, #tpu.memory_space<vmem>>, %arg5: memref<48x128xbf16, #tpu.memory_space<vmem>>, %arg6: memref<1x128xf32, #tpu.memory_space<vmem>>, %arg7: memref<1x128xf32, #tpu.memory_space<vmem>>, %arg8: memref<1x128xf32, #tpu.memory_space<vmem>>, %arg9: memref<4x512x128xbf16, #tpu.memory_space<vmem>>, %arg10: memref<1x128xf32, #tpu.memory_space<vmem>>, %arg11: memref<1x128xf32, #tpu.memory_space<vmem>>, %arg12: memref<1x128xf32, #tpu.memory_space<vmem>>, %arg13: memref<128x128xbf16, #tpu.memory_space<vmem>>, %arg14: memref<2x11x11x3xf32, #tpu.memory_space<vmem>>, %arg15: memref<2x11x11x128xf32, #tpu.memory_space<vmem>>, %arg16: memref<128x48xf32, #tpu.memory_space<vmem>>) attributes {dimension_semantics = [], scalar_prefetch = 0 : i64, scratch_operands = 3 : i64, tpu.core_type = #tpu.core_type<tc>} {
    %c0 = arith.constant 0 : index
    %c0_0 = arith.constant 0 : index
    %0 = vector.load %arg0[%c0, %c0_0] : memref<128x1xf32, #tpu.memory_space<vmem>>, vector<128x1xf32>
    %c0_1 = arith.constant 0 : index
    %c0_2 = arith.constant 0 : index
    %1 = vector.load %arg1[%c0_1, %c0_2] : memref<1x3xf32, #tpu.memory_space<vmem>>, vector<1x3xf32>
    %2 = vector.broadcast %0 : vector<128x1xf32> to vector<128x3xf32>
    %3 = vector.broadcast %1 : vector<1x3xf32> to vector<128x3xf32>
    %4 = arith.mulf %2, %3 : vector<128x3xf32>
    %c0_3 = arith.constant 0 : index
    %c0_4 = arith.constant 0 : index
    %5 = vector.load %arg2[%c0_3, %c0_4] : memref<1x3xf32, #tpu.memory_space<vmem>>, vector<1x3xf32>
    %6 = vector.broadcast %5 : vector<1x3xf32> to vector<128x3xf32>
    %7 = arith.addf %4, %6 : vector<128x3xf32>
    %cst = arith.constant 0.000000e+00 : f32
    %8 = vector.broadcast %cst : f32 to vector<128x3xf32>
    %9 = arith.maximumf %7, %8 : vector<128x3xf32>
    %c0_5 = arith.constant 0 : index
    %c0_6 = arith.constant 0 : index
    %10 = vector.load %arg3[%c0_5, %c0_6] : memref<1x3xf32, #tpu.memory_space<vmem>>, vector<1x3xf32>
    %c0_7 = arith.constant 0 : index
    %c0_8 = arith.constant 0 : index
    %11 = vector.load %arg4[%c0_7, %c0_8] : memref<1x3xf32, #tpu.memory_space<vmem>>, vector<1x3xf32>
    %cst_9 = arith.constant dense<0.000000e+00> : vector<3xf32>
    %12 = vector.multi_reduction <add>, %9, %cst_9 [0] : vector<128x3xf32> to vector<3xf32>
    %13 = vector.shape_cast %12 : vector<3xf32> to vector<1x3xf32>
    %cst_10 = arith.constant 7.812500e-03 : f32
    %14 = vector.broadcast %cst_10 : f32 to vector<1x3xf32>
    %15 = arith.mulf %13, %14 : vector<1x3xf32>
    %16 = vector.broadcast %15 : vector<1x3xf32> to vector<128x3xf32>
    %17 = arith.subf %9, %16 : vector<128x3xf32>
    %18 = arith.mulf %17, %17 : vector<128x3xf32>
    %cst_11 = arith.constant dense<0.000000e+00> : vector<3xf32>
    %19 = vector.multi_reduction <add>, %18, %cst_11 [0] : vector<128x3xf32> to vector<3xf32>
    %20 = vector.shape_cast %19 : vector<3xf32> to vector<1x3xf32>
    %cst_12 = arith.constant 7.812500e-03 : f32
    %21 = vector.broadcast %cst_12 : f32 to vector<1x3xf32>
    %22 = arith.mulf %20, %21 : vector<1x3xf32>
    %cst_13 = arith.constant 9.99999974E-6 : f32
    %23 = vector.broadcast %cst_13 : f32 to vector<1x3xf32>
    %24 = arith.addf %22, %23 : vector<1x3xf32>
    %25 = math.rsqrt %24 : vector<1x3xf32>
    %26 = vector.broadcast %25 : vector<1x3xf32> to vector<128x3xf32>
    %27 = arith.mulf %17, %26 : vector<128x3xf32>
    %28 = vector.broadcast %10 : vector<1x3xf32> to vector<128x3xf32>
    %29 = arith.mulf %27, %28 : vector<128x3xf32>
    %30 = vector.broadcast %11 : vector<1x3xf32> to vector<128x3xf32>
    %31 = arith.addf %29, %30 : vector<128x3xf32>
    %cst_14 = arith.constant 0.000000e+00 : f32
    %32 = vector.broadcast %cst_14 : f32 to vector<2x1x11x3xf32>
    %c0_15 = arith.constant 0 : index
    %c0_16 = arith.constant 0 : index
    %c0_17 = arith.constant 0 : index
    %c0_18 = arith.constant 0 : index
    %33 = vector.load %arg14[%c0_15, %c0_16, %c0_17, %c0_18] : memref<2x11x11x3xf32, #tpu.memory_space<vmem>>, vector<2x1x11x3xf32>
    tpu.vector_store %arg14[%c0_15, %c0_16, %c0_17, %c0_18], %32 {strides = array<i32>} : memref<2x11x11x3xf32, #tpu.memory_space<vmem>>, vector<2x1x11x3xf32>,
    %cst_19 = arith.constant 0.000000e+00 : f32
    %34 = vector.broadcast %cst_19 : f32 to vector<2x2x11x3xf32>
    %c0_20 = arith.constant 0 : index
    %c9 = arith.constant 9 : index
    %c0_21 = arith.constant 0 : index
    %c0_22 = arith.constant 0 : index
    %35 = vector.load %arg14[%c0_20, %c9, %c0_21, %c0_22] : memref<2x11x11x3xf32, #tpu.memory_space<vmem>>, vector<2x2x11x3xf32>
    tpu.vector_store %arg14[%c0_20, %c9, %c0_21, %c0_22], %34 {strides = array<i32>} : memref<2x11x11x3xf32, #tpu.memory_space<vmem>>, vector<2x2x11x3xf32>,
    %cst_23 = arith.constant 0.000000e+00 : f32
    %36 = vector.broadcast %cst_23 : f32 to vector<2x11x1x3xf32>
    %c0_24 = arith.constant 0 : index
    %c0_25 = arith.constant 0 : index
    %c0_26 = arith.constant 0 : index
    %c0_27 = arith.constant 0 : index
    %37 = vector.load %arg14[%c0_24, %c0_25, %c0_26, %c0_27] : memref<2x11x11x3xf32, #tpu.memory_space<vmem>>, vector<2x11x1x3xf32>
    tpu.vector_store %arg14[%c0_24, %c0_25, %c0_26, %c0_27], %36 {strides = array<i32>} : memref<2x11x11x3xf32, #tpu.memory_space<vmem>>, vector<2x11x1x3xf32>,
    %cst_28 = arith.constant 0.000000e+00 : f32
    %38 = vector.broadcast %cst_28 : f32 to vector<2x11x2x3xf32>
    %c0_29 = arith.constant 0 : index
    %c0_30 = arith.constant 0 : index
    %c9_31 = arith.constant 9 : index
    %c0_32 = arith.constant 0 : index
    %39 = vector.load %arg14[%c0_29, %c0_30, %c9_31, %c0_32] : memref<2x11x11x3xf32, #tpu.memory_space<vmem>>, vector<2x11x2x3xf32>
    tpu.vector_store %arg14[%c0_29, %c0_30, %c9_31, %c0_32], %38 {strides = array<i32>} : memref<2x11x11x3xf32, #tpu.memory_space<vmem>>, vector<2x11x2x3xf32>,
    %40 = vector.shape_cast %31 : vector<128x3xf32> to vector<2x8x8x3xf32>
    %c0_33 = arith.constant 0 : index
    %c1 = arith.constant 1 : index
    %c1_34 = arith.constant 1 : index
    %c0_35 = arith.constant 0 : index
    %41 = vector.load %arg14[%c0_33, %c1, %c1_34, %c0_35] : memref<2x11x11x3xf32, #tpu.memory_space<vmem>>, vector<2x8x8x3xf32>
    tpu.vector_store %arg14[%c0_33, %c1, %c1_34, %c0_35], %40 {strides = array<i32>} : memref<2x11x11x3xf32, #tpu.memory_space<vmem>>, vector<2x8x8x3xf32>,
    %c0_36 = arith.constant 0 : index
    %c0_37 = arith.constant 0 : index
    %c0_38 = arith.constant 0 : index
    %c0_39 = arith.constant 0 : index
    %42 = vector.load %arg14[%c0_36, %c0_37, %c0_38, %c0_39] : memref<2x11x11x3xf32, #tpu.memory_space<vmem>>, vector<2x8x8x3xf32>
    %43 = vector.shape_cast %42 : vector<2x8x8x3xf32> to vector<128x3xf32>
    %c0_40 = arith.constant 0 : index
    %c0_41 = arith.constant 0 : index
    %44 = vector.load %arg16[%c0_40, %c0_41] : memref<128x48xf32, #tpu.memory_space<vmem>>, vector<128x3xf32>
    tpu.vector_store %arg16[%c0_40, %c0_41], %43 {strides = array<i32>} : memref<128x48xf32, #tpu.memory_space<vmem>>, vector<128x3xf32>,
    %c0_42 = arith.constant 0 : index
    %c0_43 = arith.constant 0 : index
    %c1_44 = arith.constant 1 : index
    %c0_45 = arith.constant 0 : index
    %45 = vector.load %arg14[%c0_42, %c0_43, %c1_44, %c0_45] : memref<2x11x11x3xf32, #tpu.memory_space<vmem>>, vector<2x8x8x3xf32>
    %46 = vector.shape_cast %45 : vector<2x8x8x3xf32> to vector<128x3xf32>
    %c0_46 = arith.constant 0 : index
    %c3 = arith.constant 3 : index
    %47 = vector.load %arg16[%c0_46, %c3] : memref<128x48xf32, #tpu.memory_space<vmem>>, vector<128x3xf32>
    tpu.vector_store %arg16[%c0_46, %c3], %46 {strides = array<i32>} : memref<128x48xf32, #tpu.memory_space<vmem>>, vector<128x3xf32>,
    %c0_47 = arith.constant 0 : index
    %c0_48 = arith.constant 0 : index
    %c2 = arith.constant 2 : index
    %c0_49 = arith.constant 0 : index
    %48 = vector.load %arg14[%c0_47, %c0_48, %c2, %c0_49] : memref<2x11x11x3xf32, #tpu.memory_space<vmem>>, vector<2x8x8x3xf32>
    %49 = vector.shape_cast %48 : vector<2x8x8x3xf32> to vector<128x3xf32>
    %c0_50 = arith.constant 0 : index
    %c6 = arith.constant 6 : index
    %50 = vector.load %arg16[%c0_50, %c6] : memref<128x48xf32, #tpu.memory_space<vmem>>, vector<128x3xf32>
    tpu.vector_store %arg16[%c0_50, %c6], %49 {strides = array<i32>} : memref<128x48xf32, #tpu.memory_space<vmem>>, vector<128x3xf32>,
    %c0_51 = arith.constant 0 : index
    %c0_52 = arith.constant 0 : index
    %c3_53 = arith.constant 3 : index
    %c0_54 = arith.constant 0 : index
    %51 = vector.load %arg14[%c0_51, %c0_52, %c3_53, %c0_54] : memref<2x11x11x3xf32, #tpu.memory_space<vmem>>, vector<2x8x8x3xf32>
    %52 = vector.shape_cast %51 : vector<2x8x8x3xf32> to vector<128x3xf32>
    %c0_55 = arith.constant 0 : index
    %c9_56 = arith.constant 9 : index
    %53 = vector.load %arg16[%c0_55, %c9_56] : memref<128x48xf32, #tpu.memory_space<vmem>>, vector<128x3xf32>
    tpu.vector_store %arg16[%c0_55, %c9_56], %52 {strides = array<i32>} : memref<128x48xf32, #tpu.memory_space<vmem>>, vector<128x3xf32>,
    %c0_57 = arith.constant 0 : index
    %c1_58 = arith.constant 1 : index
    %c0_59 = arith.constant 0 : index
    %c0_60 = arith.constant 0 : index
    %54 = vector.load %arg14[%c0_57, %c1_58, %c0_59, %c0_60] : memref<2x11x11x3xf32, #tpu.memory_space<vmem>>, vector<2x8x8x3xf32>
    %55 = vector.shape_cast %54 : vector<2x8x8x3xf32> to vector<128x3xf32>
    %c0_61 = arith.constant 0 : index
    %c12 = arith.constant 12 : index
    %56 = vector.load %arg16[%c0_61, %c12] : memref<128x48xf32, #tpu.memory_space<vmem>>, vector<128x3xf32>
    tpu.vector_store %arg16[%c0_61, %c12], %55 {strides = array<i32>} : memref<128x48xf32, #tpu.memory_space<vmem>>, vector<128x3xf32>,
    %c0_62 = arith.constant 0 : index
    %c1_63 = arith.constant 1 : index
    %c1_64 = arith.constant 1 : index
    %c0_65 = arith.constant 0 : index
    %57 = vector.load %arg14[%c0_62, %c1_63, %c1_64, %c0_65] : memref<2x11x11x3xf32, #tpu.memory_space<vmem>>, vector<2x8x8x3xf32>
    %58 = vector.shape_cast %57 : vector<2x8x8x3xf32> to vector<128x3xf32>
    %c0_66 = arith.constant 0 : index
    %c15 = arith.constant 15 : index
    %59 = vector.load %arg16[%c0_66, %c15] : memref<128x48xf32, #tpu.memory_space<vmem>>, vector<128x3xf32>
    tpu.vector_store %arg16[%c0_66, %c15], %58 {strides = array<i32>} : memref<128x48xf32, #tpu.memory_space<vmem>>, vector<128x3xf32>,
    %c0_67 = arith.constant 0 : index
    %c1_68 = arith.constant 1 : index
    %c2_69 = arith.constant 2 : index
    %c0_70 = arith.constant 0 : index
    %60 = vector.load %arg14[%c0_67, %c1_68, %c2_69, %c0_70] : memref<2x11x11x3xf32, #tpu.memory_space<vmem>>, vector<2x8x8x3xf32>
    %61 = vector.shape_cast %60 : vector<2x8x8x3xf32> to vector<128x3xf32>
    %c0_71 = arith.constant 0 : index
    %c18 = arith.constant 18 : index
    %62 = vector.load %arg16[%c0_71, %c18] : memref<128x48xf32, #tpu.memory_space<vmem>>, vector<128x3xf32>
    tpu.vector_store %arg16[%c0_71, %c18], %61 {strides = array<i32>} : memref<128x48xf32, #tpu.memory_space<vmem>>, vector<128x3xf32>,
    %c0_72 = arith.constant 0 : index
    %c1_73 = arith.constant 1 : index
    %c3_74 = arith.constant 3 : index
    %c0_75 = arith.constant 0 : index
    %63 = vector.load %arg14[%c0_72, %c1_73, %c3_74, %c0_75] : memref<2x11x11x3xf32, #tpu.memory_space<vmem>>, vector<2x8x8x3xf32>
    %64 = vector.shape_cast %63 : vector<2x8x8x3xf32> to vector<128x3xf32>
    %c0_76 = arith.constant 0 : index
    %c21 = arith.constant 21 : index
    %65 = vector.load %arg16[%c0_76, %c21] : memref<128x48xf32, #tpu.memory_space<vmem>>, vector<128x3xf32>
    tpu.vector_store %arg16[%c0_76, %c21], %64 {strides = array<i32>} : memref<128x48xf32, #tpu.memory_space<vmem>>, vector<128x3xf32>,
    %c0_77 = arith.constant 0 : index
    %c2_78 = arith.constant 2 : index
    %c0_79 = arith.constant 0 : index
    %c0_80 = arith.constant 0 : index
    %66 = vector.load %arg14[%c0_77, %c2_78, %c0_79, %c0_80] : memref<2x11x11x3xf32, #tpu.memory_space<vmem>>, vector<2x8x8x3xf32>
    %67 = vector.shape_cast %66 : vector<2x8x8x3xf32> to vector<128x3xf32>
    %c0_81 = arith.constant 0 : index
    %c24 = arith.constant 24 : index
    %68 = vector.load %arg16[%c0_81, %c24] : memref<128x48xf32, #tpu.memory_space<vmem>>, vector<128x3xf32>
    tpu.vector_store %arg16[%c0_81, %c24], %67 {strides = array<i32>} : memref<128x48xf32, #tpu.memory_space<vmem>>, vector<128x3xf32>,
    %c0_82 = arith.constant 0 : index
    %c2_83 = arith.constant 2 : index
    %c1_84 = arith.constant 1 : index
    %c0_85 = arith.constant 0 : index
    %69 = vector.load %arg14[%c0_82, %c2_83, %c1_84, %c0_85] : memref<2x11x11x3xf32, #tpu.memory_space<vmem>>, vector<2x8x8x3xf32>
    %70 = vector.shape_cast %69 : vector<2x8x8x3xf32> to vector<128x3xf32>
    %c0_86 = arith.constant 0 : index
    %c27 = arith.constant 27 : index
    %71 = vector.load %arg16[%c0_86, %c27] : memref<128x48xf32, #tpu.memory_space<vmem>>, vector<128x3xf32>
    tpu.vector_store %arg16[%c0_86, %c27], %70 {strides = array<i32>} : memref<128x48xf32, #tpu.memory_space<vmem>>, vector<128x3xf32>,
    %c0_87 = arith.constant 0 : index
    %c2_88 = arith.constant 2 : index
    %c2_89 = arith.constant 2 : index
    %c0_90 = arith.constant 0 : index
    %72 = vector.load %arg14[%c0_87, %c2_88, %c2_89, %c0_90] : memref<2x11x11x3xf32, #tpu.memory_space<vmem>>, vector<2x8x8x3xf32>
    %73 = vector.shape_cast %72 : vector<2x8x8x3xf32> to vector<128x3xf32>
    %c0_91 = arith.constant 0 : index
    %c30 = arith.constant 30 : index
    %74 = vector.load %arg16[%c0_91, %c30] : memref<128x48xf32, #tpu.memory_space<vmem>>, vector<128x3xf32>
    tpu.vector_store %arg16[%c0_91, %c30], %73 {strides = array<i32>} : memref<128x48xf32, #tpu.memory_space<vmem>>, vector<128x3xf32>,
    %c0_92 = arith.constant 0 : index
    %c2_93 = arith.constant 2 : index
    %c3_94 = arith.constant 3 : index
    %c0_95 = arith.constant 0 : index
    %75 = vector.load %arg14[%c0_92, %c2_93, %c3_94, %c0_95] : memref<2x11x11x3xf32, #tpu.memory_space<vmem>>, vector<2x8x8x3xf32>
    %76 = vector.shape_cast %75 : vector<2x8x8x3xf32> to vector<128x3xf32>
    %c0_96 = arith.constant 0 : index
    %c33 = arith.constant 33 : index
    %77 = vector.load %arg16[%c0_96, %c33] : memref<128x48xf32, #tpu.memory_space<vmem>>, vector<128x3xf32>
    tpu.vector_store %arg16[%c0_96, %c33], %76 {strides = array<i32>} : memref<128x48xf32, #tpu.memory_space<vmem>>, vector<128x3xf32>,
    %c0_97 = arith.constant 0 : index
    %c3_98 = arith.constant 3 : index
    %c0_99 = arith.constant 0 : index
    %c0_100 = arith.constant 0 : index
    %78 = vector.load %arg14[%c0_97, %c3_98, %c0_99, %c0_100] : memref<2x11x11x3xf32, #tpu.memory_space<vmem>>, vector<2x8x8x3xf32>
    %79 = vector.shape_cast %78 : vector<2x8x8x3xf32> to vector<128x3xf32>
    %c0_101 = arith.constant 0 : index
    %c36 = arith.constant 36 : index
    %80 = vector.load %arg16[%c0_101, %c36] : memref<128x48xf32, #tpu.memory_space<vmem>>, vector<128x3xf32>
    tpu.vector_store %arg16[%c0_101, %c36], %79 {strides = array<i32>} : memref<128x48xf32, #tpu.memory_space<vmem>>, vector<128x3xf32>,
    %c0_102 = arith.constant 0 : index
    %c3_103 = arith.constant 3 : index
    %c1_104 = arith.constant 1 : index
    %c0_105 = arith.constant 0 : index
    %81 = vector.load %arg14[%c0_102, %c3_103, %c1_104, %c0_105] : memref<2x11x11x3xf32, #tpu.memory_space<vmem>>, vector<2x8x8x3xf32>
    %82 = vector.shape_cast %81 : vector<2x8x8x3xf32> to vector<128x3xf32>
    %c0_106 = arith.constant 0 : index
    %c39 = arith.constant 39 : index
    %83 = vector.load %arg16[%c0_106, %c39] : memref<128x48xf32, #tpu.memory_space<vmem>>, vector<128x3xf32>
    tpu.vector_store %arg16[%c0_106, %c39], %82 {strides = array<i32>} : memref<128x48xf32, #tpu.memory_space<vmem>>, vector<128x3xf32>,
    %c0_107 = arith.constant 0 : index
    %c3_108 = arith.constant 3 : index
    %c2_109 = arith.constant 2 : index
    %c0_110 = arith.constant 0 : index
    %84 = vector.load %arg14[%c0_107, %c3_108, %c2_109, %c0_110] : memref<2x11x11x3xf32, #tpu.memory_space<vmem>>, vector<2x8x8x3xf32>
    %85 = vector.shape_cast %84 : vector<2x8x8x3xf32> to vector<128x3xf32>
    %c0_111 = arith.constant 0 : index
    %c42 = arith.constant 42 : index
    %86 = vector.load %arg16[%c0_111, %c42] : memref<128x48xf32, #tpu.memory_space<vmem>>, vector<128x3xf32>
    tpu.vector_store %arg16[%c0_111, %c42], %85 {strides = array<i32>} : memref<128x48xf32, #tpu.memory_space<vmem>>, vector<128x3xf32>,
    %c0_112 = arith.constant 0 : index
    %c3_113 = arith.constant 3 : index
    %c3_114 = arith.constant 3 : index
    %c0_115 = arith.constant 0 : index
    %87 = vector.load %arg14[%c0_112, %c3_113, %c3_114, %c0_115] : memref<2x11x11x3xf32, #tpu.memory_space<vmem>>, vector<2x8x8x3xf32>
    %88 = vector.shape_cast %87 : vector<2x8x8x3xf32> to vector<128x3xf32>
    %c0_116 = arith.constant 0 : index
    %c45 = arith.constant 45 : index
    %89 = vector.load %arg16[%c0_116, %c45] : memref<128x48xf32, #tpu.memory_space<vmem>>, vector<128x3xf32>
    tpu.vector_store %arg16[%c0_116, %c45], %88 {strides = array<i32>} : memref<128x48xf32, #tpu.memory_space<vmem>>, vector<128x3xf32>,
    %c0_117 = arith.constant 0 : index
    %c0_118 = arith.constant 0 : index
    %90 = vector.load %arg16[%c0_117, %c0_118] : memref<128x48xf32, #tpu.memory_space<vmem>>, vector<128x48xf32>
    %91 = arith.truncf %90 : vector<128x48xf32> to vector<128x48xbf16>
    %c0_119 = arith.constant 0 : index
    %c0_120 = arith.constant 0 : index
    %92 = vector.load %arg5[%c0_119, %c0_120] : memref<48x128xbf16, #tpu.memory_space<vmem>>, vector<48x128xbf16>
    %cst_121 = arith.constant dense<0.000000e+00> : vector<128x128xf32>
    %93 = tpu.matmul %91, %92, %cst_121 {dimension_numbers = #tpu.dot_dimension_numbers<[1], [0], [0], [1], [0, 0, 1, 1], [], []>} : vector<128x48xbf16>, vector<48x128xbf16>, vector<128x128xf32> -> vector<128x128xf32>
    %c0_122 = arith.constant 0 : index
    %c0_123 = arith.constant 0 : index
    %94 = vector.load %arg6[%c0_122, %c0_123] : memref<1x128xf32, #tpu.memory_space<vmem>>, vector<1x128xf32>
    %95 = vector.broadcast %94 : vector<1x128xf32> to vector<128x128xf32>
    %96 = arith.addf %93, %95 : vector<128x128xf32>
    %cst_124 = arith.constant 0.000000e+00 : f32
    %97 = vector.broadcast %cst_124 : f32 to vector<128x128xf32>
    %98 = arith.maximumf %96, %97 : vector<128x128xf32>
    %c0_125 = arith.constant 0 : index
    %c0_126 = arith.constant 0 : index
    %99 = vector.load %arg7[%c0_125, %c0_126] : memref<1x128xf32, #tpu.memory_space<vmem>>, vector<1x128xf32>
    %c0_127 = arith.constant 0 : index
    %c0_128 = arith.constant 0 : index
    %100 = vector.load %arg8[%c0_127, %c0_128] : memref<1x128xf32, #tpu.memory_space<vmem>>, vector<1x128xf32>
    %cst_129 = arith.constant dense<0.000000e+00> : vector<128xf32>
    %101 = vector.multi_reduction <add>, %98, %cst_129 [0] : vector<128x128xf32> to vector<128xf32>
    %102 = vector.shape_cast %101 : vector<128xf32> to vector<1x128xf32>
    %cst_130 = arith.constant 7.812500e-03 : f32
    %103 = vector.broadcast %cst_130 : f32 to vector<1x128xf32>
    %104 = arith.mulf %102, %103 : vector<1x128xf32>
    %105 = vector.broadcast %104 : vector<1x128xf32> to vector<128x128xf32>
    %106 = arith.subf %98, %105 : vector<128x128xf32>
    %107 = arith.mulf %106, %106 : vector<128x128xf32>
    %cst_131 = arith.constant dense<0.000000e+00> : vector<128xf32>
    %108 = vector.multi_reduction <add>, %107, %cst_131 [0] : vector<128x128xf32> to vector<128xf32>
    %109 = vector.shape_cast %108 : vector<128xf32> to vector<1x128xf32>
    %cst_132 = arith.constant 7.812500e-03 : f32
    %110 = vector.broadcast %cst_132 : f32 to vector<1x128xf32>
    %111 = arith.mulf %109, %110 : vector<1x128xf32>
    %cst_133 = arith.constant 9.99999974E-6 : f32
    %112 = vector.broadcast %cst_133 : f32 to vector<1x128xf32>
    %113 = arith.addf %111, %112 : vector<1x128xf32>
    %114 = math.rsqrt %113 : vector<1x128xf32>
    %115 = vector.broadcast %114 : vector<1x128xf32> to vector<128x128xf32>
    %116 = arith.mulf %106, %115 : vector<128x128xf32>
    %117 = vector.broadcast %99 : vector<1x128xf32> to vector<128x128xf32>
    %118 = arith.mulf %116, %117 : vector<128x128xf32>
    %119 = vector.broadcast %100 : vector<1x128xf32> to vector<128x128xf32>
    %120 = arith.addf %118, %119 : vector<128x128xf32>
    %cst_134 = arith.constant 0.000000e+00 : f32
    %121 = vector.broadcast %cst_134 : f32 to vector<2x1x11x128xf32>
    %c0_135 = arith.constant 0 : index
    %c0_136 = arith.constant 0 : index
    %c0_137 = arith.constant 0 : index
    %c0_138 = arith.constant 0 : index
    %122 = vector.load %arg15[%c0_135, %c0_136, %c0_137, %c0_138] : memref<2x11x11x128xf32, #tpu.memory_space<vmem>>, vector<2x1x11x128xf32>
    tpu.vector_store %arg15[%c0_135, %c0_136, %c0_137, %c0_138], %121 {strides = array<i32>} : memref<2x11x11x128xf32, #tpu.memory_space<vmem>>, vector<2x1x11x128xf32>,
    %cst_139 = arith.constant 0.000000e+00 : f32
    %123 = vector.broadcast %cst_139 : f32 to vector<2x2x11x128xf32>
    %c0_140 = arith.constant 0 : index
    %c9_141 = arith.constant 9 : index
    %c0_142 = arith.constant 0 : index
    %c0_143 = arith.constant 0 : index
    %124 = vector.load %arg15[%c0_140, %c9_141, %c0_142, %c0_143] : memref<2x11x11x128xf32, #tpu.memory_space<vmem>>, vector<2x2x11x128xf32>
    tpu.vector_store %arg15[%c0_140, %c9_141, %c0_142, %c0_143], %123 {strides = array<i32>} : memref<2x11x11x128xf32, #tpu.memory_space<vmem>>, vector<2x2x11x128xf32>,
    %cst_144 = arith.constant 0.000000e+00 : f32
    %125 = vector.broadcast %cst_144 : f32 to vector<2x11x1x128xf32>
    %c0_145 = arith.constant 0 : index
    %c0_146 = arith.constant 0 : index
    %c0_147 = arith.constant 0 : index
    %c0_148 = arith.constant 0 : index
    %126 = vector.load %arg15[%c0_145, %c0_146, %c0_147, %c0_148] : memref<2x11x11x128xf32, #tpu.memory_space<vmem>>, vector<2x11x1x128xf32>
    tpu.vector_store %arg15[%c0_145, %c0_146, %c0_147, %c0_148], %125 {strides = array<i32>} : memref<2x11x11x128xf32, #tpu.memory_space<vmem>>, vector<2x11x1x128xf32>,
    %cst_149 = arith.constant 0.000000e+00 : f32
    %127 = vector.broadcast %cst_149 : f32 to vector<2x11x2x128xf32>
    %c0_150 = arith.constant 0 : index
    %c0_151 = arith.constant 0 : index
    %c9_152 = arith.constant 9 : index
    %c0_153 = arith.constant 0 : index
    %128 = vector.load %arg15[%c0_150, %c0_151, %c9_152, %c0_153] : memref<2x11x11x128xf32, #tpu.memory_space<vmem>>, vector<2x11x2x128xf32>
    tpu.vector_store %arg15[%c0_150, %c0_151, %c9_152, %c0_153], %127 {strides = array<i32>} : memref<2x11x11x128xf32, #tpu.memory_space<vmem>>, vector<2x11x2x128xf32>,
    %129 = vector.shape_cast %120 : vector<128x128xf32> to vector<2x8x8x128xf32>
    %c0_154 = arith.constant 0 : index
    %c1_155 = arith.constant 1 : index
    %c1_156 = arith.constant 1 : index
    %c0_157 = arith.constant 0 : index
    %130 = vector.load %arg15[%c0_154, %c1_155, %c1_156, %c0_157] : memref<2x11x11x128xf32, #tpu.memory_space<vmem>>, vector<2x8x8x128xf32>
    tpu.vector_store %arg15[%c0_154, %c1_155, %c1_156, %c0_157], %129 {strides = array<i32>} : memref<2x11x11x128xf32, #tpu.memory_space<vmem>>, vector<2x8x8x128xf32>,
    %cst_158 = arith.constant 0.000000e+00 : f32
    %131 = vector.broadcast %cst_158 : f32 to vector<128x128xf32>
    %c0_159 = arith.constant 0 : index
    %c0_160 = arith.constant 0 : index
    %c0_161 = arith.constant 0 : index
    %c0_162 = arith.constant 0 : index
    %132 = vector.load %arg15[%c0_159, %c0_160, %c0_161, %c0_162] : memref<2x11x11x128xf32, #tpu.memory_space<vmem>>, vector<2x8x8x128xf32>
    %133 = vector.shape_cast %132 : vector<2x8x8x128xf32> to vector<128x128xf32>
    %134 = arith.truncf %133 : vector<128x128xf32> to vector<128x128xbf16>
    %c0_163 = arith.constant 0 : index
    %c0_164 = arith.constant 0 : index
    %c1_165 = arith.constant 1 : index
    %c0_166 = arith.constant 0 : index
    %135 = vector.load %arg15[%c0_163, %c0_164, %c1_165, %c0_166] : memref<2x11x11x128xf32, #tpu.memory_space<vmem>>, vector<2x8x8x128xf32>
    %136 = vector.shape_cast %135 : vector<2x8x8x128xf32> to vector<128x128xf32>
    %137 = arith.truncf %136 : vector<128x128xf32> to vector<128x128xbf16>
    %c0_167 = arith.constant 0 : index
    %c0_168 = arith.constant 0 : index
    %c2_169 = arith.constant 2 : index
    %c0_170 = arith.constant 0 : index
    %138 = vector.load %arg15[%c0_167, %c0_168, %c2_169, %c0_170] : memref<2x11x11x128xf32, #tpu.memory_space<vmem>>, vector<2x8x8x128xf32>
    %139 = vector.shape_cast %138 : vector<2x8x8x128xf32> to vector<128x128xf32>
    %140 = arith.truncf %139 : vector<128x128xf32> to vector<128x128xbf16>
    %c0_171 = arith.constant 0 : index
    %c0_172 = arith.constant 0 : index
    %c3_173 = arith.constant 3 : index
    %c0_174 = arith.constant 0 : index
    %141 = vector.load %arg15[%c0_171, %c0_172, %c3_173, %c0_174] : memref<2x11x11x128xf32, #tpu.memory_space<vmem>>, vector<2x8x8x128xf32>
    %142 = vector.shape_cast %141 : vector<2x8x8x128xf32> to vector<128x128xf32>
    %143 = arith.truncf %142 : vector<128x128xf32> to vector<128x128xbf16>
    %144 = tpu.concatenate %134, %137, %140, %143 in 1 : vector<128x128xbf16>, vector<128x128xbf16>, vector<128x128xbf16>, vector<128x128xbf16> -> vector<128x512xbf16>
    %c0_175 = arith.constant 0 : index
    %c0_176 = arith.constant 0 : index
    %c0_177 = arith.constant 0 : index
    %145 = vector.load %arg9[%c0_175, %c0_176, %c0_177] : memref<4x512x128xbf16, #tpu.memory_space<vmem>>, vector<1x512x128xbf16>
    %146 = vector.shape_cast %145 : vector<1x512x128xbf16> to vector<512x128xbf16>
    %cst_178 = arith.constant dense<0.000000e+00> : vector<128x128xf32>
    %147 = tpu.matmul %144, %146, %cst_178 {dimension_numbers = #tpu.dot_dimension_numbers<[1], [0], [0], [1], [0, 0, 1, 1], [], []>} : vector<128x512xbf16>, vector<512x128xbf16>, vector<128x128xf32> -> vector<128x128xf32>
    %148 = arith.addf %131, %147 : vector<128x128xf32>
    %c0_179 = arith.constant 0 : index
    %c1_180 = arith.constant 1 : index
    %c0_181 = arith.constant 0 : index
    %c0_182 = arith.constant 0 : index
    %149 = vector.load %arg15[%c0_179, %c1_180, %c0_181, %c0_182] : memref<2x11x11x128xf32, #tpu.memory_space<vmem>>, vector<2x8x8x128xf32>
    %150 = vector.shape_cast %149 : vector<2x8x8x128xf32> to vector<128x128xf32>
    %151 = arith.truncf %150 : vector<128x128xf32> to vector<128x128xbf16>
    %c0_183 = arith.constant 0 : index
    %c1_184 = arith.constant 1 : index
    %c1_185 = arith.constant 1 : index
    %c0_186 = arith.constant 0 : index
    %152 = vector.load %arg15[%c0_183, %c1_184, %c1_185, %c0_186] : memref<2x11x11x128xf32, #tpu.memory_space<vmem>>, vector<2x8x8x128xf32>
    %153 = vector.shape_cast %152 : vector<2x8x8x128xf32> to vector<128x128xf32>
    %154 = arith.truncf %153 : vector<128x128xf32> to vector<128x128xbf16>
    %c0_187 = arith.constant 0 : index
    %c1_188 = arith.constant 1 : index
    %c2_189 = arith.constant 2 : index
    %c0_190 = arith.constant 0 : index
    %155 = vector.load %arg15[%c0_187, %c1_188, %c2_189, %c0_190] : memref<2x11x11x128xf32, #tpu.memory_space<vmem>>, vector<2x8x8x128xf32>
    %156 = vector.shape_cast %155 : vector<2x8x8x128xf32> to vector<128x128xf32>
    %157 = arith.truncf %156 : vector<128x128xf32> to vector<128x128xbf16>
    %c0_191 = arith.constant 0 : index
    %c1_192 = arith.constant 1 : index
    %c3_193 = arith.constant 3 : index
    %c0_194 = arith.constant 0 : index
    %158 = vector.load %arg15[%c0_191, %c1_192, %c3_193, %c0_194] : memref<2x11x11x128xf32, #tpu.memory_space<vmem>>, vector<2x8x8x128xf32>
    %159 = vector.shape_cast %158 : vector<2x8x8x128xf32> to vector<128x128xf32>
    %160 = arith.truncf %159 : vector<128x128xf32> to vector<128x128xbf16>
    %161 = tpu.concatenate %151, %154, %157, %160 in 1 : vector<128x128xbf16>, vector<128x128xbf16>, vector<128x128xbf16>, vector<128x128xbf16> -> vector<128x512xbf16>
    %c1_195 = arith.constant 1 : index
    %c0_196 = arith.constant 0 : index
    %c0_197 = arith.constant 0 : index
    %162 = vector.load %arg9[%c1_195, %c0_196, %c0_197] : memref<4x512x128xbf16, #tpu.memory_space<vmem>>, vector<1x512x128xbf16>
    %163 = vector.shape_cast %162 : vector<1x512x128xbf16> to vector<512x128xbf16>
    %cst_198 = arith.constant dense<0.000000e+00> : vector<128x128xf32>
    %164 = tpu.matmul %161, %163, %cst_198 {dimension_numbers = #tpu.dot_dimension_numbers<[1], [0], [0], [1], [0, 0, 1, 1], [], []>} : vector<128x512xbf16>, vector<512x128xbf16>, vector<128x128xf32> -> vector<128x128xf32>
    %165 = arith.addf %148, %164 : vector<128x128xf32>
    %c0_199 = arith.constant 0 : index
    %c2_200 = arith.constant 2 : index
    %c0_201 = arith.constant 0 : index
    %c0_202 = arith.constant 0 : index
    %166 = vector.load %arg15[%c0_199, %c2_200, %c0_201, %c0_202] : memref<2x11x11x128xf32, #tpu.memory_space<vmem>>, vector<2x8x8x128xf32>
    %167 = vector.shape_cast %166 : vector<2x8x8x128xf32> to vector<128x128xf32>
    %168 = arith.truncf %167 : vector<128x128xf32> to vector<128x128xbf16>
    %c0_203 = arith.constant 0 : index
    %c2_204 = arith.constant 2 : index
    %c1_205 = arith.constant 1 : index
    %c0_206 = arith.constant 0 : index
    %169 = vector.load %arg15[%c0_203, %c2_204, %c1_205, %c0_206] : memref<2x11x11x128xf32, #tpu.memory_space<vmem>>, vector<2x8x8x128xf32>
    %170 = vector.shape_cast %169 : vector<2x8x8x128xf32> to vector<128x128xf32>
    %171 = arith.truncf %170 : vector<128x128xf32> to vector<128x128xbf16>
    %c0_207 = arith.constant 0 : index
    %c2_208 = arith.constant 2 : index
    %c2_209 = arith.constant 2 : index
    %c0_210 = arith.constant 0 : index
    %172 = vector.load %arg15[%c0_207, %c2_208, %c2_209, %c0_210] : memref<2x11x11x128xf32, #tpu.memory_space<vmem>>, vector<2x8x8x128xf32>
    %173 = vector.shape_cast %172 : vector<2x8x8x128xf32> to vector<128x128xf32>
    %174 = arith.truncf %173 : vector<128x128xf32> to vector<128x128xbf16>
    %c0_211 = arith.constant 0 : index
    %c2_212 = arith.constant 2 : index
    %c3_213 = arith.constant 3 : index
    %c0_214 = arith.constant 0 : index
    %175 = vector.load %arg15[%c0_211, %c2_212, %c3_213, %c0_214] : memref<2x11x11x128xf32, #tpu.memory_space<vmem>>, vector<2x8x8x128xf32>
    %176 = vector.shape_cast %175 : vector<2x8x8x128xf32> to vector<128x128xf32>
    %177 = arith.truncf %176 : vector<128x128xf32> to vector<128x128xbf16>
    %178 = tpu.concatenate %168, %171, %174, %177 in 1 : vector<128x128xbf16>, vector<128x128xbf16>, vector<128x128xbf16>, vector<128x128xbf16> -> vector<128x512xbf16>
    %c2_215 = arith.constant 2 : index
    %c0_216 = arith.constant 0 : index
    %c0_217 = arith.constant 0 : index
    %179 = vector.load %arg9[%c2_215, %c0_216, %c0_217] : memref<4x512x128xbf16, #tpu.memory_space<vmem>>, vector<1x512x128xbf16>
    %180 = vector.shape_cast %179 : vector<1x512x128xbf16> to vector<512x128xbf16>
    %cst_218 = arith.constant dense<0.000000e+00> : vector<128x128xf32>
    %181 = tpu.matmul %178, %180, %cst_218 {dimension_numbers = #tpu.dot_dimension_numbers<[1], [0], [0], [1], [0, 0, 1, 1], [], []>} : vector<128x512xbf16>, vector<512x128xbf16>, vector<128x128xf32> -> vector<128x128xf32>
    %182 = arith.addf %165, %181 : vector<128x128xf32>
    %c0_219 = arith.constant 0 : index
    %c3_220 = arith.constant 3 : index
    %c0_221 = arith.constant 0 : index
    %c0_222 = arith.constant 0 : index
    %183 = vector.load %arg15[%c0_219, %c3_220, %c0_221, %c0_222] : memref<2x11x11x128xf32, #tpu.memory_space<vmem>>, vector<2x8x8x128xf32>
    %184 = vector.shape_cast %183 : vector<2x8x8x128xf32> to vector<128x128xf32>
    %185 = arith.truncf %184 : vector<128x128xf32> to vector<128x128xbf16>
    %c0_223 = arith.constant 0 : index
    %c3_224 = arith.constant 3 : index
    %c1_225 = arith.constant 1 : index
    %c0_226 = arith.constant 0 : index
    %186 = vector.load %arg15[%c0_223, %c3_224, %c1_225, %c0_226] : memref<2x11x11x128xf32, #tpu.memory_space<vmem>>, vector<2x8x8x128xf32>
    %187 = vector.shape_cast %186 : vector<2x8x8x128xf32> to vector<128x128xf32>
    %188 = arith.truncf %187 : vector<128x128xf32> to vector<128x128xbf16>
    %c0_227 = arith.constant 0 : index
    %c3_228 = arith.constant 3 : index
    %c2_229 = arith.constant 2 : index
    %c0_230 = arith.constant 0 : index
    %189 = vector.load %arg15[%c0_227, %c3_228, %c2_229, %c0_230] : memref<2x11x11x128xf32, #tpu.memory_space<vmem>>, vector<2x8x8x128xf32>
    %190 = vector.shape_cast %189 : vector<2x8x8x128xf32> to vector<128x128xf32>
    %191 = arith.truncf %190 : vector<128x128xf32> to vector<128x128xbf16>
    %c0_231 = arith.constant 0 : index
    %c3_232 = arith.constant 3 : index
    %c3_233 = arith.constant 3 : index
    %c0_234 = arith.constant 0 : index
    %192 = vector.load %arg15[%c0_231, %c3_232, %c3_233, %c0_234] : memref<2x11x11x128xf32, #tpu.memory_space<vmem>>, vector<2x8x8x128xf32>
    %193 = vector.shape_cast %192 : vector<2x8x8x128xf32> to vector<128x128xf32>
    %194 = arith.truncf %193 : vector<128x128xf32> to vector<128x128xbf16>
    %195 = tpu.concatenate %185, %188, %191, %194 in 1 : vector<128x128xbf16>, vector<128x128xbf16>, vector<128x128xbf16>, vector<128x128xbf16> -> vector<128x512xbf16>
    %c3_235 = arith.constant 3 : index
    %c0_236 = arith.constant 0 : index
    %c0_237 = arith.constant 0 : index
    %196 = vector.load %arg9[%c3_235, %c0_236, %c0_237] : memref<4x512x128xbf16, #tpu.memory_space<vmem>>, vector<1x512x128xbf16>
    %197 = vector.shape_cast %196 : vector<1x512x128xbf16> to vector<512x128xbf16>
    %cst_238 = arith.constant dense<0.000000e+00> : vector<128x128xf32>
    %198 = tpu.matmul %195, %197, %cst_238 {dimension_numbers = #tpu.dot_dimension_numbers<[1], [0], [0], [1], [0, 0, 1, 1], [], []>} : vector<128x512xbf16>, vector<512x128xbf16>, vector<128x128xf32> -> vector<128x128xf32>
    %199 = arith.addf %182, %198 : vector<128x128xf32>
    %c0_239 = arith.constant 0 : index
    %c0_240 = arith.constant 0 : index
    %200 = vector.load %arg10[%c0_239, %c0_240] : memref<1x128xf32, #tpu.memory_space<vmem>>, vector<1x128xf32>
    %201 = vector.broadcast %200 : vector<1x128xf32> to vector<128x128xf32>
    %202 = arith.addf %199, %201 : vector<128x128xf32>
    %cst_241 = arith.constant 0.000000e+00 : f32
    %203 = vector.broadcast %cst_241 : f32 to vector<128x128xf32>
    %204 = arith.maximumf %202, %203 : vector<128x128xf32>
    %c0_242 = arith.constant 0 : index
    %c0_243 = arith.constant 0 : index
    %205 = vector.load %arg11[%c0_242, %c0_243] : memref<1x128xf32, #tpu.memory_space<vmem>>, vector<1x128xf32>
    %c0_244 = arith.constant 0 : index
    %c0_245 = arith.constant 0 : index
    %206 = vector.load %arg12[%c0_244, %c0_245] : memref<1x128xf32, #tpu.memory_space<vmem>>, vector<1x128xf32>
    %cst_246 = arith.constant dense<0.000000e+00> : vector<128xf32>
    %207 = vector.multi_reduction <add>, %204, %cst_246 [0] : vector<128x128xf32> to vector<128xf32>
    %208 = vector.shape_cast %207 : vector<128xf32> to vector<1x128xf32>
    %cst_247 = arith.constant 7.812500e-03 : f32
    %209 = vector.broadcast %cst_247 : f32 to vector<1x128xf32>
    %210 = arith.mulf %208, %209 : vector<1x128xf32>
    %211 = vector.broadcast %210 : vector<1x128xf32> to vector<128x128xf32>
    %212 = arith.subf %204, %211 : vector<128x128xf32>
    %213 = arith.mulf %212, %212 : vector<128x128xf32>
    %cst_248 = arith.constant dense<0.000000e+00> : vector<128xf32>
    %214 = vector.multi_reduction <add>, %213, %cst_248 [0] : vector<128x128xf32> to vector<128xf32>
    %215 = vector.shape_cast %214 : vector<128xf32> to vector<1x128xf32>
    %cst_249 = arith.constant 7.812500e-03 : f32
    %216 = vector.broadcast %cst_249 : f32 to vector<1x128xf32>
    %217 = arith.mulf %215, %216 : vector<1x128xf32>
    %cst_250 = arith.constant 9.99999974E-6 : f32
    %218 = vector.broadcast %cst_250 : f32 to vector<1x128xf32>
    %219 = arith.addf %217, %218 : vector<1x128xf32>
    %220 = math.rsqrt %219 : vector<1x128xf32>
    %221 = vector.broadcast %220 : vector<1x128xf32> to vector<128x128xf32>
    %222 = arith.mulf %212, %221 : vector<128x128xf32>
    %223 = vector.broadcast %205 : vector<1x128xf32> to vector<128x128xf32>
    %224 = arith.mulf %222, %223 : vector<128x128xf32>
    %225 = vector.broadcast %206 : vector<1x128xf32> to vector<128x128xf32>
    %226 = arith.addf %224, %225 : vector<128x128xf32>
    %227 = arith.truncf %226 : vector<128x128xf32> to vector<128x128xbf16>
    %c0_251 = arith.constant 0 : index
    %c0_252 = arith.constant 0 : index
    %228 = vector.load %arg13[%c0_251, %c0_252] : memref<128x128xbf16, #tpu.memory_space<vmem>>, vector<128x128xbf16>
    tpu.vector_store %arg13[%c0_251, %c0_252], %227 {strides = array<i32>} : memref<128x128xbf16, #tpu.memory_space<vmem>>, vector<128x128xbf16>,
    return
  }
}

module attributes {stable_mosaic.version = 11 : i64} {
  func.func @_head_kernel(%arg0: memref<2x8192xbf16, #tpu.memory_space<vmem>>, %arg1: memref<8192x32xbf16, #tpu.memory_space<vmem>>, %arg2: memref<1x32xf32, #tpu.memory_space<vmem>>, %arg3: memref<1x32xf32, #tpu.memory_space<vmem>>, %arg4: memref<1x32xf32, #tpu.memory_space<vmem>>, %arg5: memref<2x32xf32, #tpu.memory_space<vmem>>) attributes {dimension_semantics = [], scalar_prefetch = 0 : i64, scratch_operands = 0 : i64, tpu.core_type = #tpu.core_type<tc>} {
    %c0 = arith.constant 0 : index
    %c0_0 = arith.constant 0 : index
    %0 = vector.load %arg0[%c0, %c0_0] : memref<2x8192xbf16, #tpu.memory_space<vmem>>, vector<2x8192xbf16>
    %c0_1 = arith.constant 0 : index
    %c0_2 = arith.constant 0 : index
    %1 = vector.load %arg1[%c0_1, %c0_2] : memref<8192x32xbf16, #tpu.memory_space<vmem>>, vector<8192x32xbf16>
    %cst = arith.constant dense<0.000000e+00> : vector<2x32xf32>
    %2 = tpu.matmul %0, %1, %cst {dimension_numbers = #tpu.dot_dimension_numbers<[1], [0], [0], [1], [0, 0, 1, 1], [], []>} : vector<2x8192xbf16>, vector<8192x32xbf16>, vector<2x32xf32> -> vector<2x32xf32>
    %c0_3 = arith.constant 0 : index
    %c0_4 = arith.constant 0 : index
    %3 = vector.load %arg2[%c0_3, %c0_4] : memref<1x32xf32, #tpu.memory_space<vmem>>, vector<1x32xf32>
    %4 = vector.broadcast %3 : vector<1x32xf32> to vector<2x32xf32>
    %5 = arith.addf %2, %4 : vector<2x32xf32>
    %cst_5 = arith.constant 0.000000e+00 : f32
    %6 = vector.broadcast %cst_5 : f32 to vector<2x32xf32>
    %7 = arith.maximumf %5, %6 : vector<2x32xf32>
    %c0_6 = arith.constant 0 : index
    %c0_7 = arith.constant 0 : index
    %8 = vector.load %arg3[%c0_6, %c0_7] : memref<1x32xf32, #tpu.memory_space<vmem>>, vector<1x32xf32>
    %c0_8 = arith.constant 0 : index
    %c0_9 = arith.constant 0 : index
    %9 = vector.load %arg4[%c0_8, %c0_9] : memref<1x32xf32, #tpu.memory_space<vmem>>, vector<1x32xf32>
    %cst_10 = arith.constant dense<0.000000e+00> : vector<32xf32>
    %10 = vector.multi_reduction <add>, %7, %cst_10 [0] : vector<2x32xf32> to vector<32xf32>
    %11 = vector.shape_cast %10 : vector<32xf32> to vector<1x32xf32>
    %cst_11 = arith.constant 5.000000e-01 : f32
    %12 = vector.broadcast %cst_11 : f32 to vector<1x32xf32>
    %13 = arith.mulf %11, %12 : vector<1x32xf32>
    %14 = vector.broadcast %13 : vector<1x32xf32> to vector<2x32xf32>
    %15 = arith.subf %7, %14 : vector<2x32xf32>
    %16 = arith.mulf %15, %15 : vector<2x32xf32>
    %cst_12 = arith.constant dense<0.000000e+00> : vector<32xf32>
    %17 = vector.multi_reduction <add>, %16, %cst_12 [0] : vector<2x32xf32> to vector<32xf32>
    %18 = vector.shape_cast %17 : vector<32xf32> to vector<1x32xf32>
    %cst_13 = arith.constant 5.000000e-01 : f32
    %19 = vector.broadcast %cst_13 : f32 to vector<1x32xf32>
    %20 = arith.mulf %18, %19 : vector<1x32xf32>
    %cst_14 = arith.constant 9.99999974E-6 : f32
    %21 = vector.broadcast %cst_14 : f32 to vector<1x32xf32>
    %22 = arith.addf %20, %21 : vector<1x32xf32>
    %23 = math.rsqrt %22 : vector<1x32xf32>
    %24 = vector.broadcast %23 : vector<1x32xf32> to vector<2x32xf32>
    %25 = arith.mulf %15, %24 : vector<2x32xf32>
    %26 = vector.broadcast %8 : vector<1x32xf32> to vector<2x32xf32>
    %27 = arith.mulf %25, %26 : vector<2x32xf32>
    %28 = vector.broadcast %9 : vector<1x32xf32> to vector<2x32xf32>
    %29 = arith.addf %27, %28 : vector<2x32xf32>
    %c0_15 = arith.constant 0 : index
    %c0_16 = arith.constant 0 : index
    %30 = vector.load %arg5[%c0_15, %c0_16] : memref<2x32xf32, #tpu.memory_space<vmem>>, vector<2x32xf32>
    tpu.vector_store %arg5[%c0_15, %c0_16], %29 {strides = array<i32>} : memref<2x32xf32, #tpu.memory_space<vmem>>, vector<2x32xf32>,
    return
  }
}

</mosaic_0001>

<llo_original>
// kernel: model_forward.3
$region0: #{model_forward.3}
  #allocation0 [shape = 'u32[]', space=smem, size = 0x4, offset = 0x4, fixed_abs, tag = 'smem constant byte address 0x4 - core index']
  #allocation1 [shape = 'u32[72,128]{1,0:T(1,128)}', space=vmem, size = 0x9000, scoped, tag = 'internal scratch']
  %s0 = inlined_call_operand.vmem [shape: bf16[2,8192], index: 0, kind: input, shape index: {}]
  %s1 = inlined_call_operand.vmem [shape: bf16[8192,32], index: 1, kind: input, shape index: {}]
  %s2 = inlined_call_operand.vmem [shape: f32[1,32], index: 2, kind: input, shape index: {}]
  %s3 = inlined_call_operand.vmem [shape: f32[1,32], index: 3, kind: input, shape index: {}]
  %s4 = inlined_call_operand.vmem [shape: f32[1,32], index: 4, kind: input, shape index: {}]
  %s5 = inlined_call_operand.hbm [shape: f32[2,32], index: 5, kind: output, shape index: {}]
  %s6 = sld [smem:[#allocation0]]
  $region30: #{model_forward.3} parent=0
    _
  %s8 = ssub.s32 1, %s6
  %s9 = scalar_select 0, %s8, %s6
  $region1: #{model_forward.3} parent=0
    #allocation2 [shape = 'u8[1024]{0}', space=vmem, size = 0x400, scoped, tag = 'output window, operand 0, single buffered']
    #allocation3 [shape = 's32[1]{0}', space=sflag, size = 0x4, scoped, tag = 'scoped memory for model_forward.3']
    %10 = vsyncpa [#allocation3], 0
    // Predicated region
    $region2: #{model_forward.3} parent=1 // pred_check
      _
    $region3: #{model_forward.3} parent=1 // pred_check_branch
      %12 = sbr.rel (0) target = $region5
    $region4: #{model_forward.3} parent=1 // pred_region
      _
    $region5: #{model_forward.3} parent=1 // pred_fallthru
      _
    // Predicated region
    $region6: #{model_forward.3} parent=1 // pred_check
      _
    $region7: #{model_forward.3} parent=1 // pred_check_branch
      %14 = sbr.rel (0) target = $region9
    $region8: #{model_forward.3} parent=1 // pred_region
      _
    $region9: #{model_forward.3} parent=1 // pred_fallthru
      _
    // Predicated region
    $region10: #{model_forward.3} parent=1 // pred_check
      _
    $region11: #{model_forward.3} parent=1 // pred_check_branch
      %16 = sbr.rel (0) target = $region13
    $region12: #{model_forward.3} parent=1 // pred_region
      _
    $region13: #{model_forward.3} parent=1 // pred_fallthru
      _
    // Predicated region
    $region14: #{model_forward.3} parent=1 // pred_check
      _
    $region15: #{model_forward.3} parent=1 // pred_check_branch
      %18 = sbr.rel (0) target = $region17
    $region16: #{model_forward.3} parent=1 // pred_region
      _
    $region17: #{model_forward.3} parent=1 // pred_fallthru
      _
    // Predicated region
    $region18: #{model_forward.3} parent=1 // pred_check
      _
    $region19: #{model_forward.3} parent=1 // pred_check_branch
      %20 = sbr.rel (0) target = $region21
    $region20: #{model_forward.3} parent=1 // pred_region
      _
    $region21: #{model_forward.3} parent=1 // pred_fallthru
      _
    %v21 = vld [vmem:[%s0] sm:$0xff]
    %v22 = vld [vmem:[%s0 + $0x8] sm:$0xff]
    %v23 = vld [vmem:[%s0 + $0x10] sm:$0xff]
    %v24 = vld [vmem:[%s0 + $0x18] sm:$0xff]
    %v25 = vld [vmem:[%s0 + $0x20] sm:$0xff]
    %v26 = vld [vmem:[%s0 + $0x28] sm:$0xff]
    %v27 = vld [vmem:[%s0 + $0x30] sm:$0xff]
    %v28 = vld [vmem:[%s0 + $0x38] sm:$0xff]
    %v29 = vld [vmem:[%s1] sm:$0xf]
    %v30 = vld [vmem:[%s1 + $0x4] sm:$0xf]
    %v31 = vld [vmem:[%s1 + $0x8] sm:$0xf]
    %v32 = vld [vmem:[%s1 + $0xc] sm:$0xf]
    %v33 = vld [vmem:[%s1 + $0x10] sm:$0xf]
    %v34 = vld [vmem:[%s1 + $0x14] sm:$0xf]
    %v35 = vld [vmem:[%s1 + $0x18] sm:$0xf]
    %v36 = vld [vmem:[%s1 + $0x1c] sm:$0xf]
    %v37 = vld [vmem:[%s1 + $0x20] sm:$0xf]
    %v38 = vld [vmem:[%s1 + $0x24] sm:$0xf]
    %v39 = vld [vmem:[%s1 + $0x28] sm:$0xf]
    %v40 = vld [vmem:[%s1 + $0x2c] sm:$0xf]
    %v41 = vld [vmem:[%s1 + $0x30] sm:$0xf]
    %v42 = vld [vmem:[%s1 + $0x34] sm:$0xf]
    %v43 = vld [vmem:[%s1 + $0x38] sm:$0xf]
    %v44 = vld [vmem:[%s1 + $0x3c] sm:$0xf]
    %v45 = vld [vmem:[%s1 + $0x40] sm:$0xf]
    %v46 = vld [vmem:[%s1 + $0x44] sm:$0xf]
    %v47 = vld [vmem:[%s1 + $0x48] sm:$0xf]
    %v48 = vld [vmem:[%s1 + $0x4c] sm:$0xf]
    %v49 = vld [vmem:[%s1 + $0x50] sm:$0xf]
    %v50 = vld [vmem:[%s1 + $0x54] sm:$0xf]
    %v51 = vld [vmem:[%s1 + $0x58] sm:$0xf]
    %v52 = vld [vmem:[%s1 + $0x5c] sm:$0xf]
    %v53 = vld [vmem:[%s1 + $0x60] sm:$0xf]
    %v54 = vld [vmem:[%s1 + $0x64] sm:$0xf]
    %v55 = vld [vmem:[%s1 + $0x68] sm:$0xf]
    %v56 = vld [vmem:[%s1 + $0x6c] sm:$0xf]
    %v57 = vld [vmem:[%s1 + $0x70] sm:$0xf]
    %v58 = vld [vmem:[%s1 + $0x74] sm:$0xf]
    %v59 = vld [vmem:[%s1 + $0x78] sm:$0xf]
    %v60 = vld [vmem:[%s1 + $0x7c] sm:$0xf]
    %v61 = vld [vmem:[%s1 + $0x80] sm:$0xf]
    %v62 = vld [vmem:[%s1 + $0x84] sm:$0xf]
    %v63 = vld [vmem:[%s1 + $0x88] sm:$0xf]
    %v64 = vld [vmem:[%s1 + $0x8c] sm:$0xf]
    %v65 = vld [vmem:[%s1 + $0x90] sm:$0xf]
    %v66 = vld [vmem:[%s1 + $0x94] sm:$0xf]
    %v67 = vld [vmem:[%s1 + $0x98] sm:$0xf]
    %v68 = vld [vmem:[%s1 + $0x9c] sm:$0xf]
    %v69 = vld [vmem:[%s1 + $0xa0] sm:$0xf]
    %v70 = vld [vmem:[%s1 + $0xa4] sm:$0xf]
    %v71 = vld [vmem:[%s1 + $0xa8] sm:$0xf]
    %v72 = vld [vmem:[%s1 + $0xac] sm:$0xf]
    %v73 = vld [vmem:[%s1 + $0xb0] sm:$0xf]
    %v74 = vld [vmem:[%s1 + $0xb4] sm:$0xf]
    %v75 = vld [vmem:[%s1 + $0xb8] sm:$0xf]
    %v76 = vld [vmem:[%s1 + $0xbc] sm:$0xf]
    %v77 = vld [vmem:[%s1 + $0xc0] sm:$0xf]
    %v78 = vld [vmem:[%s1 + $0xc4] sm:$0xf]
    %v79 = vld [vmem:[%s1 + $0xc8] sm:$0xf]
    %v80 = vld [vmem:[%s1 + $0xcc] sm:$0xf]
    %v81 = vld [vmem:[%s1 + $0xd0] sm:$0xf]
    %v82 = vld [vmem:[%s1 + $0xd4] sm:$0xf]
    %v83 = vld [vmem:[%s1 + $0xd8] sm:$0xf]
    %v84 = vld [vmem:[%s1 + $0xdc] sm:$0xf]
    %v85 = vld [vmem:[%s1 + $0xe0] sm:$0xf]
    %v86 = vld [vmem:[%s1 + $0xe4] sm:$0xf]
    %v87 = vld [vmem:[%s1 + $0xe8] sm:$0xf]
    %v88 = vld [vmem:[%s1 + $0xec] sm:$0xf]
    %v89 = vld [vmem:[%s1 + $0xf0] sm:$0xf]
    %v90 = vld [vmem:[%s1 + $0xf4] sm:$0xf]
    %v91 = vld [vmem:[%s1 + $0xf8] sm:$0xf]
    %v92 = vld [vmem:[%s1 + $0xfc] sm:$0xf]
    %v93 = vld [vmem:[%s1 + $0x100] sm:$0xf]
    %v94 = vld [vmem:[%s1 + $0x104] sm:$0xf]
    %v95 = vld [vmem:[%s1 + $0x108] sm:$0xf]
    %v96 = vld [vmem:[%s1 + $0x10c] sm:$0xf]
    %v97 = vld [vmem:[%s1 + $0x110] sm:$0xf]
    %v98 = vld [vmem:[%s1 + $0x114] sm:$0xf]
    %v99 = vld [vmem:[%s1 + $0x118] sm:$0xf]
    %v100 = vld [vmem:[%s1 + $0x11c] sm:$0xf]
    %v101 = vld [vmem:[%s1 + $0x120] sm:$0xf]
    %v102 = vld [vmem:[%s1 + $0x124] sm:$0xf]
    %v103 = vld [vmem:[%s1 + $0x128] sm:$0xf]
    %v104 = vld [vmem:[%s1 + $0x12c] sm:$0xf]
    %v105 = vld [vmem:[%s1 + $0x130] sm:$0xf]
    %v106 = vld [vmem:[%s1 + $0x134] sm:$0xf]
    %v107 = vld [vmem:[%s1 + $0x138] sm:$0xf]
    %v108 = vld [vmem:[%s1 + $0x13c] sm:$0xf]
    %v109 = vld [vmem:[%s1 + $0x140] sm:$0xf]
    %v110 = vld [vmem:[%s1 + $0x144] sm:$0xf]
    %v111 = vld [vmem:[%s1 + $0x148] sm:$0xf]
    %v112 = vld [vmem:[%s1 + $0x14c] sm:$0xf]
    %v113 = vld [vmem:[%s1 + $0x150] sm:$0xf]
    %v114 = vld [vmem:[%s1 + $0x154] sm:$0xf]
    %v115 = vld [vmem:[%s1 + $0x158] sm:$0xf]
    %v116 = vld [vmem:[%s1 + $0x15c] sm:$0xf]
    %v117 = vld [vmem:[%s1 + $0x160] sm:$0xf]
    %v118 = vld [vmem:[%s1 + $0x164] sm:$0xf]
    %v119 = vld [vmem:[%s1 + $0x168] sm:$0xf]
    %v120 = vld [vmem:[%s1 + $0x16c] sm:$0xf]
    %v121 = vld [vmem:[%s1 + $0x170] sm:$0xf]
    %v122 = vld [vmem:[%s1 + $0x174] sm:$0xf]
    %v123 = vld [vmem:[%s1 + $0x178] sm:$0xf]
    %v124 = vld [vmem:[%s1 + $0x17c] sm:$0xf]
    %v125 = vld [vmem:[%s1 + $0x180] sm:$0xf]
    %v126 = vld [vmem:[%s1 + $0x184] sm:$0xf]
    %v127 = vld [vmem:[%s1 + $0x188] sm:$0xf]
    %v128 = vld [vmem:[%s1 + $0x18c] sm:$0xf]
    %v129 = vld [vmem:[%s1 + $0x190] sm:$0xf]
    %v130 = vld [vmem:[%s1 + $0x194] sm:$0xf]
    %v131 = vld [vmem:[%s1 + $0x198] sm:$0xf]
    %v132 = vld [vmem:[%s1 + $0x19c] sm:$0xf]
    %v133 = vld [vmem:[%s1 + $0x1a0] sm:$0xf]
    %v134 = vld [vmem:[%s1 + $0x1a4] sm:$0xf]
    %v135 = vld [vmem:[%s1 + $0x1a8] sm:$0xf]
    %v136 = vld [vmem:[%s1 + $0x1ac] sm:$0xf]
    %v137 = vld [vmem:[%s1 + $0x1b0] sm:$0xf]
    %v138 = vld [vmem:[%s1 + $0x1b4] sm:$0xf]
    %v139 = vld [vmem:[%s1 + $0x1b8] sm:$0xf]
    %v140 = vld [vmem:[%s1 + $0x1bc] sm:$0xf]
    %v141 = vld [vmem:[%s1 + $0x1c0] sm:$0xf]
    %v142 = vld [vmem:[%s1 + $0x1c4] sm:$0xf]
    %v143 = vld [vmem:[%s1 + $0x1c8] sm:$0xf]
    %v144 = vld [vmem:[%s1 + $0x1cc] sm:$0xf]
    %v145 = vld [vmem:[%s1 + $0x1d0] sm:$0xf]
    %v146 = vld [vmem:[%s1 + $0x1d4] sm:$0xf]
    %v147 = vld [vmem:[%s1 + $0x1d8] sm:$0xf]
    %v148 = vld [vmem:[%s1 + $0x1dc] sm:$0xf]
    %v149 = vld [vmem:[%s1 + $0x1e0] sm:$0xf]
    %v150 = vld [vmem:[%s1 + $0x1e4] sm:$0xf]
    %v151 = vld [vmem:[%s1 + $0x1e8] sm:$0xf]
    %v152 = vld [vmem:[%s1 + $0x1ec] sm:$0xf]
    %v153 = vld [vmem:[%s1 + $0x1f0] sm:$0xf]
    %v154 = vld [vmem:[%s1 + $0x1f4] sm:$0xf]
    %v155 = vld [vmem:[%s1 + $0x1f8] sm:$0xf]
    %v156 = vld [vmem:[%s1 + $0x1fc] sm:$0xf]
    %v157 = vld [vmem:[%s1 + $0x200] sm:$0xf]
    %v158 = vld [vmem:[%s1 + $0x204] sm:$0xf]
    %v159 = vld [vmem:[%s1 + $0x208] sm:$0xf]
    %v160 = vld [vmem:[%s1 + $0x20c] sm:$0xf]
    %v161 = vld [vmem:[%s1 + $0x210] sm:$0xf]
    %v162 = vld [vmem:[%s1 + $0x214] sm:$0xf]
    %v163 = vld [vmem:[%s1 + $0x218] sm:$0xf]
    %v164 = vld [vmem:[%s1 + $0x21c] sm:$0xf]
    %v165 = vld [vmem:[%s1 + $0x220] sm:$0xf]
    %v166 = vld [vmem:[%s1 + $0x224] sm:$0xf]
    %v167 = vld [vmem:[%s1 + $0x228] sm:$0xf]
    %v168 = vld [vmem:[%s1 + $0x22c] sm:$0xf]
    %v169 = vld [vmem:[%s1 + $0x230] sm:$0xf]
    %v170 = vld [vmem:[%s1 + $0x234] sm:$0xf]
    %v171 = vld [vmem:[%s1 + $0x238] sm:$0xf]
    %v172 = vld [vmem:[%s1 + $0x23c] sm:$0xf]
    %v173 = vld [vmem:[%s1 + $0x240] sm:$0xf]
    %v174 = vld [vmem:[%s1 + $0x244] sm:$0xf]
    %v175 = vld [vmem:[%s1 + $0x248] sm:$0xf]
    %v176 = vld [vmem:[%s1 + $0x24c] sm:$0xf]
    %v177 = vld [vmem:[%s1 + $0x250] sm:$0xf]
    %v178 = vld [vmem:[%s1 + $0x254] sm:$0xf]
    %v179 = vld [vmem:[%s1 + $0x258] sm:$0xf]
    %v180 = vld [vmem:[%s1 + $0x25c] sm:$0xf]
    %v181 = vld [vmem:[%s1 + $0x260] sm:$0xf]
    %v182 = vld [vmem:[%s1 + $0x264] sm:$0xf]
    %v183 = vld [vmem:[%s1 + $0x268] sm:$0xf]
    %v184 = vld [vmem:[%s1 + $0x26c] sm:$0xf]
    %v185 = vld [vmem:[%s1 + $0x270] sm:$0xf]
    %v186 = vld [vmem:[%s1 + $0x274] sm:$0xf]
    %v187 = vld [vmem:[%s1 + $0x278] sm:$0xf]
    %v188 = vld [vmem:[%s1 + $0x27c] sm:$0xf]
    %v189 = vld [vmem:[%s1 + $0x280] sm:$0xf]
    %v190 = vld [vmem:[%s1 + $0x284] sm:$0xf]
    %v191 = vld [vmem:[%s1 + $0x288] sm:$0xf]
    %v192 = vld [vmem:[%s1 + $0x28c] sm:$0xf]
    %v193 = vld [vmem:[%s1 + $0x290] sm:$0xf]
    %v194 = vld [vmem:[%s1 + $0x294] sm:$0xf]
    %v195 = vld [vmem:[%s1 + $0x298] sm:$0xf]
    %v196 = vld [vmem:[%s1 + $0x29c] sm:$0xf]
    %v197 = vld [vmem:[%s1 + $0x2a0] sm:$0xf]
    %v198 = vld [vmem:[%s1 + $0x2a4] sm:$0xf]
    %v199 = vld [vmem:[%s1 + $0x2a8] sm:$0xf]
    %v200 = vld [vmem:[%s1 + $0x2ac] sm:$0xf]
    %v201 = vld [vmem:[%s1 + $0x2b0] sm:$0xf]
    %v202 = vld [vmem:[%s1 + $0x2b4] sm:$0xf]
    %v203 = vld [vmem:[%s1 + $0x2b8] sm:$0xf]
    %v204 = vld [vmem:[%s1 + $0x2bc] sm:$0xf]
    %v205 = vld [vmem:[%s1 + $0x2c0] sm:$0xf]
    %v206 = vld [vmem:[%s1 + $0x2c4] sm:$0xf]
    %v207 = vld [vmem:[%s1 + $0x2c8] sm:$0xf]
    %v208 = vld [vmem:[%s1 + $0x2cc] sm:$0xf]
    %v209 = vld [vmem:[%s1 + $0x2d0] sm:$0xf]
    %v210 = vld [vmem:[%s1 + $0x2d4] sm:$0xf]
    %v211 = vld [vmem:[%s1 + $0x2d8] sm:$0xf]
    %v212 = vld [vmem:[%s1 + $0x2dc] sm:$0xf]
    %v213 = vld [vmem:[%s1 + $0x2e0] sm:$0xf]
    %v214 = vld [vmem:[%s1 + $0x2e4] sm:$0xf]
    %v215 = vld [vmem:[%s1 + $0x2e8] sm:$0xf]
    %v216 = vld [vmem:[%s1 + $0x2ec] sm:$0xf]
    %v217 = vld [vmem:[%s1 + $0x2f0] sm:$0xf]
    %v218 = vld [vmem:[%s1 + $0x2f4] sm:$0xf]
    %v219 = vld [vmem:[%s1 + $0x2f8] sm:$0xf]
    %v220 = vld [vmem:[%s1 + $0x2fc] sm:$0xf]
    %v221 = vld [vmem:[%s1 + $0x300] sm:$0xf]
    %v222 = vld [vmem:[%s1 + $0x304] sm:$0xf]
    %v223 = vld [vmem:[%s1 + $0x308] sm:$0xf]
    %v224 = vld [vmem:[%s1 + $0x30c] sm:$0xf]
    %v225 = vld [vmem:[%s1 + $0x310] sm:$0xf]
    %v226 = vld [vmem:[%s1 + $0x314] sm:$0xf]
    %v227 = vld [vmem:[%s1 + $0x318] sm:$0xf]
    %v228 = vld [vmem:[%s1 + $0x31c] sm:$0xf]
    %v229 = vld [vmem:[%s1 + $0x320] sm:$0xf]
    %v230 = vld [vmem:[%s1 + $0x324] sm:$0xf]
    %v231 = vld [vmem:[%s1 + $0x328] sm:$0xf]
    %v232 = vld [vmem:[%s1 + $0x32c] sm:$0xf]
    %v233 = vld [vmem:[%s1 + $0x330] sm:$0xf]
    %v234 = vld [vmem:[%s1 + $0x334] sm:$0xf]
    %v235 = vld [vmem:[%s1 + $0x338] sm:$0xf]
    %v236 = vld [vmem:[%s1 + $0x33c] sm:$0xf]
    %v237 = vld [vmem:[%s1 + $0x340] sm:$0xf]
    %v238 = vld [vmem:[%s1 + $0x344] sm:$0xf]
    %v239 = vld [vmem:[%s1 + $0x348] sm:$0xf]
    %v240 = vld [vmem:[%s1 + $0x34c] sm:$0xf]
    %v241 = vld [vmem:[%s1 + $0x350] sm:$0xf]
    %v242 = vld [vmem:[%s1 + $0x354] sm:$0xf]
    %v243 = vld [vmem:[%s1 + $0x358] sm:$0xf]
    %v244 = vld [vmem:[%s1 + $0x35c] sm:$0xf]
    %v245 = vld [vmem:[%s1 + $0x360] sm:$0xf]
    %v246 = vld [vmem:[%s1 + $0x364] sm:$0xf]
    %v247 = vld [vmem:[%s1 + $0x368] sm:$0xf]
    %v248 = vld [vmem:[%s1 + $0x36c] sm:$0xf]
    %v249 = vld [vmem:[%s1 + $0x370] sm:$0xf]
    %v250 = vld [vmem:[%s1 + $0x374] sm:$0xf]
    %v251 = vld [vmem:[%s1 + $0x378] sm:$0xf]
    %v252 = vld [vmem:[%s1 + $0x37c] sm:$0xf]
    %v253 = vld [vmem:[%s1 + $0x380] sm:$0xf]
    %v254 = vld [vmem:[%s1 + $0x384] sm:$0xf]
    %v255 = vld [vmem:[%s1 + $0x388] sm:$0xf]
    %v256 = vld [vmem:[%s1 + $0x38c] sm:$0xf]
    %v257 = vld [vmem:[%s1 + $0x390] sm:$0xf]
    %v258 = vld [vmem:[%s1 + $0x394] sm:$0xf]
    %v259 = vld [vmem:[%s1 + $0x398] sm:$0xf]
    %v260 = vld [vmem:[%s1 + $0x39c] sm:$0xf]
    %v261 = vld [vmem:[%s1 + $0x3a0] sm:$0xf]
    %v262 = vld [vmem:[%s1 + $0x3a4] sm:$0xf]
    %v263 = vld [vmem:[%s1 + $0x3a8] sm:$0xf]
    %v264 = vld [vmem:[%s1 + $0x3ac] sm:$0xf]
    %v265 = vld [vmem:[%s1 + $0x3b0] sm:$0xf]
    %v266 = vld [vmem:[%s1 + $0x3b4] sm:$0xf]
    %v267 = vld [vmem:[%s1 + $0x3b8] sm:$0xf]
    %v268 = vld [vmem:[%s1 + $0x3bc] sm:$0xf]
    %v269 = vld [vmem:[%s1 + $0x3c0] sm:$0xf]
    %v270 = vld [vmem:[%s1 + $0x3c4] sm:$0xf]
    %v271 = vld [vmem:[%s1 + $0x3c8] sm:$0xf]
    %v272 = vld [vmem:[%s1 + $0x3cc] sm:$0xf]
    %v273 = vld [vmem:[%s1 + $0x3d0] sm:$0xf]
    %v274 = vld [vmem:[%s1 + $0x3d4] sm:$0xf]
    %v275 = vld [vmem:[%s1 + $0x3d8] sm:$0xf]
    %v276 = vld [vmem:[%s1 + $0x3dc] sm:$0xf]
    %v277 = vld [vmem:[%s1 + $0x3e0] sm:$0xf]
    %v278 = vld [vmem:[%s1 + $0x3e4] sm:$0xf]
    %v279 = vld [vmem:[%s1 + $0x3e8] sm:$0xf]
    %v280 = vld [vmem:[%s1 + $0x3ec] sm:$0xf]
    %v281 = vld [vmem:[%s1 + $0x3f0] sm:$0xf]
    %v282 = vld [vmem:[%s1 + $0x3f4] sm:$0xf]
    %v283 = vld [vmem:[%s1 + $0x3f8] sm:$0xf]
    %v284 = vld [vmem:[%s1 + $0x3fc] sm:$0xf]
    %v285 = vld [vmem:[%s1 + $0x400] sm:$0xf]
    %v286 = vld [vmem:[%s1 + $0x404] sm:$0xf]
    %v287 = vld [vmem:[%s1 + $0x408] sm:$0xf]
    %v288 = vld [vmem:[%s1 + $0x40c] sm:$0xf]
    %v289 = vld [vmem:[%s1 + $0x410] sm:$0xf]
    %v290 = vld [vmem:[%s1 + $0x414] sm:$0xf]
    %v291 = vld [vmem:[%s1 + $0x418] sm:$0xf]
    %v292 = vld [vmem:[%s1 + $0x41c] sm:$0xf]
    %v293 = vld [vmem:[%s1 + $0x420] sm:$0xf]
    %v294 = vld [vmem:[%s1 + $0x424] sm:$0xf]
    %v295 = vld [vmem:[%s1 + $0x428] sm:$0xf]
    %v296 = vld [vmem:[%s1 + $0x42c] sm:$0xf]
    %v297 = vld [vmem:[%s1 + $0x430] sm:$0xf]
    %v298 = vld [vmem:[%s1 + $0x434] sm:$0xf]
    %v299 = vld [vmem:[%s1 + $0x438] sm:$0xf]
    %v300 = vld [vmem:[%s1 + $0x43c] sm:$0xf]
    %v301 = vld [vmem:[%s1 + $0x440] sm:$0xf]
    %v302 = vld [vmem:[%s1 + $0x444] sm:$0xf]
    %v303 = vld [vmem:[%s1 + $0x448] sm:$0xf]
    %v304 = vld [vmem:[%s1 + $0x44c] sm:$0xf]
    %v305 = vld [vmem:[%s1 + $0x450] sm:$0xf]
    %v306 = vld [vmem:[%s1 + $0x454] sm:$0xf]
    %v307 = vld [vmem:[%s1 + $0x458] sm:$0xf]
    %v308 = vld [vmem:[%s1 + $0x45c] sm:$0xf]
    %v309 = vld [vmem:[%s1 + $0x460] sm:$0xf]
    %v310 = vld [vmem:[%s1 + $0x464] sm:$0xf]
    %v311 = vld [vmem:[%s1 + $0x468] sm:$0xf]
    %v312 = vld [vmem:[%s1 + $0x46c] sm:$0xf]
    %v313 = vld [vmem:[%s1 + $0x470] sm:$0xf]
    %v314 = vld [vmem:[%s1 + $0x474] sm:$0xf]
    %v315 = vld [vmem:[%s1 + $0x478] sm:$0xf]
    %v316 = vld [vmem:[%s1 + $0x47c] sm:$0xf]
    %v317 = vld [vmem:[%s1 + $0x480] sm:$0xf]
    %v318 = vld [vmem:[%s1 + $0x484] sm:$0xf]
    %v319 = vld [vmem:[%s1 + $0x488] sm:$0xf]
    %v320 = vld [vmem:[%s1 + $0x48c] sm:$0xf]
    %v321 = vld [vmem:[%s1 + $0x490] sm:$0xf]
    %v322 = vld [vmem:[%s1 + $0x494] sm:$0xf]
    %v323 = vld [vmem:[%s1 + $0x498] sm:$0xf]
    %v324 = vld [vmem:[%s1 + $0x49c] sm:$0xf]
    %v325 = vld [vmem:[%s1 + $0x4a0] sm:$0xf]
    %v326 = vld [vmem:[%s1 + $0x4a4] sm:$0xf]
    %v327 = vld [vmem:[%s1 + $0x4a8] sm:$0xf]
    %v328 = vld [vmem:[%s1 + $0x4ac] sm:$0xf]
    %v329 = vld [vmem:[%s1 + $0x4b0] sm:$0xf]
    %v330 = vld [vmem:[%s1 + $0x4b4] sm:$0xf]
    %v331 = vld [vmem:[%s1 + $0x4b8] sm:$0xf]
    %v332 = vld [vmem:[%s1 + $0x4bc] sm:$0xf]
    %v333 = vld [vmem:[%s1 + $0x4c0] sm:$0xf]
    %v334 = vld [vmem:[%s1 + $0x4c4] sm:$0xf]
    %v335 = vld [vmem:[%s1 + $0x4c8] sm:$0xf]
    %v336 = vld [vmem:[%s1 + $0x4cc] sm:$0xf]
    %v337 = vld [vmem:[%s1 + $0x4d0] sm:$0xf]
    %v338 = vld [vmem:[%s1 + $0x4d4] sm:$0xf]
    %v339 = vld [vmem:[%s1 + $0x4d8] sm:$0xf]
    %v340 = vld [vmem:[%s1 + $0x4dc] sm:$0xf]
    %v341 = vld [vmem:[%s1 + $0x4e0] sm:$0xf]
    %v342 = vld [vmem:[%s1 + $0x4e4] sm:$0xf]
    %v343 = vld [vmem:[%s1 + $0x4e8] sm:$0xf]
    %v344 = vld [vmem:[%s1 + $0x4ec] sm:$0xf]
    %v345 = vld [vmem:[%s1 + $0x4f0] sm:$0xf]
    %v346 = vld [vmem:[%s1 + $0x4f4] sm:$0xf]
    %v347 = vld [vmem:[%s1 + $0x4f8] sm:$0xf]
    %v348 = vld [vmem:[%s1 + $0x4fc] sm:$0xf]
    %v349 = vld [vmem:[%s1 + $0x500] sm:$0xf]
    %v350 = vld [vmem:[%s1 + $0x504] sm:$0xf]
    %v351 = vld [vmem:[%s1 + $0x508] sm:$0xf]
    %v352 = vld [vmem:[%s1 + $0x50c] sm:$0xf]
    %v353 = vld [vmem:[%s1 + $0x510] sm:$0xf]
    %v354 = vld [vmem:[%s1 + $0x514] sm:$0xf]
    %v355 = vld [vmem:[%s1 + $0x518] sm:$0xf]
    %v356 = vld [vmem:[%s1 + $0x51c] sm:$0xf]
    %v357 = vld [vmem:[%s1 + $0x520] sm:$0xf]
    %v358 = vld [vmem:[%s1 + $0x524] sm:$0xf]
    %v359 = vld [vmem:[%s1 + $0x528] sm:$0xf]
    %v360 = vld [vmem:[%s1 + $0x52c] sm:$0xf]
    %v361 = vld [vmem:[%s1 + $0x530] sm:$0xf]
    %v362 = vld [vmem:[%s1 + $0x534] sm:$0xf]
    %v363 = vld [vmem:[%s1 + $0x538] sm:$0xf]
    %v364 = vld [vmem:[%s1 + $0x53c] sm:$0xf]
    %v365 = vld [vmem:[%s1 + $0x540] sm:$0xf]
    %v366 = vld [vmem:[%s1 + $0x544] sm:$0xf]
    %v367 = vld [vmem:[%s1 + $0x548] sm:$0xf]
    %v368 = vld [vmem:[%s1 + $0x54c] sm:$0xf]
    %v369 = vld [vmem:[%s1 + $0x550] sm:$0xf]
    %v370 = vld [vmem:[%s1 + $0x554] sm:$0xf]
    %v371 = vld [vmem:[%s1 + $0x558] sm:$0xf]
    %v372 = vld [vmem:[%s1 + $0x55c] sm:$0xf]
    %v373 = vld [vmem:[%s1 + $0x560] sm:$0xf]
    %v374 = vld [vmem:[%s1 + $0x564] sm:$0xf]
    %v375 = vld [vmem:[%s1 + $0x568] sm:$0xf]
    %v376 = vld [vmem:[%s1 + $0x56c] sm:$0xf]
    %v377 = vld [vmem:[%s1 + $0x570] sm:$0xf]
    %v378 = vld [vmem:[%s1 + $0x574] sm:$0xf]
    %v379 = vld [vmem:[%s1 + $0x578] sm:$0xf]
    %v380 = vld [vmem:[%s1 + $0x57c] sm:$0xf]
    %v381 = vld [vmem:[%s1 + $0x580] sm:$0xf]
    %v382 = vld [vmem:[%s1 + $0x584] sm:$0xf]
    %v383 = vld [vmem:[%s1 + $0x588] sm:$0xf]
    %v384 = vld [vmem:[%s1 + $0x58c] sm:$0xf]
    %v385 = vld [vmem:[%s1 + $0x590] sm:$0xf]
    %v386 = vld [vmem:[%s1 + $0x594] sm:$0xf]
    %v387 = vld [vmem:[%s1 + $0x598] sm:$0xf]
    %v388 = vld [vmem:[%s1 + $0x59c] sm:$0xf]
    %v389 = vld [vmem:[%s1 + $0x5a0] sm:$0xf]
    %v390 = vld [vmem:[%s1 + $0x5a4] sm:$0xf]
    %v391 = vld [vmem:[%s1 + $0x5a8] sm:$0xf]
    %v392 = vld [vmem:[%s1 + $0x5ac] sm:$0xf]
    %v393 = vld [vmem:[%s1 + $0x5b0] sm:$0xf]
    %v394 = vld [vmem:[%s1 + $0x5b4] sm:$0xf]
    %v395 = vld [vmem:[%s1 + $0x5b8] sm:$0xf]
    %v396 = vld [vmem:[%s1 + $0x5bc] sm:$0xf]
    %v397 = vld [vmem:[%s1 + $0x5c0] sm:$0xf]
    %v398 = vld [vmem:[%s1 + $0x5c4] sm:$0xf]
    %v399 = vld [vmem:[%s1 + $0x5c8] sm:$0xf]
    %v400 = vld [vmem:[%s1 + $0x5cc] sm:$0xf]
    %v401 = vld [vmem:[%s1 + $0x5d0] sm:$0xf]
    %v402 = vld [vmem:[%s1 + $0x5d4] sm:$0xf]
    %v403 = vld [vmem:[%s1 + $0x5d8] sm:$0xf]
    %v404 = vld [vmem:[%s1 + $0x5dc] sm:$0xf]
    %v405 = vld [vmem:[%s1 + $0x5e0] sm:$0xf]
    %v406 = vld [vmem:[%s1 + $0x5e4] sm:$0xf]
    %v407 = vld [vmem:[%s1 + $0x5e8] sm:$0xf]
    %v408 = vld [vmem:[%s1 + $0x5ec] sm:$0xf]
    %v409 = vld [vmem:[%s1 + $0x5f0] sm:$0xf]
    %v410 = vld [vmem:[%s1 + $0x5f4] sm:$0xf]
    %v411 = vld [vmem:[%s1 + $0x5f8] sm:$0xf]
    %v412 = vld [vmem:[%s1 + $0x5fc] sm:$0xf]
    %v413 = vld [vmem:[%s1 + $0x600] sm:$0xf]
    %v414 = vld [vmem:[%s1 + $0x604] sm:$0xf]
    %v415 = vld [vmem:[%s1 + $0x608] sm:$0xf]
    %v416 = vld [vmem:[%s1 + $0x60c] sm:$0xf]
    %v417 = vld [vmem:[%s1 + $0x610] sm:$0xf]
    %v418 = vld [vmem:[%s1 + $0x614] sm:$0xf]
    %v419 = vld [vmem:[%s1 + $0x618] sm:$0xf]
    %v420 = vld [vmem:[%s1 + $0x61c] sm:$0xf]
    %v421 = vld [vmem:[%s1 + $0x620] sm:$0xf]
    %v422 = vld [vmem:[%s1 + $0x624] sm:$0xf]
    %v423 = vld [vmem:[%s1 + $0x628] sm:$0xf]
    %v424 = vld [vmem:[%s1 + $0x62c] sm:$0xf]
    %v425 = vld [vmem:[%s1 + $0x630] sm:$0xf]
    %v426 = vld [vmem:[%s1 + $0x634] sm:$0xf]
    %v427 = vld [vmem:[%s1 + $0x638] sm:$0xf]
    %v428 = vld [vmem:[%s1 + $0x63c] sm:$0xf]
    %v429 = vld [vmem:[%s1 + $0x640] sm:$0xf]
    %v430 = vld [vmem:[%s1 + $0x644] sm:$0xf]
    %v431 = vld [vmem:[%s1 + $0x648] sm:$0xf]
    %v432 = vld [vmem:[%s1 + $0x64c] sm:$0xf]
    %v433 = vld [vmem:[%s1 + $0x650] sm:$0xf]
    %v434 = vld [vmem:[%s1 + $0x654] sm:$0xf]
    %v435 = vld [vmem:[%s1 + $0x658] sm:$0xf]
    %v436 = vld [vmem:[%s1 + $0x65c] sm:$0xf]
    %v437 = vld [vmem:[%s1 + $0x660] sm:$0xf]
    %v438 = vld [vmem:[%s1 + $0x664] sm:$0xf]
    %v439 = vld [vmem:[%s1 + $0x668] sm:$0xf]
    %v440 = vld [vmem:[%s1 + $0x66c] sm:$0xf]
    %v441 = vld [vmem:[%s1 + $0x670] sm:$0xf]
    %v442 = vld [vmem:[%s1 + $0x674] sm:$0xf]
    %v443 = vld [vmem:[%s1 + $0x678] sm:$0xf]
    %v444 = vld [vmem:[%s1 + $0x67c] sm:$0xf]
    %v445 = vld [vmem:[%s1 + $0x680] sm:$0xf]
    %v446 = vld [vmem:[%s1 + $0x684] sm:$0xf]
    %v447 = vld [vmem:[%s1 + $0x688] sm:$0xf]
    %v448 = vld [vmem:[%s1 + $0x68c] sm:$0xf]
    %v449 = vld [vmem:[%s1 + $0x690] sm:$0xf]
    %v450 = vld [vmem:[%s1 + $0x694] sm:$0xf]
    %v451 = vld [vmem:[%s1 + $0x698] sm:$0xf]
    %v452 = vld [vmem:[%s1 + $0x69c] sm:$0xf]
    %v453 = vld [vmem:[%s1 + $0x6a0] sm:$0xf]
    %v454 = vld [vmem:[%s1 + $0x6a4] sm:$0xf]
    %v455 = vld [vmem:[%s1 + $0x6a8] sm:$0xf]
    %v456 = vld [vmem:[%s1 + $0x6ac] sm:$0xf]
    %v457 = vld [vmem:[%s1 + $0x6b0] sm:$0xf]
    %v458 = vld [vmem:[%s1 + $0x6b4] sm:$0xf]
    %v459 = vld [vmem:[%s1 + $0x6b8] sm:$0xf]
    %v460 = vld [vmem:[%s1 + $0x6bc] sm:$0xf]
    %v461 = vld [vmem:[%s1 + $0x6c0] sm:$0xf]
    %v462 = vld [vmem:[%s1 + $0x6c4] sm:$0xf]
    %v463 = vld [vmem:[%s1 + $0x6c8] sm:$0xf]
    %v464 = vld [vmem:[%s1 + $0x6cc] sm:$0xf]
    %v465 = vld [vmem:[%s1 + $0x6d0] sm:$0xf]
    %v466 = vld [vmem:[%s1 + $0x6d4] sm:$0xf]
    %v467 = vld [vmem:[%s1 + $0x6d8] sm:$0xf]
    %v468 = vld [vmem:[%s1 + $0x6dc] sm:$0xf]
    %v469 = vld [vmem:[%s1 + $0x6e0] sm:$0xf]
    %v470 = vld [vmem:[%s1 + $0x6e4] sm:$0xf]
    %v471 = vld [vmem:[%s1 + $0x6e8] sm:$0xf]
    %v472 = vld [vmem:[%s1 + $0x6ec] sm:$0xf]
    %v473 = vld [vmem:[%s1 + $0x6f0] sm:$0xf]
    %v474 = vld [vmem:[%s1 + $0x6f4] sm:$0xf]
    %v475 = vld [vmem:[%s1 + $0x6f8] sm:$0xf]
    %v476 = vld [vmem:[%s1 + $0x6fc] sm:$0xf]
    %v477 = vld [vmem:[%s1 + $0x700] sm:$0xf]
    %v478 = vld [vmem:[%s1 + $0x704] sm:$0xf]
    %v479 = vld [vmem:[%s1 + $0x708] sm:$0xf]
    %v480 = vld [vmem:[%s1 + $0x70c] sm:$0xf]
    %v481 = vld [vmem:[%s1 + $0x710] sm:$0xf]
    %v482 = vld [vmem:[%s1 + $0x714] sm:$0xf]
    %v483 = vld [vmem:[%s1 + $0x718] sm:$0xf]
    %v484 = vld [vmem:[%s1 + $0x71c] sm:$0xf]
    %v485 = vld [vmem:[%s1 + $0x720] sm:$0xf]
    %v486 = vld [vmem:[%s1 + $0x724] sm:$0xf]
    %v487 = vld [vmem:[%s1 + $0x728] sm:$0xf]
    %v488 = vld [vmem:[%s1 + $0x72c] sm:$0xf]
    %v489 = vld [vmem:[%s1 + $0x730] sm:$0xf]
    %v490 = vld [vmem:[%s1 + $0x734] sm:$0xf]
    %v491 = vld [vmem:[%s1 + $0x738] sm:$0xf]
    %v492 = vld [vmem:[%s1 + $0x73c] sm:$0xf]
    %v493 = vld [vmem:[%s1 + $0x740] sm:$0xf]
    %v494 = vld [vmem:[%s1 + $0x744] sm:$0xf]
    %v495 = vld [vmem:[%s1 + $0x748] sm:$0xf]
    %v496 = vld [vmem:[%s1 + $0x74c] sm:$0xf]
    %v497 = vld [vmem:[%s1 + $0x750] sm:$0xf]
    %v498 = vld [vmem:[%s1 + $0x754] sm:$0xf]
    %v499 = vld [vmem:[%s1 + $0x758] sm:$0xf]
    %v500 = vld [vmem:[%s1 + $0x75c] sm:$0xf]
    %v501 = vld [vmem:[%s1 + $0x760] sm:$0xf]
    %v502 = vld [vmem:[%s1 + $0x764] sm:$0xf]
    %v503 = vld [vmem:[%s1 + $0x768] sm:$0xf]
    %v504 = vld [vmem:[%s1 + $0x76c] sm:$0xf]
    %v505 = vld [vmem:[%s1 + $0x770] sm:$0xf]
    %v506 = vld [vmem:[%s1 + $0x774] sm:$0xf]
    %v507 = vld [vmem:[%s1 + $0x778] sm:$0xf]
    %v508 = vld [vmem:[%s1 + $0x77c] sm:$0xf]
    %v509 = vld [vmem:[%s1 + $0x780] sm:$0xf]
    %v510 = vld [vmem:[%s1 + $0x784] sm:$0xf]
    %v511 = vld [vmem:[%s1 + $0x788] sm:$0xf]
    %v512 = vld [vmem:[%s1 + $0x78c] sm:$0xf]
    %v513 = vld [vmem:[%s1 + $0x790] sm:$0xf]
    %v514 = vld [vmem:[%s1 + $0x794] sm:$0xf]
    %v515 = vld [vmem:[%s1 + $0x798] sm:$0xf]
    %v516 = vld [vmem:[%s1 + $0x79c] sm:$0xf]
    %v517 = vld [vmem:[%s1 + $0x7a0] sm:$0xf]
    %v518 = vld [vmem:[%s1 + $0x7a4] sm:$0xf]
    %v519 = vld [vmem:[%s1 + $0x7a8] sm:$0xf]
    %v520 = vld [vmem:[%s1 + $0x7ac] sm:$0xf]
    %v521 = vld [vmem:[%s1 + $0x7b0] sm:$0xf]
    %v522 = vld [vmem:[%s1 + $0x7b4] sm:$0xf]
    %v523 = vld [vmem:[%s1 + $0x7b8] sm:$0xf]
    %v524 = vld [vmem:[%s1 + $0x7bc] sm:$0xf]
    %v525 = vld [vmem:[%s1 + $0x7c0] sm:$0xf]
    %v526 = vld [vmem:[%s1 + $0x7c4] sm:$0xf]
    %v527 = vld [vmem:[%s1 + $0x7c8] sm:$0xf]
    %v528 = vld [vmem:[%s1 + $0x7cc] sm:$0xf]
    %v529 = vld [vmem:[%s1 + $0x7d0] sm:$0xf]
    %v530 = vld [vmem:[%s1 + $0x7d4] sm:$0xf]
    %v531 = vld [vmem:[%s1 + $0x7d8] sm:$0xf]
    %v532 = vld [vmem:[%s1 + $0x7dc] sm:$0xf]
    %v533 = vld [vmem:[%s1 + $0x7e0] sm:$0xf]
    %v534 = vld [vmem:[%s1 + $0x7e4] sm:$0xf]
    %v535 = vld [vmem:[%s1 + $0x7e8] sm:$0xf]
    %v536 = vld [vmem:[%s1 + $0x7ec] sm:$0xf]
    %v537 = vld [vmem:[%s1 + $0x7f0] sm:$0xf]
    %v538 = vld [vmem:[%s1 + $0x7f4] sm:$0xf]
    %v539 = vld [vmem:[%s1 + $0x7f8] sm:$0xf]
    %v540 = vld [vmem:[%s1 + $0x7fc] sm:$0xf]
    %v541 = vld [vmem:[%s1 + $0x800] sm:$0xf]
    %v542 = vld [vmem:[%s1 + $0x804] sm:$0xf]
    %v543 = vld [vmem:[%s1 + $0x808] sm:$0xf]
    %v544 = vld [vmem:[%s1 + $0x80c] sm:$0xf]
    %v545 = vld [vmem:[%s1 + $0x810] sm:$0xf]
    %v546 = vld [vmem:[%s1 + $0x814] sm:$0xf]
    %v547 = vld [vmem:[%s1 + $0x818] sm:$0xf]
    %v548 = vld [vmem:[%s1 + $0x81c] sm:$0xf]
    %v549 = vld [vmem:[%s1 + $0x820] sm:$0xf]
    %v550 = vld [vmem:[%s1 + $0x824] sm:$0xf]
    %v551 = vld [vmem:[%s1 + $0x828] sm:$0xf]
    %v552 = vld [vmem:[%s1 + $0x82c] sm:$0xf]
    %v553 = vld [vmem:[%s1 + $0x830] sm:$0xf]
    %v554 = vld [vmem:[%s1 + $0x834] sm:$0xf]
    %v555 = vld [vmem:[%s1 + $0x838] sm:$0xf]
    %v556 = vld [vmem:[%s1 + $0x83c] sm:$0xf]
    %v557 = vld [vmem:[%s1 + $0x840] sm:$0xf]
    %v558 = vld [vmem:[%s1 + $0x844] sm:$0xf]
    %v559 = vld [vmem:[%s1 + $0x848] sm:$0xf]
    %v560 = vld [vmem:[%s1 + $0x84c] sm:$0xf]
    %v561 = vld [vmem:[%s1 + $0x850] sm:$0xf]
    %v562 = vld [vmem:[%s1 + $0x854] sm:$0xf]
    %v563 = vld [vmem:[%s1 + $0x858] sm:$0xf]
    %v564 = vld [vmem:[%s1 + $0x85c] sm:$0xf]
    %v565 = vld [vmem:[%s1 + $0x860] sm:$0xf]
    %v566 = vld [vmem:[%s1 + $0x864] sm:$0xf]
    %v567 = vld [vmem:[%s1 + $0x868] sm:$0xf]
    %v568 = vld [vmem:[%s1 + $0x86c] sm:$0xf]
    %v569 = vld [vmem:[%s1 + $0x870] sm:$0xf]
    %v570 = vld [vmem:[%s1 + $0x874] sm:$0xf]
    %v571 = vld [vmem:[%s1 + $0x878] sm:$0xf]
    %v572 = vld [vmem:[%s1 + $0x87c] sm:$0xf]
    %v573 = vld [vmem:[%s1 + $0x880] sm:$0xf]
    %v574 = vld [vmem:[%s1 + $0x884] sm:$0xf]
    %v575 = vld [vmem:[%s1 + $0x888] sm:$0xf]
    %v576 = vld [vmem:[%s1 + $0x88c] sm:$0xf]
    %v577 = vld [vmem:[%s1 + $0x890] sm:$0xf]
    %v578 = vld [vmem:[%s1 + $0x894] sm:$0xf]
    %v579 = vld [vmem:[%s1 + $0x898] sm:$0xf]
    %v580 = vld [vmem:[%s1 + $0x89c] sm:$0xf]
    %v581 = vld [vmem:[%s1 + $0x8a0] sm:$0xf]
    %v582 = vld [vmem:[%s1 + $0x8a4] sm:$0xf]
    %v583 = vld [vmem:[%s1 + $0x8a8] sm:$0xf]
    %v584 = vld [vmem:[%s1 + $0x8ac] sm:$0xf]
    %v585 = vld [vmem:[%s1 + $0x8b0] sm:$0xf]
    %v586 = vld [vmem:[%s1 + $0x8b4] sm:$0xf]
    %v587 = vld [vmem:[%s1 + $0x8b8] sm:$0xf]
    %v588 = vld [vmem:[%s1 + $0x8bc] sm:$0xf]
    %v589 = vld [vmem:[%s1 + $0x8c0] sm:$0xf]
    %v590 = vld [vmem:[%s1 + $0x8c4] sm:$0xf]
    %v591 = vld [vmem:[%s1 + $0x8c8] sm:$0xf]
    %v592 = vld [vmem:[%s1 + $0x8cc] sm:$0xf]
    %v593 = vld [vmem:[%s1 + $0x8d0] sm:$0xf]
    %v594 = vld [vmem:[%s1 + $0x8d4] sm:$0xf]
    %v595 = vld [vmem:[%s1 + $0x8d8] sm:$0xf]
    %v596 = vld [vmem:[%s1 + $0x8dc] sm:$0xf]
    %v597 = vld [vmem:[%s1 + $0x8e0] sm:$0xf]
    %v598 = vld [vmem:[%s1 + $0x8e4] sm:$0xf]
    %v599 = vld [vmem:[%s1 + $0x8e8] sm:$0xf]
    %v600 = vld [vmem:[%s1 + $0x8ec] sm:$0xf]
    %v601 = vld [vmem:[%s1 + $0x8f0] sm:$0xf]
    %v602 = vld [vmem:[%s1 + $0x8f4] sm:$0xf]
    %v603 = vld [vmem:[%s1 + $0x8f8] sm:$0xf]
    %v604 = vld [vmem:[%s1 + $0x8fc] sm:$0xf]
    %v605 = vld [vmem:[%s1 + $0x900] sm:$0xf]
    %v606 = vld [vmem:[%s1 + $0x904] sm:$0xf]
    %v607 = vld [vmem:[%s1 + $0x908] sm:$0xf]
    %v608 = vld [vmem:[%s1 + $0x90c] sm:$0xf]
    %v609 = vld [vmem:[%s1 + $0x910] sm:$0xf]
    %v610 = vld [vmem:[%s1 + $0x914] sm:$0xf]
    %v611 = vld [vmem:[%s1 + $0x918] sm:$0xf]
    %v612 = vld [vmem:[%s1 + $0x91c] sm:$0xf]
    %v613 = vld [vmem:[%s1 + $0x920] sm:$0xf]
    %v614 = vld [vmem:[%s1 + $0x924] sm:$0xf]
    %v615 = vld [vmem:[%s1 + $0x928] sm:$0xf]
    %v616 = vld [vmem:[%s1 + $0x92c] sm:$0xf]
    %v617 = vld [vmem:[%s1 + $0x930] sm:$0xf]
    %v618 = vld [vmem:[%s1 + $0x934] sm:$0xf]
    %v619 = vld [vmem:[%s1 + $0x938] sm:$0xf]
    %v620 = vld [vmem:[%s1 + $0x93c] sm:$0xf]
    %v621 = vld [vmem:[%s1 + $0x940] sm:$0xf]
    %v622 = vld [vmem:[%s1 + $0x944] sm:$0xf]
    %v623 = vld [vmem:[%s1 + $0x948] sm:$0xf]
    %v624 = vld [vmem:[%s1 + $0x94c] sm:$0xf]
    %v625 = vld [vmem:[%s1 + $0x950] sm:$0xf]
    %v626 = vld [vmem:[%s1 + $0x954] sm:$0xf]
    %v627 = vld [vmem:[%s1 + $0x958] sm:$0xf]
    %v628 = vld [vmem:[%s1 + $0x95c] sm:$0xf]
    %v629 = vld [vmem:[%s1 + $0x960] sm:$0xf]
    %v630 = vld [vmem:[%s1 + $0x964] sm:$0xf]
    %v631 = vld [vmem:[%s1 + $0x968] sm:$0xf]
    %v632 = vld [vmem:[%s1 + $0x96c] sm:$0xf]
    %v633 = vld [vmem:[%s1 + $0x970] sm:$0xf]
    %v634 = vld [vmem:[%s1 + $0x974] sm:$0xf]
    %v635 = vld [vmem:[%s1 + $0x978] sm:$0xf]
    %v636 = vld [vmem:[%s1 + $0x97c] sm:$0xf]
    %v637 = vld [vmem:[%s1 + $0x980] sm:$0xf]
    %v638 = vld [vmem:[%s1 + $0x984] sm:$0xf]
    %v639 = vld [vmem:[%s1 + $0x988] sm:$0xf]
    %v640 = vld [vmem:[%s1 + $0x98c] sm:$0xf]
    %v641 = vld [vmem:[%s1 + $0x990] sm:$0xf]
    %v642 = vld [vmem:[%s1 + $0x994] sm:$0xf]
    %v643 = vld [vmem:[%s1 + $0x998] sm:$0xf]
    %v644 = vld [vmem:[%s1 + $0x99c] sm:$0xf]
    %v645 = vld [vmem:[%s1 + $0x9a0] sm:$0xf]
    %v646 = vld [vmem:[%s1 + $0x9a4] sm:$0xf]
    %v647 = vld [vmem:[%s1 + $0x9a8] sm:$0xf]
    %v648 = vld [vmem:[%s1 + $0x9ac] sm:$0xf]
    %v649 = vld [vmem:[%s1 + $0x9b0] sm:$0xf]
    %v650 = vld [vmem:[%s1 + $0x9b4] sm:$0xf]
    %v651 = vld [vmem:[%s1 + $0x9b8] sm:$0xf]
    %v652 = vld [vmem:[%s1 + $0x9bc] sm:$0xf]
    %v653 = vld [vmem:[%s1 + $0x9c0] sm:$0xf]
    %v654 = vld [vmem:[%s1 + $0x9c4] sm:$0xf]
    %v655 = vld [vmem:[%s1 + $0x9c8] sm:$0xf]
    %v656 = vld [vmem:[%s1 + $0x9cc] sm:$0xf]
    %v657 = vld [vmem:[%s1 + $0x9d0] sm:$0xf]
    %v658 = vld [vmem:[%s1 + $0x9d4] sm:$0xf]
    %v659 = vld [vmem:[%s1 + $0x9d8] sm:$0xf]
    %v660 = vld [vmem:[%s1 + $0x9dc] sm:$0xf]
    %v661 = vld [vmem:[%s1 + $0x9e0] sm:$0xf]
    %v662 = vld [vmem:[%s1 + $0x9e4] sm:$0xf]
    %v663 = vld [vmem:[%s1 + $0x9e8] sm:$0xf]
    %v664 = vld [vmem:[%s1 + $0x9ec] sm:$0xf]
    %v665 = vld [vmem:[%s1 + $0x9f0] sm:$0xf]
    %v666 = vld [vmem:[%s1 + $0x9f4] sm:$0xf]
    %v667 = vld [vmem:[%s1 + $0x9f8] sm:$0xf]
    %v668 = vld [vmem:[%s1 + $0x9fc] sm:$0xf]
    %v669 = vld [vmem:[%s1 + $0xa00] sm:$0xf]
    %v670 = vld [vmem:[%s1 + $0xa04] sm:$0xf]
    %v671 = vld [vmem:[%s1 + $0xa08] sm:$0xf]
    %v672 = vld [vmem:[%s1 + $0xa0c] sm:$0xf]
    %v673 = vld [vmem:[%s1 + $0xa10] sm:$0xf]
    %v674 = vld [vmem:[%s1 + $0xa14] sm:$0xf]
    %v675 = vld [vmem:[%s1 + $0xa18] sm:$0xf]
    %v676 = vld [vmem:[%s1 + $0xa1c] sm:$0xf]
    %v677 = vld [vmem:[%s1 + $0xa20] sm:$0xf]
    %v678 = vld [vmem:[%s1 + $0xa24] sm:$0xf]
    %v679 = vld [vmem:[%s1 + $0xa28] sm:$0xf]
    %v680 = vld [vmem:[%s1 + $0xa2c] sm:$0xf]
    %v681 = vld [vmem:[%s1 + $0xa30] sm:$0xf]
    %v682 = vld [vmem:[%s1 + $0xa34] sm:$0xf]
    %v683 = vld [vmem:[%s1 + $0xa38] sm:$0xf]
    %v684 = vld [vmem:[%s1 + $0xa3c] sm:$0xf]
    %v685 = vld [vmem:[%s1 + $0xa40] sm:$0xf]
    %v686 = vld [vmem:[%s1 + $0xa44] sm:$0xf]
    %v687 = vld [vmem:[%s1 + $0xa48] sm:$0xf]
    %v688 = vld [vmem:[%s1 + $0xa4c] sm:$0xf]
    %v689 = vld [vmem:[%s1 + $0xa50] sm:$0xf]
    %v690 = vld [vmem:[%s1 + $0xa54] sm:$0xf]
    %v691 = vld [vmem:[%s1 + $0xa58] sm:$0xf]
    %v692 = vld [vmem:[%s1 + $0xa5c] sm:$0xf]
    %v693 = vld [vmem:[%s1 + $0xa60] sm:$0xf]
    %v694 = vld [vmem:[%s1 + $0xa64] sm:$0xf]
    %v695 = vld [vmem:[%s1 + $0xa68] sm:$0xf]
    %v696 = vld [vmem:[%s1 + $0xa6c] sm:$0xf]
    %v697 = vld [vmem:[%s1 + $0xa70] sm:$0xf]
    %v698 = vld [vmem:[%s1 + $0xa74] sm:$0xf]
    %v699 = vld [vmem:[%s1 + $0xa78] sm:$0xf]
    %v700 = vld [vmem:[%s1 + $0xa7c] sm:$0xf]
    %v701 = vld [vmem:[%s1 + $0xa80] sm:$0xf]
    %v702 = vld [vmem:[%s1 + $0xa84] sm:$0xf]
    %v703 = vld [vmem:[%s1 + $0xa88] sm:$0xf]
    %v704 = vld [vmem:[%s1 + $0xa8c] sm:$0xf]
    %v705 = vld [vmem:[%s1 + $0xa90] sm:$0xf]
    %v706 = vld [vmem:[%s1 + $0xa94] sm:$0xf]
    %v707 = vld [vmem:[%s1 + $0xa98] sm:$0xf]
    %v708 = vld [vmem:[%s1 + $0xa9c] sm:$0xf]
    %v709 = vld [vmem:[%s1 + $0xaa0] sm:$0xf]
    %v710 = vld [vmem:[%s1 + $0xaa4] sm:$0xf]
    %v711 = vld [vmem:[%s1 + $0xaa8] sm:$0xf]
    %v712 = vld [vmem:[%s1 + $0xaac] sm:$0xf]
    %v713 = vld [vmem:[%s1 + $0xab0] sm:$0xf]
    %v714 = vld [vmem:[%s1 + $0xab4] sm:$0xf]
    %v715 = vld [vmem:[%s1 + $0xab8] sm:$0xf]
    %v716 = vld [vmem:[%s1 + $0xabc] sm:$0xf]
    %v717 = vld [vmem:[%s1 + $0xac0] sm:$0xf]
    %v718 = vld [vmem:[%s1 + $0xac4] sm:$0xf]
    %v719 = vld [vmem:[%s1 + $0xac8] sm:$0xf]
    %v720 = vld [vmem:[%s1 + $0xacc] sm:$0xf]
    %v721 = vld [vmem:[%s1 + $0xad0] sm:$0xf]
    %v722 = vld [vmem:[%s1 + $0xad4] sm:$0xf]
    %v723 = vld [vmem:[%s1 + $0xad8] sm:$0xf]
    %v724 = vld [vmem:[%s1 + $0xadc] sm:$0xf]
    %v725 = vld [vmem:[%s1 + $0xae0] sm:$0xf]
    %v726 = vld [vmem:[%s1 + $0xae4] sm:$0xf]
    %v727 = vld [vmem:[%s1 + $0xae8] sm:$0xf]
    %v728 = vld [vmem:[%s1 + $0xaec] sm:$0xf]
    %v729 = vld [vmem:[%s1 + $0xaf0] sm:$0xf]
    %v730 = vld [vmem:[%s1 + $0xaf4] sm:$0xf]
    %v731 = vld [vmem:[%s1 + $0xaf8] sm:$0xf]
    %v732 = vld [vmem:[%s1 + $0xafc] sm:$0xf]
    %v733 = vld [vmem:[%s1 + $0xb00] sm:$0xf]
    %v734 = vld [vmem:[%s1 + $0xb04] sm:$0xf]
    %v735 = vld [vmem:[%s1 + $0xb08] sm:$0xf]
    %v736 = vld [vmem:[%s1 + $0xb0c] sm:$0xf]
    %v737 = vld [vmem:[%s1 + $0xb10] sm:$0xf]
    %v738 = vld [vmem:[%s1 + $0xb14] sm:$0xf]
    %v739 = vld [vmem:[%s1 + $0xb18] sm:$0xf]
    %v740 = vld [vmem:[%s1 + $0xb1c] sm:$0xf]
    %v741 = vld [vmem:[%s1 + $0xb20] sm:$0xf]
    %v742 = vld [vmem:[%s1 + $0xb24] sm:$0xf]
    %v743 = vld [vmem:[%s1 + $0xb28] sm:$0xf]
    %v744 = vld [vmem:[%s1 + $0xb2c] sm:$0xf]
    %v745 = vld [vmem:[%s1 + $0xb30] sm:$0xf]
    %v746 = vld [vmem:[%s1 + $0xb34] sm:$0xf]
    %v747 = vld [vmem:[%s1 + $0xb38] sm:$0xf]
    %v748 = vld [vmem:[%s1 + $0xb3c] sm:$0xf]
    %v749 = vld [vmem:[%s1 + $0xb40] sm:$0xf]
    %v750 = vld [vmem:[%s1 + $0xb44] sm:$0xf]
    %v751 = vld [vmem:[%s1 + $0xb48] sm:$0xf]
    %v752 = vld [vmem:[%s1 + $0xb4c] sm:$0xf]
    %v753 = vld [vmem:[%s1 + $0xb50] sm:$0xf]
    %v754 = vld [vmem:[%s1 + $0xb54] sm:$0xf]
    %v755 = vld [vmem:[%s1 + $0xb58] sm:$0xf]
    %v756 = vld [vmem:[%s1 + $0xb5c] sm:$0xf]
    %v757 = vld [vmem:[%s1 + $0xb60] sm:$0xf]
    %v758 = vld [vmem:[%s1 + $0xb64] sm:$0xf]
    %v759 = vld [vmem:[%s1 + $0xb68] sm:$0xf]
    %v760 = vld [vmem:[%s1 + $0xb6c] sm:$0xf]
    %v761 = vld [vmem:[%s1 + $0xb70] sm:$0xf]
    %v762 = vld [vmem:[%s1 + $0xb74] sm:$0xf]
    %v763 = vld [vmem:[%s1 + $0xb78] sm:$0xf]
    %v764 = vld [vmem:[%s1 + $0xb7c] sm:$0xf]
    %v765 = vld [vmem:[%s1 + $0xb80] sm:$0xf]
    %v766 = vld [vmem:[%s1 + $0xb84] sm:$0xf]
    %v767 = vld [vmem:[%s1 + $0xb88] sm:$0xf]
    %v768 = vld [vmem:[%s1 + $0xb8c] sm:$0xf]
    %v769 = vld [vmem:[%s1 + $0xb90] sm:$0xf]
    %v770 = vld [vmem:[%s1 + $0xb94] sm:$0xf]
    %v771 = vld [vmem:[%s1 + $0xb98] sm:$0xf]
    %v772 = vld [vmem:[%s1 + $0xb9c] sm:$0xf]
    %v773 = vld [vmem:[%s1 + $0xba0] sm:$0xf]
    %v774 = vld [vmem:[%s1 + $0xba4] sm:$0xf]
    %v775 = vld [vmem:[%s1 + $0xba8] sm:$0xf]
    %v776 = vld [vmem:[%s1 + $0xbac] sm:$0xf]
    %v777 = vld [vmem:[%s1 + $0xbb0] sm:$0xf]
    %v778 = vld [vmem:[%s1 + $0xbb4] sm:$0xf]
    %v779 = vld [vmem:[%s1 + $0xbb8] sm:$0xf]
    %v780 = vld [vmem:[%s1 + $0xbbc] sm:$0xf]
    %v781 = vld [vmem:[%s1 + $0xbc0] sm:$0xf]
    %v782 = vld [vmem:[%s1 + $0xbc4] sm:$0xf]
    %v783 = vld [vmem:[%s1 + $0xbc8] sm:$0xf]
    %v784 = vld [vmem:[%s1 + $0xbcc] sm:$0xf]
    %v785 = vld [vmem:[%s1 + $0xbd0] sm:$0xf]
    %v786 = vld [vmem:[%s1 + $0xbd4] sm:$0xf]
    %v787 = vld [vmem:[%s1 + $0xbd8] sm:$0xf]
    %v788 = vld [vmem:[%s1 + $0xbdc] sm:$0xf]
    %v789 = vld [vmem:[%s1 + $0xbe0] sm:$0xf]
    %v790 = vld [vmem:[%s1 + $0xbe4] sm:$0xf]
    %v791 = vld [vmem:[%s1 + $0xbe8] sm:$0xf]
    %v792 = vld [vmem:[%s1 + $0xbec] sm:$0xf]
    %v793 = vld [vmem:[%s1 + $0xbf0] sm:$0xf]
    %v794 = vld [vmem:[%s1 + $0xbf4] sm:$0xf]
    %v795 = vld [vmem:[%s1 + $0xbf8] sm:$0xf]
    %v796 = vld [vmem:[%s1 + $0xbfc] sm:$0xf]
    %v797 = vld [vmem:[%s1 + $0xc00] sm:$0xf]
    %v798 = vld [vmem:[%s1 + $0xc04] sm:$0xf]
    %v799 = vld [vmem:[%s1 + $0xc08] sm:$0xf]
    %v800 = vld [vmem:[%s1 + $0xc0c] sm:$0xf]
    %v801 = vld [vmem:[%s1 + $0xc10] sm:$0xf]
    %v802 = vld [vmem:[%s1 + $0xc14] sm:$0xf]
    %v803 = vld [vmem:[%s1 + $0xc18] sm:$0xf]
    %v804 = vld [vmem:[%s1 + $0xc1c] sm:$0xf]
    %v805 = vld [vmem:[%s1 + $0xc20] sm:$0xf]
    %v806 = vld [vmem:[%s1 + $0xc24] sm:$0xf]
    %v807 = vld [vmem:[%s1 + $0xc28] sm:$0xf]
    %v808 = vld [vmem:[%s1 + $0xc2c] sm:$0xf]
    %v809 = vld [vmem:[%s1 + $0xc30] sm:$0xf]
    %v810 = vld [vmem:[%s1 + $0xc34] sm:$0xf]
    %v811 = vld [vmem:[%s1 + $0xc38] sm:$0xf]
    %v812 = vld [vmem:[%s1 + $0xc3c] sm:$0xf]
    %v813 = vld [vmem:[%s1 + $0xc40] sm:$0xf]
    %v814 = vld [vmem:[%s1 + $0xc44] sm:$0xf]
    %v815 = vld [vmem:[%s1 + $0xc48] sm:$0xf]
    %v816 = vld [vmem:[%s1 + $0xc4c] sm:$0xf]
    %v817 = vld [vmem:[%s1 + $0xc50] sm:$0xf]
    %v818 = vld [vmem:[%s1 + $0xc54] sm:$0xf]
    %v819 = vld [vmem:[%s1 + $0xc58] sm:$0xf]
    %v820 = vld [vmem:[%s1 + $0xc5c] sm:$0xf]
    %v821 = vld [vmem:[%s1 + $0xc60] sm:$0xf]
    %v822 = vld [vmem:[%s1 + $0xc64] sm:$0xf]
    %v823 = vld [vmem:[%s1 + $0xc68] sm:$0xf]
    %v824 = vld [vmem:[%s1 + $0xc6c] sm:$0xf]
    %v825 = vld [vmem:[%s1 + $0xc70] sm:$0xf]
    %v826 = vld [vmem:[%s1 + $0xc74] sm:$0xf]
    %v827 = vld [vmem:[%s1 + $0xc78] sm:$0xf]
    %v828 = vld [vmem:[%s1 + $0xc7c] sm:$0xf]
    %v829 = vld [vmem:[%s1 + $0xc80] sm:$0xf]
    %v830 = vld [vmem:[%s1 + $0xc84] sm:$0xf]
    %v831 = vld [vmem:[%s1 + $0xc88] sm:$0xf]
    %v832 = vld [vmem:[%s1 + $0xc8c] sm:$0xf]
    %v833 = vld [vmem:[%s1 + $0xc90] sm:$0xf]
    %v834 = vld [vmem:[%s1 + $0xc94] sm:$0xf]
    %v835 = vld [vmem:[%s1 + $0xc98] sm:$0xf]
    %v836 = vld [vmem:[%s1 + $0xc9c] sm:$0xf]
    %v837 = vld [vmem:[%s1 + $0xca0] sm:$0xf]
    %v838 = vld [vmem:[%s1 + $0xca4] sm:$0xf]
    %v839 = vld [vmem:[%s1 + $0xca8] sm:$0xf]
    %v840 = vld [vmem:[%s1 + $0xcac] sm:$0xf]
    %v841 = vld [vmem:[%s1 + $0xcb0] sm:$0xf]
    %v842 = vld [vmem:[%s1 + $0xcb4] sm:$0xf]
    %v843 = vld [vmem:[%s1 + $0xcb8] sm:$0xf]
    %v844 = vld [vmem:[%s1 + $0xcbc] sm:$0xf]
    %v845 = vld [vmem:[%s1 + $0xcc0] sm:$0xf]
    %v846 = vld [vmem:[%s1 + $0xcc4] sm:$0xf]
    %v847 = vld [vmem:[%s1 + $0xcc8] sm:$0xf]
    %v848 = vld [vmem:[%s1 + $0xccc] sm:$0xf]
    %v849 = vld [vmem:[%s1 + $0xcd0] sm:$0xf]
    %v850 = vld [vmem:[%s1 + $0xcd4] sm:$0xf]
    %v851 = vld [vmem:[%s1 + $0xcd8] sm:$0xf]
    %v852 = vld [vmem:[%s1 + $0xcdc] sm:$0xf]
    %v853 = vld [vmem:[%s1 + $0xce0] sm:$0xf]
    %v854 = vld [vmem:[%s1 + $0xce4] sm:$0xf]
    %v855 = vld [vmem:[%s1 + $0xce8] sm:$0xf]
    %v856 = vld [vmem:[%s1 + $0xcec] sm:$0xf]
    %v857 = vld [vmem:[%s1 + $0xcf0] sm:$0xf]
    %v858 = vld [vmem:[%s1 + $0xcf4] sm:$0xf]
    %v859 = vld [vmem:[%s1 + $0xcf8] sm:$0xf]
    %v860 = vld [vmem:[%s1 + $0xcfc] sm:$0xf]
    %v861 = vld [vmem:[%s1 + $0xd00] sm:$0xf]
    %v862 = vld [vmem:[%s1 + $0xd04] sm:$0xf]
    %v863 = vld [vmem:[%s1 + $0xd08] sm:$0xf]
    %v864 = vld [vmem:[%s1 + $0xd0c] sm:$0xf]
    %v865 = vld [vmem:[%s1 + $0xd10] sm:$0xf]
    %v866 = vld [vmem:[%s1 + $0xd14] sm:$0xf]
    %v867 = vld [vmem:[%s1 + $0xd18] sm:$0xf]
    %v868 = vld [vmem:[%s1 + $0xd1c] sm:$0xf]
    %v869 = vld [vmem:[%s1 + $0xd20] sm:$0xf]
    %v870 = vld [vmem:[%s1 + $0xd24] sm:$0xf]
    %v871 = vld [vmem:[%s1 + $0xd28] sm:$0xf]
    %v872 = vld [vmem:[%s1 + $0xd2c] sm:$0xf]
    %v873 = vld [vmem:[%s1 + $0xd30] sm:$0xf]
    %v874 = vld [vmem:[%s1 + $0xd34] sm:$0xf]
    %v875 = vld [vmem:[%s1 + $0xd38] sm:$0xf]
    %v876 = vld [vmem:[%s1 + $0xd3c] sm:$0xf]
    %v877 = vld [vmem:[%s1 + $0xd40] sm:$0xf]
    %v878 = vld [vmem:[%s1 + $0xd44] sm:$0xf]
    %v879 = vld [vmem:[%s1 + $0xd48] sm:$0xf]
    %v880 = vld [vmem:[%s1 + $0xd4c] sm:$0xf]
    %v881 = vld [vmem:[%s1 + $0xd50] sm:$0xf]
    %v882 = vld [vmem:[%s1 + $0xd54] sm:$0xf]
    %v883 = vld [vmem:[%s1 + $0xd58] sm:$0xf]
    %v884 = vld [vmem:[%s1 + $0xd5c] sm:$0xf]
    %v885 = vld [vmem:[%s1 + $0xd60] sm:$0xf]
    %v886 = vld [vmem:[%s1 + $0xd64] sm:$0xf]
    %v887 = vld [vmem:[%s1 + $0xd68] sm:$0xf]
    %v888 = vld [vmem:[%s1 + $0xd6c] sm:$0xf]
    %v889 = vld [vmem:[%s1 + $0xd70] sm:$0xf]
    %v890 = vld [vmem:[%s1 + $0xd74] sm:$0xf]
    %v891 = vld [vmem:[%s1 + $0xd78] sm:$0xf]
    %v892 = vld [vmem:[%s1 + $0xd7c] sm:$0xf]
    %v893 = vld [vmem:[%s1 + $0xd80] sm:$0xf]
    %v894 = vld [vmem:[%s1 + $0xd84] sm:$0xf]
    %v895 = vld [vmem:[%s1 + $0xd88] sm:$0xf]
    %v896 = vld [vmem:[%s1 + $0xd8c] sm:$0xf]
    %v897 = vld [vmem:[%s1 + $0xd90] sm:$0xf]
    %v898 = vld [vmem:[%s1 + $0xd94] sm:$0xf]
    %v899 = vld [vmem:[%s1 + $0xd98] sm:$0xf]
    %v900 = vld [vmem:[%s1 + $0xd9c] sm:$0xf]
    %v901 = vld [vmem:[%s1 + $0xda0] sm:$0xf]
    %v902 = vld [vmem:[%s1 + $0xda4] sm:$0xf]
    %v903 = vld [vmem:[%s1 + $0xda8] sm:$0xf]
    %v904 = vld [vmem:[%s1 + $0xdac] sm:$0xf]
    %v905 = vld [vmem:[%s1 + $0xdb0] sm:$0xf]
    %v906 = vld [vmem:[%s1 + $0xdb4] sm:$0xf]
    %v907 = vld [vmem:[%s1 + $0xdb8] sm:$0xf]
    %v908 = vld [vmem:[%s1 + $0xdbc] sm:$0xf]
    %v909 = vld [vmem:[%s1 + $0xdc0] sm:$0xf]
    %v910 = vld [vmem:[%s1 + $0xdc4] sm:$0xf]
    %v911 = vld [vmem:[%s1 + $0xdc8] sm:$0xf]
    %v912 = vld [vmem:[%s1 + $0xdcc] sm:$0xf]
    %v913 = vld [vmem:[%s1 + $0xdd0] sm:$0xf]
    %v914 = vld [vmem:[%s1 + $0xdd4] sm:$0xf]
    %v915 = vld [vmem:[%s1 + $0xdd8] sm:$0xf]
    %v916 = vld [vmem:[%s1 + $0xddc] sm:$0xf]
    %v917 = vld [vmem:[%s1 + $0xde0] sm:$0xf]
    %v918 = vld [vmem:[%s1 + $0xde4] sm:$0xf]
    %v919 = vld [vmem:[%s1 + $0xde8] sm:$0xf]
    %v920 = vld [vmem:[%s1 + $0xdec] sm:$0xf]
    %v921 = vld [vmem:[%s1 + $0xdf0] sm:$0xf]
    %v922 = vld [vmem:[%s1 + $0xdf4] sm:$0xf]
    %v923 = vld [vmem:[%s1 + $0xdf8] sm:$0xf]
    %v924 = vld [vmem:[%s1 + $0xdfc] sm:$0xf]
    %v925 = vld [vmem:[%s1 + $0xe00] sm:$0xf]
    %v926 = vld [vmem:[%s1 + $0xe04] sm:$0xf]
    %v927 = vld [vmem:[%s1 + $0xe08] sm:$0xf]
    %v928 = vld [vmem:[%s1 + $0xe0c] sm:$0xf]
    %v929 = vld [vmem:[%s1 + $0xe10] sm:$0xf]
    %v930 = vld [vmem:[%s1 + $0xe14] sm:$0xf]
    %v931 = vld [vmem:[%s1 + $0xe18] sm:$0xf]
    %v932 = vld [vmem:[%s1 + $0xe1c] sm:$0xf]
    %v933 = vld [vmem:[%s1 + $0xe20] sm:$0xf]
    %v934 = vld [vmem:[%s1 + $0xe24] sm:$0xf]
    %v935 = vld [vmem:[%s1 + $0xe28] sm:$0xf]
    %v936 = vld [vmem:[%s1 + $0xe2c] sm:$0xf]
    %v937 = vld [vmem:[%s1 + $0xe30] sm:$0xf]
    %v938 = vld [vmem:[%s1 + $0xe34] sm:$0xf]
    %v939 = vld [vmem:[%s1 + $0xe38] sm:$0xf]
    %v940 = vld [vmem:[%s1 + $0xe3c] sm:$0xf]
    %v941 = vld [vmem:[%s1 + $0xe40] sm:$0xf]
    %v942 = vld [vmem:[%s1 + $0xe44] sm:$0xf]
    %v943 = vld [vmem:[%s1 + $0xe48] sm:$0xf]
    %v944 = vld [vmem:[%s1 + $0xe4c] sm:$0xf]
    %v945 = vld [vmem:[%s1 + $0xe50] sm:$0xf]
    %v946 = vld [vmem:[%s1 + $0xe54] sm:$0xf]
    %v947 = vld [vmem:[%s1 + $0xe58] sm:$0xf]
    %v948 = vld [vmem:[%s1 + $0xe5c] sm:$0xf]
    %v949 = vld [vmem:[%s1 + $0xe60] sm:$0xf]
    %v950 = vld [vmem:[%s1 + $0xe64] sm:$0xf]
    %v951 = vld [vmem:[%s1 + $0xe68] sm:$0xf]
    %v952 = vld [vmem:[%s1 + $0xe6c] sm:$0xf]
    %v953 = vld [vmem:[%s1 + $0xe70] sm:$0xf]
    %v954 = vld [vmem:[%s1 + $0xe74] sm:$0xf]
    %v955 = vld [vmem:[%s1 + $0xe78] sm:$0xf]
    %v956 = vld [vmem:[%s1 + $0xe7c] sm:$0xf]
    %v957 = vld [vmem:[%s1 + $0xe80] sm:$0xf]
    %v958 = vld [vmem:[%s1 + $0xe84] sm:$0xf]
    %v959 = vld [vmem:[%s1 + $0xe88] sm:$0xf]
    %v960 = vld [vmem:[%s1 + $0xe8c] sm:$0xf]
    %v961 = vld [vmem:[%s1 + $0xe90] sm:$0xf]
    %v962 = vld [vmem:[%s1 + $0xe94] sm:$0xf]
    %v963 = vld [vmem:[%s1 + $0xe98] sm:$0xf]
    %v964 = vld [vmem:[%s1 + $0xe9c] sm:$0xf]
    %v965 = vld [vmem:[%s1 + $0xea0] sm:$0xf]
    %v966 = vld [vmem:[%s1 + $0xea4] sm:$0xf]
    %v967 = vld [vmem:[%s1 + $0xea8] sm:$0xf]
    %v968 = vld [vmem:[%s1 + $0xeac] sm:$0xf]
    %v969 = vld [vmem:[%s1 + $0xeb0] sm:$0xf]
    %v970 = vld [vmem:[%s1 + $0xeb4] sm:$0xf]
    %v971 = vld [vmem:[%s1 + $0xeb8] sm:$0xf]
    %v972 = vld [vmem:[%s1 + $0xebc] sm:$0xf]
    %v973 = vld [vmem:[%s1 + $0xec0] sm:$0xf]
    %v974 = vld [vmem:[%s1 + $0xec4] sm:$0xf]
    %v975 = vld [vmem:[%s1 + $0xec8] sm:$0xf]
    %v976 = vld [vmem:[%s1 + $0xecc] sm:$0xf]
    %v977 = vld [vmem:[%s1 + $0xed0] sm:$0xf]
    %v978 = vld [vmem:[%s1 + $0xed4] sm:$0xf]
    %v979 = vld [vmem:[%s1 + $0xed8] sm:$0xf]
    %v980 = vld [vmem:[%s1 + $0xedc] sm:$0xf]
    %v981 = vld [vmem:[%s1 + $0xee0] sm:$0xf]
    %v982 = vld [vmem:[%s1 + $0xee4] sm:$0xf]
    %v983 = vld [vmem:[%s1 + $0xee8] sm:$0xf]
    %v984 = vld [vmem:[%s1 + $0xeec] sm:$0xf]
    %v985 = vld [vmem:[%s1 + $0xef0] sm:$0xf]
    %v986 = vld [vmem:[%s1 + $0xef4] sm:$0xf]
    %v987 = vld [vmem:[%s1 + $0xef8] sm:$0xf]
    %v988 = vld [vmem:[%s1 + $0xefc] sm:$0xf]
    %v989 = vld [vmem:[%s1 + $0xf00] sm:$0xf]
    %v990 = vld [vmem:[%s1 + $0xf04] sm:$0xf]
    %v991 = vld [vmem:[%s1 + $0xf08] sm:$0xf]
    %v992 = vld [vmem:[%s1 + $0xf0c] sm:$0xf]
    %v993 = vld [vmem:[%s1 + $0xf10] sm:$0xf]
    %v994 = vld [vmem:[%s1 + $0xf14] sm:$0xf]
    %v995 = vld [vmem:[%s1 + $0xf18] sm:$0xf]
    %v996 = vld [vmem:[%s1 + $0xf1c] sm:$0xf]
    %v997 = vld [vmem:[%s1 + $0xf20] sm:$0xf]
    %v998 = vld [vmem:[%s1 + $0xf24] sm:$0xf]
    %v999 = vld [vmem:[%s1 + $0xf28] sm:$0xf]
    %v1000 = vld [vmem:[%s1 + $0xf2c] sm:$0xf]
    %v1001 = vld [vmem:[%s1 + $0xf30] sm:$0xf]
    %v1002 = vld [vmem:[%s1 + $0xf34] sm:$0xf]
    %v1003 = vld [vmem:[%s1 + $0xf38] sm:$0xf]
    %v1004 = vld [vmem:[%s1 + $0xf3c] sm:$0xf]
    %v1005 = vld [vmem:[%s1 + $0xf40] sm:$0xf]
    %v1006 = vld [vmem:[%s1 + $0xf44] sm:$0xf]
    %v1007 = vld [vmem:[%s1 + $0xf48] sm:$0xf]
    %v1008 = vld [vmem:[%s1 + $0xf4c] sm:$0xf]
    %v1009 = vld [vmem:[%s1 + $0xf50] sm:$0xf]
    %v1010 = vld [vmem:[%s1 + $0xf54] sm:$0xf]
    %v1011 = vld [vmem:[%s1 + $0xf58] sm:$0xf]
    %v1012 = vld [vmem:[%s1 + $0xf5c] sm:$0xf]
    %v1013 = vld [vmem:[%s1 + $0xf60] sm:$0xf]
    %v1014 = vld [vmem:[%s1 + $0xf64] sm:$0xf]
    %v1015 = vld [vmem:[%s1 + $0xf68] sm:$0xf]
    %v1016 = vld [vmem:[%s1 + $0xf6c] sm:$0xf]
    %v1017 = vld [vmem:[%s1 + $0xf70] sm:$0xf]
    %v1018 = vld [vmem:[%s1 + $0xf74] sm:$0xf]
    %v1019 = vld [vmem:[%s1 + $0xf78] sm:$0xf]
    %v1020 = vld [vmem:[%s1 + $0xf7c] sm:$0xf]
    %v1021 = vld [vmem:[%s1 + $0xf80] sm:$0xf]
    %v1022 = vld [vmem:[%s1 + $0xf84] sm:$0xf]
    %v1023 = vld [vmem:[%s1 + $0xf88] sm:$0xf]
    %v1024 = vld [vmem:[%s1 + $0xf8c] sm:$0xf]
    %v1025 = vld [vmem:[%s1 + $0xf90] sm:$0xf]
    %v1026 = vld [vmem:[%s1 + $0xf94] sm:$0xf]
    %v1027 = vld [vmem:[%s1 + $0xf98] sm:$0xf]
    %v1028 = vld [vmem:[%s1 + $0xf9c] sm:$0xf]
    %v1029 = vld [vmem:[%s1 + $0xfa0] sm:$0xf]
    %v1030 = vld [vmem:[%s1 + $0xfa4] sm:$0xf]
    %v1031 = vld [vmem:[%s1 + $0xfa8] sm:$0xf]
    %v1032 = vld [vmem:[%s1 + $0xfac] sm:$0xf]
    %v1033 = vld [vmem:[%s1 + $0xfb0] sm:$0xf]
    %v1034 = vld [vmem:[%s1 + $0xfb4] sm:$0xf]
    %v1035 = vld [vmem:[%s1 + $0xfb8] sm:$0xf]
    %v1036 = vld [vmem:[%s1 + $0xfbc] sm:$0xf]
    %v1037 = vld [vmem:[%s1 + $0xfc0] sm:$0xf]
    %v1038 = vld [vmem:[%s1 + $0xfc4] sm:$0xf]
    %v1039 = vld [vmem:[%s1 + $0xfc8] sm:$0xf]
    %v1040 = vld [vmem:[%s1 + $0xfcc] sm:$0xf]
    %v1041 = vld [vmem:[%s1 + $0xfd0] sm:$0xf]
    %v1042 = vld [vmem:[%s1 + $0xfd4] sm:$0xf]
    %v1043 = vld [vmem:[%s1 + $0xfd8] sm:$0xf]
    %v1044 = vld [vmem:[%s1 + $0xfdc] sm:$0xf]
    %v1045 = vld [vmem:[%s1 + $0xfe0] sm:$0xf]
    %v1046 = vld [vmem:[%s1 + $0xfe4] sm:$0xf]
    %v1047 = vld [vmem:[%s1 + $0xfe8] sm:$0xf]
    %v1048 = vld [vmem:[%s1 + $0xfec] sm:$0xf]
    %v1049 = vld [vmem:[%s1 + $0xff0] sm:$0xf]
    %v1050 = vld [vmem:[%s1 + $0xff4] sm:$0xf]
    %v1051 = vld [vmem:[%s1 + $0xff8] sm:$0xf]
    %v1052 = vld [vmem:[%s1 + $0xffc] sm:$0xf]
    %v1053 = vld [vmem:[%s2] sm:$0x1]
    %v1055 = vperm.slane %v1053, 0
    %1058 = vst [vmem:[#allocation1] ss:$9 sm:$0xff] %v21
    %v1059 = vld [vmem:[#allocation1] sm:$0xff]
    %v1060 = vld [vmem:[#allocation1 + $0x9] sm:$0xff]
    %v1061 = vld [vmem:[#allocation1 + $0x12] sm:$0xff]
    %v1062 = vld [vmem:[#allocation1 + $0x1b] sm:$0xff]
    %v1063 = vld [vmem:[#allocation1 + $0x24] sm:$0xff]
    %v1064 = vld [vmem:[#allocation1 + $0x2d] sm:$0xff]
    %v1065 = vld [vmem:[#allocation1 + $0x36] sm:$0xff]
    %v1066 = vld [vmem:[#allocation1 + $0x3f] sm:$0xff]
    %1068 = vst [vmem:[#allocation1] ss:$9 sm:$0xff] %v22
    %v1069 = vld [vmem:[#allocation1] sm:$0xff]
    %v1070 = vld [vmem:[#allocation1 + $0x9] sm:$0xff]
    %v1071 = vld [vmem:[#allocation1 + $0x12] sm:$0xff]
    %v1072 = vld [vmem:[#allocation1 + $0x1b] sm:$0xff]
    %v1073 = vld [vmem:[#allocation1 + $0x24] sm:$0xff]
    %v1074 = vld [vmem:[#allocation1 + $0x2d] sm:$0xff]
    %v1075 = vld [vmem:[#allocation1 + $0x36] sm:$0xff]
    %v1076 = vld [vmem:[#allocation1 + $0x3f] sm:$0xff]
    %1078 = vst [vmem:[#allocation1] ss:$9 sm:$0xff] %v23
    %v1079 = vld [vmem:[#allocation1] sm:$0xff]
    %v1080 = vld [vmem:[#allocation1 + $0x9] sm:$0xff]
    %v1081 = vld [vmem:[#allocation1 + $0x12] sm:$0xff]
    %v1082 = vld [vmem:[#allocation1 + $0x1b] sm:$0xff]
    %v1083 = vld [vmem:[#allocation1 + $0x24] sm:$0xff]
    %v1084 = vld [vmem:[#allocation1 + $0x2d] sm:$0xff]
    %v1085 = vld [vmem:[#allocation1 + $0x36] sm:$0xff]
    %v1086 = vld [vmem:[#allocation1 + $0x3f] sm:$0xff]
    %1088 = vst [vmem:[#allocation1] ss:$9 sm:$0xff] %v24
    %v1089 = vld [vmem:[#allocation1] sm:$0xff]
    %v1090 = vld [vmem:[#allocation1 + $0x9] sm:$0xff]
    %v1091 = vld [vmem:[#allocation1 + $0x12] sm:$0xff]
    %v1092 = vld [vmem:[#allocation1 + $0x1b] sm:$0xff]
    %v1093 = vld [vmem:[#allocation1 + $0x24] sm:$0xff]
    %v1094 = vld [vmem:[#allocation1 + $0x2d] sm:$0xff]
    %v1095 = vld [vmem:[#allocation1 + $0x36] sm:$0xff]
    %v1096 = vld [vmem:[#allocation1 + $0x3f] sm:$0xff]
    %1098 = vst [vmem:[#allocation1] ss:$9 sm:$0xff] %v25
    %v1099 = vld [vmem:[#allocation1] sm:$0xff]
    %v1100 = vld [vmem:[#allocation1 + $0x9] sm:$0xff]
    %v1101 = vld [vmem:[#allocation1 + $0x12] sm:$0xff]
    %v1102 = vld [vmem:[#allocation1 + $0x1b] sm:$0xff]
    %v1103 = vld [vmem:[#allocation1 + $0x24] sm:$0xff]
    %v1104 = vld [vmem:[#allocation1 + $0x2d] sm:$0xff]
    %v1105 = vld [vmem:[#allocation1 + $0x36] sm:$0xff]
    %v1106 = vld [vmem:[#allocation1 + $0x3f] sm:$0xff]
    %1108 = vst [vmem:[#allocation1] ss:$9 sm:$0xff] %v26
    %v1109 = vld [vmem:[#allocation1] sm:$0xff]
    %v1110 = vld [vmem:[#allocation1 + $0x9] sm:$0xff]
    %v1111 = vld [vmem:[#allocation1 + $0x12] sm:$0xff]
    %v1112 = vld [vmem:[#allocation1 + $0x1b] sm:$0xff]
    %v1113 = vld [vmem:[#allocation1 + $0x24] sm:$0xff]
    %v1114 = vld [vmem:[#allocation1 + $0x2d] sm:$0xff]
    %v1115 = vld [vmem:[#allocation1 + $0x36] sm:$0xff]
    %v1116 = vld [vmem:[#allocation1 + $0x3f] sm:$0xff]
    %1118 = vst [vmem:[#allocation1] ss:$9 sm:$0xff] %v27
    %v1119 = vld [vmem:[#allocation1] sm:$0xff]
    %v1120 = vld [vmem:[#allocation1 + $0x9] sm:$0xff]
    %v1121 = vld [vmem:[#allocation1 + $0x12] sm:$0xff]
    %v1122 = vld [vmem:[#allocation1 + $0x1b] sm:$0xff]
    %v1123 = vld [vmem:[#allocation1 + $0x24] sm:$0xff]
    %v1124 = vld [vmem:[#allocation1 + $0x2d] sm:$0xff]
    %v1125 = vld [vmem:[#allocation1 + $0x36] sm:$0xff]
    %v1126 = vld [vmem:[#allocation1 + $0x3f] sm:$0xff]
    %1128 = vst [vmem:[#allocation1] ss:$9 sm:$0xff] %v28
    %v1129 = vld [vmem:[#allocation1] sm:$0xff]
    %v1130 = vld [vmem:[#allocation1 + $0x9] sm:$0xff]
    %v1131 = vld [vmem:[#allocation1 + $0x12] sm:$0xff]
    %v1132 = vld [vmem:[#allocation1 + $0x1b] sm:$0xff]
    %v1133 = vld [vmem:[#allocation1 + $0x24] sm:$0xff]
    %v1134 = vld [vmem:[#allocation1 + $0x2d] sm:$0xff]
    %v1135 = vld [vmem:[#allocation1 + $0x36] sm:$0xff]
    %v1136 = vld [vmem:[#allocation1 + $0x3f] sm:$0xff]
    %v2225 = vunpack.c.l.b16 %v29
    %v2226 = vunpack.c.l.b16 %v30
    %v2227 = vunpack.c.l.b16 %v31
    %v2228 = vunpack.c.l.b16 %v32
    %v2229 = vunpack.c.l.b16 %v33
    %v2230 = vunpack.c.l.b16 %v34
    %v2231 = vunpack.c.l.b16 %v35
    %v2232 = vunpack.c.l.b16 %v36
    %v2233 = vunpack.c.l.b16 %v37
    %v2234 = vunpack.c.l.b16 %v38
    %v2235 = vunpack.c.l.b16 %v39
    %v2236 = vunpack.c.l.b16 %v40
    %v2237 = vunpack.c.l.b16 %v41
    %v2238 = vunpack.c.l.b16 %v42
    %v2239 = vunpack.c.l.b16 %v43
    %v2240 = vunpack.c.l.b16 %v44
    %v2241 = vunpack.c.l.b16 %v45
    %v2242 = vunpack.c.l.b16 %v46
    %v2243 = vunpack.c.l.b16 %v47
    %v2244 = vunpack.c.l.b16 %v48
    %v2245 = vunpack.c.l.b16 %v49
    %v2246 = vunpack.c.l.b16 %v50
    %v2247 = vunpack.c.l.b16 %v51
    %v2248 = vunpack.c.l.b16 %v52
    %v2249 = vunpack.c.l.b16 %v53
    %v2250 = vunpack.c.l.b16 %v54
    %v2251 = vunpack.c.l.b16 %v55
    %v2252 = vunpack.c.l.b16 %v56
    %v2253 = vunpack.c.l.b16 %v57
    %v2254 = vunpack.c.l.b16 %v58
    %v2255 = vunpack.c.l.b16 %v59
    %v2256 = vunpack.c.l.b16 %v60
    %v2257 = vunpack.c.l.b16 %v61
    %v2258 = vunpack.c.l.b16 %v62
    %v2259 = vunpack.c.l.b16 %v63
    %v2260 = vunpack.c.l.b16 %v64
    %v2261 = vunpack.c.l.b16 %v65
    %v2262 = vunpack.c.l.b16 %v66
    %v2263 = vunpack.c.l.b16 %v67
    %v2264 = vunpack.c.l.b16 %v68
    %v2265 = vunpack.c.l.b16 %v69
    %v2266 = vunpack.c.l.b16 %v70
    %v2267 = vunpack.c.l.b16 %v71
    %v2268 = vunpack.c.l.b16 %v72
    %v2269 = vunpack.c.l.b16 %v73
    %v2270 = vunpack.c.l.b16 %v74
    %v2271 = vunpack.c.l.b16 %v75
    %v2272 = vunpack.c.l.b16 %v76
    %v2273 = vunpack.c.l.b16 %v77
    %v2274 = vunpack.c.l.b16 %v78
    %v2275 = vunpack.c.l.b16 %v79
    %v2276 = vunpack.c.l.b16 %v80
    %v2277 = vunpack.c.l.b16 %v81
    %v2278 = vunpack.c.l.b16 %v82
    %v2279 = vunpack.c.l.b16 %v83
    %v2280 = vunpack.c.l.b16 %v84
    %v2281 = vunpack.c.l.b16 %v85
    %v2282 = vunpack.c.l.b16 %v86
    %v2283 = vunpack.c.l.b16 %v87
    %v2284 = vunpack.c.l.b16 %v88
    %v2285 = vunpack.c.l.b16 %v89
    %v2286 = vunpack.c.l.b16 %v90
    %v2287 = vunpack.c.l.b16 %v91
    %v2288 = vunpack.c.l.b16 %v92
    %v2289 = vunpack.c.l.b16 %v93
    %v2290 = vunpack.c.l.b16 %v94
    %v2291 = vunpack.c.l.b16 %v95
    %v2292 = vunpack.c.l.b16 %v96
    %v2293 = vunpack.c.l.b16 %v97
    %v2294 = vunpack.c.l.b16 %v98
    %v2295 = vunpack.c.l.b16 %v99
    %v2296 = vunpack.c.l.b16 %v100
    %v2297 = vunpack.c.l.b16 %v101
    %v2298 = vunpack.c.l.b16 %v102
    %v2299 = vunpack.c.l.b16 %v103
    %v2300 = vunpack.c.l.b16 %v104
    %v2301 = vunpack.c.l.b16 %v105
    %v2302 = vunpack.c.l.b16 %v106
    %v2303 = vunpack.c.l.b16 %v107
    %v2304 = vunpack.c.l.b16 %v108
    %v2305 = vunpack.c.l.b16 %v109
    %v2306 = vunpack.c.l.b16 %v110
    %v2307 = vunpack.c.l.b16 %v111
    %v2308 = vunpack.c.l.b16 %v112
    %v2309 = vunpack.c.l.b16 %v113
    %v2310 = vunpack.c.l.b16 %v114
    %v2311 = vunpack.c.l.b16 %v115
    %v2312 = vunpack.c.l.b16 %v116
    %v2313 = vunpack.c.l.b16 %v117
    %v2314 = vunpack.c.l.b16 %v118
    %v2315 = vunpack.c.l.b16 %v119
    %v2316 = vunpack.c.l.b16 %v120
    %v2317 = vunpack.c.l.b16 %v121
    %v2318 = vunpack.c.l.b16 %v122
    %v2319 = vunpack.c.l.b16 %v123
    %v2320 = vunpack.c.l.b16 %v124
    %v2321 = vunpack.c.l.b16 %v125
    %v2322 = vunpack.c.l.b16 %v126
    %v2323 = vunpack.c.l.b16 %v127
    %v2324 = vunpack.c.l.b16 %v128
    %v2325 = vunpack.c.l.b16 %v129
    %v2326 = vunpack.c.l.b16 %v130
    %v2327 = vunpack.c.l.b16 %v131
    %v2328 = vunpack.c.l.b16 %v132
    %v2329 = vunpack.c.l.b16 %v133
    %v2330 = vunpack.c.l.b16 %v134
    %v2331 = vunpack.c.l.b16 %v135
    %v2332 = vunpack.c.l.b16 %v136
    %v2333 = vunpack.c.l.b16 %v137
    %v2334 = vunpack.c.l.b16 %v138
    %v2335 = vunpack.c.l.b16 %v139
    %v2336 = vunpack.c.l.b16 %v140
    %v2337 = vunpack.c.l.b16 %v141
    %v2338 = vunpack.c.l.b16 %v142
    %v2339 = vunpack.c.l.b16 %v143
    %v2340 = vunpack.c.l.b16 %v144
    %v2341 = vunpack.c.l.b16 %v145
    %v2342 = vunpack.c.l.b16 %v146
    %v2343 = vunpack.c.l.b16 %v147
    %v2344 = vunpack.c.l.b16 %v148
    %v2345 = vunpack.c.l.b16 %v149
    %v2346 = vunpack.c.l.b16 %v150
    %v2347 = vunpack.c.l.b16 %v151
    %v2348 = vunpack.c.l.b16 %v152
    %v2349 = vunpack.c.l.b16 %v153
    %v2350 = vunpack.c.l.b16 %v154
    %v2351 = vunpack.c.l.b16 %v155
    %v2352 = vunpack.c.l.b16 %v156
    %v2353 = vunpack.c.l.b16 %v157
    %v2354 = vunpack.c.l.b16 %v158
    %v2355 = vunpack.c.l.b16 %v159
    %v2356 = vunpack.c.l.b16 %v160
    %v2357 = vunpack.c.l.b16 %v161
    %v2358 = vunpack.c.l.b16 %v162
    %v2359 = vunpack.c.l.b16 %v163
    %v2360 = vunpack.c.l.b16 %v164
    %v2361 = vunpack.c.l.b16 %v165
    %v2362 = vunpack.c.l.b16 %v166
    %v2363 = vunpack.c.l.b16 %v167
    %v2364 = vunpack.c.l.b16 %v168
    %v2365 = vunpack.c.l.b16 %v169
    %v2366 = vunpack.c.l.b16 %v170
    %v2367 = vunpack.c.l.b16 %v171
    %v2368 = vunpack.c.l.b16 %v172
    %v2369 = vunpack.c.l.b16 %v173
    %v2370 = vunpack.c.l.b16 %v174
    %v2371 = vunpack.c.l.b16 %v175
    %v2372 = vunpack.c.l.b16 %v176
    %v2373 = vunpack.c.l.b16 %v177
    %v2374 = vunpack.c.l.b16 %v178
    %v2375 = vunpack.c.l.b16 %v179
    %v2376 = vunpack.c.l.b16 %v180
    %v2377 = vunpack.c.l.b16 %v181
    %v2378 = vunpack.c.l.b16 %v182
    %v2379 = vunpack.c.l.b16 %v183
    %v2380 = vunpack.c.l.b16 %v184
    %v2381 = vunpack.c.l.b16 %v185
    %v2382 = vunpack.c.l.b16 %v186
    %v2383 = vunpack.c.l.b16 %v187
    %v2384 = vunpack.c.l.b16 %v188
    %v2385 = vunpack.c.l.b16 %v189
    %v2386 = vunpack.c.l.b16 %v190
    %v2387 = vunpack.c.l.b16 %v191
    %v2388 = vunpack.c.l.b16 %v192
    %v2389 = vunpack.c.l.b16 %v193
    %v2390 = vunpack.c.l.b16 %v194
    %v2391 = vunpack.c.l.b16 %v195
    %v2392 = vunpack.c.l.b16 %v196
    %v2393 = vunpack.c.l.b16 %v197
    %v2394 = vunpack.c.l.b16 %v198
    %v2395 = vunpack.c.l.b16 %v199
    %v2396 = vunpack.c.l.b16 %v200
    %v2397 = vunpack.c.l.b16 %v201
    %v2398 = vunpack.c.l.b16 %v202
    %v2399 = vunpack.c.l.b16 %v203
    %v2400 = vunpack.c.l.b16 %v204
    %v2401 = vunpack.c.l.b16 %v205
    %v2402 = vunpack.c.l.b16 %v206
    %v2403 = vunpack.c.l.b16 %v207
    %v2404 = vunpack.c.l.b16 %v208
    %v2405 = vunpack.c.l.b16 %v209
    %v2406 = vunpack.c.l.b16 %v210
    %v2407 = vunpack.c.l.b16 %v211
    %v2408 = vunpack.c.l.b16 %v212
    %v2409 = vunpack.c.l.b16 %v213
    %v2410 = vunpack.c.l.b16 %v214
    %v2411 = vunpack.c.l.b16 %v215
    %v2412 = vunpack.c.l.b16 %v216
    %v2413 = vunpack.c.l.b16 %v217
    %v2414 = vunpack.c.l.b16 %v218
    %v2415 = vunpack.c.l.b16 %v219
    %v2416 = vunpack.c.l.b16 %v220
    %v2417 = vunpack.c.l.b16 %v221
    %v2418 = vunpack.c.l.b16 %v222
    %v2419 = vunpack.c.l.b16 %v223
    %v2420 = vunpack.c.l.b16 %v224
    %v2421 = vunpack.c.l.b16 %v225
    %v2422 = vunpack.c.l.b16 %v226
    %v2423 = vunpack.c.l.b16 %v227
    %v2424 = vunpack.c.l.b16 %v228
    %v2425 = vunpack.c.l.b16 %v229
    %v2426 = vunpack.c.l.b16 %v230
    %v2427 = vunpack.c.l.b16 %v231
    %v2428 = vunpack.c.l.b16 %v232
    %v2429 = vunpack.c.l.b16 %v233
    %v2430 = vunpack.c.l.b16 %v234
    %v2431 = vunpack.c.l.b16 %v235
    %v2432 = vunpack.c.l.b16 %v236
    %v2433 = vunpack.c.l.b16 %v237
    %v2434 = vunpack.c.l.b16 %v238
    %v2435 = vunpack.c.l.b16 %v239
    %v2436 = vunpack.c.l.b16 %v240
    %v2437 = vunpack.c.l.b16 %v241
    %v2438 = vunpack.c.l.b16 %v242
    %v2439 = vunpack.c.l.b16 %v243
    %v2440 = vunpack.c.l.b16 %v244
    %v2441 = vunpack.c.l.b16 %v245
    %v2442 = vunpack.c.l.b16 %v246
    %v2443 = vunpack.c.l.b16 %v247
    %v2444 = vunpack.c.l.b16 %v248
    %v2445 = vunpack.c.l.b16 %v249
    %v2446 = vunpack.c.l.b16 %v250
    %v2447 = vunpack.c.l.b16 %v251
    %v2448 = vunpack.c.l.b16 %v252
    %v2449 = vunpack.c.l.b16 %v253
    %v2450 = vunpack.c.l.b16 %v254
    %v2451 = vunpack.c.l.b16 %v255
    %v2452 = vunpack.c.l.b16 %v256
    %v2453 = vunpack.c.l.b16 %v257
    %v2454 = vunpack.c.l.b16 %v258
    %v2455 = vunpack.c.l.b16 %v259
    %v2456 = vunpack.c.l.b16 %v260
    %v2457 = vunpack.c.l.b16 %v261
    %v2458 = vunpack.c.l.b16 %v262
    %v2459 = vunpack.c.l.b16 %v263
    %v2460 = vunpack.c.l.b16 %v264
    %v2461 = vunpack.c.l.b16 %v265
    %v2462 = vunpack.c.l.b16 %v266
    %v2463 = vunpack.c.l.b16 %v267
    %v2464 = vunpack.c.l.b16 %v268
    %v2465 = vunpack.c.l.b16 %v269
    %v2466 = vunpack.c.l.b16 %v270
    %v2467 = vunpack.c.l.b16 %v271
    %v2468 = vunpack.c.l.b16 %v272
    %v2469 = vunpack.c.l.b16 %v273
    %v2470 = vunpack.c.l.b16 %v274
    %v2471 = vunpack.c.l.b16 %v275
    %v2472 = vunpack.c.l.b16 %v276
    %v2473 = vunpack.c.l.b16 %v277
    %v2474 = vunpack.c.l.b16 %v278
    %v2475 = vunpack.c.l.b16 %v279
    %v2476 = vunpack.c.l.b16 %v280
    %v2477 = vunpack.c.l.b16 %v281
    %v2478 = vunpack.c.l.b16 %v282
    %v2479 = vunpack.c.l.b16 %v283
    %v2480 = vunpack.c.l.b16 %v284
    %v2481 = vunpack.c.l.b16 %v285
    %v2482 = vunpack.c.l.b16 %v286
    %v2483 = vunpack.c.l.b16 %v287
    %v2484 = vunpack.c.l.b16 %v288
    %v2485 = vunpack.c.l.b16 %v289
    %v2486 = vunpack.c.l.b16 %v290
    %v2487 = vunpack.c.l.b16 %v291
    %v2488 = vunpack.c.l.b16 %v292
    %v2489 = vunpack.c.l.b16 %v293
    %v2490 = vunpack.c.l.b16 %v294
    %v2491 = vunpack.c.l.b16 %v295
    %v2492 = vunpack.c.l.b16 %v296
    %v2493 = vunpack.c.l.b16 %v297
    %v2494 = vunpack.c.l.b16 %v298
    %v2495 = vunpack.c.l.b16 %v299
    %v2496 = vunpack.c.l.b16 %v300
    %v2497 = vunpack.c.l.b16 %v301
    %v2498 = vunpack.c.l.b16 %v302
    %v2499 = vunpack.c.l.b16 %v303
    %v2500 = vunpack.c.l.b16 %v304
    %v2501 = vunpack.c.l.b16 %v305
    %v2502 = vunpack.c.l.b16 %v306
    %v2503 = vunpack.c.l.b16 %v307
    %v2504 = vunpack.c.l.b16 %v308
    %v2505 = vunpack.c.l.b16 %v309
    %v2506 = vunpack.c.l.b16 %v310
    %v2507 = vunpack.c.l.b16 %v311
    %v2508 = vunpack.c.l.b16 %v312
    %v2509 = vunpack.c.l.b16 %v313
    %v2510 = vunpack.c.l.b16 %v314
    %v2511 = vunpack.c.l.b16 %v315
    %v2512 = vunpack.c.l.b16 %v316
    %v2513 = vunpack.c.l.b16 %v317
    %v2514 = vunpack.c.l.b16 %v318
    %v2515 = vunpack.c.l.b16 %v319
    %v2516 = vunpack.c.l.b16 %v320
    %v2517 = vunpack.c.l.b16 %v321
    %v2518 = vunpack.c.l.b16 %v322
    %v2519 = vunpack.c.l.b16 %v323
    %v2520 = vunpack.c.l.b16 %v324
    %v2521 = vunpack.c.l.b16 %v325
    %v2522 = vunpack.c.l.b16 %v326
    %v2523 = vunpack.c.l.b16 %v327
    %v2524 = vunpack.c.l.b16 %v328
    %v2525 = vunpack.c.l.b16 %v329
    %v2526 = vunpack.c.l.b16 %v330
    %v2527 = vunpack.c.l.b16 %v331
    %v2528 = vunpack.c.l.b16 %v332
    %v2529 = vunpack.c.l.b16 %v333
    %v2530 = vunpack.c.l.b16 %v334
    %v2531 = vunpack.c.l.b16 %v335
    %v2532 = vunpack.c.l.b16 %v336
    %v2533 = vunpack.c.l.b16 %v337
    %v2534 = vunpack.c.l.b16 %v338
    %v2535 = vunpack.c.l.b16 %v339
    %v2536 = vunpack.c.l.b16 %v340
    %v2537 = vunpack.c.l.b16 %v341
    %v2538 = vunpack.c.l.b16 %v342
    %v2539 = vunpack.c.l.b16 %v343
    %v2540 = vunpack.c.l.b16 %v344
    %v2541 = vunpack.c.l.b16 %v345
    %v2542 = vunpack.c.l.b16 %v346
    %v2543 = vunpack.c.l.b16 %v347
    %v2544 = vunpack.c.l.b16 %v348
    %v2545 = vunpack.c.l.b16 %v349
    %v2546 = vunpack.c.l.b16 %v350
    %v2547 = vunpack.c.l.b16 %v351
    %v2548 = vunpack.c.l.b16 %v352
    %v2549 = vunpack.c.l.b16 %v353
    %v2550 = vunpack.c.l.b16 %v354
    %v2551 = vunpack.c.l.b16 %v355
    %v2552 = vunpack.c.l.b16 %v356
    %v2553 = vunpack.c.l.b16 %v357
    %v2554 = vunpack.c.l.b16 %v358
    %v2555 = vunpack.c.l.b16 %v359
    %v2556 = vunpack.c.l.b16 %v360
    %v2557 = vunpack.c.l.b16 %v361
    %v2558 = vunpack.c.l.b16 %v362
    %v2559 = vunpack.c.l.b16 %v363
    %v2560 = vunpack.c.l.b16 %v364
    %v2561 = vunpack.c.l.b16 %v365
    %v2562 = vunpack.c.l.b16 %v366
    %v2563 = vunpack.c.l.b16 %v367
    %v2564 = vunpack.c.l.b16 %v368
    %v2565 = vunpack.c.l.b16 %v369
    %v2566 = vunpack.c.l.b16 %v370
    %v2567 = vunpack.c.l.b16 %v371
    %v2568 = vunpack.c.l.b16 %v372
    %v2569 = vunpack.c.l.b16 %v373
    %v2570 = vunpack.c.l.b16 %v374
    %v2571 = vunpack.c.l.b16 %v375
    %v2572 = vunpack.c.l.b16 %v376
    %v2573 = vunpack.c.l.b16 %v377
    %v2574 = vunpack.c.l.b16 %v378
    %v2575 = vunpack.c.l.b16 %v379
    %v2576 = vunpack.c.l.b16 %v380
    %v2577 = vunpack.c.l.b16 %v381
    %v2578 = vunpack.c.l.b16 %v382
    %v2579 = vunpack.c.l.b16 %v383
    %v2580 = vunpack.c.l.b16 %v384
    %v2581 = vunpack.c.l.b16 %v385
    %v2582 = vunpack.c.l.b16 %v386
    %v2583 = vunpack.c.l.b16 %v387
    %v2584 = vunpack.c.l.b16 %v388
    %v2585 = vunpack.c.l.b16 %v389
    %v2586 = vunpack.c.l.b16 %v390
    %v2587 = vunpack.c.l.b16 %v391
    %v2588 = vunpack.c.l.b16 %v392
    %v2589 = vunpack.c.l.b16 %v393
    %v2590 = vunpack.c.l.b16 %v394
    %v2591 = vunpack.c.l.b16 %v395
    %v2592 = vunpack.c.l.b16 %v396
    %v2593 = vunpack.c.l.b16 %v397
    %v2594 = vunpack.c.l.b16 %v398
    %v2595 = vunpack.c.l.b16 %v399
    %v2596 = vunpack.c.l.b16 %v400
    %v2597 = vunpack.c.l.b16 %v401
    %v2598 = vunpack.c.l.b16 %v402
    %v2599 = vunpack.c.l.b16 %v403
    %v2600 = vunpack.c.l.b16 %v404
    %v2601 = vunpack.c.l.b16 %v405
    %v2602 = vunpack.c.l.b16 %v406
    %v2603 = vunpack.c.l.b16 %v407
    %v2604 = vunpack.c.l.b16 %v408
    %v2605 = vunpack.c.l.b16 %v409
    %v2606 = vunpack.c.l.b16 %v410
    %v2607 = vunpack.c.l.b16 %v411
    %v2608 = vunpack.c.l.b16 %v412
    %v2609 = vunpack.c.l.b16 %v413
    %v2610 = vunpack.c.l.b16 %v414
    %v2611 = vunpack.c.l.b16 %v415
    %v2612 = vunpack.c.l.b16 %v416
    %v2613 = vunpack.c.l.b16 %v417
    %v2614 = vunpack.c.l.b16 %v418
    %v2615 = vunpack.c.l.b16 %v419
    %v2616 = vunpack.c.l.b16 %v420
    %v2617 = vunpack.c.l.b16 %v421
    %v2618 = vunpack.c.l.b16 %v422
    %v2619 = vunpack.c.l.b16 %v423
    %v2620 = vunpack.c.l.b16 %v424
    %v2621 = vunpack.c.l.b16 %v425
    %v2622 = vunpack.c.l.b16 %v426
    %v2623 = vunpack.c.l.b16 %v427
    %v2624 = vunpack.c.l.b16 %v428
    %v2625 = vunpack.c.l.b16 %v429
    %v2626 = vunpack.c.l.b16 %v430
    %v2627 = vunpack.c.l.b16 %v431
    %v2628 = vunpack.c.l.b16 %v432
    %v2629 = vunpack.c.l.b16 %v433
    %v2630 = vunpack.c.l.b16 %v434
    %v2631 = vunpack.c.l.b16 %v435
    %v2632 = vunpack.c.l.b16 %v436
    %v2633 = vunpack.c.l.b16 %v437
    %v2634 = vunpack.c.l.b16 %v438
    %v2635 = vunpack.c.l.b16 %v439
    %v2636 = vunpack.c.l.b16 %v440
    %v2637 = vunpack.c.l.b16 %v441
    %v2638 = vunpack.c.l.b16 %v442
    %v2639 = vunpack.c.l.b16 %v443
    %v2640 = vunpack.c.l.b16 %v444
    %v2641 = vunpack.c.l.b16 %v445
    %v2642 = vunpack.c.l.b16 %v446
    %v2643 = vunpack.c.l.b16 %v447
    %v2644 = vunpack.c.l.b16 %v448
    %v2645 = vunpack.c.l.b16 %v449
    %v2646 = vunpack.c.l.b16 %v450
    %v2647 = vunpack.c.l.b16 %v451
    %v2648 = vunpack.c.l.b16 %v452
    %v2649 = vunpack.c.l.b16 %v453
    %v2650 = vunpack.c.l.b16 %v454
    %v2651 = vunpack.c.l.b16 %v455
    %v2652 = vunpack.c.l.b16 %v456
    %v2653 = vunpack.c.l.b16 %v457
    %v2654 = vunpack.c.l.b16 %v458
    %v2655 = vunpack.c.l.b16 %v459
    %v2656 = vunpack.c.l.b16 %v460
    %v2657 = vunpack.c.l.b16 %v461
    %v2658 = vunpack.c.l.b16 %v462
    %v2659 = vunpack.c.l.b16 %v463
    %v2660 = vunpack.c.l.b16 %v464
    %v2661 = vunpack.c.l.b16 %v465
    %v2662 = vunpack.c.l.b16 %v466
    %v2663 = vunpack.c.l.b16 %v467
    %v2664 = vunpack.c.l.b16 %v468
    %v2665 = vunpack.c.l.b16 %v469
    %v2666 = vunpack.c.l.b16 %v470
    %v2667 = vunpack.c.l.b16 %v471
    %v2668 = vunpack.c.l.b16 %v472
    %v2669 = vunpack.c.l.b16 %v473
    %v2670 = vunpack.c.l.b16 %v474
    %v2671 = vunpack.c.l.b16 %v475
    %v2672 = vunpack.c.l.b16 %v476
    %v2673 = vunpack.c.l.b16 %v477
    %v2674 = vunpack.c.l.b16 %v478
    %v2675 = vunpack.c.l.b16 %v479
    %v2676 = vunpack.c.l.b16 %v480
    %v2677 = vunpack.c.l.b16 %v481
    %v2678 = vunpack.c.l.b16 %v482
    %v2679 = vunpack.c.l.b16 %v483
    %v2680 = vunpack.c.l.b16 %v484
    %v2681 = vunpack.c.l.b16 %v485
    %v2682 = vunpack.c.l.b16 %v486
    %v2683 = vunpack.c.l.b16 %v487
    %v2684 = vunpack.c.l.b16 %v488
    %v2685 = vunpack.c.l.b16 %v489
    %v2686 = vunpack.c.l.b16 %v490
    %v2687 = vunpack.c.l.b16 %v491
    %v2688 = vunpack.c.l.b16 %v492
    %v2689 = vunpack.c.l.b16 %v493
    %v2690 = vunpack.c.l.b16 %v494
    %v2691 = vunpack.c.l.b16 %v495
    %v2692 = vunpack.c.l.b16 %v496
    %v2693 = vunpack.c.l.b16 %v497
    %v2694 = vunpack.c.l.b16 %v498
    %v2695 = vunpack.c.l.b16 %v499
    %v2696 = vunpack.c.l.b16 %v500
    %v2697 = vunpack.c.l.b16 %v501
    %v2698 = vunpack.c.l.b16 %v502
    %v2699 = vunpack.c.l.b16 %v503
    %v2700 = vunpack.c.l.b16 %v504
    %v2701 = vunpack.c.l.b16 %v505
    %v2702 = vunpack.c.l.b16 %v506
    %v2703 = vunpack.c.l.b16 %v507
    %v2704 = vunpack.c.l.b16 %v508
    %v2705 = vunpack.c.l.b16 %v509
    %v2706 = vunpack.c.l.b16 %v510
    %v2707 = vunpack.c.l.b16 %v511
    %v2708 = vunpack.c.l.b16 %v512
    %v2709 = vunpack.c.l.b16 %v513
    %v2710 = vunpack.c.l.b16 %v514
    %v2711 = vunpack.c.l.b16 %v515
    %v2712 = vunpack.c.l.b16 %v516
    %v2713 = vunpack.c.l.b16 %v517
    %v2714 = vunpack.c.l.b16 %v518
    %v2715 = vunpack.c.l.b16 %v519
    %v2716 = vunpack.c.l.b16 %v520
    %v2717 = vunpack.c.l.b16 %v521
    %v2718 = vunpack.c.l.b16 %v522
    %v2719 = vunpack.c.l.b16 %v523
    %v2720 = vunpack.c.l.b16 %v524
    %v2721 = vunpack.c.l.b16 %v525
    %v2722 = vunpack.c.l.b16 %v526
    %v2723 = vunpack.c.l.b16 %v527
    %v2724 = vunpack.c.l.b16 %v528
    %v2725 = vunpack.c.l.b16 %v529
    %v2726 = vunpack.c.l.b16 %v530
    %v2727 = vunpack.c.l.b16 %v531
    %v2728 = vunpack.c.l.b16 %v532
    %v2729 = vunpack.c.l.b16 %v533
    %v2730 = vunpack.c.l.b16 %v534
    %v2731 = vunpack.c.l.b16 %v535
    %v2732 = vunpack.c.l.b16 %v536
    %v2733 = vunpack.c.l.b16 %v537
    %v2734 = vunpack.c.l.b16 %v538
    %v2735 = vunpack.c.l.b16 %v539
    %v2736 = vunpack.c.l.b16 %v540
    %v2737 = vunpack.c.l.b16 %v541
    %v2738 = vunpack.c.l.b16 %v542
    %v2739 = vunpack.c.l.b16 %v543
    %v2740 = vunpack.c.l.b16 %v544
    %v2741 = vunpack.c.l.b16 %v545
    %v2742 = vunpack.c.l.b16 %v546
    %v2743 = vunpack.c.l.b16 %v547
    %v2744 = vunpack.c.l.b16 %v548
    %v2745 = vunpack.c.l.b16 %v549
    %v2746 = vunpack.c.l.b16 %v550
    %v2747 = vunpack.c.l.b16 %v551
    %v2748 = vunpack.c.l.b16 %v552
    %v2749 = vunpack.c.l.b16 %v553
    %v2750 = vunpack.c.l.b16 %v554
    %v2751 = vunpack.c.l.b16 %v555
    %v2752 = vunpack.c.l.b16 %v556
    %v2753 = vunpack.c.l.b16 %v557
    %v2754 = vunpack.c.l.b16 %v558
    %v2755 = vunpack.c.l.b16 %v559
    %v2756 = vunpack.c.l.b16 %v560
    %v2757 = vunpack.c.l.b16 %v561
    %v2758 = vunpack.c.l.b16 %v562
    %v2759 = vunpack.c.l.b16 %v563
    %v2760 = vunpack.c.l.b16 %v564
    %v2761 = vunpack.c.l.b16 %v565
    %v2762 = vunpack.c.l.b16 %v566
    %v2763 = vunpack.c.l.b16 %v567
    %v2764 = vunpack.c.l.b16 %v568
    %v2765 = vunpack.c.l.b16 %v569
    %v2766 = vunpack.c.l.b16 %v570
    %v2767 = vunpack.c.l.b16 %v571
    %v2768 = vunpack.c.l.b16 %v572
    %v2769 = vunpack.c.l.b16 %v573
    %v2770 = vunpack.c.l.b16 %v574
    %v2771 = vunpack.c.l.b16 %v575
    %v2772 = vunpack.c.l.b16 %v576
    %v2773 = vunpack.c.l.b16 %v577
    %v2774 = vunpack.c.l.b16 %v578
    %v2775 = vunpack.c.l.b16 %v579
    %v2776 = vunpack.c.l.b16 %v580
    %v2777 = vunpack.c.l.b16 %v581
    %v2778 = vunpack.c.l.b16 %v582
    %v2779 = vunpack.c.l.b16 %v583
    %v2780 = vunpack.c.l.b16 %v584
    %v2781 = vunpack.c.l.b16 %v585
    %v2782 = vunpack.c.l.b16 %v586
    %v2783 = vunpack.c.l.b16 %v587
    %v2784 = vunpack.c.l.b16 %v588
    %v2785 = vunpack.c.l.b16 %v589
    %v2786 = vunpack.c.l.b16 %v590
    %v2787 = vunpack.c.l.b16 %v591
    %v2788 = vunpack.c.l.b16 %v592
    %v2789 = vunpack.c.l.b16 %v593
    %v2790 = vunpack.c.l.b16 %v594
    %v2791 = vunpack.c.l.b16 %v595
    %v2792 = vunpack.c.l.b16 %v596
    %v2793 = vunpack.c.l.b16 %v597
    %v2794 = vunpack.c.l.b16 %v598
    %v2795 = vunpack.c.l.b16 %v599
    %v2796 = vunpack.c.l.b16 %v600
    %v2797 = vunpack.c.l.b16 %v601
    %v2798 = vunpack.c.l.b16 %v602
    %v2799 = vunpack.c.l.b16 %v603
    %v2800 = vunpack.c.l.b16 %v604
    %v2801 = vunpack.c.l.b16 %v605
    %v2802 = vunpack.c.l.b16 %v606
    %v2803 = vunpack.c.l.b16 %v607
    %v2804 = vunpack.c.l.b16 %v608
    %v2805 = vunpack.c.l.b16 %v609
    %v2806 = vunpack.c.l.b16 %v610
    %v2807 = vunpack.c.l.b16 %v611
    %v2808 = vunpack.c.l.b16 %v612
    %v2809 = vunpack.c.l.b16 %v613
    %v2810 = vunpack.c.l.b16 %v614
    %v2811 = vunpack.c.l.b16 %v615
    %v2812 = vunpack.c.l.b16 %v616
    %v2813 = vunpack.c.l.b16 %v617
    %v2814 = vunpack.c.l.b16 %v618
    %v2815 = vunpack.c.l.b16 %v619
    %v2816 = vunpack.c.l.b16 %v620
    %v2817 = vunpack.c.l.b16 %v621
    %v2818 = vunpack.c.l.b16 %v622
    %v2819 = vunpack.c.l.b16 %v623
    %v2820 = vunpack.c.l.b16 %v624
    %v2821 = vunpack.c.l.b16 %v625
    %v2822 = vunpack.c.l.b16 %v626
    %v2823 = vunpack.c.l.b16 %v627
    %v2824 = vunpack.c.l.b16 %v628
    %v2825 = vunpack.c.l.b16 %v629
    %v2826 = vunpack.c.l.b16 %v630
    %v2827 = vunpack.c.l.b16 %v631
    %v2828 = vunpack.c.l.b16 %v632
    %v2829 = vunpack.c.l.b16 %v633
    %v2830 = vunpack.c.l.b16 %v634
    %v2831 = vunpack.c.l.b16 %v635
    %v2832 = vunpack.c.l.b16 %v636
    %v2833 = vunpack.c.l.b16 %v637
    %v2834 = vunpack.c.l.b16 %v638
    %v2835 = vunpack.c.l.b16 %v639
    %v2836 = vunpack.c.l.b16 %v640
    %v2837 = vunpack.c.l.b16 %v641
    %v2838 = vunpack.c.l.b16 %v642
    %v2839 = vunpack.c.l.b16 %v643
    %v2840 = vunpack.c.l.b16 %v644
    %v2841 = vunpack.c.l.b16 %v645
    %v2842 = vunpack.c.l.b16 %v646
    %v2843 = vunpack.c.l.b16 %v647
    %v2844 = vunpack.c.l.b16 %v648
    %v2845 = vunpack.c.l.b16 %v649
    %v2846 = vunpack.c.l.b16 %v650
    %v2847 = vunpack.c.l.b16 %v651
    %v2848 = vunpack.c.l.b16 %v652
    %v2849 = vunpack.c.l.b16 %v653
    %v2850 = vunpack.c.l.b16 %v654
    %v2851 = vunpack.c.l.b16 %v655
    %v2852 = vunpack.c.l.b16 %v656
    %v2853 = vunpack.c.l.b16 %v657
    %v2854 = vunpack.c.l.b16 %v658
    %v2855 = vunpack.c.l.b16 %v659
    %v2856 = vunpack.c.l.b16 %v660
    %v2857 = vunpack.c.l.b16 %v661
    %v2858 = vunpack.c.l.b16 %v662
    %v2859 = vunpack.c.l.b16 %v663
    %v2860 = vunpack.c.l.b16 %v664
    %v2861 = vunpack.c.l.b16 %v665
    %v2862 = vunpack.c.l.b16 %v666
    %v2863 = vunpack.c.l.b16 %v667
    %v2864 = vunpack.c.l.b16 %v668
    %v2865 = vunpack.c.l.b16 %v669
    %v2866 = vunpack.c.l.b16 %v670
    %v2867 = vunpack.c.l.b16 %v671
    %v2868 = vunpack.c.l.b16 %v672
    %v2869 = vunpack.c.l.b16 %v673
    %v2870 = vunpack.c.l.b16 %v674
    %v2871 = vunpack.c.l.b16 %v675
    %v2872 = vunpack.c.l.b16 %v676
    %v2873 = vunpack.c.l.b16 %v677
    %v2874 = vunpack.c.l.b16 %v678
    %v2875 = vunpack.c.l.b16 %v679
    %v2876 = vunpack.c.l.b16 %v680
    %v2877 = vunpack.c.l.b16 %v681
    %v2878 = vunpack.c.l.b16 %v682
    %v2879 = vunpack.c.l.b16 %v683
    %v2880 = vunpack.c.l.b16 %v684
    %v2881 = vunpack.c.l.b16 %v685
    %v2882 = vunpack.c.l.b16 %v686
    %v2883 = vunpack.c.l.b16 %v687
    %v2884 = vunpack.c.l.b16 %v688
    %v2885 = vunpack.c.l.b16 %v689
    %v2886 = vunpack.c.l.b16 %v690
    %v2887 = vunpack.c.l.b16 %v691
    %v2888 = vunpack.c.l.b16 %v692
    %v2889 = vunpack.c.l.b16 %v693
    %v2890 = vunpack.c.l.b16 %v694
    %v2891 = vunpack.c.l.b16 %v695
    %v2892 = vunpack.c.l.b16 %v696
    %v2893 = vunpack.c.l.b16 %v697
    %v2894 = vunpack.c.l.b16 %v698
    %v2895 = vunpack.c.l.b16 %v699
    %v2896 = vunpack.c.l.b16 %v700
    %v2897 = vunpack.c.l.b16 %v701
    %v2898 = vunpack.c.l.b16 %v702
    %v2899 = vunpack.c.l.b16 %v703
    %v2900 = vunpack.c.l.b16 %v704
    %v2901 = vunpack.c.l.b16 %v705
    %v2902 = vunpack.c.l.b16 %v706
    %v2903 = vunpack.c.l.b16 %v707
    %v2904 = vunpack.c.l.b16 %v708
    %v2905 = vunpack.c.l.b16 %v709
    %v2906 = vunpack.c.l.b16 %v710
    %v2907 = vunpack.c.l.b16 %v711
    %v2908 = vunpack.c.l.b16 %v712
    %v2909 = vunpack.c.l.b16 %v713
    %v2910 = vunpack.c.l.b16 %v714
    %v2911 = vunpack.c.l.b16 %v715
    %v2912 = vunpack.c.l.b16 %v716
    %v2913 = vunpack.c.l.b16 %v717
    %v2914 = vunpack.c.l.b16 %v718
    %v2915 = vunpack.c.l.b16 %v719
    %v2916 = vunpack.c.l.b16 %v720
    %v2917 = vunpack.c.l.b16 %v721
    %v2918 = vunpack.c.l.b16 %v722
    %v2919 = vunpack.c.l.b16 %v723
    %v2920 = vunpack.c.l.b16 %v724
    %v2921 = vunpack.c.l.b16 %v725
    %v2922 = vunpack.c.l.b16 %v726
    %v2923 = vunpack.c.l.b16 %v727
    %v2924 = vunpack.c.l.b16 %v728
    %v2925 = vunpack.c.l.b16 %v729
    %v2926 = vunpack.c.l.b16 %v730
    %v2927 = vunpack.c.l.b16 %v731
    %v2928 = vunpack.c.l.b16 %v732
    %v2929 = vunpack.c.l.b16 %v733
    %v2930 = vunpack.c.l.b16 %v734
    %v2931 = vunpack.c.l.b16 %v735
    %v2932 = vunpack.c.l.b16 %v736
    %v2933 = vunpack.c.l.b16 %v737
    %v2934 = vunpack.c.l.b16 %v738
    %v2935 = vunpack.c.l.b16 %v739
    %v2936 = vunpack.c.l.b16 %v740
    %v2937 = vunpack.c.l.b16 %v741
    %v2938 = vunpack.c.l.b16 %v742
    %v2939 = vunpack.c.l.b16 %v743
    %v2940 = vunpack.c.l.b16 %v744
    %v2941 = vunpack.c.l.b16 %v745
    %v2942 = vunpack.c.l.b16 %v746
    %v2943 = vunpack.c.l.b16 %v747
    %v2944 = vunpack.c.l.b16 %v748
    %v2945 = vunpack.c.l.b16 %v749
    %v2946 = vunpack.c.l.b16 %v750
    %v2947 = vunpack.c.l.b16 %v751
    %v2948 = vunpack.c.l.b16 %v752
    %v2949 = vunpack.c.l.b16 %v753
    %v2950 = vunpack.c.l.b16 %v754
    %v2951 = vunpack.c.l.b16 %v755
    %v2952 = vunpack.c.l.b16 %v756
    %v2953 = vunpack.c.l.b16 %v757
    %v2954 = vunpack.c.l.b16 %v758
    %v2955 = vunpack.c.l.b16 %v759
    %v2956 = vunpack.c.l.b16 %v760
    %v2957 = vunpack.c.l.b16 %v761
    %v2958 = vunpack.c.l.b16 %v762
    %v2959 = vunpack.c.l.b16 %v763
    %v2960 = vunpack.c.l.b16 %v764
    %v2961 = vunpack.c.l.b16 %v765
    %v2962 = vunpack.c.l.b16 %v766
    %v2963 = vunpack.c.l.b16 %v767
    %v2964 = vunpack.c.l.b16 %v768
    %v2965 = vunpack.c.l.b16 %v769
    %v2966 = vunpack.c.l.b16 %v770
    %v2967 = vunpack.c.l.b16 %v771
    %v2968 = vunpack.c.l.b16 %v772
    %v2969 = vunpack.c.l.b16 %v773
    %v2970 = vunpack.c.l.b16 %v774
    %v2971 = vunpack.c.l.b16 %v775
    %v2972 = vunpack.c.l.b16 %v776
    %v2973 = vunpack.c.l.b16 %v777
    %v2974 = vunpack.c.l.b16 %v778
    %v2975 = vunpack.c.l.b16 %v779
    %v2976 = vunpack.c.l.b16 %v780
    %v2977 = vunpack.c.l.b16 %v781
    %v2978 = vunpack.c.l.b16 %v782
    %v2979 = vunpack.c.l.b16 %v783
    %v2980 = vunpack.c.l.b16 %v784
    %v2981 = vunpack.c.l.b16 %v785
    %v2982 = vunpack.c.l.b16 %v786
    %v2983 = vunpack.c.l.b16 %v787
    %v2984 = vunpack.c.l.b16 %v788
    %v2985 = vunpack.c.l.b16 %v789
    %v2986 = vunpack.c.l.b16 %v790
    %v2987 = vunpack.c.l.b16 %v791
    %v2988 = vunpack.c.l.b16 %v792
    %v2989 = vunpack.c.l.b16 %v793
    %v2990 = vunpack.c.l.b16 %v794
    %v2991 = vunpack.c.l.b16 %v795
    %v2992 = vunpack.c.l.b16 %v796
    %v2993 = vunpack.c.l.b16 %v797
    %v2994 = vunpack.c.l.b16 %v798
    %v2995 = vunpack.c.l.b16 %v799
    %v2996 = vunpack.c.l.b16 %v800
    %v2997 = vunpack.c.l.b16 %v801
    %v2998 = vunpack.c.l.b16 %v802
    %v2999 = vunpack.c.l.b16 %v803
    %v3000 = vunpack.c.l.b16 %v804
    %v3001 = vunpack.c.l.b16 %v805
    %v3002 = vunpack.c.l.b16 %v806
    %v3003 = vunpack.c.l.b16 %v807
    %v3004 = vunpack.c.l.b16 %v808
    %v3005 = vunpack.c.l.b16 %v809
    %v3006 = vunpack.c.l.b16 %v810
    %v3007 = vunpack.c.l.b16 %v811
    %v3008 = vunpack.c.l.b16 %v812
    %v3009 = vunpack.c.l.b16 %v813
    %v3010 = vunpack.c.l.b16 %v814
    %v3011 = vunpack.c.l.b16 %v815
    %v3012 = vunpack.c.l.b16 %v816
    %v3013 = vunpack.c.l.b16 %v817
    %v3014 = vunpack.c.l.b16 %v818
    %v3015 = vunpack.c.l.b16 %v819
    %v3016 = vunpack.c.l.b16 %v820
    %v3017 = vunpack.c.l.b16 %v821
    %v3018 = vunpack.c.l.b16 %v822
    %v3019 = vunpack.c.l.b16 %v823
    %v3020 = vunpack.c.l.b16 %v824
    %v3021 = vunpack.c.l.b16 %v825
    %v3022 = vunpack.c.l.b16 %v826
    %v3023 = vunpack.c.l.b16 %v827
    %v3024 = vunpack.c.l.b16 %v828
    %v3025 = vunpack.c.l.b16 %v829
    %v3026 = vunpack.c.l.b16 %v830
    %v3027 = vunpack.c.l.b16 %v831
    %v3028 = vunpack.c.l.b16 %v832
    %v3029 = vunpack.c.l.b16 %v833
    %v3030 = vunpack.c.l.b16 %v834
    %v3031 = vunpack.c.l.b16 %v835
    %v3032 = vunpack.c.l.b16 %v836
    %v3033 = vunpack.c.l.b16 %v837
    %v3034 = vunpack.c.l.b16 %v838
    %v3035 = vunpack.c.l.b16 %v839
    %v3036 = vunpack.c.l.b16 %v840
    %v3037 = vunpack.c.l.b16 %v841
    %v3038 = vunpack.c.l.b16 %v842
    %v3039 = vunpack.c.l.b16 %v843
    %v3040 = vunpack.c.l.b16 %v844
    %v3041 = vunpack.c.l.b16 %v845
    %v3042 = vunpack.c.l.b16 %v846
    %v3043 = vunpack.c.l.b16 %v847
    %v3044 = vunpack.c.l.b16 %v848
    %v3045 = vunpack.c.l.b16 %v849
    %v3046 = vunpack.c.l.b16 %v850
    %v3047 = vunpack.c.l.b16 %v851
    %v3048 = vunpack.c.l.b16 %v852
    %v3049 = vunpack.c.l.b16 %v853
    %v3050 = vunpack.c.l.b16 %v854
    %v3051 = vunpack.c.l.b16 %v855
    %v3052 = vunpack.c.l.b16 %v856
    %v3053 = vunpack.c.l.b16 %v857
    %v3054 = vunpack.c.l.b16 %v858
    %v3055 = vunpack.c.l.b16 %v859
    %v3056 = vunpack.c.l.b16 %v860
    %v3057 = vunpack.c.l.b16 %v861
    %v3058 = vunpack.c.l.b16 %v862
    %v3059 = vunpack.c.l.b16 %v863
    %v3060 = vunpack.c.l.b16 %v864
    %v3061 = vunpack.c.l.b16 %v865
    %v3062 = vunpack.c.l.b16 %v866
    %v3063 = vunpack.c.l.b16 %v867
    %v3064 = vunpack.c.l.b16 %v868
    %v3065 = vunpack.c.l.b16 %v869
    %v3066 = vunpack.c.l.b16 %v870
    %v3067 = vunpack.c.l.b16 %v871
    %v3068 = vunpack.c.l.b16 %v872
    %v3069 = vunpack.c.l.b16 %v873
    %v3070 = vunpack.c.l.b16 %v874
    %v3071 = vunpack.c.l.b16 %v875
    %v3072 = vunpack.c.l.b16 %v876
    %v3073 = vunpack.c.l.b16 %v877
    %v3074 = vunpack.c.l.b16 %v878
    %v3075 = vunpack.c.l.b16 %v879
    %v3076 = vunpack.c.l.b16 %v880
    %v3077 = vunpack.c.l.b16 %v881
    %v3078 = vunpack.c.l.b16 %v882
    %v3079 = vunpack.c.l.b16 %v883
    %v3080 = vunpack.c.l.b16 %v884
    %v3081 = vunpack.c.l.b16 %v885
    %v3082 = vunpack.c.l.b16 %v886
    %v3083 = vunpack.c.l.b16 %v887
    %v3084 = vunpack.c.l.b16 %v888
    %v3085 = vunpack.c.l.b16 %v889
    %v3086 = vunpack.c.l.b16 %v890
    %v3087 = vunpack.c.l.b16 %v891
    %v3088 = vunpack.c.l.b16 %v892
    %v3089 = vunpack.c.l.b16 %v893
    %v3090 = vunpack.c.l.b16 %v894
    %v3091 = vunpack.c.l.b16 %v895
    %v3092 = vunpack.c.l.b16 %v896
    %v3093 = vunpack.c.l.b16 %v897
    %v3094 = vunpack.c.l.b16 %v898
    %v3095 = vunpack.c.l.b16 %v899
    %v3096 = vunpack.c.l.b16 %v900
    %v3097 = vunpack.c.l.b16 %v901
    %v3098 = vunpack.c.l.b16 %v902
    %v3099 = vunpack.c.l.b16 %v903
    %v3100 = vunpack.c.l.b16 %v904
    %v3101 = vunpack.c.l.b16 %v905
    %v3102 = vunpack.c.l.b16 %v906
    %v3103 = vunpack.c.l.b16 %v907
    %v3104 = vunpack.c.l.b16 %v908
    %v3105 = vunpack.c.l.b16 %v909
    %v3106 = vunpack.c.l.b16 %v910
    %v3107 = vunpack.c.l.b16 %v911
    %v3108 = vunpack.c.l.b16 %v912
    %v3109 = vunpack.c.l.b16 %v913
    %v3110 = vunpack.c.l.b16 %v914
    %v3111 = vunpack.c.l.b16 %v915
    %v3112 = vunpack.c.l.b16 %v916
    %v3113 = vunpack.c.l.b16 %v917
    %v3114 = vunpack.c.l.b16 %v918
    %v3115 = vunpack.c.l.b16 %v919
    %v3116 = vunpack.c.l.b16 %v920
    %v3117 = vunpack.c.l.b16 %v921
    %v3118 = vunpack.c.l.b16 %v922
    %v3119 = vunpack.c.l.b16 %v923
    %v3120 = vunpack.c.l.b16 %v924
    %v3121 = vunpack.c.l.b16 %v925
    %v3122 = vunpack.c.l.b16 %v926
    %v3123 = vunpack.c.l.b16 %v927
    %v3124 = vunpack.c.l.b16 %v928
    %v3125 = vunpack.c.l.b16 %v929
    %v3126 = vunpack.c.l.b16 %v930
    %v3127 = vunpack.c.l.b16 %v931
    %v3128 = vunpack.c.l.b16 %v932
    %v3129 = vunpack.c.l.b16 %v933
    %v3130 = vunpack.c.l.b16 %v934
    %v3131 = vunpack.c.l.b16 %v935
    %v3132 = vunpack.c.l.b16 %v936
    %v3133 = vunpack.c.l.b16 %v937
    %v3134 = vunpack.c.l.b16 %v938
    %v3135 = vunpack.c.l.b16 %v939
    %v3136 = vunpack.c.l.b16 %v940
    %v3137 = vunpack.c.l.b16 %v941
    %v3138 = vunpack.c.l.b16 %v942
    %v3139 = vunpack.c.l.b16 %v943
    %v3140 = vunpack.c.l.b16 %v944
    %v3141 = vunpack.c.l.b16 %v945
    %v3142 = vunpack.c.l.b16 %v946
    %v3143 = vunpack.c.l.b16 %v947
    %v3144 = vunpack.c.l.b16 %v948
    %v3145 = vunpack.c.l.b16 %v949
    %v3146 = vunpack.c.l.b16 %v950
    %v3147 = vunpack.c.l.b16 %v951
    %v3148 = vunpack.c.l.b16 %v952
    %v3149 = vunpack.c.l.b16 %v953
    %v3150 = vunpack.c.l.b16 %v954
    %v3151 = vunpack.c.l.b16 %v955
    %v3152 = vunpack.c.l.b16 %v956
    %v3153 = vunpack.c.l.b16 %v957
    %v3154 = vunpack.c.l.b16 %v958
    %v3155 = vunpack.c.l.b16 %v959
    %v3156 = vunpack.c.l.b16 %v960
    %v3157 = vunpack.c.l.b16 %v961
    %v3158 = vunpack.c.l.b16 %v962
    %v3159 = vunpack.c.l.b16 %v963
    %v3160 = vunpack.c.l.b16 %v964
    %v3161 = vunpack.c.l.b16 %v965
    %v3162 = vunpack.c.l.b16 %v966
    %v3163 = vunpack.c.l.b16 %v967
    %v3164 = vunpack.c.l.b16 %v968
    %v3165 = vunpack.c.l.b16 %v969
    %v3166 = vunpack.c.l.b16 %v970
    %v3167 = vunpack.c.l.b16 %v971
    %v3168 = vunpack.c.l.b16 %v972
    %v3169 = vunpack.c.l.b16 %v973
    %v3170 = vunpack.c.l.b16 %v974
    %v3171 = vunpack.c.l.b16 %v975
    %v3172 = vunpack.c.l.b16 %v976
    %v3173 = vunpack.c.l.b16 %v977
    %v3174 = vunpack.c.l.b16 %v978
    %v3175 = vunpack.c.l.b16 %v979
    %v3176 = vunpack.c.l.b16 %v980
    %v3177 = vunpack.c.l.b16 %v981
    %v3178 = vunpack.c.l.b16 %v982
    %v3179 = vunpack.c.l.b16 %v983
    %v3180 = vunpack.c.l.b16 %v984
    %v3181 = vunpack.c.l.b16 %v985
    %v3182 = vunpack.c.l.b16 %v986
    %v3183 = vunpack.c.l.b16 %v987
    %v3184 = vunpack.c.l.b16 %v988
    %v3185 = vunpack.c.l.b16 %v989
    %v3186 = vunpack.c.l.b16 %v990
    %v3187 = vunpack.c.l.b16 %v991
    %v3188 = vunpack.c.l.b16 %v992
    %v3189 = vunpack.c.l.b16 %v993
    %v3190 = vunpack.c.l.b16 %v994
    %v3191 = vunpack.c.l.b16 %v995
    %v3192 = vunpack.c.l.b16 %v996
    %v3193 = vunpack.c.l.b16 %v997
    %v3194 = vunpack.c.l.b16 %v998
    %v3195 = vunpack.c.l.b16 %v999
    %v3196 = vunpack.c.l.b16 %v1000
    %v3197 = vunpack.c.l.b16 %v1001
    %v3198 = vunpack.c.l.b16 %v1002
    %v3199 = vunpack.c.l.b16 %v1003
    %v3200 = vunpack.c.l.b16 %v1004
    %v3201 = vunpack.c.l.b16 %v1005
    %v3202 = vunpack.c.l.b16 %v1006
    %v3203 = vunpack.c.l.b16 %v1007
    %v3204 = vunpack.c.l.b16 %v1008
    %v3205 = vunpack.c.l.b16 %v1009
    %v3206 = vunpack.c.l.b16 %v1010
    %v3207 = vunpack.c.l.b16 %v1011
    %v3208 = vunpack.c.l.b16 %v1012
    %v3209 = vunpack.c.l.b16 %v1013
    %v3210 = vunpack.c.l.b16 %v1014
    %v3211 = vunpack.c.l.b16 %v1015
    %v3212 = vunpack.c.l.b16 %v1016
    %v3213 = vunpack.c.l.b16 %v1017
    %v3214 = vunpack.c.l.b16 %v1018
    %v3215 = vunpack.c.l.b16 %v1019
    %v3216 = vunpack.c.l.b16 %v1020
    %v3217 = vunpack.c.l.b16 %v1021
    %v3218 = vunpack.c.l.b16 %v1022
    %v3219 = vunpack.c.l.b16 %v1023
    %v3220 = vunpack.c.l.b16 %v1024
    %v3221 = vunpack.c.l.b16 %v1025
    %v3222 = vunpack.c.l.b16 %v1026
    %v3223 = vunpack.c.l.b16 %v1027
    %v3224 = vunpack.c.l.b16 %v1028
    %v3225 = vunpack.c.l.b16 %v1029
    %v3226 = vunpack.c.l.b16 %v1030
    %v3227 = vunpack.c.l.b16 %v1031
    %v3228 = vunpack.c.l.b16 %v1032
    %v3229 = vunpack.c.l.b16 %v1033
    %v3230 = vunpack.c.l.b16 %v1034
    %v3231 = vunpack.c.l.b16 %v1035
    %v3232 = vunpack.c.l.b16 %v1036
    %v3233 = vunpack.c.l.b16 %v1037
    %v3234 = vunpack.c.l.b16 %v1038
    %v3235 = vunpack.c.l.b16 %v1039
    %v3236 = vunpack.c.l.b16 %v1040
    %v3237 = vunpack.c.l.b16 %v1041
    %v3238 = vunpack.c.l.b16 %v1042
    %v3239 = vunpack.c.l.b16 %v1043
    %v3240 = vunpack.c.l.b16 %v1044
    %v3241 = vunpack.c.l.b16 %v1045
    %v3242 = vunpack.c.l.b16 %v1046
    %v3243 = vunpack.c.l.b16 %v1047
    %v3244 = vunpack.c.l.b16 %v1048
    %v3245 = vunpack.c.l.b16 %v1049
    %v3246 = vunpack.c.l.b16 %v1050
    %v3247 = vunpack.c.l.b16 %v1051
    %v3248 = vunpack.c.l.b16 %v1052
    %v3249 = vpack.c.b16 %v2226, %v2225
    %v3250 = vpack.c.b16 %v2228, %v2227
    %v3251 = vpack.c.b16 %v2230, %v2229
    %v3252 = vpack.c.b16 %v2232, %v2231
    %v3253 = vpack.c.b16 %v2234, %v2233
    %v3254 = vpack.c.b16 %v2236, %v2235
    %v3255 = vpack.c.b16 %v2238, %v2237
    %v3256 = vpack.c.b16 %v2240, %v2239
    %v3257 = vpack.c.b16 %v2242, %v2241
    %v3258 = vpack.c.b16 %v2244, %v2243
    %v3259 = vpack.c.b16 %v2246, %v2245
    %v3260 = vpack.c.b16 %v2248, %v2247
    %v3261 = vpack.c.b16 %v2250, %v2249
    %v3262 = vpack.c.b16 %v2252, %v2251
    %v3263 = vpack.c.b16 %v2254, %v2253
    %v3264 = vpack.c.b16 %v2256, %v2255
    %v3265 = vpack.c.b16 %v2258, %v2257
    %v3266 = vpack.c.b16 %v2260, %v2259
    %v3267 = vpack.c.b16 %v2262, %v2261
    %v3268 = vpack.c.b16 %v2264, %v2263
    %v3269 = vpack.c.b16 %v2266, %v2265
    %v3270 = vpack.c.b16 %v2268, %v2267
    %v3271 = vpack.c.b16 %v2270, %v2269
    %v3272 = vpack.c.b16 %v2272, %v2271
    %v3273 = vpack.c.b16 %v2274, %v2273
    %v3274 = vpack.c.b16 %v2276, %v2275
    %v3275 = vpack.c.b16 %v2278, %v2277
    %v3276 = vpack.c.b16 %v2280, %v2279
    %v3277 = vpack.c.b16 %v2282, %v2281
    %v3278 = vpack.c.b16 %v2284, %v2283
    %v3279 = vpack.c.b16 %v2286, %v2285
    %v3280 = vpack.c.b16 %v2288, %v2287
    %v3281 = vpack.c.b16 %v2290, %v2289
    %v3282 = vpack.c.b16 %v2292, %v2291
    %v3283 = vpack.c.b16 %v2294, %v2293
    %v3284 = vpack.c.b16 %v2296, %v2295
    %v3285 = vpack.c.b16 %v2298, %v2297
    %v3286 = vpack.c.b16 %v2300, %v2299
    %v3287 = vpack.c.b16 %v2302, %v2301
    %v3288 = vpack.c.b16 %v2304, %v2303
    %v3289 = vpack.c.b16 %v2306, %v2305
    %v3290 = vpack.c.b16 %v2308, %v2307
    %v3291 = vpack.c.b16 %v2310, %v2309
    %v3292 = vpack.c.b16 %v2312, %v2311
    %v3293 = vpack.c.b16 %v2314, %v2313
    %v3294 = vpack.c.b16 %v2316, %v2315
    %v3295 = vpack.c.b16 %v2318, %v2317
    %v3296 = vpack.c.b16 %v2320, %v2319
    %v3297 = vpack.c.b16 %v2322, %v2321
    %v3298 = vpack.c.b16 %v2324, %v2323
    %v3299 = vpack.c.b16 %v2326, %v2325
    %v3300 = vpack.c.b16 %v2328, %v2327
    %v3301 = vpack.c.b16 %v2330, %v2329
    %v3302 = vpack.c.b16 %v2332, %v2331
    %v3303 = vpack.c.b16 %v2334, %v2333
    %v3304 = vpack.c.b16 %v2336, %v2335
    %v3305 = vpack.c.b16 %v2338, %v2337
    %v3306 = vpack.c.b16 %v2340, %v2339
    %v3307 = vpack.c.b16 %v2342, %v2341
    %v3308 = vpack.c.b16 %v2344, %v2343
    %v3309 = vpack.c.b16 %v2346, %v2345
    %v3310 = vpack.c.b16 %v2348, %v2347
    %v3311 = vpack.c.b16 %v2350, %v2349
    %v3312 = vpack.c.b16 %v2352, %v2351
    %v3313 = vpack.c.b16 %v2354, %v2353
    %v3314 = vpack.c.b16 %v2356, %v2355
    %v3315 = vpack.c.b16 %v2358, %v2357
    %v3316 = vpack.c.b16 %v2360, %v2359
    %v3317 = vpack.c.b16 %v2362, %v2361
    %v3318 = vpack.c.b16 %v2364, %v2363
    %v3319 = vpack.c.b16 %v2366, %v2365
    %v3320 = vpack.c.b16 %v2368, %v2367
    %v3321 = vpack.c.b16 %v2370, %v2369
    %v3322 = vpack.c.b16 %v2372, %v2371
    %v3323 = vpack.c.b16 %v2374, %v2373
    %v3324 = vpack.c.b16 %v2376, %v2375
    %v3325 = vpack.c.b16 %v2378, %v2377
    %v3326 = vpack.c.b16 %v2380, %v2379
    %v3327 = vpack.c.b16 %v2382, %v2381
    %v3328 = vpack.c.b16 %v2384, %v2383
    %v3329 = vpack.c.b16 %v2386, %v2385
    %v3330 = vpack.c.b16 %v2388, %v2387
    %v3331 = vpack.c.b16 %v2390, %v2389
    %v3332 = vpack.c.b16 %v2392, %v2391
    %v3333 = vpack.c.b16 %v2394, %v2393
    %v3334 = vpack.c.b16 %v2396, %v2395
    %v3335 = vpack.c.b16 %v2398, %v2397
    %v3336 = vpack.c.b16 %v2400, %v2399
    %v3337 = vpack.c.b16 %v2402, %v2401
    %v3338 = vpack.c.b16 %v2404, %v2403
    %v3339 = vpack.c.b16 %v2406, %v2405
    %v3340 = vpack.c.b16 %v2408, %v2407
    %v3341 = vpack.c.b16 %v2410, %v2409
    %v3342 = vpack.c.b16 %v2412, %v2411
    %v3343 = vpack.c.b16 %v2414, %v2413
    %v3344 = vpack.c.b16 %v2416, %v2415
    %v3345 = vpack.c.b16 %v2418, %v2417
    %v3346 = vpack.c.b16 %v2420, %v2419
    %v3347 = vpack.c.b16 %v2422, %v2421
    %v3348 = vpack.c.b16 %v2424, %v2423
    %v3349 = vpack.c.b16 %v2426, %v2425
    %v3350 = vpack.c.b16 %v2428, %v2427
    %v3351 = vpack.c.b16 %v2430, %v2429
    %v3352 = vpack.c.b16 %v2432, %v2431
    %v3353 = vpack.c.b16 %v2434, %v2433
    %v3354 = vpack.c.b16 %v2436, %v2435
    %v3355 = vpack.c.b16 %v2438, %v2437
    %v3356 = vpack.c.b16 %v2440, %v2439
    %v3357 = vpack.c.b16 %v2442, %v2441
    %v3358 = vpack.c.b16 %v2444, %v2443
    %v3359 = vpack.c.b16 %v2446, %v2445
    %v3360 = vpack.c.b16 %v2448, %v2447
    %v3361 = vpack.c.b16 %v2450, %v2449
    %v3362 = vpack.c.b16 %v2452, %v2451
    %v3363 = vpack.c.b16 %v2454, %v2453
    %v3364 = vpack.c.b16 %v2456, %v2455
    %v3365 = vpack.c.b16 %v2458, %v2457
    %v3366 = vpack.c.b16 %v2460, %v2459
    %v3367 = vpack.c.b16 %v2462, %v2461
    %v3368 = vpack.c.b16 %v2464, %v2463
    %v3369 = vpack.c.b16 %v2466, %v2465
    %v3370 = vpack.c.b16 %v2468, %v2467
    %v3371 = vpack.c.b16 %v2470, %v2469
    %v3372 = vpack.c.b16 %v2472, %v2471
    %v3373 = vpack.c.b16 %v2474, %v2473
    %v3374 = vpack.c.b16 %v2476, %v2475
    %v3375 = vpack.c.b16 %v2478, %v2477
    %v3376 = vpack.c.b16 %v2480, %v2479
    %v3377 = vpack.c.b16 %v2482, %v2481
    %v3378 = vpack.c.b16 %v2484, %v2483
    %v3379 = vpack.c.b16 %v2486, %v2485
    %v3380 = vpack.c.b16 %v2488, %v2487
    %v3381 = vpack.c.b16 %v2490, %v2489
    %v3382 = vpack.c.b16 %v2492, %v2491
    %v3383 = vpack.c.b16 %v2494, %v2493
    %v3384 = vpack.c.b16 %v2496, %v2495
    %v3385 = vpack.c.b16 %v2498, %v2497
    %v3386 = vpack.c.b16 %v2500, %v2499
    %v3387 = vpack.c.b16 %v2502, %v2501
    %v3388 = vpack.c.b16 %v2504, %v2503
    %v3389 = vpack.c.b16 %v2506, %v2505
    %v3390 = vpack.c.b16 %v2508, %v2507
    %v3391 = vpack.c.b16 %v2510, %v2509
    %v3392 = vpack.c.b16 %v2512, %v2511
    %v3393 = vpack.c.b16 %v2514, %v2513
    %v3394 = vpack.c.b16 %v2516, %v2515
    %v3395 = vpack.c.b16 %v2518, %v2517
    %v3396 = vpack.c.b16 %v2520, %v2519
    %v3397 = vpack.c.b16 %v2522, %v2521
    %v3398 = vpack.c.b16 %v2524, %v2523
    %v3399 = vpack.c.b16 %v2526, %v2525
    %v3400 = vpack.c.b16 %v2528, %v2527
    %v3401 = vpack.c.b16 %v2530, %v2529
    %v3402 = vpack.c.b16 %v2532, %v2531
    %v3403 = vpack.c.b16 %v2534, %v2533
    %v3404 = vpack.c.b16 %v2536, %v2535
    %v3405 = vpack.c.b16 %v2538, %v2537
    %v3406 = vpack.c.b16 %v2540, %v2539
    %v3407 = vpack.c.b16 %v2542, %v2541
    %v3408 = vpack.c.b16 %v2544, %v2543
    %v3409 = vpack.c.b16 %v2546, %v2545
    %v3410 = vpack.c.b16 %v2548, %v2547
    %v3411 = vpack.c.b16 %v2550, %v2549
    %v3412 = vpack.c.b16 %v2552, %v2551
    %v3413 = vpack.c.b16 %v2554, %v2553
    %v3414 = vpack.c.b16 %v2556, %v2555
    %v3415 = vpack.c.b16 %v2558, %v2557
    %v3416 = vpack.c.b16 %v2560, %v2559
    %v3417 = vpack.c.b16 %v2562, %v2561
    %v3418 = vpack.c.b16 %v2564, %v2563
    %v3419 = vpack.c.b16 %v2566, %v2565
    %v3420 = vpack.c.b16 %v2568, %v2567
    %v3421 = vpack.c.b16 %v2570, %v2569
    %v3422 = vpack.c.b16 %v2572, %v2571
    %v3423 = vpack.c.b16 %v2574, %v2573
    %v3424 = vpack.c.b16 %v2576, %v2575
    %v3425 = vpack.c.b16 %v2578, %v2577
    %v3426 = vpack.c.b16 %v2580, %v2579
    %v3427 = vpack.c.b16 %v2582, %v2581
    %v3428 = vpack.c.b16 %v2584, %v2583
    %v3429 = vpack.c.b16 %v2586, %v2585
    %v3430 = vpack.c.b16 %v2588, %v2587
    %v3431 = vpack.c.b16 %v2590, %v2589
    %v3432 = vpack.c.b16 %v2592, %v2591
    %v3433 = vpack.c.b16 %v2594, %v2593
    %v3434 = vpack.c.b16 %v2596, %v2595
    %v3435 = vpack.c.b16 %v2598, %v2597
    %v3436 = vpack.c.b16 %v2600, %v2599
    %v3437 = vpack.c.b16 %v2602, %v2601
    %v3438 = vpack.c.b16 %v2604, %v2603
    %v3439 = vpack.c.b16 %v2606, %v2605
    %v3440 = vpack.c.b16 %v2608, %v2607
    %v3441 = vpack.c.b16 %v2610, %v2609
    %v3442 = vpack.c.b16 %v2612, %v2611
    %v3443 = vpack.c.b16 %v2614, %v2613
    %v3444 = vpack.c.b16 %v2616, %v2615
    %v3445 = vpack.c.b16 %v2618, %v2617
    %v3446 = vpack.c.b16 %v2620, %v2619
    %v3447 = vpack.c.b16 %v2622, %v2621
    %v3448 = vpack.c.b16 %v2624, %v2623
    %v3449 = vpack.c.b16 %v2626, %v2625
    %v3450 = vpack.c.b16 %v2628, %v2627
    %v3451 = vpack.c.b16 %v2630, %v2629
    %v3452 = vpack.c.b16 %v2632, %v2631
    %v3453 = vpack.c.b16 %v2634, %v2633
    %v3454 = vpack.c.b16 %v2636, %v2635
    %v3455 = vpack.c.b16 %v2638, %v2637
    %v3456 = vpack.c.b16 %v2640, %v2639
    %v3457 = vpack.c.b16 %v2642, %v2641
    %v3458 = vpack.c.b16 %v2644, %v2643
    %v3459 = vpack.c.b16 %v2646, %v2645
    %v3460 = vpack.c.b16 %v2648, %v2647
    %v3461 = vpack.c.b16 %v2650, %v2649
    %v3462 = vpack.c.b16 %v2652, %v2651
    %v3463 = vpack.c.b16 %v2654, %v2653
    %v3464 = vpack.c.b16 %v2656, %v2655
    %v3465 = vpack.c.b16 %v2658, %v2657
    %v3466 = vpack.c.b16 %v2660, %v2659
    %v3467 = vpack.c.b16 %v2662, %v2661
    %v3468 = vpack.c.b16 %v2664, %v2663
    %v3469 = vpack.c.b16 %v2666, %v2665
    %v3470 = vpack.c.b16 %v2668, %v2667
    %v3471 = vpack.c.b16 %v2670, %v2669
    %v3472 = vpack.c.b16 %v2672, %v2671
    %v3473 = vpack.c.b16 %v2674, %v2673
    %v3474 = vpack.c.b16 %v2676, %v2675
    %v3475 = vpack.c.b16 %v2678, %v2677
    %v3476 = vpack.c.b16 %v2680, %v2679
    %v3477 = vpack.c.b16 %v2682, %v2681
    %v3478 = vpack.c.b16 %v2684, %v2683
    %v3479 = vpack.c.b16 %v2686, %v2685
    %v3480 = vpack.c.b16 %v2688, %v2687
    %v3481 = vpack.c.b16 %v2690, %v2689
    %v3482 = vpack.c.b16 %v2692, %v2691
    %v3483 = vpack.c.b16 %v2694, %v2693
    %v3484 = vpack.c.b16 %v2696, %v2695
    %v3485 = vpack.c.b16 %v2698, %v2697
    %v3486 = vpack.c.b16 %v2700, %v2699
    %v3487 = vpack.c.b16 %v2702, %v2701
    %v3488 = vpack.c.b16 %v2704, %v2703
    %v3489 = vpack.c.b16 %v2706, %v2705
    %v3490 = vpack.c.b16 %v2708, %v2707
    %v3491 = vpack.c.b16 %v2710, %v2709
    %v3492 = vpack.c.b16 %v2712, %v2711
    %v3493 = vpack.c.b16 %v2714, %v2713
    %v3494 = vpack.c.b16 %v2716, %v2715
    %v3495 = vpack.c.b16 %v2718, %v2717
    %v3496 = vpack.c.b16 %v2720, %v2719
    %v3497 = vpack.c.b16 %v2722, %v2721
    %v3498 = vpack.c.b16 %v2724, %v2723
    %v3499 = vpack.c.b16 %v2726, %v2725
    %v3500 = vpack.c.b16 %v2728, %v2727
    %v3501 = vpack.c.b16 %v2730, %v2729
    %v3502 = vpack.c.b16 %v2732, %v2731
    %v3503 = vpack.c.b16 %v2734, %v2733
    %v3504 = vpack.c.b16 %v2736, %v2735
    %v3505 = vpack.c.b16 %v2738, %v2737
    %v3506 = vpack.c.b16 %v2740, %v2739
    %v3507 = vpack.c.b16 %v2742, %v2741
    %v3508 = vpack.c.b16 %v2744, %v2743
    %v3509 = vpack.c.b16 %v2746, %v2745
    %v3510 = vpack.c.b16 %v2748, %v2747
    %v3511 = vpack.c.b16 %v2750, %v2749
    %v3512 = vpack.c.b16 %v2752, %v2751
    %v3513 = vpack.c.b16 %v2754, %v2753
    %v3514 = vpack.c.b16 %v2756, %v2755
    %v3515 = vpack.c.b16 %v2758, %v2757
    %v3516 = vpack.c.b16 %v2760, %v2759
    %v3517 = vpack.c.b16 %v2762, %v2761
    %v3518 = vpack.c.b16 %v2764, %v2763
    %v3519 = vpack.c.b16 %v2766, %v2765
    %v3520 = vpack.c.b16 %v2768, %v2767
    %v3521 = vpack.c.b16 %v2770, %v2769
    %v3522 = vpack.c.b16 %v2772, %v2771
    %v3523 = vpack.c.b16 %v2774, %v2773
    %v3524 = vpack.c.b16 %v2776, %v2775
    %v3525 = vpack.c.b16 %v2778, %v2777
    %v3526 = vpack.c.b16 %v2780, %v2779
    %v3527 = vpack.c.b16 %v2782, %v2781
    %v3528 = vpack.c.b16 %v2784, %v2783
    %v3529 = vpack.c.b16 %v2786, %v2785
    %v3530 = vpack.c.b16 %v2788, %v2787
    %v3531 = vpack.c.b16 %v2790, %v2789
    %v3532 = vpack.c.b16 %v2792, %v2791
    %v3533 = vpack.c.b16 %v2794, %v2793
    %v3534 = vpack.c.b16 %v2796, %v2795
    %v3535 = vpack.c.b16 %v2798, %v2797
    %v3536 = vpack.c.b16 %v2800, %v2799
    %v3537 = vpack.c.b16 %v2802, %v2801
    %v3538 = vpack.c.b16 %v2804, %v2803
    %v3539 = vpack.c.b16 %v2806, %v2805
    %v3540 = vpack.c.b16 %v2808, %v2807
    %v3541 = vpack.c.b16 %v2810, %v2809
    %v3542 = vpack.c.b16 %v2812, %v2811
    %v3543 = vpack.c.b16 %v2814, %v2813
    %v3544 = vpack.c.b16 %v2816, %v2815
    %v3545 = vpack.c.b16 %v2818, %v2817
    %v3546 = vpack.c.b16 %v2820, %v2819
    %v3547 = vpack.c.b16 %v2822, %v2821
    %v3548 = vpack.c.b16 %v2824, %v2823
    %v3549 = vpack.c.b16 %v2826, %v2825
    %v3550 = vpack.c.b16 %v2828, %v2827
    %v3551 = vpack.c.b16 %v2830, %v2829
    %v3552 = vpack.c.b16 %v2832, %v2831
    %v3553 = vpack.c.b16 %v2834, %v2833
    %v3554 = vpack.c.b16 %v2836, %v2835
    %v3555 = vpack.c.b16 %v2838, %v2837
    %v3556 = vpack.c.b16 %v2840, %v2839
    %v3557 = vpack.c.b16 %v2842, %v2841
    %v3558 = vpack.c.b16 %v2844, %v2843
    %v3559 = vpack.c.b16 %v2846, %v2845
    %v3560 = vpack.c.b16 %v2848, %v2847
    %v3561 = vpack.c.b16 %v2850, %v2849
    %v3562 = vpack.c.b16 %v2852, %v2851
    %v3563 = vpack.c.b16 %v2854, %v2853
    %v3564 = vpack.c.b16 %v2856, %v2855
    %v3565 = vpack.c.b16 %v2858, %v2857
    %v3566 = vpack.c.b16 %v2860, %v2859
    %v3567 = vpack.c.b16 %v2862, %v2861
    %v3568 = vpack.c.b16 %v2864, %v2863
    %v3569 = vpack.c.b16 %v2866, %v2865
    %v3570 = vpack.c.b16 %v2868, %v2867
    %v3571 = vpack.c.b16 %v2870, %v2869
    %v3572 = vpack.c.b16 %v2872, %v2871
    %v3573 = vpack.c.b16 %v2874, %v2873
    %v3574 = vpack.c.b16 %v2876, %v2875
    %v3575 = vpack.c.b16 %v2878, %v2877
    %v3576 = vpack.c.b16 %v2880, %v2879
    %v3577 = vpack.c.b16 %v2882, %v2881
    %v3578 = vpack.c.b16 %v2884, %v2883
    %v3579 = vpack.c.b16 %v2886, %v2885
    %v3580 = vpack.c.b16 %v2888, %v2887
    %v3581 = vpack.c.b16 %v2890, %v2889
    %v3582 = vpack.c.b16 %v2892, %v2891
    %v3583 = vpack.c.b16 %v2894, %v2893
    %v3584 = vpack.c.b16 %v2896, %v2895
    %v3585 = vpack.c.b16 %v2898, %v2897
    %v3586 = vpack.c.b16 %v2900, %v2899
    %v3587 = vpack.c.b16 %v2902, %v2901
    %v3588 = vpack.c.b16 %v2904, %v2903
    %v3589 = vpack.c.b16 %v2906, %v2905
    %v3590 = vpack.c.b16 %v2908, %v2907
    %v3591 = vpack.c.b16 %v2910, %v2909
    %v3592 = vpack.c.b16 %v2912, %v2911
    %v3593 = vpack.c.b16 %v2914, %v2913
    %v3594 = vpack.c.b16 %v2916, %v2915
    %v3595 = vpack.c.b16 %v2918, %v2917
    %v3596 = vpack.c.b16 %v2920, %v2919
    %v3597 = vpack.c.b16 %v2922, %v2921
    %v3598 = vpack.c.b16 %v2924, %v2923
    %v3599 = vpack.c.b16 %v2926, %v2925
    %v3600 = vpack.c.b16 %v2928, %v2927
    %v3601 = vpack.c.b16 %v2930, %v2929
    %v3602 = vpack.c.b16 %v2932, %v2931
    %v3603 = vpack.c.b16 %v2934, %v2933
    %v3604 = vpack.c.b16 %v2936, %v2935
    %v3605 = vpack.c.b16 %v2938, %v2937
    %v3606 = vpack.c.b16 %v2940, %v2939
    %v3607 = vpack.c.b16 %v2942, %v2941
    %v3608 = vpack.c.b16 %v2944, %v2943
    %v3609 = vpack.c.b16 %v2946, %v2945
    %v3610 = vpack.c.b16 %v2948, %v2947
    %v3611 = vpack.c.b16 %v2950, %v2949
    %v3612 = vpack.c.b16 %v2952, %v2951
    %v3613 = vpack.c.b16 %v2954, %v2953
    %v3614 = vpack.c.b16 %v2956, %v2955
    %v3615 = vpack.c.b16 %v2958, %v2957
    %v3616 = vpack.c.b16 %v2960, %v2959
    %v3617 = vpack.c.b16 %v2962, %v2961
    %v3618 = vpack.c.b16 %v2964, %v2963
    %v3619 = vpack.c.b16 %v2966, %v2965
    %v3620 = vpack.c.b16 %v2968, %v2967
    %v3621 = vpack.c.b16 %v2970, %v2969
    %v3622 = vpack.c.b16 %v2972, %v2971
    %v3623 = vpack.c.b16 %v2974, %v2973
    %v3624 = vpack.c.b16 %v2976, %v2975
    %v3625 = vpack.c.b16 %v2978, %v2977
    %v3626 = vpack.c.b16 %v2980, %v2979
    %v3627 = vpack.c.b16 %v2982, %v2981
    %v3628 = vpack.c.b16 %v2984, %v2983
    %v3629 = vpack.c.b16 %v2986, %v2985
    %v3630 = vpack.c.b16 %v2988, %v2987
    %v3631 = vpack.c.b16 %v2990, %v2989
    %v3632 = vpack.c.b16 %v2992, %v2991
    %v3633 = vpack.c.b16 %v2994, %v2993
    %v3634 = vpack.c.b16 %v2996, %v2995
    %v3635 = vpack.c.b16 %v2998, %v2997
    %v3636 = vpack.c.b16 %v3000, %v2999
    %v3637 = vpack.c.b16 %v3002, %v3001
    %v3638 = vpack.c.b16 %v3004, %v3003
    %v3639 = vpack.c.b16 %v3006, %v3005
    %v3640 = vpack.c.b16 %v3008, %v3007
    %v3641 = vpack.c.b16 %v3010, %v3009
    %v3642 = vpack.c.b16 %v3012, %v3011
    %v3643 = vpack.c.b16 %v3014, %v3013
    %v3644 = vpack.c.b16 %v3016, %v3015
    %v3645 = vpack.c.b16 %v3018, %v3017
    %v3646 = vpack.c.b16 %v3020, %v3019
    %v3647 = vpack.c.b16 %v3022, %v3021
    %v3648 = vpack.c.b16 %v3024, %v3023
    %v3649 = vpack.c.b16 %v3026, %v3025
    %v3650 = vpack.c.b16 %v3028, %v3027
    %v3651 = vpack.c.b16 %v3030, %v3029
    %v3652 = vpack.c.b16 %v3032, %v3031
    %v3653 = vpack.c.b16 %v3034, %v3033
    %v3654 = vpack.c.b16 %v3036, %v3035
    %v3655 = vpack.c.b16 %v3038, %v3037
    %v3656 = vpack.c.b16 %v3040, %v3039
    %v3657 = vpack.c.b16 %v3042, %v3041
    %v3658 = vpack.c.b16 %v3044, %v3043
    %v3659 = vpack.c.b16 %v3046, %v3045
    %v3660 = vpack.c.b16 %v3048, %v3047
    %v3661 = vpack.c.b16 %v3050, %v3049
    %v3662 = vpack.c.b16 %v3052, %v3051
    %v3663 = vpack.c.b16 %v3054, %v3053
    %v3664 = vpack.c.b16 %v3056, %v3055
    %v3665 = vpack.c.b16 %v3058, %v3057
    %v3666 = vpack.c.b16 %v3060, %v3059
    %v3667 = vpack.c.b16 %v3062, %v3061
    %v3668 = vpack.c.b16 %v3064, %v3063
    %v3669 = vpack.c.b16 %v3066, %v3065
    %v3670 = vpack.c.b16 %v3068, %v3067
    %v3671 = vpack.c.b16 %v3070, %v3069
    %v3672 = vpack.c.b16 %v3072, %v3071
    %v3673 = vpack.c.b16 %v3074, %v3073
    %v3674 = vpack.c.b16 %v3076, %v3075
    %v3675 = vpack.c.b16 %v3078, %v3077
    %v3676 = vpack.c.b16 %v3080, %v3079
    %v3677 = vpack.c.b16 %v3082, %v3081
    %v3678 = vpack.c.b16 %v3084, %v3083
    %v3679 = vpack.c.b16 %v3086, %v3085
    %v3680 = vpack.c.b16 %v3088, %v3087
    %v3681 = vpack.c.b16 %v3090, %v3089
    %v3682 = vpack.c.b16 %v3092, %v3091
    %v3683 = vpack.c.b16 %v3094, %v3093
    %v3684 = vpack.c.b16 %v3096, %v3095
    %v3685 = vpack.c.b16 %v3098, %v3097
    %v3686 = vpack.c.b16 %v3100, %v3099
    %v3687 = vpack.c.b16 %v3102, %v3101
    %v3688 = vpack.c.b16 %v3104, %v3103
    %v3689 = vpack.c.b16 %v3106, %v3105
    %v3690 = vpack.c.b16 %v3108, %v3107
    %v3691 = vpack.c.b16 %v3110, %v3109
    %v3692 = vpack.c.b16 %v3112, %v3111
    %v3693 = vpack.c.b16 %v3114, %v3113
    %v3694 = vpack.c.b16 %v3116, %v3115
    %v3695 = vpack.c.b16 %v3118, %v3117
    %v3696 = vpack.c.b16 %v3120, %v3119
    %v3697 = vpack.c.b16 %v3122, %v3121
    %v3698 = vpack.c.b16 %v3124, %v3123
    %v3699 = vpack.c.b16 %v3126, %v3125
    %v3700 = vpack.c.b16 %v3128, %v3127
    %v3701 = vpack.c.b16 %v3130, %v3129
    %v3702 = vpack.c.b16 %v3132, %v3131
    %v3703 = vpack.c.b16 %v3134, %v3133
    %v3704 = vpack.c.b16 %v3136, %v3135
    %v3705 = vpack.c.b16 %v3138, %v3137
    %v3706 = vpack.c.b16 %v3140, %v3139
    %v3707 = vpack.c.b16 %v3142, %v3141
    %v3708 = vpack.c.b16 %v3144, %v3143
    %v3709 = vpack.c.b16 %v3146, %v3145
    %v3710 = vpack.c.b16 %v3148, %v3147
    %v3711 = vpack.c.b16 %v3150, %v3149
    %v3712 = vpack.c.b16 %v3152, %v3151
    %v3713 = vpack.c.b16 %v3154, %v3153
    %v3714 = vpack.c.b16 %v3156, %v3155
    %v3715 = vpack.c.b16 %v3158, %v3157
    %v3716 = vpack.c.b16 %v3160, %v3159
    %v3717 = vpack.c.b16 %v3162, %v3161
    %v3718 = vpack.c.b16 %v3164, %v3163
    %v3719 = vpack.c.b16 %v3166, %v3165
    %v3720 = vpack.c.b16 %v3168, %v3167
    %v3721 = vpack.c.b16 %v3170, %v3169
    %v3722 = vpack.c.b16 %v3172, %v3171
    %v3723 = vpack.c.b16 %v3174, %v3173
    %v3724 = vpack.c.b16 %v3176, %v3175
    %v3725 = vpack.c.b16 %v3178, %v3177
    %v3726 = vpack.c.b16 %v3180, %v3179
    %v3727 = vpack.c.b16 %v3182, %v3181
    %v3728 = vpack.c.b16 %v3184, %v3183
    %v3729 = vpack.c.b16 %v3186, %v3185
    %v3730 = vpack.c.b16 %v3188, %v3187
    %v3731 = vpack.c.b16 %v3190, %v3189
    %v3732 = vpack.c.b16 %v3192, %v3191
    %v3733 = vpack.c.b16 %v3194, %v3193
    %v3734 = vpack.c.b16 %v3196, %v3195
    %v3735 = vpack.c.b16 %v3198, %v3197
    %v3736 = vpack.c.b16 %v3200, %v3199
    %v3737 = vpack.c.b16 %v3202, %v3201
    %v3738 = vpack.c.b16 %v3204, %v3203
    %v3739 = vpack.c.b16 %v3206, %v3205
    %v3740 = vpack.c.b16 %v3208, %v3207
    %v3741 = vpack.c.b16 %v3210, %v3209
    %v3742 = vpack.c.b16 %v3212, %v3211
    %v3743 = vpack.c.b16 %v3214, %v3213
    %v3744 = vpack.c.b16 %v3216, %v3215
    %v3745 = vpack.c.b16 %v3218, %v3217
    %v3746 = vpack.c.b16 %v3220, %v3219
    %v3747 = vpack.c.b16 %v3222, %v3221
    %v3748 = vpack.c.b16 %v3224, %v3223
    %v3749 = vpack.c.b16 %v3226, %v3225
    %v3750 = vpack.c.b16 %v3228, %v3227
    %v3751 = vpack.c.b16 %v3230, %v3229
    %v3752 = vpack.c.b16 %v3232, %v3231
    %v3753 = vpack.c.b16 %v3234, %v3233
    %v3754 = vpack.c.b16 %v3236, %v3235
    %v3755 = vpack.c.b16 %v3238, %v3237
    %v3756 = vpack.c.b16 %v3240, %v3239
    %v3757 = vpack.c.b16 %v3242, %v3241
    %v3758 = vpack.c.b16 %v3244, %v3243
    %v3759 = vpack.c.b16 %v3246, %v3245
    %v3760 = vpack.c.b16 %v3248, %v3247
    %4273 = vmatpush.bf16.msra.mxu0 %v3256
    %4274 = vmatpush.bf16.msra.mxu0 %v3255
    %4275 = vmatpush.bf16.msra.mxu0 %v3254
    %4276 = vmatpush.bf16.msra.mxu0 %v3253
    %4277 = vmatpush.bf16.msra.mxu0 %v3252
    %4278 = vmatpush.bf16.msra.mxu0 %v3251
    %4279 = vmatpush.bf16.msra.mxu0 %v3250
    %4280 = vmatpush.bf16.msra.mxu0 %v3249
    %4281 = vmatmul.bf16.gmra.mxu0 %v1059
    %v4282 = vpop.f32.mrf.mxu0
    %v4283 = vadd.f32 %v1055, %v4282
    %v4284 = vpop.f32.mrf.mxu0
    %4285 = vdwg.mxu0
    %4286 = vmatpush.bf16.msra.mxu0 %v3264
    %4287 = vmatpush.bf16.msra.mxu0 %v3263
    %4288 = vmatpush.bf16.msra.mxu0 %v3262
    %4289 = vmatpush.bf16.msra.mxu0 %v3261
    %4290 = vmatpush.bf16.msra.mxu0 %v3260
    %4291 = vmatpush.bf16.msra.mxu0 %v3259
    %4292 = vmatpush.bf16.msra.mxu0 %v3258
    %4293 = vmatpush.bf16.msra.mxu0 %v3257
    %4294 = vmatmul.bf16.gmra.mxu0 %v1060
    %v4295 = vpop.f32.mrf.mxu0
    %v4296 = vadd.f32 %v4283, %v4295
    %v4297 = vpop.f32.mrf.mxu0
    %4298 = vdwg.mxu0
    %4299 = vmatpush.bf16.msra.mxu0 %v3272
    %4300 = vmatpush.bf16.msra.mxu0 %v3271
    %4301 = vmatpush.bf16.msra.mxu0 %v3270
    %4302 = vmatpush.bf16.msra.mxu0 %v3269
    %4303 = vmatpush.bf16.msra.mxu0 %v3268
    %4304 = vmatpush.bf16.msra.mxu0 %v3267
    %4305 = vmatpush.bf16.msra.mxu0 %v3266
    %4306 = vmatpush.bf16.msra.mxu0 %v3265
    %4307 = vmatmul.bf16.gmra.mxu0 %v1061
    %v4308 = vpop.f32.mrf.mxu0
    %v4309 = vadd.f32 %v4296, %v4308
    %v4310 = vpop.f32.mrf.mxu0
    %4311 = vdwg.mxu0
    %4312 = vmatpush.bf16.msra.mxu0 %v3280
    %4313 = vmatpush.bf16.msra.mxu0 %v3279
    %4314 = vmatpush.bf16.msra.mxu0 %v3278
    %4315 = vmatpush.bf16.msra.mxu0 %v3277
    %4316 = vmatpush.bf16.msra.mxu0 %v3276
    %4317 = vmatpush.bf16.msra.mxu0 %v3275
    %4318 = vmatpush.bf16.msra.mxu0 %v3274
    %4319 = vmatpush.bf16.msra.mxu0 %v3273
    %4320 = vmatmul.bf16.gmra.mxu0 %v1062
    %v4321 = vpop.f32.mrf.mxu0
    %v4322 = vadd.f32 %v4309, %v4321
    %v4323 = vpop.f32.mrf.mxu0
    %4324 = vdwg.mxu0
    %4325 = vmatpush.bf16.msra.mxu0 %v3288
    %4326 = vmatpush.bf16.msra.mxu0 %v3287
    %4327 = vmatpush.bf16.msra.mxu0 %v3286
    %4328 = vmatpush.bf16.msra.mxu0 %v3285
    %4329 = vmatpush.bf16.msra.mxu0 %v3284
    %4330 = vmatpush.bf16.msra.mxu0 %v3283
    %4331 = vmatpush.bf16.msra.mxu0 %v3282
    %4332 = vmatpush.bf16.msra.mxu0 %v3281
    %4333 = vmatmul.bf16.gmra.mxu0 %v1063
    %v4334 = vpop.f32.mrf.mxu0
    %v4335 = vadd.f32 %v4322, %v4334
    %v4336 = vpop.f32.mrf.mxu0
    %4337 = vdwg.mxu0
    %4338 = vmatpush.bf16.msra.mxu0 %v3296
    %4339 = vmatpush.bf16.msra.mxu0 %v3295
    %4340 = vmatpush.bf16.msra.mxu0 %v3294
    %4341 = vmatpush.bf16.msra.mxu0 %v3293
    %4342 = vmatpush.bf16.msra.mxu0 %v3292
    %4343 = vmatpush.bf16.msra.mxu0 %v3291
    %4344 = vmatpush.bf16.msra.mxu0 %v3290
    %4345 = vmatpush.bf16.msra.mxu0 %v3289
    %4346 = vmatmul.bf16.gmra.mxu0 %v1064
    %v4347 = vpop.f32.mrf.mxu0
    %v4348 = vadd.f32 %v4335, %v4347
    %v4349 = vpop.f32.mrf.mxu0
    %4350 = vdwg.mxu0
    %4351 = vmatpush.bf16.msra.mxu0 %v3304
    %4352 = vmatpush.bf16.msra.mxu0 %v3303
    %4353 = vmatpush.bf16.msra.mxu0 %v3302
    %4354 = vmatpush.bf16.msra.mxu0 %v3301
    %4355 = vmatpush.bf16.msra.mxu0 %v3300
    %4356 = vmatpush.bf16.msra.mxu0 %v3299
    %4357 = vmatpush.bf16.msra.mxu0 %v3298
    %4358 = vmatpush.bf16.msra.mxu0 %v3297
    %4359 = vmatmul.bf16.gmra.mxu0 %v1065
    %v4360 = vpop.f32.mrf.mxu0
    %v4361 = vadd.f32 %v4348, %v4360
    %v4362 = vpop.f32.mrf.mxu0
    %4363 = vdwg.mxu0
    %4364 = vmatpush.bf16.msra.mxu0 %v3312
    %4365 = vmatpush.bf16.msra.mxu0 %v3311
    %4366 = vmatpush.bf16.msra.mxu0 %v3310
    %4367 = vmatpush.bf16.msra.mxu0 %v3309
    %4368 = vmatpush.bf16.msra.mxu0 %v3308
    %4369 = vmatpush.bf16.msra.mxu0 %v3307
    %4370 = vmatpush.bf16.msra.mxu0 %v3306
    %4371 = vmatpush.bf16.msra.mxu0 %v3305
    %4372 = vmatmul.bf16.gmra.mxu0 %v1066
    %v4373 = vpop.f32.mrf.mxu0
    %v4374 = vadd.f32 %v4361, %v4373
    %v4375 = vpop.f32.mrf.mxu0
    %4376 = vdwg.mxu0
    %4377 = vmatpush.bf16.msra.mxu0 %v3320
    %4378 = vmatpush.bf16.msra.mxu0 %v3319
    %4379 = vmatpush.bf16.msra.mxu0 %v3318
    %4380 = vmatpush.bf16.msra.mxu0 %v3317
    %4381 = vmatpush.bf16.msra.mxu0 %v3316
    %4382 = vmatpush.bf16.msra.mxu0 %v3315
    %4383 = vmatpush.bf16.msra.mxu0 %v3314
    %4384 = vmatpush.bf16.msra.mxu0 %v3313
    %4385 = vmatmul.bf16.gmra.mxu0 %v1069
    %v4386 = vpop.f32.mrf.mxu0
    %v4387 = vadd.f32 %v4374, %v4386
    %v4388 = vpop.f32.mrf.mxu0
    %4389 = vdwg.mxu0
    %4390 = vmatpush.bf16.msra.mxu0 %v3328
    %4391 = vmatpush.bf16.msra.mxu0 %v3327
    %4392 = vmatpush.bf16.msra.mxu0 %v3326
    %4393 = vmatpush.bf16.msra.mxu0 %v3325
    %4394 = vmatpush.bf16.msra.mxu0 %v3324
    %4395 = vmatpush.bf16.msra.mxu0 %v3323
    %4396 = vmatpush.bf16.msra.mxu0 %v3322
    %4397 = vmatpush.bf16.msra.mxu0 %v3321
    %4398 = vmatmul.bf16.gmra.mxu0 %v1070
    %v4399 = vpop.f32.mrf.mxu0
    %v4400 = vadd.f32 %v4387, %v4399
    %v4401 = vpop.f32.mrf.mxu0
    %4402 = vdwg.mxu0
    %4403 = vmatpush.bf16.msra.mxu0 %v3336
    %4404 = vmatpush.bf16.msra.mxu0 %v3335
    %4405 = vmatpush.bf16.msra.mxu0 %v3334
    %4406 = vmatpush.bf16.msra.mxu0 %v3333
    %4407 = vmatpush.bf16.msra.mxu0 %v3332
    %4408 = vmatpush.bf16.msra.mxu0 %v3331
    %4409 = vmatpush.bf16.msra.mxu0 %v3330
    %4410 = vmatpush.bf16.msra.mxu0 %v3329
    %4411 = vmatmul.bf16.gmra.mxu0 %v1071
    %v4412 = vpop.f32.mrf.mxu0
    %v4413 = vadd.f32 %v4400, %v4412
    %v4414 = vpop.f32.mrf.mxu0
    %4415 = vdwg.mxu0
    %4416 = vmatpush.bf16.msra.mxu0 %v3344
    %4417 = vmatpush.bf16.msra.mxu0 %v3343
    %4418 = vmatpush.bf16.msra.mxu0 %v3342
    %4419 = vmatpush.bf16.msra.mxu0 %v3341
    %4420 = vmatpush.bf16.msra.mxu0 %v3340
    %4421 = vmatpush.bf16.msra.mxu0 %v3339
    %4422 = vmatpush.bf16.msra.mxu0 %v3338
    %4423 = vmatpush.bf16.msra.mxu0 %v3337
    %4424 = vmatmul.bf16.gmra.mxu0 %v1072
    %v4425 = vpop.f32.mrf.mxu0
    %v4426 = vadd.f32 %v4413, %v4425
    %v4427 = vpop.f32.mrf.mxu0
    %4428 = vdwg.mxu0
    %4429 = vmatpush.bf16.msra.mxu0 %v3352
    %4430 = vmatpush.bf16.msra.mxu0 %v3351
    %4431 = vmatpush.bf16.msra.mxu0 %v3350
    %4432 = vmatpush.bf16.msra.mxu0 %v3349
    %4433 = vmatpush.bf16.msra.mxu0 %v3348
    %4434 = vmatpush.bf16.msra.mxu0 %v3347
    %4435 = vmatpush.bf16.msra.mxu0 %v3346
    %4436 = vmatpush.bf16.msra.mxu0 %v3345
    %4437 = vmatmul.bf16.gmra.mxu0 %v1073
    %v4438 = vpop.f32.mrf.mxu0
    %v4439 = vadd.f32 %v4426, %v4438
    %v4440 = vpop.f32.mrf.mxu0
    %4441 = vdwg.mxu0
    %4442 = vmatpush.bf16.msra.mxu0 %v3360
    %4443 = vmatpush.bf16.msra.mxu0 %v3359
    %4444 = vmatpush.bf16.msra.mxu0 %v3358
    %4445 = vmatpush.bf16.msra.mxu0 %v3357
    %4446 = vmatpush.bf16.msra.mxu0 %v3356
    %4447 = vmatpush.bf16.msra.mxu0 %v3355
    %4448 = vmatpush.bf16.msra.mxu0 %v3354
    %4449 = vmatpush.bf16.msra.mxu0 %v3353
    %4450 = vmatmul.bf16.gmra.mxu0 %v1074
    %v4451 = vpop.f32.mrf.mxu0
    %v4452 = vadd.f32 %v4439, %v4451
    %v4453 = vpop.f32.mrf.mxu0
    %4454 = vdwg.mxu0
    %4455 = vmatpush.bf16.msra.mxu0 %v3368
    %4456 = vmatpush.bf16.msra.mxu0 %v3367
    %4457 = vmatpush.bf16.msra.mxu0 %v3366
    %4458 = vmatpush.bf16.msra.mxu0 %v3365
    %4459 = vmatpush.bf16.msra.mxu0 %v3364
    %4460 = vmatpush.bf16.msra.mxu0 %v3363
    %4461 = vmatpush.bf16.msra.mxu0 %v3362
    %4462 = vmatpush.bf16.msra.mxu0 %v3361
    %4463 = vmatmul.bf16.gmra.mxu0 %v1075
    %v4464 = vpop.f32.mrf.mxu0
    %v4465 = vadd.f32 %v4452, %v4464
    %v4466 = vpop.f32.mrf.mxu0
    %4467 = vdwg.mxu0
    %4468 = vmatpush.bf16.msra.mxu0 %v3376
    %4469 = vmatpush.bf16.msra.mxu0 %v3375
    %4470 = vmatpush.bf16.msra.mxu0 %v3374
    %4471 = vmatpush.bf16.msra.mxu0 %v3373
    %4472 = vmatpush.bf16.msra.mxu0 %v3372
    %4473 = vmatpush.bf16.msra.mxu0 %v3371
    %4474 = vmatpush.bf16.msra.mxu0 %v3370
    %4475 = vmatpush.bf16.msra.mxu0 %v3369
    %4476 = vmatmul.bf16.gmra.mxu0 %v1076
    %v4477 = vpop.f32.mrf.mxu0
    %v4478 = vadd.f32 %v4465, %v4477
    %v4479 = vpop.f32.mrf.mxu0
    %4480 = vdwg.mxu0
    %4481 = vmatpush.bf16.msra.mxu0 %v3384
    %4482 = vmatpush.bf16.msra.mxu0 %v3383
    %4483 = vmatpush.bf16.msra.mxu0 %v3382
    %4484 = vmatpush.bf16.msra.mxu0 %v3381
    %4485 = vmatpush.bf16.msra.mxu0 %v3380
    %4486 = vmatpush.bf16.msra.mxu0 %v3379
    %4487 = vmatpush.bf16.msra.mxu0 %v3378
    %4488 = vmatpush.bf16.msra.mxu0 %v3377
    %4489 = vmatmul.bf16.gmra.mxu0 %v1079
    %v4490 = vpop.f32.mrf.mxu0
    %v4491 = vadd.f32 %v4478, %v4490
    %v4492 = vpop.f32.mrf.mxu0
    %4493 = vdwg.mxu0
    %4494 = vmatpush.bf16.msra.mxu0 %v3392
    %4495 = vmatpush.bf16.msra.mxu0 %v3391
    %4496 = vmatpush.bf16.msra.mxu0 %v3390
    %4497 = vmatpush.bf16.msra.mxu0 %v3389
    %4498 = vmatpush.bf16.msra.mxu0 %v3388
    %4499 = vmatpush.bf16.msra.mxu0 %v3387
    %4500 = vmatpush.bf16.msra.mxu0 %v3386
    %4501 = vmatpush.bf16.msra.mxu0 %v3385
    %4502 = vmatmul.bf16.gmra.mxu0 %v1080
    %v4503 = vpop.f32.mrf.mxu0
    %v4504 = vadd.f32 %v4491, %v4503
    %v4505 = vpop.f32.mrf.mxu0
    %4506 = vdwg.mxu0
    %4507 = vmatpush.bf16.msra.mxu0 %v3400
    %4508 = vmatpush.bf16.msra.mxu0 %v3399
    %4509 = vmatpush.bf16.msra.mxu0 %v3398
    %4510 = vmatpush.bf16.msra.mxu0 %v3397
    %4511 = vmatpush.bf16.msra.mxu0 %v3396
    %4512 = vmatpush.bf16.msra.mxu0 %v3395
    %4513 = vmatpush.bf16.msra.mxu0 %v3394
    %4514 = vmatpush.bf16.msra.mxu0 %v3393
    %4515 = vmatmul.bf16.gmra.mxu0 %v1081
    %v4516 = vpop.f32.mrf.mxu0
    %v4517 = vadd.f32 %v4504, %v4516
    %v4518 = vpop.f32.mrf.mxu0
    %4519 = vdwg.mxu0
    %4520 = vmatpush.bf16.msra.mxu0 %v3408
    %4521 = vmatpush.bf16.msra.mxu0 %v3407
    %4522 = vmatpush.bf16.msra.mxu0 %v3406
    %4523 = vmatpush.bf16.msra.mxu0 %v3405
    %4524 = vmatpush.bf16.msra.mxu0 %v3404
    %4525 = vmatpush.bf16.msra.mxu0 %v3403
    %4526 = vmatpush.bf16.msra.mxu0 %v3402
    %4527 = vmatpush.bf16.msra.mxu0 %v3401
    %4528 = vmatmul.bf16.gmra.mxu0 %v1082
    %v4529 = vpop.f32.mrf.mxu0
    %v4530 = vadd.f32 %v4517, %v4529
    %v4531 = vpop.f32.mrf.mxu0
    %4532 = vdwg.mxu0
    %4533 = vmatpush.bf16.msra.mxu0 %v3416
    %4534 = vmatpush.bf16.msra.mxu0 %v3415
    %4535 = vmatpush.bf16.msra.mxu0 %v3414
    %4536 = vmatpush.bf16.msra.mxu0 %v3413
    %4537 = vmatpush.bf16.msra.mxu0 %v3412
    %4538 = vmatpush.bf16.msra.mxu0 %v3411
    %4539 = vmatpush.bf16.msra.mxu0 %v3410
    %4540 = vmatpush.bf16.msra.mxu0 %v3409
    %4541 = vmatmul.bf16.gmra.mxu0 %v1083
    %v4542 = vpop.f32.mrf.mxu0
    %v4543 = vadd.f32 %v4530, %v4542
    %v4544 = vpop.f32.mrf.mxu0
    %4545 = vdwg.mxu0
    %4546 = vmatpush.bf16.msra.mxu0 %v3424
    %4547 = vmatpush.bf16.msra.mxu0 %v3423
    %4548 = vmatpush.bf16.msra.mxu0 %v3422
    %4549 = vmatpush.bf16.msra.mxu0 %v3421
    %4550 = vmatpush.bf16.msra.mxu0 %v3420
    %4551 = vmatpush.bf16.msra.mxu0 %v3419
    %4552 = vmatpush.bf16.msra.mxu0 %v3418
    %4553 = vmatpush.bf16.msra.mxu0 %v3417
    %4554 = vmatmul.bf16.gmra.mxu0 %v1084
    %v4555 = vpop.f32.mrf.mxu0
    %v4556 = vadd.f32 %v4543, %v4555
    %v4557 = vpop.f32.mrf.mxu0
    %4558 = vdwg.mxu0
    %4559 = vmatpush.bf16.msra.mxu0 %v3432
    %4560 = vmatpush.bf16.msra.mxu0 %v3431
    %4561 = vmatpush.bf16.msra.mxu0 %v3430
    %4562 = vmatpush.bf16.msra.mxu0 %v3429
    %4563 = vmatpush.bf16.msra.mxu0 %v3428
    %4564 = vmatpush.bf16.msra.mxu0 %v3427
    %4565 = vmatpush.bf16.msra.mxu0 %v3426
    %4566 = vmatpush.bf16.msra.mxu0 %v3425
    %4567 = vmatmul.bf16.gmra.mxu0 %v1085
    %v4568 = vpop.f32.mrf.mxu0
    %v4569 = vadd.f32 %v4556, %v4568
    %v4570 = vpop.f32.mrf.mxu0
    %4571 = vdwg.mxu0
    %4572 = vmatpush.bf16.msra.mxu0 %v3440
    %4573 = vmatpush.bf16.msra.mxu0 %v3439
    %4574 = vmatpush.bf16.msra.mxu0 %v3438
    %4575 = vmatpush.bf16.msra.mxu0 %v3437
    %4576 = vmatpush.bf16.msra.mxu0 %v3436
    %4577 = vmatpush.bf16.msra.mxu0 %v3435
    %4578 = vmatpush.bf16.msra.mxu0 %v3434
    %4579 = vmatpush.bf16.msra.mxu0 %v3433
    %4580 = vmatmul.bf16.gmra.mxu0 %v1086
    %v4581 = vpop.f32.mrf.mxu0
    %v4582 = vadd.f32 %v4569, %v4581
    %v4583 = vpop.f32.mrf.mxu0
    %4584 = vdwg.mxu0
    %4585 = vmatpush.bf16.msra.mxu0 %v3448
    %4586 = vmatpush.bf16.msra.mxu0 %v3447
    %4587 = vmatpush.bf16.msra.mxu0 %v3446
    %4588 = vmatpush.bf16.msra.mxu0 %v3445
    %4589 = vmatpush.bf16.msra.mxu0 %v3444
    %4590 = vmatpush.bf16.msra.mxu0 %v3443
    %4591 = vmatpush.bf16.msra.mxu0 %v3442
    %4592 = vmatpush.bf16.msra.mxu0 %v3441
    %4593 = vmatmul.bf16.gmra.mxu0 %v1089
    %v4594 = vpop.f32.mrf.mxu0
    %v4595 = vadd.f32 %v4582, %v4594
    %v4596 = vpop.f32.mrf.mxu0
    %4597 = vdwg.mxu0
    %4598 = vmatpush.bf16.msra.mxu0 %v3456
    %4599 = vmatpush.bf16.msra.mxu0 %v3455
    %4600 = vmatpush.bf16.msra.mxu0 %v3454
    %4601 = vmatpush.bf16.msra.mxu0 %v3453
    %4602 = vmatpush.bf16.msra.mxu0 %v3452
    %4603 = vmatpush.bf16.msra.mxu0 %v3451
    %4604 = vmatpush.bf16.msra.mxu0 %v3450
    %4605 = vmatpush.bf16.msra.mxu0 %v3449
    %4606 = vmatmul.bf16.gmra.mxu0 %v1090
    %v4607 = vpop.f32.mrf.mxu0
    %v4608 = vadd.f32 %v4595, %v4607
    %v4609 = vpop.f32.mrf.mxu0
    %4610 = vdwg.mxu0
    %4611 = vmatpush.bf16.msra.mxu0 %v3464
    %4612 = vmatpush.bf16.msra.mxu0 %v3463
    %4613 = vmatpush.bf16.msra.mxu0 %v3462
    %4614 = vmatpush.bf16.msra.mxu0 %v3461
    %4615 = vmatpush.bf16.msra.mxu0 %v3460
    %4616 = vmatpush.bf16.msra.mxu0 %v3459
    %4617 = vmatpush.bf16.msra.mxu0 %v3458
    %4618 = vmatpush.bf16.msra.mxu0 %v3457
    %4619 = vmatmul.bf16.gmra.mxu0 %v1091
    %v4620 = vpop.f32.mrf.mxu0
    %v4621 = vadd.f32 %v4608, %v4620
    %v4622 = vpop.f32.mrf.mxu0
    %4623 = vdwg.mxu0
    %4624 = vmatpush.bf16.msra.mxu0 %v3472
    %4625 = vmatpush.bf16.msra.mxu0 %v3471
    %4626 = vmatpush.bf16.msra.mxu0 %v3470
    %4627 = vmatpush.bf16.msra.mxu0 %v3469
    %4628 = vmatpush.bf16.msra.mxu0 %v3468
    %4629 = vmatpush.bf16.msra.mxu0 %v3467
    %4630 = vmatpush.bf16.msra.mxu0 %v3466
    %4631 = vmatpush.bf16.msra.mxu0 %v3465
    %4632 = vmatmul.bf16.gmra.mxu0 %v1092
    %v4633 = vpop.f32.mrf.mxu0
    %v4634 = vadd.f32 %v4621, %v4633
    %v4635 = vpop.f32.mrf.mxu0
    %4636 = vdwg.mxu0
    %4637 = vmatpush.bf16.msra.mxu0 %v3480
    %4638 = vmatpush.bf16.msra.mxu0 %v3479
    %4639 = vmatpush.bf16.msra.mxu0 %v3478
    %4640 = vmatpush.bf16.msra.mxu0 %v3477
    %4641 = vmatpush.bf16.msra.mxu0 %v3476
    %4642 = vmatpush.bf16.msra.mxu0 %v3475
    %4643 = vmatpush.bf16.msra.mxu0 %v3474
    %4644 = vmatpush.bf16.msra.mxu0 %v3473
    %4645 = vmatmul.bf16.gmra.mxu0 %v1093
    %v4646 = vpop.f32.mrf.mxu0
    %v4647 = vadd.f32 %v4634, %v4646
    %v4648 = vpop.f32.mrf.mxu0
    %4649 = vdwg.mxu0
    %4650 = vmatpush.bf16.msra.mxu0 %v3488
    %4651 = vmatpush.bf16.msra.mxu0 %v3487
    %4652 = vmatpush.bf16.msra.mxu0 %v3486
    %4653 = vmatpush.bf16.msra.mxu0 %v3485
    %4654 = vmatpush.bf16.msra.mxu0 %v3484
    %4655 = vmatpush.bf16.msra.mxu0 %v3483
    %4656 = vmatpush.bf16.msra.mxu0 %v3482
    %4657 = vmatpush.bf16.msra.mxu0 %v3481
    %4658 = vmatmul.bf16.gmra.mxu0 %v1094
    %v4659 = vpop.f32.mrf.mxu0
    %v4660 = vadd.f32 %v4647, %v4659
    %v4661 = vpop.f32.mrf.mxu0
    %4662 = vdwg.mxu0
    %4663 = vmatpush.bf16.msra.mxu0 %v3496
    %4664 = vmatpush.bf16.msra.mxu0 %v3495
    %4665 = vmatpush.bf16.msra.mxu0 %v3494
    %4666 = vmatpush.bf16.msra.mxu0 %v3493
    %4667 = vmatpush.bf16.msra.mxu0 %v3492
    %4668 = vmatpush.bf16.msra.mxu0 %v3491
    %4669 = vmatpush.bf16.msra.mxu0 %v3490
    %4670 = vmatpush.bf16.msra.mxu0 %v3489
    %4671 = vmatmul.bf16.gmra.mxu0 %v1095
    %v4672 = vpop.f32.mrf.mxu0
    %v4673 = vadd.f32 %v4660, %v4672
    %v4674 = vpop.f32.mrf.mxu0
    %4675 = vdwg.mxu0
    %4676 = vmatpush.bf16.msra.mxu0 %v3504
    %4677 = vmatpush.bf16.msra.mxu0 %v3503
    %4678 = vmatpush.bf16.msra.mxu0 %v3502
    %4679 = vmatpush.bf16.msra.mxu0 %v3501
    %4680 = vmatpush.bf16.msra.mxu0 %v3500
    %4681 = vmatpush.bf16.msra.mxu0 %v3499
    %4682 = vmatpush.bf16.msra.mxu0 %v3498
    %4683 = vmatpush.bf16.msra.mxu0 %v3497
    %4684 = vmatmul.bf16.gmra.mxu0 %v1096
    %v4685 = vpop.f32.mrf.mxu0
    %v4686 = vadd.f32 %v4673, %v4685
    %v4687 = vpop.f32.mrf.mxu0
    %4688 = vdwg.mxu0
    %4689 = vmatpush.bf16.msra.mxu0 %v3512
    %4690 = vmatpush.bf16.msra.mxu0 %v3511
    %4691 = vmatpush.bf16.msra.mxu0 %v3510
    %4692 = vmatpush.bf16.msra.mxu0 %v3509
    %4693 = vmatpush.bf16.msra.mxu0 %v3508
    %4694 = vmatpush.bf16.msra.mxu0 %v3507
    %4695 = vmatpush.bf16.msra.mxu0 %v3506
    %4696 = vmatpush.bf16.msra.mxu0 %v3505
    %4697 = vmatmul.bf16.gmra.mxu0 %v1099
    %v4698 = vpop.f32.mrf.mxu0
    %v4699 = vadd.f32 %v4686, %v4698
    %v4700 = vpop.f32.mrf.mxu0
    %4701 = vdwg.mxu0
    %4702 = vmatpush.bf16.msra.mxu0 %v3520
    %4703 = vmatpush.bf16.msra.mxu0 %v3519
    %4704 = vmatpush.bf16.msra.mxu0 %v3518
    %4705 = vmatpush.bf16.msra.mxu0 %v3517
    %4706 = vmatpush.bf16.msra.mxu0 %v3516
    %4707 = vmatpush.bf16.msra.mxu0 %v3515
    %4708 = vmatpush.bf16.msra.mxu0 %v3514
    %4709 = vmatpush.bf16.msra.mxu0 %v3513
    %4710 = vmatmul.bf16.gmra.mxu0 %v1100
    %v4711 = vpop.f32.mrf.mxu0
    %v4712 = vadd.f32 %v4699, %v4711
    %v4713 = vpop.f32.mrf.mxu0
    %4714 = vdwg.mxu0
    %4715 = vmatpush.bf16.msra.mxu0 %v3528
    %4716 = vmatpush.bf16.msra.mxu0 %v3527
    %4717 = vmatpush.bf16.msra.mxu0 %v3526
    %4718 = vmatpush.bf16.msra.mxu0 %v3525
    %4719 = vmatpush.bf16.msra.mxu0 %v3524
    %4720 = vmatpush.bf16.msra.mxu0 %v3523
    %4721 = vmatpush.bf16.msra.mxu0 %v3522
    %4722 = vmatpush.bf16.msra.mxu0 %v3521
    %4723 = vmatmul.bf16.gmra.mxu0 %v1101
    %v4724 = vpop.f32.mrf.mxu0
    %v4725 = vadd.f32 %v4712, %v4724
    %v4726 = vpop.f32.mrf.mxu0
    %4727 = vdwg.mxu0
    %4728 = vmatpush.bf16.msra.mxu0 %v3536
    %4729 = vmatpush.bf16.msra.mxu0 %v3535
    %4730 = vmatpush.bf16.msra.mxu0 %v3534
    %4731 = vmatpush.bf16.msra.mxu0 %v3533
    %4732 = vmatpush.bf16.msra.mxu0 %v3532
    %4733 = vmatpush.bf16.msra.mxu0 %v3531
    %4734 = vmatpush.bf16.msra.mxu0 %v3530
    %4735 = vmatpush.bf16.msra.mxu0 %v3529
    %4736 = vmatmul.bf16.gmra.mxu0 %v1102
    %v4737 = vpop.f32.mrf.mxu0
    %v4738 = vadd.f32 %v4725, %v4737
    %v4739 = vpop.f32.mrf.mxu0
    %4740 = vdwg.mxu0
    %4741 = vmatpush.bf16.msra.mxu0 %v3544
    %4742 = vmatpush.bf16.msra.mxu0 %v3543
    %4743 = vmatpush.bf16.msra.mxu0 %v3542
    %4744 = vmatpush.bf16.msra.mxu0 %v3541
    %4745 = vmatpush.bf16.msra.mxu0 %v3540
    %4746 = vmatpush.bf16.msra.mxu0 %v3539
    %4747 = vmatpush.bf16.msra.mxu0 %v3538
    %4748 = vmatpush.bf16.msra.mxu0 %v3537
    %4749 = vmatmul.bf16.gmra.mxu0 %v1103
    %v4750 = vpop.f32.mrf.mxu0
    %v4751 = vadd.f32 %v4738, %v4750
    %v4752 = vpop.f32.mrf.mxu0
    %4753 = vdwg.mxu0
    %4754 = vmatpush.bf16.msra.mxu0 %v3552
    %4755 = vmatpush.bf16.msra.mxu0 %v3551
    %4756 = vmatpush.bf16.msra.mxu0 %v3550
    %4757 = vmatpush.bf16.msra.mxu0 %v3549
    %4758 = vmatpush.bf16.msra.mxu0 %v3548
    %4759 = vmatpush.bf16.msra.mxu0 %v3547
    %4760 = vmatpush.bf16.msra.mxu0 %v3546
    %4761 = vmatpush.bf16.msra.mxu0 %v3545
    %4762 = vmatmul.bf16.gmra.mxu0 %v1104
    %v4763 = vpop.f32.mrf.mxu0
    %v4764 = vadd.f32 %v4751, %v4763
    %v4765 = vpop.f32.mrf.mxu0
    %4766 = vdwg.mxu0
    %4767 = vmatpush.bf16.msra.mxu0 %v3560
    %4768 = vmatpush.bf16.msra.mxu0 %v3559
    %4769 = vmatpush.bf16.msra.mxu0 %v3558
    %4770 = vmatpush.bf16.msra.mxu0 %v3557
    %4771 = vmatpush.bf16.msra.mxu0 %v3556
    %4772 = vmatpush.bf16.msra.mxu0 %v3555
    %4773 = vmatpush.bf16.msra.mxu0 %v3554
    %4774 = vmatpush.bf16.msra.mxu0 %v3553
    %4775 = vmatmul.bf16.gmra.mxu0 %v1105
    %v4776 = vpop.f32.mrf.mxu0
    %v4777 = vadd.f32 %v4764, %v4776
    %v4778 = vpop.f32.mrf.mxu0
    %4779 = vdwg.mxu0
    %4780 = vmatpush.bf16.msra.mxu0 %v3568
    %4781 = vmatpush.bf16.msra.mxu0 %v3567
    %4782 = vmatpush.bf16.msra.mxu0 %v3566
    %4783 = vmatpush.bf16.msra.mxu0 %v3565
    %4784 = vmatpush.bf16.msra.mxu0 %v3564
    %4785 = vmatpush.bf16.msra.mxu0 %v3563
    %4786 = vmatpush.bf16.msra.mxu0 %v3562
    %4787 = vmatpush.bf16.msra.mxu0 %v3561
    %4788 = vmatmul.bf16.gmra.mxu0 %v1106
    %v4789 = vpop.f32.mrf.mxu0
    %v4790 = vadd.f32 %v4777, %v4789
    %v4791 = vpop.f32.mrf.mxu0
    %4792 = vdwg.mxu0
    %4793 = vmatpush.bf16.msra.mxu0 %v3576
    %4794 = vmatpush.bf16.msra.mxu0 %v3575
    %4795 = vmatpush.bf16.msra.mxu0 %v3574
    %4796 = vmatpush.bf16.msra.mxu0 %v3573
    %4797 = vmatpush.bf16.msra.mxu0 %v3572
    %4798 = vmatpush.bf16.msra.mxu0 %v3571
    %4799 = vmatpush.bf16.msra.mxu0 %v3570
    %4800 = vmatpush.bf16.msra.mxu0 %v3569
    %4801 = vmatmul.bf16.gmra.mxu0 %v1109
    %v4802 = vpop.f32.mrf.mxu0
    %v4803 = vadd.f32 %v4790, %v4802
    %v4804 = vpop.f32.mrf.mxu0
    %4805 = vdwg.mxu0
    %4806 = vmatpush.bf16.msra.mxu0 %v3584
    %4807 = vmatpush.bf16.msra.mxu0 %v3583
    %4808 = vmatpush.bf16.msra.mxu0 %v3582
    %4809 = vmatpush.bf16.msra.mxu0 %v3581
    %4810 = vmatpush.bf16.msra.mxu0 %v3580
    %4811 = vmatpush.bf16.msra.mxu0 %v3579
    %4812 = vmatpush.bf16.msra.mxu0 %v3578
    %4813 = vmatpush.bf16.msra.mxu0 %v3577
    %4814 = vmatmul.bf16.gmra.mxu0 %v1110
    %v4815 = vpop.f32.mrf.mxu0
    %v4816 = vadd.f32 %v4803, %v4815
    %v4817 = vpop.f32.mrf.mxu0
    %4818 = vdwg.mxu0
    %4819 = vmatpush.bf16.msra.mxu0 %v3592
    %4820 = vmatpush.bf16.msra.mxu0 %v3591
    %4821 = vmatpush.bf16.msra.mxu0 %v3590
    %4822 = vmatpush.bf16.msra.mxu0 %v3589
    %4823 = vmatpush.bf16.msra.mxu0 %v3588
    %4824 = vmatpush.bf16.msra.mxu0 %v3587
    %4825 = vmatpush.bf16.msra.mxu0 %v3586
    %4826 = vmatpush.bf16.msra.mxu0 %v3585
    %4827 = vmatmul.bf16.gmra.mxu0 %v1111
    %v4828 = vpop.f32.mrf.mxu0
    %v4829 = vadd.f32 %v4816, %v4828
    %v4830 = vpop.f32.mrf.mxu0
    %4831 = vdwg.mxu0
    %4832 = vmatpush.bf16.msra.mxu0 %v3600
    %4833 = vmatpush.bf16.msra.mxu0 %v3599
    %4834 = vmatpush.bf16.msra.mxu0 %v3598
    %4835 = vmatpush.bf16.msra.mxu0 %v3597
    %4836 = vmatpush.bf16.msra.mxu0 %v3596
    %4837 = vmatpush.bf16.msra.mxu0 %v3595
    %4838 = vmatpush.bf16.msra.mxu0 %v3594
    %4839 = vmatpush.bf16.msra.mxu0 %v3593
    %4840 = vmatmul.bf16.gmra.mxu0 %v1112
    %v4841 = vpop.f32.mrf.mxu0
    %v4842 = vadd.f32 %v4829, %v4841
    %v4843 = vpop.f32.mrf.mxu0
    %4844 = vdwg.mxu0
    %4845 = vmatpush.bf16.msra.mxu0 %v3608
    %4846 = vmatpush.bf16.msra.mxu0 %v3607
    %4847 = vmatpush.bf16.msra.mxu0 %v3606
    %4848 = vmatpush.bf16.msra.mxu0 %v3605
    %4849 = vmatpush.bf16.msra.mxu0 %v3604
    %4850 = vmatpush.bf16.msra.mxu0 %v3603
    %4851 = vmatpush.bf16.msra.mxu0 %v3602
    %4852 = vmatpush.bf16.msra.mxu0 %v3601
    %4853 = vmatmul.bf16.gmra.mxu0 %v1113
    %v4854 = vpop.f32.mrf.mxu0
    %v4855 = vadd.f32 %v4842, %v4854
    %v4856 = vpop.f32.mrf.mxu0
    %4857 = vdwg.mxu0
    %4858 = vmatpush.bf16.msra.mxu0 %v3616
    %4859 = vmatpush.bf16.msra.mxu0 %v3615
    %4860 = vmatpush.bf16.msra.mxu0 %v3614
    %4861 = vmatpush.bf16.msra.mxu0 %v3613
    %4862 = vmatpush.bf16.msra.mxu0 %v3612
    %4863 = vmatpush.bf16.msra.mxu0 %v3611
    %4864 = vmatpush.bf16.msra.mxu0 %v3610
    %4865 = vmatpush.bf16.msra.mxu0 %v3609
    %4866 = vmatmul.bf16.gmra.mxu0 %v1114
    %v4867 = vpop.f32.mrf.mxu0
    %v4868 = vadd.f32 %v4855, %v4867
    %v4869 = vpop.f32.mrf.mxu0
    %4870 = vdwg.mxu0
    %4871 = vmatpush.bf16.msra.mxu0 %v3624
    %4872 = vmatpush.bf16.msra.mxu0 %v3623
    %4873 = vmatpush.bf16.msra.mxu0 %v3622
    %4874 = vmatpush.bf16.msra.mxu0 %v3621
    %4875 = vmatpush.bf16.msra.mxu0 %v3620
    %4876 = vmatpush.bf16.msra.mxu0 %v3619
    %4877 = vmatpush.bf16.msra.mxu0 %v3618
    %4878 = vmatpush.bf16.msra.mxu0 %v3617
    %4879 = vmatmul.bf16.gmra.mxu0 %v1115
    %v4880 = vpop.f32.mrf.mxu0
    %v4881 = vadd.f32 %v4868, %v4880
    %v4882 = vpop.f32.mrf.mxu0
    %4883 = vdwg.mxu0
    %4884 = vmatpush.bf16.msra.mxu0 %v3632
    %4885 = vmatpush.bf16.msra.mxu0 %v3631
    %4886 = vmatpush.bf16.msra.mxu0 %v3630
    %4887 = vmatpush.bf16.msra.mxu0 %v3629
    %4888 = vmatpush.bf16.msra.mxu0 %v3628
    %4889 = vmatpush.bf16.msra.mxu0 %v3627
    %4890 = vmatpush.bf16.msra.mxu0 %v3626
    %4891 = vmatpush.bf16.msra.mxu0 %v3625
    %4892 = vmatmul.bf16.gmra.mxu0 %v1116
    %v4893 = vpop.f32.mrf.mxu0
    %v4894 = vadd.f32 %v4881, %v4893
    %v4895 = vpop.f32.mrf.mxu0
    %4896 = vdwg.mxu0
    %4897 = vmatpush.bf16.msra.mxu0 %v3640
    %4898 = vmatpush.bf16.msra.mxu0 %v3639
    %4899 = vmatpush.bf16.msra.mxu0 %v3638
    %4900 = vmatpush.bf16.msra.mxu0 %v3637
    %4901 = vmatpush.bf16.msra.mxu0 %v3636
    %4902 = vmatpush.bf16.msra.mxu0 %v3635
    %4903 = vmatpush.bf16.msra.mxu0 %v3634
    %4904 = vmatpush.bf16.msra.mxu0 %v3633
    %4905 = vmatmul.bf16.gmra.mxu0 %v1119
    %v4906 = vpop.f32.mrf.mxu0
    %v4907 = vadd.f32 %v4894, %v4906
    %v4908 = vpop.f32.mrf.mxu0
    %4909 = vdwg.mxu0
    %4910 = vmatpush.bf16.msra.mxu0 %v3648
    %4911 = vmatpush.bf16.msra.mxu0 %v3647
    %4912 = vmatpush.bf16.msra.mxu0 %v3646
    %4913 = vmatpush.bf16.msra.mxu0 %v3645
    %4914 = vmatpush.bf16.msra.mxu0 %v3644
    %4915 = vmatpush.bf16.msra.mxu0 %v3643
    %4916 = vmatpush.bf16.msra.mxu0 %v3642
    %4917 = vmatpush.bf16.msra.mxu0 %v3641
    %4918 = vmatmul.bf16.gmra.mxu0 %v1120
    %v4919 = vpop.f32.mrf.mxu0
    %v4920 = vadd.f32 %v4907, %v4919
    %v4921 = vpop.f32.mrf.mxu0
    %4922 = vdwg.mxu0
    %4923 = vmatpush.bf16.msra.mxu0 %v3656
    %4924 = vmatpush.bf16.msra.mxu0 %v3655
    %4925 = vmatpush.bf16.msra.mxu0 %v3654
    %4926 = vmatpush.bf16.msra.mxu0 %v3653
    %4927 = vmatpush.bf16.msra.mxu0 %v3652
    %4928 = vmatpush.bf16.msra.mxu0 %v3651
    %4929 = vmatpush.bf16.msra.mxu0 %v3650
    %4930 = vmatpush.bf16.msra.mxu0 %v3649
    %4931 = vmatmul.bf16.gmra.mxu0 %v1121
    %v4932 = vpop.f32.mrf.mxu0
    %v4933 = vadd.f32 %v4920, %v4932
    %v4934 = vpop.f32.mrf.mxu0
    %4935 = vdwg.mxu0
    %4936 = vmatpush.bf16.msra.mxu0 %v3664
    %4937 = vmatpush.bf16.msra.mxu0 %v3663
    %4938 = vmatpush.bf16.msra.mxu0 %v3662
    %4939 = vmatpush.bf16.msra.mxu0 %v3661
    %4940 = vmatpush.bf16.msra.mxu0 %v3660
    %4941 = vmatpush.bf16.msra.mxu0 %v3659
    %4942 = vmatpush.bf16.msra.mxu0 %v3658
    %4943 = vmatpush.bf16.msra.mxu0 %v3657
    %4944 = vmatmul.bf16.gmra.mxu0 %v1122
    %v4945 = vpop.f32.mrf.mxu0
    %v4946 = vadd.f32 %v4933, %v4945
    %v4947 = vpop.f32.mrf.mxu0
    %4948 = vdwg.mxu0
    %4949 = vmatpush.bf16.msra.mxu0 %v3672
    %4950 = vmatpush.bf16.msra.mxu0 %v3671
    %4951 = vmatpush.bf16.msra.mxu0 %v3670
    %4952 = vmatpush.bf16.msra.mxu0 %v3669
    %4953 = vmatpush.bf16.msra.mxu0 %v3668
    %4954 = vmatpush.bf16.msra.mxu0 %v3667
    %4955 = vmatpush.bf16.msra.mxu0 %v3666
    %4956 = vmatpush.bf16.msra.mxu0 %v3665
    %4957 = vmatmul.bf16.gmra.mxu0 %v1123
    %v4958 = vpop.f32.mrf.mxu0
    %v4959 = vadd.f32 %v4946, %v4958
    %v4960 = vpop.f32.mrf.mxu0
    %4961 = vdwg.mxu0
    %4962 = vmatpush.bf16.msra.mxu0 %v3680
    %4963 = vmatpush.bf16.msra.mxu0 %v3679
    %4964 = vmatpush.bf16.msra.mxu0 %v3678
    %4965 = vmatpush.bf16.msra.mxu0 %v3677
    %4966 = vmatpush.bf16.msra.mxu0 %v3676
    %4967 = vmatpush.bf16.msra.mxu0 %v3675
    %4968 = vmatpush.bf16.msra.mxu0 %v3674
    %4969 = vmatpush.bf16.msra.mxu0 %v3673
    %4970 = vmatmul.bf16.gmra.mxu0 %v1124
    %v4971 = vpop.f32.mrf.mxu0
    %v4972 = vadd.f32 %v4959, %v4971
    %v4973 = vpop.f32.mrf.mxu0
    %4974 = vdwg.mxu0
    %4975 = vmatpush.bf16.msra.mxu0 %v3688
    %4976 = vmatpush.bf16.msra.mxu0 %v3687
    %4977 = vmatpush.bf16.msra.mxu0 %v3686
    %4978 = vmatpush.bf16.msra.mxu0 %v3685
    %4979 = vmatpush.bf16.msra.mxu0 %v3684
    %4980 = vmatpush.bf16.msra.mxu0 %v3683
    %4981 = vmatpush.bf16.msra.mxu0 %v3682
    %4982 = vmatpush.bf16.msra.mxu0 %v3681
    %4983 = vmatmul.bf16.gmra.mxu0 %v1125
    %v4984 = vpop.f32.mrf.mxu0
    %v4985 = vadd.f32 %v4972, %v4984
    %v4986 = vpop.f32.mrf.mxu0
    %4987 = vdwg.mxu0
    %4988 = vmatpush.bf16.msra.mxu0 %v3696
    %4989 = vmatpush.bf16.msra.mxu0 %v3695
    %4990 = vmatpush.bf16.msra.mxu0 %v3694
    %4991 = vmatpush.bf16.msra.mxu0 %v3693
    %4992 = vmatpush.bf16.msra.mxu0 %v3692
    %4993 = vmatpush.bf16.msra.mxu0 %v3691
    %4994 = vmatpush.bf16.msra.mxu0 %v3690
    %4995 = vmatpush.bf16.msra.mxu0 %v3689
    %4996 = vmatmul.bf16.gmra.mxu0 %v1126
    %v4997 = vpop.f32.mrf.mxu0
    %v4998 = vadd.f32 %v4985, %v4997
    %v4999 = vpop.f32.mrf.mxu0
    %5000 = vdwg.mxu0
    %5001 = vmatpush.bf16.msra.mxu0 %v3704
    %5002 = vmatpush.bf16.msra.mxu0 %v3703
    %5003 = vmatpush.bf16.msra.mxu0 %v3702
    %5004 = vmatpush.bf16.msra.mxu0 %v3701
    %5005 = vmatpush.bf16.msra.mxu0 %v3700
    %5006 = vmatpush.bf16.msra.mxu0 %v3699
    %5007 = vmatpush.bf16.msra.mxu0 %v3698
    %5008 = vmatpush.bf16.msra.mxu0 %v3697
    %5009 = vmatmul.bf16.gmra.mxu0 %v1129
    %v5010 = vpop.f32.mrf.mxu0
    %v5011 = vadd.f32 %v4998, %v5010
    %v5012 = vpop.f32.mrf.mxu0
    %5013 = vdwg.mxu0
    %5014 = vmatpush.bf16.msra.mxu0 %v3712
    %5015 = vmatpush.bf16.msra.mxu0 %v3711
    %5016 = vmatpush.bf16.msra.mxu0 %v3710
    %5017 = vmatpush.bf16.msra.mxu0 %v3709
    %5018 = vmatpush.bf16.msra.mxu0 %v3708
    %5019 = vmatpush.bf16.msra.mxu0 %v3707
    %5020 = vmatpush.bf16.msra.mxu0 %v3706
    %5021 = vmatpush.bf16.msra.mxu0 %v3705
    %5022 = vmatmul.bf16.gmra.mxu0 %v1130
    %v5023 = vpop.f32.mrf.mxu0
    %v5024 = vadd.f32 %v5011, %v5023
    %v5025 = vpop.f32.mrf.mxu0
    %5026 = vdwg.mxu0
    %5027 = vmatpush.bf16.msra.mxu0 %v3720
    %5028 = vmatpush.bf16.msra.mxu0 %v3719
    %5029 = vmatpush.bf16.msra.mxu0 %v3718
    %5030 = vmatpush.bf16.msra.mxu0 %v3717
    %5031 = vmatpush.bf16.msra.mxu0 %v3716
    %5032 = vmatpush.bf16.msra.mxu0 %v3715
    %5033 = vmatpush.bf16.msra.mxu0 %v3714
    %5034 = vmatpush.bf16.msra.mxu0 %v3713
    %5035 = vmatmul.bf16.gmra.mxu0 %v1131
    %v5036 = vpop.f32.mrf.mxu0
    %v5037 = vadd.f32 %v5024, %v5036
    %v5038 = vpop.f32.mrf.mxu0
    %5039 = vdwg.mxu0
    %5040 = vmatpush.bf16.msra.mxu0 %v3728
    %5041 = vmatpush.bf16.msra.mxu0 %v3727
    %5042 = vmatpush.bf16.msra.mxu0 %v3726
    %5043 = vmatpush.bf16.msra.mxu0 %v3725
    %5044 = vmatpush.bf16.msra.mxu0 %v3724
    %5045 = vmatpush.bf16.msra.mxu0 %v3723
    %5046 = vmatpush.bf16.msra.mxu0 %v3722
    %5047 = vmatpush.bf16.msra.mxu0 %v3721
    %5048 = vmatmul.bf16.gmra.mxu0 %v1132
    %v5049 = vpop.f32.mrf.mxu0
    %v5050 = vadd.f32 %v5037, %v5049
    %v5051 = vpop.f32.mrf.mxu0
    %5052 = vdwg.mxu0
    %5053 = vmatpush.bf16.msra.mxu0 %v3736
    %5054 = vmatpush.bf16.msra.mxu0 %v3735
    %5055 = vmatpush.bf16.msra.mxu0 %v3734
    %5056 = vmatpush.bf16.msra.mxu0 %v3733
    %5057 = vmatpush.bf16.msra.mxu0 %v3732
    %5058 = vmatpush.bf16.msra.mxu0 %v3731
    %5059 = vmatpush.bf16.msra.mxu0 %v3730
    %5060 = vmatpush.bf16.msra.mxu0 %v3729
    %5061 = vmatmul.bf16.gmra.mxu0 %v1133
    %v5062 = vpop.f32.mrf.mxu0
    %v5063 = vadd.f32 %v5050, %v5062
    %v5064 = vpop.f32.mrf.mxu0
    %5065 = vdwg.mxu0
    %5066 = vmatpush.bf16.msra.mxu0 %v3744
    %5067 = vmatpush.bf16.msra.mxu0 %v3743
    %5068 = vmatpush.bf16.msra.mxu0 %v3742
    %5069 = vmatpush.bf16.msra.mxu0 %v3741
    %5070 = vmatpush.bf16.msra.mxu0 %v3740
    %5071 = vmatpush.bf16.msra.mxu0 %v3739
    %5072 = vmatpush.bf16.msra.mxu0 %v3738
    %5073 = vmatpush.bf16.msra.mxu0 %v3737
    %5074 = vmatmul.bf16.gmra.mxu0 %v1134
    %v5075 = vpop.f32.mrf.mxu0
    %v5076 = vadd.f32 %v5063, %v5075
    %v5077 = vpop.f32.mrf.mxu0
    %5078 = vdwg.mxu0
    %5079 = vmatpush.bf16.msra.mxu0 %v3752
    %5080 = vmatpush.bf16.msra.mxu0 %v3751
    %5081 = vmatpush.bf16.msra.mxu0 %v3750
    %5082 = vmatpush.bf16.msra.mxu0 %v3749
    %5083 = vmatpush.bf16.msra.mxu0 %v3748
    %5084 = vmatpush.bf16.msra.mxu0 %v3747
    %5085 = vmatpush.bf16.msra.mxu0 %v3746
    %5086 = vmatpush.bf16.msra.mxu0 %v3745
    %5087 = vmatmul.bf16.gmra.mxu0 %v1135
    %v5088 = vpop.f32.mrf.mxu0
    %v5089 = vadd.f32 %v5076, %v5088
    %v5090 = vpop.f32.mrf.mxu0
    %5091 = vdwg.mxu0
    %5092 = vmatpush.bf16.msra.mxu0 %v3760
    %5093 = vmatpush.bf16.msra.mxu0 %v3759
    %5094 = vmatpush.bf16.msra.mxu0 %v3758
    %5095 = vmatpush.bf16.msra.mxu0 %v3757
    %5096 = vmatpush.bf16.msra.mxu0 %v3756
    %5097 = vmatpush.bf16.msra.mxu0 %v3755
    %5098 = vmatpush.bf16.msra.mxu0 %v3754
    %5099 = vmatpush.bf16.msra.mxu0 %v3753
    %5100 = vmatmul.bf16.gmra.mxu0 %v1136
    %v5101 = vpop.f32.mrf.mxu0
    %v5102 = vadd.f32 %v5089, %v5101
    %v5103 = vpop.f32.mrf.mxu0
    %5104 = vdwg.mxu0
    %v5105 = vmax.f32 %v5102, 0.0
    %v5106 = vld [vmem:[%s3] sm:$0x1]
    %v5107 = vld [vmem:[%s4] sm:$0x1]
    %vm5108 = vcmask 254976
    %v5109 = vsel %vm5108, %v5105, 0.0
    %v5110 = vrot.slane %v5109, 4
    %v5111 = vadd.f32 %v5109, %v5110
    %v5112 = vrot.slane %v5111, 2
    %v5113 = vadd.f32 %v5111, %v5112
    %v5114 = vrot.slane %v5113, 1
    %v5115 = vadd.f32 %v5113, %v5114
    %v5116 = vmul.f32 %v5115, 0.5
    %v5117 = vsub.f32 %v5105, %v5116
    %v5118 = vmul.f32 %v5117, %v5117
    %v5119 = vsel %vm5108, %v5118, 0.0
    %v5120 = vrot.slane %v5119, 4
    %v5121 = vadd.f32 %v5119, %v5120
    %v5122 = vrot.slane %v5121, 2
    %v5123 = vadd.f32 %v5121, %v5122
    %v5124 = vrot.slane %v5123, 1
    %v5125 = vadd.f32 %v5123, %v5124
    %v5126 = vmul.f32 %v5125, 0.5
    %v5127 = vadd.f32 %v5126, 1e-05
    %v5128 = vrsqrt.pop %v5127
    %v5129 = vmul.f32 %v5128, %v5127
    %v5130 = vmul.f32 %v5129, %v5128
    %v5131 = vmul.f32 0.5, %v5130
    %v5132 = vsub.f32 1.5, %v5131
    %v5133 = vmul.f32 %v5128, %v5132
    %vm5134 = vweird.f32 %v5127
    %vm5135 = vweird.f32 %v5128
    %vm5136 = vmor %vm5134, %vm5135
    %v5137 = vsel %vm5136, %v5128, %v5133
    %v5138 = vmul.f32 %v5117, %v5137
    %v5140 = vperm.slane %v5106, 0
    %v5142 = vmul.f32 %v5138, %v5140
    %v5144 = vperm.slane %v5107, 0
    %v5146 = vadd.f32 %v5142, %v5144
    %5147 = vst.msk [vmem:[#allocation2] sm:$0x3] %vm5108, %v5146
    // Predicated region
    $region22: #{model_forward.3} parent=1 // pred_check
      _
    $region23: #{model_forward.3} parent=1 // pred_check_branch
      %5149 = sbr.rel (0) target = $region25
    $region24: #{model_forward.3} parent=1 // pred_region
      %5151 = vsyncadd [#allocation3], 0
      %s5153 = sshll.u32 [#allocation2], 4
      %s5154 = int_to_ptr.vmem [resolvable:$true] %s5153
      %s5155 = sshll.u32 %s5, 4
      %s5156 = int_to_ptr.hbm [resolvable:$true] %s5155
      %5158 = dma.vmem_to_hbm [thread:$0]  %s5154, 32, %s5156, [#allocation3]
    $region25: #{model_forward.3} parent=1 // pred_fallthru
      _
    // Predicated region
    $region26: #{model_forward.3} parent=1 // pred_check
      _
    $region27: #{model_forward.3} parent=1 // pred_check_branch
      %5160 = sbr.rel (0) target = $region29
    $region28: #{model_forward.3} parent=1 // pred_region
      %5162 = dma.done [#allocation3], 32
    $region29: #{model_forward.3} parent=1 // pred_fallthru
      _
    %5163 = vsyncpa [#allocation3], 1

// kernel: model_forward.2
$region0: #{model_forward.2}
  #allocation0 [shape = 'u32[]', space=smem, size = 0x4, offset = 0x4, fixed_abs, tag = 'smem constant byte address 0x4 - core index']
  #allocation1 [shape = 'u32[72,128]{1,0:T(1,128)}', space=vmem, size = 0x9000, scoped, tag = 'internal scratch']
  #allocation2 [shape = 'f32[2,11,11,3]{3,2,1,0:T(8,128)}', space=vmem, size = 0x2c000, scoped, tag = 'scratch operand']
  #allocation3 [shape = 'f32[2,11,11,128]{3,2,1,0:T(8,128)}', space=vmem, size = 0x2c000, scoped, tag = 'scratch operand']
  #allocation4 [shape = 'f32[128,48]{1,0:T(8,128)}', space=vmem, size = 0x10000, scoped, tag = 'scratch operand']
  %s0 = inlined_call_operand.vmem [shape: f32[128,1], index: 0, kind: input, shape index: {}]
  %s1 = inlined_call_operand.hbm [shape: f32[1,3], index: 1, kind: input, shape index: {}]
  %s2 = inlined_call_operand.hbm [shape: f32[1,3], index: 2, kind: input, shape index: {}]
  %s3 = inlined_call_operand.hbm [shape: f32[1,3], index: 3, kind: input, shape index: {}]
  %s4 = inlined_call_operand.hbm [shape: f32[1,3], index: 4, kind: input, shape index: {}]
  %s5 = inlined_call_operand.hbm [shape: bf16[48,128], index: 5, kind: input, shape index: {}]
  %s6 = inlined_call_operand.hbm [shape: f32[1,128], index: 6, kind: input, shape index: {}]
  %s7 = inlined_call_operand.hbm [shape: f32[1,128], index: 7, kind: input, shape index: {}]
  %s8 = inlined_call_operand.hbm [shape: f32[1,128], index: 8, kind: input, shape index: {}]
  %s9 = inlined_call_operand.hbm [shape: bf16[4,512,128], index: 9, kind: input, shape index: {}]
  %s10 = inlined_call_operand.hbm [shape: f32[1,128], index: 10, kind: input, shape index: {}]
  %s11 = inlined_call_operand.hbm [shape: f32[1,128], index: 11, kind: input, shape index: {}]
  %s12 = inlined_call_operand.hbm [shape: f32[1,128], index: 12, kind: input, shape index: {}]
  %s13 = inlined_call_operand.vmem [shape: bf16[128,128], index: 13, kind: output, shape index: {}]
  %s14 = sld [smem:[#allocation0]]
  $region110: #{model_forward.2} parent=0
    _
  %s16 = ssub.s32 1, %s14
  %s17 = scalar_select 0, %s16, %s14
  $region1: #{model_forward.2} parent=0
    #allocation5 [shape = 'u8[512]{0}', space=vmem, size = 0x400, scoped, tag = 'input window, operand 1, single buffered']
    #allocation6 [shape = 's32[1]{0}', space=sflag, size = 0x4, scoped, tag = 'scoped memory for model_forward.2']
    #allocation7 [shape = 'u8[512]{0}', space=vmem, size = 0x400, scoped, tag = 'input window, operand 2, single buffered']
    #allocation8 [shape = 's32[1]{0}', space=sflag, size = 0x4, scoped, tag = 'scoped memory for model_forward.2']
    #allocation9 [shape = 'u8[512]{0}', space=vmem, size = 0x400, scoped, tag = 'input window, operand 3, single buffered']
    #allocation10 [shape = 'u8[512]{0}', space=vmem, size = 0x400, scoped, tag = 'input window, operand 4, single buffered']
    #allocation11 [shape = 's32[1]{0}', space=sflag, size = 0x4, scoped, tag = 'scoped memory for model_forward.2']
    #allocation12 [shape = 'u8[12288]{0}', space=vmem, size = 0x3000, scoped, tag = 'input window, operand 5, single buffered']
    #allocation13 [shape = 'u8[512]{0}', space=vmem, size = 0x400, scoped, tag = 'input window, operand 6, single buffered']
    #allocation14 [shape = 's32[1]{0}', space=sflag, size = 0x4, scoped, tag = 'scoped memory for model_forward.2']
    #allocation15 [shape = 'u8[512]{0}', space=vmem, size = 0x400, scoped, tag = 'input window, operand 7, single buffered']
    #allocation16 [shape = 'u8[512]{0}', space=vmem, size = 0x400, scoped, tag = 'input window, operand 8, single buffered']
    #allocation17 [shape = 's32[1]{0}', space=sflag, size = 0x4, scoped, tag = 'scoped memory for model_forward.2']
    #allocation18 [shape = 'u8[524288]{0}', space=vmem, size = 0x80000, scoped, tag = 'input window, operand 9, single buffered']
    #allocation19 [shape = 'u8[512]{0}', space=vmem, size = 0x400, scoped, tag = 'input window, operand 10, single buffered']
    #allocation20 [shape = 's32[1]{0}', space=sflag, size = 0x4, scoped, tag = 'scoped memory for model_forward.2']
    #allocation21 [shape = 'u8[512]{0}', space=vmem, size = 0x400, scoped, tag = 'input window, operand 11, single buffered']
    #allocation22 [shape = 'u8[512]{0}', space=vmem, size = 0x400, scoped, tag = 'input window, operand 12, single buffered']
    #allocation23 [shape = 's32[1]{0}', space=sflag, size = 0x4, scoped, tag = 'scoped memory for model_forward.2']
    %18 = vsyncpa [#allocation6], 0
    %19 = vsyncpa [#allocation8], 0
    %20 = vsyncpa [#allocation11], 0
    %21 = vsyncpa [#allocation14], 0
    %22 = vsyncpa [#allocation17], 0
    %23 = vsyncpa [#allocation20], 0
    %24 = vsyncpa [#allocation23], 0
    // Predicated region
    $region2: #{model_forward.2} parent=1 // pred_check
      _
    $region3: #{model_forward.2} parent=1 // pred_check_branch
      %26 = sbr.rel (0) target = $region5
    $region4: #{model_forward.2} parent=1 // pred_region
      _
    $region5: #{model_forward.2} parent=1 // pred_fallthru
      _
    // Predicated region
    $region6: #{model_forward.2} parent=1 // pred_check
      _
    $region7: #{model_forward.2} parent=1 // pred_check_branch
      %28 = sbr.rel (0) target = $region9
    $region8: #{model_forward.2} parent=1 // pred_region
      %30 = vsyncadd [#allocation6], 0
      %s32 = sshll.u32 %s1, 4
      %s33 = int_to_ptr.hbm [resolvable:$true] %s32
      %s34 = sshll.u32 [#allocation5], 4
      %s35 = int_to_ptr.vmem [resolvable:$true] %s34
      %37 = dma.hbm_to_vmem [thread:$0]  %s33, 16, %s35, [#allocation6]
    $region9: #{model_forward.2} parent=1 // pred_fallthru
      _
    // Predicated region
    $region10: #{model_forward.2} parent=1 // pred_check
      _
    $region11: #{model_forward.2} parent=1 // pred_check_branch
      %39 = sbr.rel (0) target = $region13
    $region12: #{model_forward.2} parent=1 // pred_region
      %41 = vsyncadd [#allocation8], 0
      %s43 = sshll.u32 %s2, 4
      %s44 = int_to_ptr.hbm [resolvable:$true] %s43
      %s45 = sshll.u32 [#allocation7], 4
      %s46 = int_to_ptr.vmem [resolvable:$true] %s45
      %48 = dma.hbm_to_vmem [thread:$0]  %s44, 16, %s46, [#allocation8]
    $region13: #{model_forward.2} parent=1 // pred_fallthru
      _
    // Predicated region
    $region14: #{model_forward.2} parent=1 // pred_check
      _
    $region15: #{model_forward.2} parent=1 // pred_check_branch
      %50 = sbr.rel (0) target = $region17
    $region16: #{model_forward.2} parent=1 // pred_region
      %52 = vsyncadd [#allocation8], 0
      %s54 = sshll.u32 %s3, 4
      %s55 = int_to_ptr.hbm [resolvable:$true] %s54
      %s56 = sshll.u32 [#allocation9], 4
      %s57 = int_to_ptr.vmem [resolvable:$true] %s56
      %59 = dma.hbm_to_vmem [thread:$0]  %s55, 16, %s57, [#allocation8]
    $region17: #{model_forward.2} parent=1 // pred_fallthru
      _
    // Predicated region
    $region18: #{model_forward.2} parent=1 // pred_check
      _
    $region19: #{model_forward.2} parent=1 // pred_check_branch
      %61 = sbr.rel (0) target = $region21
    $region20: #{model_forward.2} parent=1 // pred_region
      %63 = vsyncadd [#allocation11], 0
      %s65 = sshll.u32 %s4, 4
      %s66 = int_to_ptr.hbm [resolvable:$true] %s65
      %s67 = sshll.u32 [#allocation10], 4
      %s68 = int_to_ptr.vmem [resolvable:$true] %s67
      %70 = dma.hbm_to_vmem [thread:$0]  %s66, 16, %s68, [#allocation11]
    $region21: #{model_forward.2} parent=1 // pred_fallthru
      _
    // Predicated region
    $region22: #{model_forward.2} parent=1 // pred_check
      _
    $region23: #{model_forward.2} parent=1 // pred_check_branch
      %72 = sbr.rel (0) target = $region25
    $region24: #{model_forward.2} parent=1 // pred_region
      %74 = vsyncadd [#allocation11], 0
      %s75 = sshll.u32 %s5, 4
      %s76 = int_to_ptr.hbm [resolvable:$true] %s75
      %s77 = sshll.u32 [#allocation12], 4
      %s78 = int_to_ptr.vmem [resolvable:$true] %s77
      %83 = dma.hbm_to_vmem [thread:$0]  %s76, 384, %s78, [#allocation11], 64, 64, 4
    $region25: #{model_forward.2} parent=1 // pred_fallthru
      _
    // Predicated region
    $region26: #{model_forward.2} parent=1 // pred_check
      _
    $region27: #{model_forward.2} parent=1 // pred_check_branch
      %85 = sbr.rel (0) target = $region29
    $region28: #{model_forward.2} parent=1 // pred_region
      %87 = vsyncadd [#allocation14], 0
      %s89 = sshll.u32 %s6, 4
      %s90 = int_to_ptr.hbm [resolvable:$true] %s89
      %s91 = sshll.u32 [#allocation13], 4
      %s92 = int_to_ptr.vmem [resolvable:$true] %s91
      %94 = dma.hbm_to_vmem [thread:$0]  %s90, 16, %s92, [#allocation14]
    $region29: #{model_forward.2} parent=1 // pred_fallthru
      _
    // Predicated region
    $region30: #{model_forward.2} parent=1 // pred_check
      _
    $region31: #{model_forward.2} parent=1 // pred_check_branch
      %96 = sbr.rel (0) target = $region33
    $region32: #{model_forward.2} parent=1 // pred_region
      %98 = vsyncadd [#allocation14], 0
      %s100 = sshll.u32 %s7, 4
      %s101 = int_to_ptr.hbm [resolvable:$true] %s100
      %s102 = sshll.u32 [#allocation15], 4
      %s103 = int_to_ptr.vmem [resolvable:$true] %s102
      %105 = dma.hbm_to_vmem [thread:$0]  %s101, 16, %s103, [#allocation14]
    $region33: #{model_forward.2} parent=1 // pred_fallthru
      _
    // Predicated region
    $region34: #{model_forward.2} parent=1 // pred_check
      _
    $region35: #{model_forward.2} parent=1 // pred_check_branch
      %107 = sbr.rel (0) target = $region37
    $region36: #{model_forward.2} parent=1 // pred_region
      %109 = vsyncadd [#allocation17], 0
      %s111 = sshll.u32 %s8, 4
      %s112 = int_to_ptr.hbm [resolvable:$true] %s111
      %s113 = sshll.u32 [#allocation16], 4
      %s114 = int_to_ptr.vmem [resolvable:$true] %s113
      %116 = dma.hbm_to_vmem [thread:$0]  %s112, 16, %s114, [#allocation17]
    $region37: #{model_forward.2} parent=1 // pred_fallthru
      _
    // Predicated region
    $region38: #{model_forward.2} parent=1 // pred_check
      _
    $region39: #{model_forward.2} parent=1 // pred_check_branch
      %118 = sbr.rel (0) target = $region41
    $region40: #{model_forward.2} parent=1 // pred_region
      %120 = vsyncadd [#allocation17], 0
      %s121 = sshll.u32 %s9, 4
      %s122 = int_to_ptr.hbm [resolvable:$true] %s121
      %s123 = sshll.u32 [#allocation18], 4
      %s124 = int_to_ptr.vmem [resolvable:$true] %s123
      %129 = dma.hbm_to_vmem [thread:$0]  %s122, 16384, %s124, [#allocation17], 64, 64, 4
    $region41: #{model_forward.2} parent=1 // pred_fallthru
      _
    // Predicated region
    $region42: #{model_forward.2} parent=1 // pred_check
      _
    $region43: #{model_forward.2} parent=1 // pred_check_branch
      %131 = sbr.rel (0) target = $region45
    $region44: #{model_forward.2} parent=1 // pred_region
      %133 = vsyncadd [#allocation20], 0
      %s135 = sshll.u32 %s10, 4
      %s136 = int_to_ptr.hbm [resolvable:$true] %s135
      %s137 = sshll.u32 [#allocation19], 4
      %s138 = int_to_ptr.vmem [resolvable:$true] %s137
      %140 = dma.hbm_to_vmem [thread:$0]  %s136, 16, %s138, [#allocation20]
    $region45: #{model_forward.2} parent=1 // pred_fallthru
      _
    // Predicated region
    $region46: #{model_forward.2} parent=1 // pred_check
      _
    $region47: #{model_forward.2} parent=1 // pred_check_branch
      %142 = sbr.rel (0) target = $region49
    $region48: #{model_forward.2} parent=1 // pred_region
      %144 = vsyncadd [#allocation20], 0
      %s146 = sshll.u32 %s11, 4
      %s147 = int_to_ptr.hbm [resolvable:$true] %s146
      %s148 = sshll.u32 [#allocation21], 4
      %s149 = int_to_ptr.vmem [resolvable:$true] %s148
      %151 = dma.hbm_to_vmem [thread:$0]  %s147, 16, %s149, [#allocation20]
    $region49: #{model_forward.2} parent=1 // pred_fallthru
      _
    // Predicated region
    $region50: #{model_forward.2} parent=1 // pred_check
      _
    $region51: #{model_forward.2} parent=1 // pred_check_branch
      %153 = sbr.rel (0) target = $region53
    $region52: #{model_forward.2} parent=1 // pred_region
      %155 = vsyncadd [#allocation23], 0
      %s157 = sshll.u32 %s12, 4
      %s158 = int_to_ptr.hbm [resolvable:$true] %s157
      %s159 = sshll.u32 [#allocation22], 4
      %s160 = int_to_ptr.vmem [resolvable:$true] %s159
      %162 = dma.hbm_to_vmem [thread:$0]  %s158, 16, %s160, [#allocation23]
    $region53: #{model_forward.2} parent=1 // pred_fallthru
      _
    // Predicated region
    $region54: #{model_forward.2} parent=1 // pred_check
      _
    $region55: #{model_forward.2} parent=1 // pred_check_branch
      %164 = sbr.rel (0) target = $region57
    $region56: #{model_forward.2} parent=1 // pred_region
      %166 = dma.done [#allocation6], 16
    $region57: #{model_forward.2} parent=1 // pred_fallthru
      _
    // Predicated region
    $region58: #{model_forward.2} parent=1 // pred_check
      _
    $region59: #{model_forward.2} parent=1 // pred_check_branch
      %168 = sbr.rel (0) target = $region61
    $region60: #{model_forward.2} parent=1 // pred_region
      %170 = dma.done [#allocation8], 16
    $region61: #{model_forward.2} parent=1 // pred_fallthru
      _
    // Predicated region
    $region62: #{model_forward.2} parent=1 // pred_check
      _
    $region63: #{model_forward.2} parent=1 // pred_check_branch
      %172 = sbr.rel (0) target = $region65
    $region64: #{model_forward.2} parent=1 // pred_region
      %174 = dma.done [#allocation8], 16
    $region65: #{model_forward.2} parent=1 // pred_fallthru
      _
    // Predicated region
    $region66: #{model_forward.2} parent=1 // pred_check
      _
    $region67: #{model_forward.2} parent=1 // pred_check_branch
      %176 = sbr.rel (0) target = $region69
    $region68: #{model_forward.2} parent=1 // pred_region
      %178 = dma.done [#allocation11], 16
    $region69: #{model_forward.2} parent=1 // pred_fallthru
      _
    // Predicated region
    $region70: #{model_forward.2} parent=1 // pred_check
      _
    $region71: #{model_forward.2} parent=1 // pred_check_branch
      %180 = sbr.rel (0) target = $region73
    $region72: #{model_forward.2} parent=1 // pred_region
      %182 = dma.done [#allocation11], 384
    $region73: #{model_forward.2} parent=1 // pred_fallthru
      _
    // Predicated region
    $region74: #{model_forward.2} parent=1 // pred_check
      _
    $region75: #{model_forward.2} parent=1 // pred_check_branch
      %184 = sbr.rel (0) target = $region77
    $region76: #{model_forward.2} parent=1 // pred_region
      %186 = dma.done [#allocation14], 16
    $region77: #{model_forward.2} parent=1 // pred_fallthru
      _
    // Predicated region
    $region78: #{model_forward.2} parent=1 // pred_check
      _
    $region79: #{model_forward.2} parent=1 // pred_check_branch
      %188 = sbr.rel (0) target = $region81
    $region80: #{model_forward.2} parent=1 // pred_region
      %190 = dma.done [#allocation14], 16
    $region81: #{model_forward.2} parent=1 // pred_fallthru
      _
    // Predicated region
    $region82: #{model_forward.2} parent=1 // pred_check
      _
    $region83: #{model_forward.2} parent=1 // pred_check_branch
      %192 = sbr.rel (0) target = $region85
    $region84: #{model_forward.2} parent=1 // pred_region
      %194 = dma.done [#allocation17], 16
    $region85: #{model_forward.2} parent=1 // pred_fallthru
      _
    // Predicated region
    $region86: #{model_forward.2} parent=1 // pred_check
      _
    $region87: #{model_forward.2} parent=1 // pred_check_branch
      %196 = sbr.rel (0) target = $region89
    $region88: #{model_forward.2} parent=1 // pred_region
      %198 = dma.done [#allocation17], 16384
    $region89: #{model_forward.2} parent=1 // pred_fallthru
      _
    // Predicated region
    $region90: #{model_forward.2} parent=1 // pred_check
      _
    $region91: #{model_forward.2} parent=1 // pred_check_branch
      %200 = sbr.rel (0) target = $region93
    $region92: #{model_forward.2} parent=1 // pred_region
      %202 = dma.done [#allocation20], 16
    $region93: #{model_forward.2} parent=1 // pred_fallthru
      _
    // Predicated region
    $region94: #{model_forward.2} parent=1 // pred_check
      _
    $region95: #{model_forward.2} parent=1 // pred_check_branch
      %204 = sbr.rel (0) target = $region97
    $region96: #{model_forward.2} parent=1 // pred_region
      %206 = dma.done [#allocation20], 16
    $region97: #{model_forward.2} parent=1 // pred_fallthru
      _
    // Predicated region
    $region98: #{model_forward.2} parent=1 // pred_check
      _
    $region99: #{model_forward.2} parent=1 // pred_check_branch
      %208 = sbr.rel (0) target = $region101
    $region100: #{model_forward.2} parent=1 // pred_region
      %210 = dma.done [#allocation23], 16
    $region101: #{model_forward.2} parent=1 // pred_fallthru
      _
    %v212 = vld [vmem:[%s0] sm:$0xff]
    %v213 = vld [vmem:[%s0 + $0x8] sm:$0xff]
    %v214 = vld [vmem:[%s0 + $0x10] sm:$0xff]
    %v215 = vld [vmem:[%s0 + $0x18] sm:$0xff]
    %v216 = vld [vmem:[%s0 + $0x20] sm:$0xff]
    %v217 = vld [vmem:[%s0 + $0x28] sm:$0xff]
    %v218 = vld [vmem:[%s0 + $0x30] sm:$0xff]
    %v219 = vld [vmem:[%s0 + $0x38] sm:$0xff]
    %v220 = vld [vmem:[%s0 + $0x40] sm:$0xff]
    %v221 = vld [vmem:[%s0 + $0x48] sm:$0xff]
    %v222 = vld [vmem:[%s0 + $0x50] sm:$0xff]
    %v223 = vld [vmem:[%s0 + $0x58] sm:$0xff]
    %v224 = vld [vmem:[%s0 + $0x60] sm:$0xff]
    %v225 = vld [vmem:[%s0 + $0x68] sm:$0xff]
    %v226 = vld [vmem:[%s0 + $0x70] sm:$0xff]
    %v227 = vld [vmem:[%s0 + $0x78] sm:$0xff]
    %v228 = vld [vmem:[#allocation5] sm:$0x1]
    %230 = vset.pattern.permute.xlu0 0
    %231 = vperm.xlu0 %230, %v212
    %v232 = vpop.permute.xlu0 %231
    %235 = vset.pattern.permute.xlu0 0
    %236 = vperm.xlu0 %235, %v213
    %v237 = vpop.permute.xlu0 %236
    %240 = vset.pattern.permute.xlu0 0
    %241 = vperm.xlu0 %240, %v214
    %v242 = vpop.permute.xlu0 %241
    %245 = vset.pattern.permute.xlu0 0
    %246 = vperm.xlu0 %245, %v215
    %v247 = vpop.permute.xlu0 %246
    %250 = vset.pattern.permute.xlu0 0
    %251 = vperm.xlu0 %250, %v216
    %v252 = vpop.permute.xlu0 %251
    %255 = vset.pattern.permute.xlu0 0
    %256 = vperm.xlu0 %255, %v217
    %v257 = vpop.permute.xlu0 %256
    %260 = vset.pattern.permute.xlu0 0
    %261 = vperm.xlu0 %260, %v218
    %v262 = vpop.permute.xlu0 %261
    %265 = vset.pattern.permute.xlu0 0
    %266 = vperm.xlu0 %265, %v219
    %v267 = vpop.permute.xlu0 %266
    %270 = vset.pattern.permute.xlu0 0
    %271 = vperm.xlu0 %270, %v220
    %v272 = vpop.permute.xlu0 %271
    %275 = vset.pattern.permute.xlu0 0
    %276 = vperm.xlu0 %275, %v221
    %v277 = vpop.permute.xlu0 %276
    %280 = vset.pattern.permute.xlu0 0
    %281 = vperm.xlu0 %280, %v222
    %v282 = vpop.permute.xlu0 %281
    %285 = vset.pattern.permute.xlu0 0
    %286 = vperm.xlu0 %285, %v223
    %v287 = vpop.permute.xlu0 %286
    %290 = vset.pattern.permute.xlu0 0
    %291 = vperm.xlu0 %290, %v224
    %v292 = vpop.permute.xlu0 %291
    %295 = vset.pattern.permute.xlu0 0
    %296 = vperm.xlu0 %295, %v225
    %v297 = vpop.permute.xlu0 %296
    %300 = vset.pattern.permute.xlu0 0
    %301 = vperm.xlu0 %300, %v226
    %v302 = vpop.permute.xlu0 %301
    %305 = vset.pattern.permute.xlu0 0
    %306 = vperm.xlu0 %305, %v227
    %v307 = vpop.permute.xlu0 %306
    %v310 = vperm.slane %v228, 0
    %v312 = vmul.f32 %v232, %v310
    %v313 = vmul.f32 %v237, %v310
    %v314 = vmul.f32 %v242, %v310
    %v315 = vmul.f32 %v247, %v310
    %v316 = vmul.f32 %v252, %v310
    %v317 = vmul.f32 %v257, %v310
    %v318 = vmul.f32 %v262, %v310
    %v319 = vmul.f32 %v267, %v310
    %v320 = vmul.f32 %v272, %v310
    %v321 = vmul.f32 %v277, %v310
    %v322 = vmul.f32 %v282, %v310
    %v323 = vmul.f32 %v287, %v310
    %v324 = vmul.f32 %v292, %v310
    %v325 = vmul.f32 %v297, %v310
    %v326 = vmul.f32 %v302, %v310
    %v327 = vmul.f32 %v307, %v310
    %v328 = vld [vmem:[#allocation7] sm:$0x1]
    %v330 = vperm.slane %v328, 0
    %v332 = vadd.f32 %v312, %v330
    %v333 = vadd.f32 %v313, %v330
    %v334 = vadd.f32 %v314, %v330
    %v335 = vadd.f32 %v315, %v330
    %v336 = vadd.f32 %v316, %v330
    %v337 = vadd.f32 %v317, %v330
    %v338 = vadd.f32 %v318, %v330
    %v339 = vadd.f32 %v319, %v330
    %v340 = vadd.f32 %v320, %v330
    %v341 = vadd.f32 %v321, %v330
    %v342 = vadd.f32 %v322, %v330
    %v343 = vadd.f32 %v323, %v330
    %v344 = vadd.f32 %v324, %v330
    %v345 = vadd.f32 %v325, %v330
    %v346 = vadd.f32 %v326, %v330
    %v347 = vadd.f32 %v327, %v330
    %v348 = vmax.f32 %v332, 0.0
    %v349 = vmax.f32 %v333, 0.0
    %v350 = vmax.f32 %v334, 0.0
    %v351 = vmax.f32 %v335, 0.0
    %v352 = vmax.f32 %v336, 0.0
    %v353 = vmax.f32 %v337, 0.0
    %v354 = vmax.f32 %v338, 0.0
    %v355 = vmax.f32 %v339, 0.0
    %v356 = vmax.f32 %v340, 0.0
    %v357 = vmax.f32 %v341, 0.0
    %v358 = vmax.f32 %v342, 0.0
    %v359 = vmax.f32 %v343, 0.0
    %v360 = vmax.f32 %v344, 0.0
    %v361 = vmax.f32 %v345, 0.0
    %v362 = vmax.f32 %v346, 0.0
    %v363 = vmax.f32 %v347, 0.0
    %v364 = vld [vmem:[#allocation9] sm:$0x1]
    %v365 = vld [vmem:[#allocation10] sm:$0x1]
    %vm366 = vcmask 23552
    %v367 = vsel %vm366, %v348, 0.0
    %v368 = vsel %vm366, %v349, 0.0
    %v369 = vadd.f32 %v367, %v368
    %v370 = vsel %vm366, %v350, 0.0
    %v371 = vadd.f32 %v369, %v370
    %v372 = vsel %vm366, %v351, 0.0
    %v373 = vadd.f32 %v371, %v372
    %v374 = vsel %vm366, %v352, 0.0
    %v375 = vadd.f32 %v373, %v374
    %v376 = vsel %vm366, %v353, 0.0
    %v377 = vadd.f32 %v375, %v376
    %v378 = vsel %vm366, %v354, 0.0
    %v379 = vadd.f32 %v377, %v378
    %v380 = vsel %vm366, %v355, 0.0
    %v381 = vadd.f32 %v379, %v380
    %v382 = vsel %vm366, %v356, 0.0
    %v383 = vadd.f32 %v381, %v382
    %v384 = vsel %vm366, %v357, 0.0
    %v385 = vadd.f32 %v383, %v384
    %v386 = vsel %vm366, %v358, 0.0
    %v387 = vadd.f32 %v385, %v386
    %v388 = vsel %vm366, %v359, 0.0
    %v389 = vadd.f32 %v387, %v388
    %v390 = vsel %vm366, %v360, 0.0
    %v391 = vadd.f32 %v389, %v390
    %v392 = vsel %vm366, %v361, 0.0
    %v393 = vadd.f32 %v391, %v392
    %v394 = vsel %vm366, %v362, 0.0
    %v395 = vadd.f32 %v393, %v394
    %v396 = vsel %vm366, %v363, 0.0
    %v397 = vadd.f32 %v395, %v396
    %v398 = vrot.slane %v397, 4
    %v399 = vadd.f32 %v397, %v398
    %v400 = vrot.slane %v399, 2
    %v401 = vadd.f32 %v399, %v400
    %v402 = vrot.slane %v401, 1
    %v403 = vadd.f32 %v401, %v402
    %v404 = vmul.f32 %v403, 0.0078125
    %v405 = vsub.f32 %v348, %v404
    %v406 = vsub.f32 %v349, %v404
    %v407 = vsub.f32 %v350, %v404
    %v408 = vsub.f32 %v351, %v404
    %v409 = vsub.f32 %v352, %v404
    %v410 = vsub.f32 %v353, %v404
    %v411 = vsub.f32 %v354, %v404
    %v412 = vsub.f32 %v355, %v404
    %v413 = vsub.f32 %v356, %v404
    %v414 = vsub.f32 %v357, %v404
    %v415 = vsub.f32 %v358, %v404
    %v416 = vsub.f32 %v359, %v404
    %v417 = vsub.f32 %v360, %v404
    %v418 = vsub.f32 %v361, %v404
    %v419 = vsub.f32 %v362, %v404
    %v420 = vsub.f32 %v363, %v404
    %v421 = vmul.f32 %v405, %v405
    %v422 = vmul.f32 %v406, %v406
    %v423 = vmul.f32 %v407, %v407
    %v424 = vmul.f32 %v408, %v408
    %v425 = vmul.f32 %v409, %v409
    %v426 = vmul.f32 %v410, %v410
    %v427 = vmul.f32 %v411, %v411
    %v428 = vmul.f32 %v412, %v412
    %v429 = vmul.f32 %v413, %v413
    %v430 = vmul.f32 %v414, %v414
    %v431 = vmul.f32 %v415, %v415
    %v432 = vmul.f32 %v416, %v416
    %v433 = vmul.f32 %v417, %v417
    %v434 = vmul.f32 %v418, %v418
    %v435 = vmul.f32 %v419, %v419
    %v436 = vmul.f32 %v420, %v420
    %v437 = vsel %vm366, %v421, 0.0
    %v438 = vsel %vm366, %v422, 0.0
    %v439 = vadd.f32 %v437, %v438
    %v440 = vsel %vm366, %v423, 0.0
    %v441 = vadd.f32 %v439, %v440
    %v442 = vsel %vm366, %v424, 0.0
    %v443 = vadd.f32 %v441, %v442
    %v444 = vsel %vm366, %v425, 0.0
    %v445 = vadd.f32 %v443, %v444
    %v446 = vsel %vm366, %v426, 0.0
    %v447 = vadd.f32 %v445, %v446
    %v448 = vsel %vm366, %v427, 0.0
    %v449 = vadd.f32 %v447, %v448
    %v450 = vsel %vm366, %v428, 0.0
    %v451 = vadd.f32 %v449, %v450
    %v452 = vsel %vm366, %v429, 0.0
    %v453 = vadd.f32 %v451, %v452
    %v454 = vsel %vm366, %v430, 0.0
    %v455 = vadd.f32 %v453, %v454
    %v456 = vsel %vm366, %v431, 0.0
    %v457 = vadd.f32 %v455, %v456
    %v458 = vsel %vm366, %v432, 0.0
    %v459 = vadd.f32 %v457, %v458
    %v460 = vsel %vm366, %v433, 0.0
    %v461 = vadd.f32 %v459, %v460
    %v462 = vsel %vm366, %v434, 0.0
    %v463 = vadd.f32 %v461, %v462
    %v464 = vsel %vm366, %v435, 0.0
    %v465 = vadd.f32 %v463, %v464
    %v466 = vsel %vm366, %v436, 0.0
    %v467 = vadd.f32 %v465, %v466
    %v468 = vrot.slane %v467, 4
    %v469 = vadd.f32 %v467, %v468
    %v470 = vrot.slane %v469, 2
    %v471 = vadd.f32 %v469, %v470
    %v472 = vrot.slane %v471, 1
    %v473 = vadd.f32 %v471, %v472
    %v474 = vmul.f32 %v473, 0.0078125
    %v475 = vadd.f32 %v474, 1e-05
    %v476 = vrsqrt.pop %v475
    %v477 = vmul.f32 %v476, %v475
    %v478 = vmul.f32 %v477, %v476
    %v479 = vmul.f32 0.5, %v478
    %v480 = vsub.f32 1.5, %v479
    %v481 = vmul.f32 %v476, %v480
    %vm482 = vweird.f32 %v475
    %vm483 = vweird.f32 %v476
    %vm484 = vmor %vm482, %vm483
    %v485 = vsel %vm484, %v476, %v481
    %v486 = vmul.f32 %v405, %v485
    %v487 = vmul.f32 %v406, %v485
    %v488 = vmul.f32 %v407, %v485
    %v489 = vmul.f32 %v408, %v485
    %v490 = vmul.f32 %v409, %v485
    %v491 = vmul.f32 %v410, %v485
    %v492 = vmul.f32 %v411, %v485
    %v493 = vmul.f32 %v412, %v485
    %v494 = vmul.f32 %v413, %v485
    %v495 = vmul.f32 %v414, %v485
    %v496 = vmul.f32 %v415, %v485
    %v497 = vmul.f32 %v416, %v485
    %v498 = vmul.f32 %v417, %v485
    %v499 = vmul.f32 %v418, %v485
    %v500 = vmul.f32 %v419, %v485
    %v501 = vmul.f32 %v420, %v485
    %v503 = vperm.slane %v364, 0
    %v505 = vmul.f32 %v486, %v503
    %v506 = vmul.f32 %v487, %v503
    %v507 = vmul.f32 %v488, %v503
    %v508 = vmul.f32 %v489, %v503
    %v509 = vmul.f32 %v490, %v503
    %v510 = vmul.f32 %v491, %v503
    %v511 = vmul.f32 %v492, %v503
    %v512 = vmul.f32 %v493, %v503
    %v513 = vmul.f32 %v494, %v503
    %v514 = vmul.f32 %v495, %v503
    %v515 = vmul.f32 %v496, %v503
    %v516 = vmul.f32 %v497, %v503
    %v517 = vmul.f32 %v498, %v503
    %v518 = vmul.f32 %v499, %v503
    %v519 = vmul.f32 %v500, %v503
    %v520 = vmul.f32 %v501, %v503
    %v522 = vperm.slane %v365, 0
    %v524 = vadd.f32 %v505, %v522
    %v525 = vadd.f32 %v506, %v522
    %v526 = vadd.f32 %v507, %v522
    %v527 = vadd.f32 %v508, %v522
    %v528 = vadd.f32 %v509, %v522
    %v529 = vadd.f32 %v510, %v522
    %v530 = vadd.f32 %v511, %v522
    %v531 = vadd.f32 %v512, %v522
    %v532 = vadd.f32 %v513, %v522
    %v533 = vadd.f32 %v514, %v522
    %v534 = vadd.f32 %v515, %v522
    %v535 = vadd.f32 %v516, %v522
    %v536 = vadd.f32 %v517, %v522
    %v537 = vadd.f32 %v518, %v522
    %v538 = vadd.f32 %v519, %v522
    %v539 = vadd.f32 %v520, %v522
    %540 = vst.msk [vmem:[#allocation2] sm:$0xff] %vm366, 0.0
    %vm541 = vcmask 18432
    %542 = vst.msk [vmem:[#allocation2 + $0x8] sm:$0x7] %vm541, 0.0
    %543 = vst.msk [vmem:[#allocation2 + $0xb0] sm:$0xff] %vm366, 0.0
    %544 = vst.msk [vmem:[#allocation2 + $0xb8] sm:$0x7] %vm541, 0.0
    %s545 = scalar_lea.vmem [#allocation2], 144
    %546 = vst.msk [vmem:[%s545] sm:$0xff] %vm366, 0.0
    %547 = vst.msk [vmem:[%s545 + $0x8] sm:$0x7] %vm541, 0.0
    %548 = vst.msk [vmem:[%s545 + $0x10] sm:$0xff] %vm366, 0.0
    %549 = vst.msk [vmem:[%s545 + $0x18] sm:$0x7] %vm541, 0.0
    %550 = vst.msk [vmem:[%s545 + $0xb0] sm:$0xff] %vm366, 0.0
    %551 = vst.msk [vmem:[%s545 + $0xb8] sm:$0x7] %vm541, 0.0
    %552 = vst.msk [vmem:[%s545 + $0xc0] sm:$0xff] %vm366, 0.0
    %553 = vst.msk [vmem:[%s545 + $0xc8] sm:$0x7] %vm541, 0.0
    %vm554 = vcmask 16384
    %555 = vst.msk [vmem:[#allocation2] sm:$0x1] %vm554, 0.0
    %556 = vst.msk [vmem:[#allocation2 + $0x10] sm:$0x1] %vm554, 0.0
    %557 = vst.msk [vmem:[#allocation2 + $0x20] sm:$0x1] %vm554, 0.0
    %558 = vst.msk [vmem:[#allocation2 + $0x30] sm:$0x1] %vm554, 0.0
    %559 = vst.msk [vmem:[#allocation2 + $0x40] sm:$0x1] %vm554, 0.0
    %560 = vst.msk [vmem:[#allocation2 + $0x50] sm:$0x1] %vm554, 0.0
    %561 = vst.msk [vmem:[#allocation2 + $0x60] sm:$0x1] %vm554, 0.0
    %562 = vst.msk [vmem:[#allocation2 + $0x70] sm:$0x1] %vm554, 0.0
    %563 = vst.msk [vmem:[#allocation2 + $0x80] sm:$0x1] %vm554, 0.0
    %564 = vst.msk [vmem:[#allocation2 + $0x90] sm:$0x1] %vm554, 0.0
    %565 = vst.msk [vmem:[#allocation2 + $0xa0] sm:$0x1] %vm554, 0.0
    %566 = vst.msk [vmem:[#allocation2 + $0xb0] sm:$0x1] %vm554, 0.0
    %567 = vst.msk [vmem:[#allocation2 + $0xc0] sm:$0x1] %vm554, 0.0
    %568 = vst.msk [vmem:[#allocation2 + $0xd0] sm:$0x1] %vm554, 0.0
    %569 = vst.msk [vmem:[#allocation2 + $0xe0] sm:$0x1] %vm554, 0.0
    %570 = vst.msk [vmem:[#allocation2 + $0xf0] sm:$0x1] %vm554, 0.0
    %571 = vst.msk [vmem:[#allocation2 + $0x100] sm:$0x1] %vm554, 0.0
    %572 = vst.msk [vmem:[#allocation2 + $0x110] sm:$0x1] %vm554, 0.0
    %573 = vst.msk [vmem:[#allocation2 + $0x120] sm:$0x1] %vm554, 0.0
    %574 = vst.msk [vmem:[#allocation2 + $0x130] sm:$0x1] %vm554, 0.0
    %575 = vst.msk [vmem:[#allocation2 + $0x140] sm:$0x1] %vm554, 0.0
    %576 = vst.msk [vmem:[#allocation2 + $0x150] sm:$0x1] %vm554, 0.0
    %vm577 = vcmask 17408
    %578 = vst.msk [vmem:[#allocation2 + $0x9] sm:$0x3] %vm577, 0.0
    %579 = vst.msk [vmem:[#allocation2 + $0x19] sm:$0x3] %vm577, 0.0
    %580 = vst.msk [vmem:[#allocation2 + $0x29] sm:$0x3] %vm577, 0.0
    %581 = vst.msk [vmem:[#allocation2 + $0x39] sm:$0x3] %vm577, 0.0
    %582 = vst.msk [vmem:[#allocation2 + $0x49] sm:$0x3] %vm577, 0.0
    %583 = vst.msk [vmem:[#allocation2 + $0x59] sm:$0x3] %vm577, 0.0
    %584 = vst.msk [vmem:[#allocation2 + $0x69] sm:$0x3] %vm577, 0.0
    %585 = vst.msk [vmem:[#allocation2 + $0x79] sm:$0x3] %vm577, 0.0
    %586 = vst.msk [vmem:[#allocation2 + $0x89] sm:$0x3] %vm577, 0.0
    %587 = vst.msk [vmem:[#allocation2 + $0x99] sm:$0x3] %vm577, 0.0
    %588 = vst.msk [vmem:[#allocation2 + $0xa9] sm:$0x3] %vm577, 0.0
    %589 = vst.msk [vmem:[#allocation2 + $0xb9] sm:$0x3] %vm577, 0.0
    %590 = vst.msk [vmem:[#allocation2 + $0xc9] sm:$0x3] %vm577, 0.0
    %591 = vst.msk [vmem:[#allocation2 + $0xd9] sm:$0x3] %vm577, 0.0
    %592 = vst.msk [vmem:[#allocation2 + $0xe9] sm:$0x3] %vm577, 0.0
    %593 = vst.msk [vmem:[#allocation2 + $0xf9] sm:$0x3] %vm577, 0.0
    %594 = vst.msk [vmem:[#allocation2 + $0x109] sm:$0x3] %vm577, 0.0
    %595 = vst.msk [vmem:[#allocation2 + $0x119] sm:$0x3] %vm577, 0.0
    %596 = vst.msk [vmem:[#allocation2 + $0x129] sm:$0x3] %vm577, 0.0
    %597 = vst.msk [vmem:[#allocation2 + $0x139] sm:$0x3] %vm577, 0.0
    %598 = vst.msk [vmem:[#allocation2 + $0x149] sm:$0x3] %vm577, 0.0
    %599 = vst.msk [vmem:[#allocation2 + $0x159] sm:$0x3] %vm577, 0.0
    %s600 = scalar_lea.vmem [#allocation2], 16
    %601 = vst.msk [vmem:[%s600 + $0x1] sm:$0xff] %vm366, %v524
    %602 = vst.msk [vmem:[%s600 + $0x11] sm:$0xff] %vm366, %v525
    %603 = vst.msk [vmem:[%s600 + $0x21] sm:$0xff] %vm366, %v526
    %604 = vst.msk [vmem:[%s600 + $0x31] sm:$0xff] %vm366, %v527
    %605 = vst.msk [vmem:[%s600 + $0x41] sm:$0xff] %vm366, %v528
    %606 = vst.msk [vmem:[%s600 + $0x51] sm:$0xff] %vm366, %v529
    %607 = vst.msk [vmem:[%s600 + $0x61] sm:$0xff] %vm366, %v530
    %608 = vst.msk [vmem:[%s600 + $0x71] sm:$0xff] %vm366, %v531
    %609 = vst.msk [vmem:[%s600 + $0xb1] sm:$0xff] %vm366, %v532
    %610 = vst.msk [vmem:[%s600 + $0xc1] sm:$0xff] %vm366, %v533
    %611 = vst.msk [vmem:[%s600 + $0xd1] sm:$0xff] %vm366, %v534
    %612 = vst.msk [vmem:[%s600 + $0xe1] sm:$0xff] %vm366, %v535
    %613 = vst.msk [vmem:[%s600 + $0xf1] sm:$0xff] %vm366, %v536
    %614 = vst.msk [vmem:[%s600 + $0x101] sm:$0xff] %vm366, %v537
    %615 = vst.msk [vmem:[%s600 + $0x111] sm:$0xff] %vm366, %v538
    %616 = vst.msk [vmem:[%s600 + $0x121] sm:$0xff] %vm366, %v539
    %v617 = vld [vmem:[#allocation2] sm:$0xff]
    %v618 = vld [vmem:[#allocation2 + $0x10] sm:$0xff]
    %v619 = vld [vmem:[#allocation2 + $0x20] sm:$0xff]
    %v620 = vld [vmem:[#allocation2 + $0x30] sm:$0xff]
    %v621 = vld [vmem:[#allocation2 + $0x40] sm:$0xff]
    %v622 = vld [vmem:[#allocation2 + $0x50] sm:$0xff]
    %v623 = vld [vmem:[#allocation2 + $0x60] sm:$0xff]
    %v624 = vld [vmem:[#allocation2 + $0x70] sm:$0xff]
    %v625 = vld [vmem:[#allocation2 + $0xb0] sm:$0xff]
    %v626 = vld [vmem:[#allocation2 + $0xc0] sm:$0xff]
    %v627 = vld [vmem:[#allocation2 + $0xd0] sm:$0xff]
    %v628 = vld [vmem:[#allocation2 + $0xe0] sm:$0xff]
    %v629 = vld [vmem:[#allocation2 + $0xf0] sm:$0xff]
    %v630 = vld [vmem:[#allocation2 + $0x100] sm:$0xff]
    %v631 = vld [vmem:[#allocation2 + $0x110] sm:$0xff]
    %v632 = vld [vmem:[#allocation2 + $0x120] sm:$0xff]
    %633 = vst.msk [vmem:[#allocation4] sm:$0xff] %vm366, %v617
    %634 = vst.msk [vmem:[#allocation4 + $0x8] sm:$0xff] %vm366, %v618
    %635 = vst.msk [vmem:[#allocation4 + $0x10] sm:$0xff] %vm366, %v619
    %636 = vst.msk [vmem:[#allocation4 + $0x18] sm:$0xff] %vm366, %v620
    %637 = vst.msk [vmem:[#allocation4 + $0x20] sm:$0xff] %vm366, %v621
    %638 = vst.msk [vmem:[#allocation4 + $0x28] sm:$0xff] %vm366, %v622
    %639 = vst.msk [vmem:[#allocation4 + $0x30] sm:$0xff] %vm366, %v623
    %640 = vst.msk [vmem:[#allocation4 + $0x38] sm:$0xff] %vm366, %v624
    %641 = vst.msk [vmem:[#allocation4 + $0x40] sm:$0xff] %vm366, %v625
    %642 = vst.msk [vmem:[#allocation4 + $0x48] sm:$0xff] %vm366, %v626
    %643 = vst.msk [vmem:[#allocation4 + $0x50] sm:$0xff] %vm366, %v627
    %644 = vst.msk [vmem:[#allocation4 + $0x58] sm:$0xff] %vm366, %v628
    %645 = vst.msk [vmem:[#allocation4 + $0x60] sm:$0xff] %vm366, %v629
    %646 = vst.msk [vmem:[#allocation4 + $0x68] sm:$0xff] %vm366, %v630
    %647 = vst.msk [vmem:[#allocation4 + $0x70] sm:$0xff] %vm366, %v631
    %648 = vst.msk [vmem:[#allocation4 + $0x78] sm:$0xff] %vm366, %v632
    %v649 = vld [vmem:[#allocation2 + $0x1] sm:$0xff]
    %v650 = vld [vmem:[#allocation2 + $0x11] sm:$0xff]
    %v651 = vld [vmem:[#allocation2 + $0x21] sm:$0xff]
    %v652 = vld [vmem:[#allocation2 + $0x31] sm:$0xff]
    %v653 = vld [vmem:[#allocation2 + $0x41] sm:$0xff]
    %v654 = vld [vmem:[#allocation2 + $0x51] sm:$0xff]
    %v655 = vld [vmem:[#allocation2 + $0x61] sm:$0xff]
    %v656 = vld [vmem:[#allocation2 + $0x71] sm:$0xff]
    %v657 = vld [vmem:[#allocation2 + $0xb1] sm:$0xff]
    %v658 = vld [vmem:[#allocation2 + $0xc1] sm:$0xff]
    %v659 = vld [vmem:[#allocation2 + $0xd1] sm:$0xff]
    %v660 = vld [vmem:[#allocation2 + $0xe1] sm:$0xff]
    %v661 = vld [vmem:[#allocation2 + $0xf1] sm:$0xff]
    %v662 = vld [vmem:[#allocation2 + $0x101] sm:$0xff]
    %v663 = vld [vmem:[#allocation2 + $0x111] sm:$0xff]
    %v664 = vld [vmem:[#allocation2 + $0x121] sm:$0xff]
    %681 = vrot.lane.b32.xlu0 %v649, 3
    %v682 = vpop.permute.xlu0 %681
    %683 = vrot.lane.b32.xlu0 %v650, 3
    %v684 = vpop.permute.xlu0 %683
    %685 = vrot.lane.b32.xlu0 %v651, 3
    %v686 = vpop.permute.xlu0 %685
    %687 = vrot.lane.b32.xlu0 %v652, 3
    %v688 = vpop.permute.xlu0 %687
    %689 = vrot.lane.b32.xlu0 %v653, 3
    %v690 = vpop.permute.xlu0 %689
    %691 = vrot.lane.b32.xlu0 %v654, 3
    %v692 = vpop.permute.xlu0 %691
    %693 = vrot.lane.b32.xlu0 %v655, 3
    %v694 = vpop.permute.xlu0 %693
    %695 = vrot.lane.b32.xlu0 %v656, 3
    %v696 = vpop.permute.xlu0 %695
    %697 = vrot.lane.b32.xlu0 %v657, 3
    %v698 = vpop.permute.xlu0 %697
    %699 = vrot.lane.b32.xlu0 %v658, 3
    %v700 = vpop.permute.xlu0 %699
    %701 = vrot.lane.b32.xlu0 %v659, 3
    %v702 = vpop.permute.xlu0 %701
    %703 = vrot.lane.b32.xlu0 %v660, 3
    %v704 = vpop.permute.xlu0 %703
    %705 = vrot.lane.b32.xlu0 %v661, 3
    %v706 = vpop.permute.xlu0 %705
    %707 = vrot.lane.b32.xlu0 %v662, 3
    %v708 = vpop.permute.xlu0 %707
    %709 = vrot.lane.b32.xlu0 %v663, 3
    %v710 = vpop.permute.xlu0 %709
    %711 = vrot.lane.b32.xlu0 %v664, 3
    %v712 = vpop.permute.xlu0 %711
    %vm729 = vcmask 48152
    %730 = vst.msk [vmem:[#allocation4] sm:$0xff] %vm729, %v682
    %731 = vst.msk [vmem:[#allocation4 + $0x8] sm:$0xff] %vm729, %v684
    %732 = vst.msk [vmem:[#allocation4 + $0x10] sm:$0xff] %vm729, %v686
    %733 = vst.msk [vmem:[#allocation4 + $0x18] sm:$0xff] %vm729, %v688
    %734 = vst.msk [vmem:[#allocation4 + $0x20] sm:$0xff] %vm729, %v690
    %735 = vst.msk [vmem:[#allocation4 + $0x28] sm:$0xff] %vm729, %v692
    %736 = vst.msk [vmem:[#allocation4 + $0x30] sm:$0xff] %vm729, %v694
    %737 = vst.msk [vmem:[#allocation4 + $0x38] sm:$0xff] %vm729, %v696
    %738 = vst.msk [vmem:[#allocation4 + $0x40] sm:$0xff] %vm729, %v698
    %739 = vst.msk [vmem:[#allocation4 + $0x48] sm:$0xff] %vm729, %v700
    %740 = vst.msk [vmem:[#allocation4 + $0x50] sm:$0xff] %vm729, %v702
    %741 = vst.msk [vmem:[#allocation4 + $0x58] sm:$0xff] %vm729, %v704
    %742 = vst.msk [vmem:[#allocation4 + $0x60] sm:$0xff] %vm729, %v706
    %743 = vst.msk [vmem:[#allocation4 + $0x68] sm:$0xff] %vm729, %v708
    %744 = vst.msk [vmem:[#allocation4 + $0x70] sm:$0xff] %vm729, %v710
    %745 = vst.msk [vmem:[#allocation4 + $0x78] sm:$0xff] %vm729, %v712
    %v746 = vld [vmem:[#allocation2 + $0x2] sm:$0xff]
    %v747 = vld [vmem:[#allocation2 + $0x12] sm:$0xff]
    %v748 = vld [vmem:[#allocation2 + $0x22] sm:$0xff]
    %v749 = vld [vmem:[#allocation2 + $0x32] sm:$0xff]
    %v750 = vld [vmem:[#allocation2 + $0x42] sm:$0xff]
    %v751 = vld [vmem:[#allocation2 + $0x52] sm:$0xff]
    %v752 = vld [vmem:[#allocation2 + $0x62] sm:$0xff]
    %v753 = vld [vmem:[#allocation2 + $0x72] sm:$0xff]
    %v754 = vld [vmem:[#allocation2 + $0xb2] sm:$0xff]
    %v755 = vld [vmem:[#allocation2 + $0xc2] sm:$0xff]
    %v756 = vld [vmem:[#allocation2 + $0xd2] sm:$0xff]
    %v757 = vld [vmem:[#allocation2 + $0xe2] sm:$0xff]
    %v758 = vld [vmem:[#allocation2 + $0xf2] sm:$0xff]
    %v759 = vld [vmem:[#allocation2 + $0x102] sm:$0xff]
    %v760 = vld [vmem:[#allocation2 + $0x112] sm:$0xff]
    %v761 = vld [vmem:[#allocation2 + $0x122] sm:$0xff]
    %778 = vrot.lane.b32.xlu0 %v746, 6
    %v779 = vpop.permute.xlu0 %778
    %780 = vrot.lane.b32.xlu0 %v747, 6
    %v781 = vpop.permute.xlu0 %780
    %782 = vrot.lane.b32.xlu0 %v748, 6
    %v783 = vpop.permute.xlu0 %782
    %784 = vrot.lane.b32.xlu0 %v749, 6
    %v785 = vpop.permute.xlu0 %784
    %786 = vrot.lane.b32.xlu0 %v750, 6
    %v787 = vpop.permute.xlu0 %786
    %788 = vrot.lane.b32.xlu0 %v751, 6
    %v789 = vpop.permute.xlu0 %788
    %790 = vrot.lane.b32.xlu0 %v752, 6
    %v791 = vpop.permute.xlu0 %790
    %792 = vrot.lane.b32.xlu0 %v753, 6
    %v793 = vpop.permute.xlu0 %792
    %794 = vrot.lane.b32.xlu0 %v754, 6
    %v795 = vpop.permute.xlu0 %794
    %796 = vrot.lane.b32.xlu0 %v755, 6
    %v797 = vpop.permute.xlu0 %796
    %798 = vrot.lane.b32.xlu0 %v756, 6
    %v799 = vpop.permute.xlu0 %798
    %800 = vrot.lane.b32.xlu0 %v757, 6
    %v801 = vpop.permute.xlu0 %800
    %802 = vrot.lane.b32.xlu0 %v758, 6
    %v803 = vpop.permute.xlu0 %802
    %804 = vrot.lane.b32.xlu0 %v759, 6
    %v805 = vpop.permute.xlu0 %804
    %806 = vrot.lane.b32.xlu0 %v760, 6
    %v807 = vpop.permute.xlu0 %806
    %808 = vrot.lane.b32.xlu0 %v761, 6
    %v809 = vpop.permute.xlu0 %808
    %vm826 = vcmask 72752
    %827 = vst.msk [vmem:[#allocation4] sm:$0xff] %vm826, %v779
    %828 = vst.msk [vmem:[#allocation4 + $0x8] sm:$0xff] %vm826, %v781
    %829 = vst.msk [vmem:[#allocation4 + $0x10] sm:$0xff] %vm826, %v783
    %830 = vst.msk [vmem:[#allocation4 + $0x18] sm:$0xff] %vm826, %v785
    %831 = vst.msk [vmem:[#allocation4 + $0x20] sm:$0xff] %vm826, %v787
    %832 = vst.msk [vmem:[#allocation4 + $0x28] sm:$0xff] %vm826, %v789
    %833 = vst.msk [vmem:[#allocation4 + $0x30] sm:$0xff] %vm826, %v791
    %834 = vst.msk [vmem:[#allocation4 + $0x38] sm:$0xff] %vm826, %v793
    %835 = vst.msk [vmem:[#allocation4 + $0x40] sm:$0xff] %vm826, %v795
    %836 = vst.msk [vmem:[#allocation4 + $0x48] sm:$0xff] %vm826, %v797
    %837 = vst.msk [vmem:[#allocation4 + $0x50] sm:$0xff] %vm826, %v799
    %838 = vst.msk [vmem:[#allocation4 + $0x58] sm:$0xff] %vm826, %v801
    %839 = vst.msk [vmem:[#allocation4 + $0x60] sm:$0xff] %vm826, %v803
    %840 = vst.msk [vmem:[#allocation4 + $0x68] sm:$0xff] %vm826, %v805
    %841 = vst.msk [vmem:[#allocation4 + $0x70] sm:$0xff] %vm826, %v807
    %842 = vst.msk [vmem:[#allocation4 + $0x78] sm:$0xff] %vm826, %v809
    %v843 = vld [vmem:[#allocation2 + $0x3] sm:$0xff]
    %v844 = vld [vmem:[#allocation2 + $0x13] sm:$0xff]
    %v845 = vld [vmem:[#allocation2 + $0x23] sm:$0xff]
    %v846 = vld [vmem:[#allocation2 + $0x33] sm:$0xff]
    %v847 = vld [vmem:[#allocation2 + $0x43] sm:$0xff]
    %v848 = vld [vmem:[#allocation2 + $0x53] sm:$0xff]
    %v849 = vld [vmem:[#allocation2 + $0x63] sm:$0xff]
    %v850 = vld [vmem:[#allocation2 + $0x73] sm:$0xff]
    %v851 = vld [vmem:[#allocation2 + $0xb3] sm:$0xff]
    %v852 = vld [vmem:[#allocation2 + $0xc3] sm:$0xff]
    %v853 = vld [vmem:[#allocation2 + $0xd3] sm:$0xff]
    %v854 = vld [vmem:[#allocation2 + $0xe3] sm:$0xff]
    %v855 = vld [vmem:[#allocation2 + $0xf3] sm:$0xff]
    %v856 = vld [vmem:[#allocation2 + $0x103] sm:$0xff]
    %v857 = vld [vmem:[#allocation2 + $0x113] sm:$0xff]
    %v858 = vld [vmem:[#allocation2 + $0x123] sm:$0xff]
    %875 = vrot.lane.b32.xlu0 %v843, 9
    %v876 = vpop.permute.xlu0 %875
    %877 = vrot.lane.b32.xlu0 %v844, 9
    %v878 = vpop.permute.xlu0 %877
    %879 = vrot.lane.b32.xlu0 %v845, 9
    %v880 = vpop.permute.xlu0 %879
    %881 = vrot.lane.b32.xlu0 %v846, 9
    %v882 = vpop.permute.xlu0 %881
    %883 = vrot.lane.b32.xlu0 %v847, 9
    %v884 = vpop.permute.xlu0 %883
    %885 = vrot.lane.b32.xlu0 %v848, 9
    %v886 = vpop.permute.xlu0 %885
    %887 = vrot.lane.b32.xlu0 %v849, 9
    %v888 = vpop.permute.xlu0 %887
    %889 = vrot.lane.b32.xlu0 %v850, 9
    %v890 = vpop.permute.xlu0 %889
    %891 = vrot.lane.b32.xlu0 %v851, 9
    %v892 = vpop.permute.xlu0 %891
    %893 = vrot.lane.b32.xlu0 %v852, 9
    %v894 = vpop.permute.xlu0 %893
    %895 = vrot.lane.b32.xlu0 %v853, 9
    %v896 = vpop.permute.xlu0 %895
    %897 = vrot.lane.b32.xlu0 %v854, 9
    %v898 = vpop.permute.xlu0 %897
    %899 = vrot.lane.b32.xlu0 %v855, 9
    %v900 = vpop.permute.xlu0 %899
    %901 = vrot.lane.b32.xlu0 %v856, 9
    %v902 = vpop.permute.xlu0 %901
    %903 = vrot.lane.b32.xlu0 %v857, 9
    %v904 = vpop.permute.xlu0 %903
    %905 = vrot.lane.b32.xlu0 %v858, 9
    %v906 = vpop.permute.xlu0 %905
    %vm923 = vcmask 97352
    %924 = vst.msk [vmem:[#allocation4] sm:$0xff] %vm923, %v876
    %925 = vst.msk [vmem:[#allocation4 + $0x8] sm:$0xff] %vm923, %v878
    %926 = vst.msk [vmem:[#allocation4 + $0x10] sm:$0xff] %vm923, %v880
    %927 = vst.msk [vmem:[#allocation4 + $0x18] sm:$0xff] %vm923, %v882
    %928 = vst.msk [vmem:[#allocation4 + $0x20] sm:$0xff] %vm923, %v884
    %929 = vst.msk [vmem:[#allocation4 + $0x28] sm:$0xff] %vm923, %v886
    %930 = vst.msk [vmem:[#allocation4 + $0x30] sm:$0xff] %vm923, %v888
    %931 = vst.msk [vmem:[#allocation4 + $0x38] sm:$0xff] %vm923, %v890
    %932 = vst.msk [vmem:[#allocation4 + $0x40] sm:$0xff] %vm923, %v892
    %933 = vst.msk [vmem:[#allocation4 + $0x48] sm:$0xff] %vm923, %v894
    %934 = vst.msk [vmem:[#allocation4 + $0x50] sm:$0xff] %vm923, %v896
    %935 = vst.msk [vmem:[#allocation4 + $0x58] sm:$0xff] %vm923, %v898
    %936 = vst.msk [vmem:[#allocation4 + $0x60] sm:$0xff] %vm923, %v900
    %937 = vst.msk [vmem:[#allocation4 + $0x68] sm:$0xff] %vm923, %v902
    %938 = vst.msk [vmem:[#allocation4 + $0x70] sm:$0xff] %vm923, %v904
    %939 = vst.msk [vmem:[#allocation4 + $0x78] sm:$0xff] %vm923, %v906
    %v940 = vld [vmem:[%s600] sm:$0xff]
    %v941 = vld [vmem:[%s600 + $0x10] sm:$0xff]
    %v942 = vld [vmem:[%s600 + $0x20] sm:$0xff]
    %v943 = vld [vmem:[%s600 + $0x30] sm:$0xff]
    %v944 = vld [vmem:[%s600 + $0x40] sm:$0xff]
    %v945 = vld [vmem:[%s600 + $0x50] sm:$0xff]
    %v946 = vld [vmem:[%s600 + $0x60] sm:$0xff]
    %v947 = vld [vmem:[%s600 + $0x70] sm:$0xff]
    %v948 = vld [vmem:[%s600 + $0xb0] sm:$0xff]
    %v949 = vld [vmem:[%s600 + $0xc0] sm:$0xff]
    %v950 = vld [vmem:[%s600 + $0xd0] sm:$0xff]
    %v951 = vld [vmem:[%s600 + $0xe0] sm:$0xff]
    %v952 = vld [vmem:[%s600 + $0xf0] sm:$0xff]
    %v953 = vld [vmem:[%s600 + $0x100] sm:$0xff]
    %v954 = vld [vmem:[%s600 + $0x110] sm:$0xff]
    %v955 = vld [vmem:[%s600 + $0x120] sm:$0xff]
    %972 = vrot.lane.b32.xlu0 %v940, 12
    %v973 = vpop.permute.xlu0 %972
    %974 = vrot.lane.b32.xlu0 %v941, 12
    %v975 = vpop.permute.xlu0 %974
    %976 = vrot.lane.b32.xlu0 %v942, 12
    %v977 = vpop.permute.xlu0 %976
    %978 = vrot.lane.b32.xlu0 %v943, 12
    %v979 = vpop.permute.xlu0 %978
    %980 = vrot.lane.b32.xlu0 %v944, 12
    %v981 = vpop.permute.xlu0 %980
    %982 = vrot.lane.b32.xlu0 %v945, 12
    %v983 = vpop.permute.xlu0 %982
    %984 = vrot.lane.b32.xlu0 %v946, 12
    %v985 = vpop.permute.xlu0 %984
    %986 = vrot.lane.b32.xlu0 %v947, 12
    %v987 = vpop.permute.xlu0 %986
    %988 = vrot.lane.b32.xlu0 %v948, 12
    %v989 = vpop.permute.xlu0 %988
    %990 = vrot.lane.b32.xlu0 %v949, 12
    %v991 = vpop.permute.xlu0 %990
    %992 = vrot.lane.b32.xlu0 %v950, 12
    %v993 = vpop.permute.xlu0 %992
    %994 = vrot.lane.b32.xlu0 %v951, 12
    %v995 = vpop.permute.xlu0 %994
    %996 = vrot.lane.b32.xlu0 %v952, 12
    %v997 = vpop.permute.xlu0 %996
    %998 = vrot.lane.b32.xlu0 %v953, 12
    %v999 = vpop.permute.xlu0 %998
    %1000 = vrot.lane.b32.xlu0 %v954, 12
    %v1001 = vpop.permute.xlu0 %1000
    %1002 = vrot.lane.b32.xlu0 %v955, 12
    %v1003 = vpop.permute.xlu0 %1002
    %vm1020 = vcmask 121952
    %1021 = vst.msk [vmem:[#allocation4] sm:$0xff] %vm1020, %v973
    %1022 = vst.msk [vmem:[#allocation4 + $0x8] sm:$0xff] %vm1020, %v975
    %1023 = vst.msk [vmem:[#allocation4 + $0x10] sm:$0xff] %vm1020, %v977
    %1024 = vst.msk [vmem:[#allocation4 + $0x18] sm:$0xff] %vm1020, %v979
    %1025 = vst.msk [vmem:[#allocation4 + $0x20] sm:$0xff] %vm1020, %v981
    %1026 = vst.msk [vmem:[#allocation4 + $0x28] sm:$0xff] %vm1020, %v983
    %1027 = vst.msk [vmem:[#allocation4 + $0x30] sm:$0xff] %vm1020, %v985
    %1028 = vst.msk [vmem:[#allocation4 + $0x38] sm:$0xff] %vm1020, %v987
    %1029 = vst.msk [vmem:[#allocation4 + $0x40] sm:$0xff] %vm1020, %v989
    %1030 = vst.msk [vmem:[#allocation4 + $0x48] sm:$0xff] %vm1020, %v991
    %1031 = vst.msk [vmem:[#allocation4 + $0x50] sm:$0xff] %vm1020, %v993
    %1032 = vst.msk [vmem:[#allocation4 + $0x58] sm:$0xff] %vm1020, %v995
    %1033 = vst.msk [vmem:[#allocation4 + $0x60] sm:$0xff] %vm1020, %v997
    %1034 = vst.msk [vmem:[#allocation4 + $0x68] sm:$0xff] %vm1020, %v999
    %1035 = vst.msk [vmem:[#allocation4 + $0x70] sm:$0xff] %vm1020, %v1001
    %1036 = vst.msk [vmem:[#allocation4 + $0x78] sm:$0xff] %vm1020, %v1003
    %v1037 = vld [vmem:[%s600 + $0x1] sm:$0xff]
    %v1038 = vld [vmem:[%s600 + $0x11] sm:$0xff]
    %v1039 = vld [vmem:[%s600 + $0x21] sm:$0xff]
    %v1040 = vld [vmem:[%s600 + $0x31] sm:$0xff]
    %v1041 = vld [vmem:[%s600 + $0x41] sm:$0xff]
    %v1042 = vld [vmem:[%s600 + $0x51] sm:$0xff]
    %v1043 = vld [vmem:[%s600 + $0x61] sm:$0xff]
    %v1044 = vld [vmem:[%s600 + $0x71] sm:$0xff]
    %v1045 = vld [vmem:[%s600 + $0xb1] sm:$0xff]
    %v1046 = vld [vmem:[%s600 + $0xc1] sm:$0xff]
    %v1047 = vld [vmem:[%s600 + $0xd1] sm:$0xff]
    %v1048 = vld [vmem:[%s600 + $0xe1] sm:$0xff]
    %v1049 = vld [vmem:[%s600 + $0xf1] sm:$0xff]
    %v1050 = vld [vmem:[%s600 + $0x101] sm:$0xff]
    %v1051 = vld [vmem:[%s600 + $0x111] sm:$0xff]
    %v1052 = vld [vmem:[%s600 + $0x121] sm:$0xff]
    %1069 = vrot.lane.b32.xlu0 %v1037, 15
    %v1070 = vpop.permute.xlu0 %1069
    %1071 = vrot.lane.b32.xlu0 %v1038, 15
    %v1072 = vpop.permute.xlu0 %1071
    %1073 = vrot.lane.b32.xlu0 %v1039, 15
    %v1074 = vpop.permute.xlu0 %1073
    %1075 = vrot.lane.b32.xlu0 %v1040, 15
    %v1076 = vpop.permute.xlu0 %1075
    %1077 = vrot.lane.b32.xlu0 %v1041, 15
    %v1078 = vpop.permute.xlu0 %1077
    %1079 = vrot.lane.b32.xlu0 %v1042, 15
    %v1080 = vpop.permute.xlu0 %1079
    %1081 = vrot.lane.b32.xlu0 %v1043, 15
    %v1082 = vpop.permute.xlu0 %1081
    %1083 = vrot.lane.b32.xlu0 %v1044, 15
    %v1084 = vpop.permute.xlu0 %1083
    %1085 = vrot.lane.b32.xlu0 %v1045, 15
    %v1086 = vpop.permute.xlu0 %1085
    %1087 = vrot.lane.b32.xlu0 %v1046, 15
    %v1088 = vpop.permute.xlu0 %1087
    %1089 = vrot.lane.b32.xlu0 %v1047, 15
    %v1090 = vpop.permute.xlu0 %1089
    %1091 = vrot.lane.b32.xlu0 %v1048, 15
    %v1092 = vpop.permute.xlu0 %1091
    %1093 = vrot.lane.b32.xlu0 %v1049, 15
    %v1094 = vpop.permute.xlu0 %1093
    %1095 = vrot.lane.b32.xlu0 %v1050, 15
    %v1096 = vpop.permute.xlu0 %1095
    %1097 = vrot.lane.b32.xlu0 %v1051, 15
    %v1098 = vpop.permute.xlu0 %1097
    %1099 = vrot.lane.b32.xlu0 %v1052, 15
    %v1100 = vpop.permute.xlu0 %1099
    %vm1117 = vcmask 146552
    %1118 = vst.msk [vmem:[#allocation4] sm:$0xff] %vm1117, %v1070
    %1119 = vst.msk [vmem:[#allocation4 + $0x8] sm:$0xff] %vm1117, %v1072
    %1120 = vst.msk [vmem:[#allocation4 + $0x10] sm:$0xff] %vm1117, %v1074
    %1121 = vst.msk [vmem:[#allocation4 + $0x18] sm:$0xff] %vm1117, %v1076
    %1122 = vst.msk [vmem:[#allocation4 + $0x20] sm:$0xff] %vm1117, %v1078
    %1123 = vst.msk [vmem:[#allocation4 + $0x28] sm:$0xff] %vm1117, %v1080
    %1124 = vst.msk [vmem:[#allocation4 + $0x30] sm:$0xff] %vm1117, %v1082
    %1125 = vst.msk [vmem:[#allocation4 + $0x38] sm:$0xff] %vm1117, %v1084
    %1126 = vst.msk [vmem:[#allocation4 + $0x40] sm:$0xff] %vm1117, %v1086
    %1127 = vst.msk [vmem:[#allocation4 + $0x48] sm:$0xff] %vm1117, %v1088
    %1128 = vst.msk [vmem:[#allocation4 + $0x50] sm:$0xff] %vm1117, %v1090
    %1129 = vst.msk [vmem:[#allocation4 + $0x58] sm:$0xff] %vm1117, %v1092
    %1130 = vst.msk [vmem:[#allocation4 + $0x60] sm:$0xff] %vm1117, %v1094
    %1131 = vst.msk [vmem:[#allocation4 + $0x68] sm:$0xff] %vm1117, %v1096
    %1132 = vst.msk [vmem:[#allocation4 + $0x70] sm:$0xff] %vm1117, %v1098
    %1133 = vst.msk [vmem:[#allocation4 + $0x78] sm:$0xff] %vm1117, %v1100
    %v1134 = vld [vmem:[%s600 + $0x2] sm:$0xff]
    %v1135 = vld [vmem:[%s600 + $0x12] sm:$0xff]
    %v1136 = vld [vmem:[%s600 + $0x22] sm:$0xff]
    %v1137 = vld [vmem:[%s600 + $0x32] sm:$0xff]
    %v1138 = vld [vmem:[%s600 + $0x42] sm:$0xff]
    %v1139 = vld [vmem:[%s600 + $0x52] sm:$0xff]
    %v1140 = vld [vmem:[%s600 + $0x62] sm:$0xff]
    %v1141 = vld [vmem:[%s600 + $0x72] sm:$0xff]
    %v1142 = vld [vmem:[%s600 + $0xb2] sm:$0xff]
    %v1143 = vld [vmem:[%s600 + $0xc2] sm:$0xff]
    %v1144 = vld [vmem:[%s600 + $0xd2] sm:$0xff]
    %v1145 = vld [vmem:[%s600 + $0xe2] sm:$0xff]
    %v1146 = vld [vmem:[%s600 + $0xf2] sm:$0xff]
    %v1147 = vld [vmem:[%s600 + $0x102] sm:$0xff]
    %v1148 = vld [vmem:[%s600 + $0x112] sm:$0xff]
    %v1149 = vld [vmem:[%s600 + $0x122] sm:$0xff]
    %1166 = vrot.lane.b32.xlu0 %v1134, 18
    %v1167 = vpop.permute.xlu0 %1166
    %1168 = vrot.lane.b32.xlu0 %v1135, 18
    %v1169 = vpop.permute.xlu0 %1168
    %1170 = vrot.lane.b32.xlu0 %v1136, 18
    %v1171 = vpop.permute.xlu0 %1170
    %1172 = vrot.lane.b32.xlu0 %v1137, 18
    %v1173 = vpop.permute.xlu0 %1172
    %1174 = vrot.lane.b32.xlu0 %v1138, 18
    %v1175 = vpop.permute.xlu0 %1174
    %1176 = vrot.lane.b32.xlu0 %v1139, 18
    %v1177 = vpop.permute.xlu0 %1176
    %1178 = vrot.lane.b32.xlu0 %v1140, 18
    %v1179 = vpop.permute.xlu0 %1178
    %1180 = vrot.lane.b32.xlu0 %v1141, 18
    %v1181 = vpop.permute.xlu0 %1180
    %1182 = vrot.lane.b32.xlu0 %v1142, 18
    %v1183 = vpop.permute.xlu0 %1182
    %1184 = vrot.lane.b32.xlu0 %v1143, 18
    %v1185 = vpop.permute.xlu0 %1184
    %1186 = vrot.lane.b32.xlu0 %v1144, 18
    %v1187 = vpop.permute.xlu0 %1186
    %1188 = vrot.lane.b32.xlu0 %v1145, 18
    %v1189 = vpop.permute.xlu0 %1188
    %1190 = vrot.lane.b32.xlu0 %v1146, 18
    %v1191 = vpop.permute.xlu0 %1190
    %1192 = vrot.lane.b32.xlu0 %v1147, 18
    %v1193 = vpop.permute.xlu0 %1192
    %1194 = vrot.lane.b32.xlu0 %v1148, 18
    %v1195 = vpop.permute.xlu0 %1194
    %1196 = vrot.lane.b32.xlu0 %v1149, 18
    %v1197 = vpop.permute.xlu0 %1196
    %vm1214 = vcmask 171152
    %1215 = vst.msk [vmem:[#allocation4] sm:$0xff] %vm1214, %v1167
    %1216 = vst.msk [vmem:[#allocation4 + $0x8] sm:$0xff] %vm1214, %v1169
    %1217 = vst.msk [vmem:[#allocation4 + $0x10] sm:$0xff] %vm1214, %v1171
    %1218 = vst.msk [vmem:[#allocation4 + $0x18] sm:$0xff] %vm1214, %v1173
    %1219 = vst.msk [vmem:[#allocation4 + $0x20] sm:$0xff] %vm1214, %v1175
    %1220 = vst.msk [vmem:[#allocation4 + $0x28] sm:$0xff] %vm1214, %v1177
    %1221 = vst.msk [vmem:[#allocation4 + $0x30] sm:$0xff] %vm1214, %v1179
    %1222 = vst.msk [vmem:[#allocation4 + $0x38] sm:$0xff] %vm1214, %v1181
    %1223 = vst.msk [vmem:[#allocation4 + $0x40] sm:$0xff] %vm1214, %v1183
    %1224 = vst.msk [vmem:[#allocation4 + $0x48] sm:$0xff] %vm1214, %v1185
    %1225 = vst.msk [vmem:[#allocation4 + $0x50] sm:$0xff] %vm1214, %v1187
    %1226 = vst.msk [vmem:[#allocation4 + $0x58] sm:$0xff] %vm1214, %v1189
    %1227 = vst.msk [vmem:[#allocation4 + $0x60] sm:$0xff] %vm1214, %v1191
    %1228 = vst.msk [vmem:[#allocation4 + $0x68] sm:$0xff] %vm1214, %v1193
    %1229 = vst.msk [vmem:[#allocation4 + $0x70] sm:$0xff] %vm1214, %v1195
    %1230 = vst.msk [vmem:[#allocation4 + $0x78] sm:$0xff] %vm1214, %v1197
    %v1231 = vld [vmem:[%s600 + $0x3] sm:$0xff]
    %v1232 = vld [vmem:[%s600 + $0x13] sm:$0xff]
    %v1233 = vld [vmem:[%s600 + $0x23] sm:$0xff]
    %v1234 = vld [vmem:[%s600 + $0x33] sm:$0xff]
    %v1235 = vld [vmem:[%s600 + $0x43] sm:$0xff]
    %v1236 = vld [vmem:[%s600 + $0x53] sm:$0xff]
    %v1237 = vld [vmem:[%s600 + $0x63] sm:$0xff]
    %v1238 = vld [vmem:[%s600 + $0x73] sm:$0xff]
    %v1239 = vld [vmem:[%s600 + $0xb3] sm:$0xff]
    %v1240 = vld [vmem:[%s600 + $0xc3] sm:$0xff]
    %v1241 = vld [vmem:[%s600 + $0xd3] sm:$0xff]
    %v1242 = vld [vmem:[%s600 + $0xe3] sm:$0xff]
    %v1243 = vld [vmem:[%s600 + $0xf3] sm:$0xff]
    %v1244 = vld [vmem:[%s600 + $0x103] sm:$0xff]
    %v1245 = vld [vmem:[%s600 + $0x113] sm:$0xff]
    %v1246 = vld [vmem:[%s600 + $0x123] sm:$0xff]
    %1263 = vrot.lane.b32.xlu0 %v1231, 21
    %v1264 = vpop.permute.xlu0 %1263
    %1265 = vrot.lane.b32.xlu0 %v1232, 21
    %v1266 = vpop.permute.xlu0 %1265
    %1267 = vrot.lane.b32.xlu0 %v1233, 21
    %v1268 = vpop.permute.xlu0 %1267
    %1269 = vrot.lane.b32.xlu0 %v1234, 21
    %v1270 = vpop.permute.xlu0 %1269
    %1271 = vrot.lane.b32.xlu0 %v1235, 21
    %v1272 = vpop.permute.xlu0 %1271
    %1273 = vrot.lane.b32.xlu0 %v1236, 21
    %v1274 = vpop.permute.xlu0 %1273
    %1275 = vrot.lane.b32.xlu0 %v1237, 21
    %v1276 = vpop.permute.xlu0 %1275
    %1277 = vrot.lane.b32.xlu0 %v1238, 21
    %v1278 = vpop.permute.xlu0 %1277
    %1279 = vrot.lane.b32.xlu0 %v1239, 21
    %v1280 = vpop.permute.xlu0 %1279
    %1281 = vrot.lane.b32.xlu0 %v1240, 21
    %v1282 = vpop.permute.xlu0 %1281
    %1283 = vrot.lane.b32.xlu0 %v1241, 21
    %v1284 = vpop.permute.xlu0 %1283
    %1285 = vrot.lane.b32.xlu0 %v1242, 21
    %v1286 = vpop.permute.xlu0 %1285
    %1287 = vrot.lane.b32.xlu0 %v1243, 21
    %v1288 = vpop.permute.xlu0 %1287
    %1289 = vrot.lane.b32.xlu0 %v1244, 21
    %v1290 = vpop.permute.xlu0 %1289
    %1291 = vrot.lane.b32.xlu0 %v1245, 21
    %v1292 = vpop.permute.xlu0 %1291
    %1293 = vrot.lane.b32.xlu0 %v1246, 21
    %v1294 = vpop.permute.xlu0 %1293
    %vm1311 = vcmask 195752
    %1312 = vst.msk [vmem:[#allocation4] sm:$0xff] %vm1311, %v1264
    %1313 = vst.msk [vmem:[#allocation4 + $0x8] sm:$0xff] %vm1311, %v1266
    %1314 = vst.msk [vmem:[#allocation4 + $0x10] sm:$0xff] %vm1311, %v1268
    %1315 = vst.msk [vmem:[#allocation4 + $0x18] sm:$0xff] %vm1311, %v1270
    %1316 = vst.msk [vmem:[#allocation4 + $0x20] sm:$0xff] %vm1311, %v1272
    %1317 = vst.msk [vmem:[#allocation4 + $0x28] sm:$0xff] %vm1311, %v1274
    %1318 = vst.msk [vmem:[#allocation4 + $0x30] sm:$0xff] %vm1311, %v1276
    %1319 = vst.msk [vmem:[#allocation4 + $0x38] sm:$0xff] %vm1311, %v1278
    %1320 = vst.msk [vmem:[#allocation4 + $0x40] sm:$0xff] %vm1311, %v1280
    %1321 = vst.msk [vmem:[#allocation4 + $0x48] sm:$0xff] %vm1311, %v1282
    %1322 = vst.msk [vmem:[#allocation4 + $0x50] sm:$0xff] %vm1311, %v1284
    %1323 = vst.msk [vmem:[#allocation4 + $0x58] sm:$0xff] %vm1311, %v1286
    %1324 = vst.msk [vmem:[#allocation4 + $0x60] sm:$0xff] %vm1311, %v1288
    %1325 = vst.msk [vmem:[#allocation4 + $0x68] sm:$0xff] %vm1311, %v1290
    %1326 = vst.msk [vmem:[#allocation4 + $0x70] sm:$0xff] %vm1311, %v1292
    %1327 = vst.msk [vmem:[#allocation4 + $0x78] sm:$0xff] %vm1311, %v1294
    %s1328 = scalar_lea.vmem [#allocation2], 32
    %v1329 = vld [vmem:[%s1328] sm:$0xff]
    %v1330 = vld [vmem:[%s1328 + $0x10] sm:$0xff]
    %v1331 = vld [vmem:[%s1328 + $0x20] sm:$0xff]
    %v1332 = vld [vmem:[%s1328 + $0x30] sm:$0xff]
    %v1333 = vld [vmem:[%s1328 + $0x40] sm:$0xff]
    %v1334 = vld [vmem:[%s1328 + $0x50] sm:$0xff]
    %v1335 = vld [vmem:[%s1328 + $0x60] sm:$0xff]
    %v1336 = vld [vmem:[%s1328 + $0x70] sm:$0xff]
    %v1337 = vld [vmem:[%s1328 + $0xb0] sm:$0xff]
    %v1338 = vld [vmem:[%s1328 + $0xc0] sm:$0xff]
    %v1339 = vld [vmem:[%s1328 + $0xd0] sm:$0xff]
    %v1340 = vld [vmem:[%s1328 + $0xe0] sm:$0xff]
    %v1341 = vld [vmem:[%s1328 + $0xf0] sm:$0xff]
    %v1342 = vld [vmem:[%s1328 + $0x100] sm:$0xff]
    %v1343 = vld [vmem:[%s1328 + $0x110] sm:$0xff]
    %v1344 = vld [vmem:[%s1328 + $0x120] sm:$0xff]
    %1361 = vrot.lane.b32.xlu0 %v1329, 24
    %v1362 = vpop.permute.xlu0 %1361
    %1363 = vrot.lane.b32.xlu0 %v1330, 24
    %v1364 = vpop.permute.xlu0 %1363
    %1365 = vrot.lane.b32.xlu0 %v1331, 24
    %v1366 = vpop.permute.xlu0 %1365
    %1367 = vrot.lane.b32.xlu0 %v1332, 24
    %v1368 = vpop.permute.xlu0 %1367
    %1369 = vrot.lane.b32.xlu0 %v1333, 24
    %v1370 = vpop.permute.xlu0 %1369
    %1371 = vrot.lane.b32.xlu0 %v1334, 24
    %v1372 = vpop.permute.xlu0 %1371
    %1373 = vrot.lane.b32.xlu0 %v1335, 24
    %v1374 = vpop.permute.xlu0 %1373
    %1375 = vrot.lane.b32.xlu0 %v1336, 24
    %v1376 = vpop.permute.xlu0 %1375
    %1377 = vrot.lane.b32.xlu0 %v1337, 24
    %v1378 = vpop.permute.xlu0 %1377
    %1379 = vrot.lane.b32.xlu0 %v1338, 24
    %v1380 = vpop.permute.xlu0 %1379
    %1381 = vrot.lane.b32.xlu0 %v1339, 24
    %v1382 = vpop.permute.xlu0 %1381
    %1383 = vrot.lane.b32.xlu0 %v1340, 24
    %v1384 = vpop.permute.xlu0 %1383
    %1385 = vrot.lane.b32.xlu0 %v1341, 24
    %v1386 = vpop.permute.xlu0 %1385
    %1387 = vrot.lane.b32.xlu0 %v1342, 24
    %v1388 = vpop.permute.xlu0 %1387
    %1389 = vrot.lane.b32.xlu0 %v1343, 24
    %v1390 = vpop.permute.xlu0 %1389
    %1391 = vrot.lane.b32.xlu0 %v1344, 24
    %v1392 = vpop.permute.xlu0 %1391
    %vm1409 = vcmask 220352
    %1410 = vst.msk [vmem:[#allocation4] sm:$0xff] %vm1409, %v1362
    %1411 = vst.msk [vmem:[#allocation4 + $0x8] sm:$0xff] %vm1409, %v1364
    %1412 = vst.msk [vmem:[#allocation4 + $0x10] sm:$0xff] %vm1409, %v1366
    %1413 = vst.msk [vmem:[#allocation4 + $0x18] sm:$0xff] %vm1409, %v1368
    %1414 = vst.msk [vmem:[#allocation4 + $0x20] sm:$0xff] %vm1409, %v1370
    %1415 = vst.msk [vmem:[#allocation4 + $0x28] sm:$0xff] %vm1409, %v1372
    %1416 = vst.msk [vmem:[#allocation4 + $0x30] sm:$0xff] %vm1409, %v1374
    %1417 = vst.msk [vmem:[#allocation4 + $0x38] sm:$0xff] %vm1409, %v1376
    %1418 = vst.msk [vmem:[#allocation4 + $0x40] sm:$0xff] %vm1409, %v1378
    %1419 = vst.msk [vmem:[#allocation4 + $0x48] sm:$0xff] %vm1409, %v1380
    %1420 = vst.msk [vmem:[#allocation4 + $0x50] sm:$0xff] %vm1409, %v1382
    %1421 = vst.msk [vmem:[#allocation4 + $0x58] sm:$0xff] %vm1409, %v1384
    %1422 = vst.msk [vmem:[#allocation4 + $0x60] sm:$0xff] %vm1409, %v1386
    %1423 = vst.msk [vmem:[#allocation4 + $0x68] sm:$0xff] %vm1409, %v1388
    %1424 = vst.msk [vmem:[#allocation4 + $0x70] sm:$0xff] %vm1409, %v1390
    %1425 = vst.msk [vmem:[#allocation4 + $0x78] sm:$0xff] %vm1409, %v1392
    %v1426 = vld [vmem:[%s1328 + $0x1] sm:$0xff]
    %v1427 = vld [vmem:[%s1328 + $0x11] sm:$0xff]
    %v1428 = vld [vmem:[%s1328 + $0x21] sm:$0xff]
    %v1429 = vld [vmem:[%s1328 + $0x31] sm:$0xff]
    %v1430 = vld [vmem:[%s1328 + $0x41] sm:$0xff]
    %v1431 = vld [vmem:[%s1328 + $0x51] sm:$0xff]
    %v1432 = vld [vmem:[%s1328 + $0x61] sm:$0xff]
    %v1433 = vld [vmem:[%s1328 + $0x71] sm:$0xff]
    %v1434 = vld [vmem:[%s1328 + $0xb1] sm:$0xff]
    %v1435 = vld [vmem:[%s1328 + $0xc1] sm:$0xff]
    %v1436 = vld [vmem:[%s1328 + $0xd1] sm:$0xff]
    %v1437 = vld [vmem:[%s1328 + $0xe1] sm:$0xff]
    %v1438 = vld [vmem:[%s1328 + $0xf1] sm:$0xff]
    %v1439 = vld [vmem:[%s1328 + $0x101] sm:$0xff]
    %v1440 = vld [vmem:[%s1328 + $0x111] sm:$0xff]
    %v1441 = vld [vmem:[%s1328 + $0x121] sm:$0xff]
    %1458 = vrot.lane.b32.xlu0 %v1426, 27
    %v1459 = vpop.permute.xlu0 %1458
    %1460 = vrot.lane.b32.xlu0 %v1427, 27
    %v1461 = vpop.permute.xlu0 %1460
    %1462 = vrot.lane.b32.xlu0 %v1428, 27
    %v1463 = vpop.permute.xlu0 %1462
    %1464 = vrot.lane.b32.xlu0 %v1429, 27
    %v1465 = vpop.permute.xlu0 %1464
    %1466 = vrot.lane.b32.xlu0 %v1430, 27
    %v1467 = vpop.permute.xlu0 %1466
    %1468 = vrot.lane.b32.xlu0 %v1431, 27
    %v1469 = vpop.permute.xlu0 %1468
    %1470 = vrot.lane.b32.xlu0 %v1432, 27
    %v1471 = vpop.permute.xlu0 %1470
    %1472 = vrot.lane.b32.xlu0 %v1433, 27
    %v1473 = vpop.permute.xlu0 %1472
    %1474 = vrot.lane.b32.xlu0 %v1434, 27
    %v1475 = vpop.permute.xlu0 %1474
    %1476 = vrot.lane.b32.xlu0 %v1435, 27
    %v1477 = vpop.permute.xlu0 %1476
    %1478 = vrot.lane.b32.xlu0 %v1436, 27
    %v1479 = vpop.permute.xlu0 %1478
    %1480 = vrot.lane.b32.xlu0 %v1437, 27
    %v1481 = vpop.permute.xlu0 %1480
    %1482 = vrot.lane.b32.xlu0 %v1438, 27
    %v1483 = vpop.permute.xlu0 %1482
    %1484 = vrot.lane.b32.xlu0 %v1439, 27
    %v1485 = vpop.permute.xlu0 %1484
    %1486 = vrot.lane.b32.xlu0 %v1440, 27
    %v1487 = vpop.permute.xlu0 %1486
    %1488 = vrot.lane.b32.xlu0 %v1441, 27
    %v1489 = vpop.permute.xlu0 %1488
    %vm1506 = vcmask 244952
    %1507 = vst.msk [vmem:[#allocation4] sm:$0xff] %vm1506, %v1459
    %1508 = vst.msk [vmem:[#allocation4 + $0x8] sm:$0xff] %vm1506, %v1461
    %1509 = vst.msk [vmem:[#allocation4 + $0x10] sm:$0xff] %vm1506, %v1463
    %1510 = vst.msk [vmem:[#allocation4 + $0x18] sm:$0xff] %vm1506, %v1465
    %1511 = vst.msk [vmem:[#allocation4 + $0x20] sm:$0xff] %vm1506, %v1467
    %1512 = vst.msk [vmem:[#allocation4 + $0x28] sm:$0xff] %vm1506, %v1469
    %1513 = vst.msk [vmem:[#allocation4 + $0x30] sm:$0xff] %vm1506, %v1471
    %1514 = vst.msk [vmem:[#allocation4 + $0x38] sm:$0xff] %vm1506, %v1473
    %1515 = vst.msk [vmem:[#allocation4 + $0x40] sm:$0xff] %vm1506, %v1475
    %1516 = vst.msk [vmem:[#allocation4 + $0x48] sm:$0xff] %vm1506, %v1477
    %1517 = vst.msk [vmem:[#allocation4 + $0x50] sm:$0xff] %vm1506, %v1479
    %1518 = vst.msk [vmem:[#allocation4 + $0x58] sm:$0xff] %vm1506, %v1481
    %1519 = vst.msk [vmem:[#allocation4 + $0x60] sm:$0xff] %vm1506, %v1483
    %1520 = vst.msk [vmem:[#allocation4 + $0x68] sm:$0xff] %vm1506, %v1485
    %1521 = vst.msk [vmem:[#allocation4 + $0x70] sm:$0xff] %vm1506, %v1487
    %1522 = vst.msk [vmem:[#allocation4 + $0x78] sm:$0xff] %vm1506, %v1489
    %v1523 = vld [vmem:[%s1328 + $0x2] sm:$0xff]
    %v1524 = vld [vmem:[%s1328 + $0x12] sm:$0xff]
    %v1525 = vld [vmem:[%s1328 + $0x22] sm:$0xff]
    %v1526 = vld [vmem:[%s1328 + $0x32] sm:$0xff]
    %v1527 = vld [vmem:[%s1328 + $0x42] sm:$0xff]
    %v1528 = vld [vmem:[%s1328 + $0x52] sm:$0xff]
    %v1529 = vld [vmem:[%s1328 + $0x62] sm:$0xff]
    %v1530 = vld [vmem:[%s1328 + $0x72] sm:$0xff]
    %v1531 = vld [vmem:[%s1328 + $0xb2] sm:$0xff]
    %v1532 = vld [vmem:[%s1328 + $0xc2] sm:$0xff]
    %v1533 = vld [vmem:[%s1328 + $0xd2] sm:$0xff]
    %v1534 = vld [vmem:[%s1328 + $0xe2] sm:$0xff]
    %v1535 = vld [vmem:[%s1328 + $0xf2] sm:$0xff]
    %v1536 = vld [vmem:[%s1328 + $0x102] sm:$0xff]
    %v1537 = vld [vmem:[%s1328 + $0x112] sm:$0xff]
    %v1538 = vld [vmem:[%s1328 + $0x122] sm:$0xff]
    %1555 = vrot.lane.b32.xlu0 %v1523, 30
    %v1556 = vpop.permute.xlu0 %1555
    %1557 = vrot.lane.b32.xlu0 %v1524, 30
    %v1558 = vpop.permute.xlu0 %1557
    %1559 = vrot.lane.b32.xlu0 %v1525, 30
    %v1560 = vpop.permute.xlu0 %1559
    %1561 = vrot.lane.b32.xlu0 %v1526, 30
    %v1562 = vpop.permute.xlu0 %1561
    %1563 = vrot.lane.b32.xlu0 %v1527, 30
    %v1564 = vpop.permute.xlu0 %1563
    %1565 = vrot.lane.b32.xlu0 %v1528, 30
    %v1566 = vpop.permute.xlu0 %1565
    %1567 = vrot.lane.b32.xlu0 %v1529, 30
    %v1568 = vpop.permute.xlu0 %1567
    %1569 = vrot.lane.b32.xlu0 %v1530, 30
    %v1570 = vpop.permute.xlu0 %1569
    %1571 = vrot.lane.b32.xlu0 %v1531, 30
    %v1572 = vpop.permute.xlu0 %1571
    %1573 = vrot.lane.b32.xlu0 %v1532, 30
    %v1574 = vpop.permute.xlu0 %1573
    %1575 = vrot.lane.b32.xlu0 %v1533, 30
    %v1576 = vpop.permute.xlu0 %1575
    %1577 = vrot.lane.b32.xlu0 %v1534, 30
    %v1578 = vpop.permute.xlu0 %1577
    %1579 = vrot.lane.b32.xlu0 %v1535, 30
    %v1580 = vpop.permute.xlu0 %1579
    %1581 = vrot.lane.b32.xlu0 %v1536, 30
    %v1582 = vpop.permute.xlu0 %1581
    %1583 = vrot.lane.b32.xlu0 %v1537, 30
    %v1584 = vpop.permute.xlu0 %1583
    %1585 = vrot.lane.b32.xlu0 %v1538, 30
    %v1586 = vpop.permute.xlu0 %1585
    %vm1603 = vcmask 269552
    %1604 = vst.msk [vmem:[#allocation4] sm:$0xff] %vm1603, %v1556
    %1605 = vst.msk [vmem:[#allocation4 + $0x8] sm:$0xff] %vm1603, %v1558
    %1606 = vst.msk [vmem:[#allocation4 + $0x10] sm:$0xff] %vm1603, %v1560
    %1607 = vst.msk [vmem:[#allocation4 + $0x18] sm:$0xff] %vm1603, %v1562
    %1608 = vst.msk [vmem:[#allocation4 + $0x20] sm:$0xff] %vm1603, %v1564
    %1609 = vst.msk [vmem:[#allocation4 + $0x28] sm:$0xff] %vm1603, %v1566
    %1610 = vst.msk [vmem:[#allocation4 + $0x30] sm:$0xff] %vm1603, %v1568
    %1611 = vst.msk [vmem:[#allocation4 + $0x38] sm:$0xff] %vm1603, %v1570
    %1612 = vst.msk [vmem:[#allocation4 + $0x40] sm:$0xff] %vm1603, %v1572
    %1613 = vst.msk [vmem:[#allocation4 + $0x48] sm:$0xff] %vm1603, %v1574
    %1614 = vst.msk [vmem:[#allocation4 + $0x50] sm:$0xff] %vm1603, %v1576
    %1615 = vst.msk [vmem:[#allocation4 + $0x58] sm:$0xff] %vm1603, %v1578
    %1616 = vst.msk [vmem:[#allocation4 + $0x60] sm:$0xff] %vm1603, %v1580
    %1617 = vst.msk [vmem:[#allocation4 + $0x68] sm:$0xff] %vm1603, %v1582
    %1618 = vst.msk [vmem:[#allocation4 + $0x70] sm:$0xff] %vm1603, %v1584
    %1619 = vst.msk [vmem:[#allocation4 + $0x78] sm:$0xff] %vm1603, %v1586
    %v1620 = vld [vmem:[%s1328 + $0x3] sm:$0xff]
    %v1621 = vld [vmem:[%s1328 + $0x13] sm:$0xff]
    %v1622 = vld [vmem:[%s1328 + $0x23] sm:$0xff]
    %v1623 = vld [vmem:[%s1328 + $0x33] sm:$0xff]
    %v1624 = vld [vmem:[%s1328 + $0x43] sm:$0xff]
    %v1625 = vld [vmem:[%s1328 + $0x53] sm:$0xff]
    %v1626 = vld [vmem:[%s1328 + $0x63] sm:$0xff]
    %v1627 = vld [vmem:[%s1328 + $0x73] sm:$0xff]
    %v1628 = vld [vmem:[%s1328 + $0xb3] sm:$0xff]
    %v1629 = vld [vmem:[%s1328 + $0xc3] sm:$0xff]
    %v1630 = vld [vmem:[%s1328 + $0xd3] sm:$0xff]
    %v1631 = vld [vmem:[%s1328 + $0xe3] sm:$0xff]
    %v1632 = vld [vmem:[%s1328 + $0xf3] sm:$0xff]
    %v1633 = vld [vmem:[%s1328 + $0x103] sm:$0xff]
    %v1634 = vld [vmem:[%s1328 + $0x113] sm:$0xff]
    %v1635 = vld [vmem:[%s1328 + $0x123] sm:$0xff]
    %1652 = vrot.lane.b32.xlu0 %v1620, 33
    %v1653 = vpop.permute.xlu0 %1652
    %1654 = vrot.lane.b32.xlu0 %v1621, 33
    %v1655 = vpop.permute.xlu0 %1654
    %1656 = vrot.lane.b32.xlu0 %v1622, 33
    %v1657 = vpop.permute.xlu0 %1656
    %1658 = vrot.lane.b32.xlu0 %v1623, 33
    %v1659 = vpop.permute.xlu0 %1658
    %1660 = vrot.lane.b32.xlu0 %v1624, 33
    %v1661 = vpop.permute.xlu0 %1660
    %1662 = vrot.lane.b32.xlu0 %v1625, 33
    %v1663 = vpop.permute.xlu0 %1662
    %1664 = vrot.lane.b32.xlu0 %v1626, 33
    %v1665 = vpop.permute.xlu0 %1664
    %1666 = vrot.lane.b32.xlu0 %v1627, 33
    %v1667 = vpop.permute.xlu0 %1666
    %1668 = vrot.lane.b32.xlu0 %v1628, 33
    %v1669 = vpop.permute.xlu0 %1668
    %1670 = vrot.lane.b32.xlu0 %v1629, 33
    %v1671 = vpop.permute.xlu0 %1670
    %1672 = vrot.lane.b32.xlu0 %v1630, 33
    %v1673 = vpop.permute.xlu0 %1672
    %1674 = vrot.lane.b32.xlu0 %v1631, 33
    %v1675 = vpop.permute.xlu0 %1674
    %1676 = vrot.lane.b32.xlu0 %v1632, 33
    %v1677 = vpop.permute.xlu0 %1676
    %1678 = vrot.lane.b32.xlu0 %v1633, 33
    %v1679 = vpop.permute.xlu0 %1678
    %1680 = vrot.lane.b32.xlu0 %v1634, 33
    %v1681 = vpop.permute.xlu0 %1680
    %1682 = vrot.lane.b32.xlu0 %v1635, 33
    %v1683 = vpop.permute.xlu0 %1682
    %vm1700 = vcmask 294152
    %1701 = vst.msk [vmem:[#allocation4] sm:$0xff] %vm1700, %v1653
    %1702 = vst.msk [vmem:[#allocation4 + $0x8] sm:$0xff] %vm1700, %v1655
    %1703 = vst.msk [vmem:[#allocation4 + $0x10] sm:$0xff] %vm1700, %v1657
    %1704 = vst.msk [vmem:[#allocation4 + $0x18] sm:$0xff] %vm1700, %v1659
    %1705 = vst.msk [vmem:[#allocation4 + $0x20] sm:$0xff] %vm1700, %v1661
    %1706 = vst.msk [vmem:[#allocation4 + $0x28] sm:$0xff] %vm1700, %v1663
    %1707 = vst.msk [vmem:[#allocation4 + $0x30] sm:$0xff] %vm1700, %v1665
    %1708 = vst.msk [vmem:[#allocation4 + $0x38] sm:$0xff] %vm1700, %v1667
    %1709 = vst.msk [vmem:[#allocation4 + $0x40] sm:$0xff] %vm1700, %v1669
    %1710 = vst.msk [vmem:[#allocation4 + $0x48] sm:$0xff] %vm1700, %v1671
    %1711 = vst.msk [vmem:[#allocation4 + $0x50] sm:$0xff] %vm1700, %v1673
    %1712 = vst.msk [vmem:[#allocation4 + $0x58] sm:$0xff] %vm1700, %v1675
    %1713 = vst.msk [vmem:[#allocation4 + $0x60] sm:$0xff] %vm1700, %v1677
    %1714 = vst.msk [vmem:[#allocation4 + $0x68] sm:$0xff] %vm1700, %v1679
    %1715 = vst.msk [vmem:[#allocation4 + $0x70] sm:$0xff] %vm1700, %v1681
    %1716 = vst.msk [vmem:[#allocation4 + $0x78] sm:$0xff] %vm1700, %v1683
    %s1717 = scalar_lea.vmem [#allocation2], 48
    %v1718 = vld [vmem:[%s1717] sm:$0xff]
    %v1719 = vld [vmem:[%s1717 + $0x10] sm:$0xff]
    %v1720 = vld [vmem:[%s1717 + $0x20] sm:$0xff]
    %v1721 = vld [vmem:[%s1717 + $0x30] sm:$0xff]
    %v1722 = vld [vmem:[%s1717 + $0x40] sm:$0xff]
    %v1723 = vld [vmem:[%s1717 + $0x50] sm:$0xff]
    %v1724 = vld [vmem:[%s1717 + $0x60] sm:$0xff]
    %v1725 = vld [vmem:[%s1717 + $0x70] sm:$0xff]
    %v1726 = vld [vmem:[%s1717 + $0xb0] sm:$0xff]
    %v1727 = vld [vmem:[%s1717 + $0xc0] sm:$0xff]
    %v1728 = vld [vmem:[%s1717 + $0xd0] sm:$0xff]
    %v1729 = vld [vmem:[%s1717 + $0xe0] sm:$0xff]
    %v1730 = vld [vmem:[%s1717 + $0xf0] sm:$0xff]
    %v1731 = vld [vmem:[%s1717 + $0x100] sm:$0xff]
    %v1732 = vld [vmem:[%s1717 + $0x110] sm:$0xff]
    %v1733 = vld [vmem:[%s1717 + $0x120] sm:$0xff]
    %1750 = vrot.lane.b32.xlu0 %v1718, 36
    %v1751 = vpop.permute.xlu0 %1750
    %1752 = vrot.lane.b32.xlu0 %v1719, 36
    %v1753 = vpop.permute.xlu0 %1752
    %1754 = vrot.lane.b32.xlu0 %v1720, 36
    %v1755 = vpop.permute.xlu0 %1754
    %1756 = vrot.lane.b32.xlu0 %v1721, 36
    %v1757 = vpop.permute.xlu0 %1756
    %1758 = vrot.lane.b32.xlu0 %v1722, 36
    %v1759 = vpop.permute.xlu0 %1758
    %1760 = vrot.lane.b32.xlu0 %v1723, 36
    %v1761 = vpop.permute.xlu0 %1760
    %1762 = vrot.lane.b32.xlu0 %v1724, 36
    %v1763 = vpop.permute.xlu0 %1762
    %1764 = vrot.lane.b32.xlu0 %v1725, 36
    %v1765 = vpop.permute.xlu0 %1764
    %1766 = vrot.lane.b32.xlu0 %v1726, 36
    %v1767 = vpop.permute.xlu0 %1766
    %1768 = vrot.lane.b32.xlu0 %v1727, 36
    %v1769 = vpop.permute.xlu0 %1768
    %1770 = vrot.lane.b32.xlu0 %v1728, 36
    %v1771 = vpop.permute.xlu0 %1770
    %1772 = vrot.lane.b32.xlu0 %v1729, 36
    %v1773 = vpop.permute.xlu0 %1772
    %1774 = vrot.lane.b32.xlu0 %v1730, 36
    %v1775 = vpop.permute.xlu0 %1774
    %1776 = vrot.lane.b32.xlu0 %v1731, 36
    %v1777 = vpop.permute.xlu0 %1776
    %1778 = vrot.lane.b32.xlu0 %v1732, 36
    %v1779 = vpop.permute.xlu0 %1778
    %1780 = vrot.lane.b32.xlu0 %v1733, 36
    %v1781 = vpop.permute.xlu0 %1780
    %vm1798 = vcmask 318752
    %1799 = vst.msk [vmem:[#allocation4] sm:$0xff] %vm1798, %v1751
    %1800 = vst.msk [vmem:[#allocation4 + $0x8] sm:$0xff] %vm1798, %v1753
    %1801 = vst.msk [vmem:[#allocation4 + $0x10] sm:$0xff] %vm1798, %v1755
    %1802 = vst.msk [vmem:[#allocation4 + $0x18] sm:$0xff] %vm1798, %v1757
    %1803 = vst.msk [vmem:[#allocation4 + $0x20] sm:$0xff] %vm1798, %v1759
    %1804 = vst.msk [vmem:[#allocation4 + $0x28] sm:$0xff] %vm1798, %v1761
    %1805 = vst.msk [vmem:[#allocation4 + $0x30] sm:$0xff] %vm1798, %v1763
    %1806 = vst.msk [vmem:[#allocation4 + $0x38] sm:$0xff] %vm1798, %v1765
    %1807 = vst.msk [vmem:[#allocation4 + $0x40] sm:$0xff] %vm1798, %v1767
    %1808 = vst.msk [vmem:[#allocation4 + $0x48] sm:$0xff] %vm1798, %v1769
    %1809 = vst.msk [vmem:[#allocation4 + $0x50] sm:$0xff] %vm1798, %v1771
    %1810 = vst.msk [vmem:[#allocation4 + $0x58] sm:$0xff] %vm1798, %v1773
    %1811 = vst.msk [vmem:[#allocation4 + $0x60] sm:$0xff] %vm1798, %v1775
    %1812 = vst.msk [vmem:[#allocation4 + $0x68] sm:$0xff] %vm1798, %v1777
    %1813 = vst.msk [vmem:[#allocation4 + $0x70] sm:$0xff] %vm1798, %v1779
    %1814 = vst.msk [vmem:[#allocation4 + $0x78] sm:$0xff] %vm1798, %v1781
    %v1815 = vld [vmem:[%s1717 + $0x1] sm:$0xff]
    %v1816 = vld [vmem:[%s1717 + $0x11] sm:$0xff]
    %v1817 = vld [vmem:[%s1717 + $0x21] sm:$0xff]
    %v1818 = vld [vmem:[%s1717 + $0x31] sm:$0xff]
    %v1819 = vld [vmem:[%s1717 + $0x41] sm:$0xff]
    %v1820 = vld [vmem:[%s1717 + $0x51] sm:$0xff]
    %v1821 = vld [vmem:[%s1717 + $0x61] sm:$0xff]
    %v1822 = vld [vmem:[%s1717 + $0x71] sm:$0xff]
    %v1823 = vld [vmem:[%s1717 + $0xb1] sm:$0xff]
    %v1824 = vld [vmem:[%s1717 + $0xc1] sm:$0xff]
    %v1825 = vld [vmem:[%s1717 + $0xd1] sm:$0xff]
    %v1826 = vld [vmem:[%s1717 + $0xe1] sm:$0xff]
    %v1827 = vld [vmem:[%s1717 + $0xf1] sm:$0xff]
    %v1828 = vld [vmem:[%s1717 + $0x101] sm:$0xff]
    %v1829 = vld [vmem:[%s1717 + $0x111] sm:$0xff]
    %v1830 = vld [vmem:[%s1717 + $0x121] sm:$0xff]
    %1847 = vrot.lane.b32.xlu0 %v1815, 39
    %v1848 = vpop.permute.xlu0 %1847
    %1849 = vrot.lane.b32.xlu0 %v1816, 39
    %v1850 = vpop.permute.xlu0 %1849
    %1851 = vrot.lane.b32.xlu0 %v1817, 39
    %v1852 = vpop.permute.xlu0 %1851
    %1853 = vrot.lane.b32.xlu0 %v1818, 39
    %v1854 = vpop.permute.xlu0 %1853
    %1855 = vrot.lane.b32.xlu0 %v1819, 39
    %v1856 = vpop.permute.xlu0 %1855
    %1857 = vrot.lane.b32.xlu0 %v1820, 39
    %v1858 = vpop.permute.xlu0 %1857
    %1859 = vrot.lane.b32.xlu0 %v1821, 39
    %v1860 = vpop.permute.xlu0 %1859
    %1861 = vrot.lane.b32.xlu0 %v1822, 39
    %v1862 = vpop.permute.xlu0 %1861
    %1863 = vrot.lane.b32.xlu0 %v1823, 39
    %v1864 = vpop.permute.xlu0 %1863
    %1865 = vrot.lane.b32.xlu0 %v1824, 39
    %v1866 = vpop.permute.xlu0 %1865
    %1867 = vrot.lane.b32.xlu0 %v1825, 39
    %v1868 = vpop.permute.xlu0 %1867
    %1869 = vrot.lane.b32.xlu0 %v1826, 39
    %v1870 = vpop.permute.xlu0 %1869
    %1871 = vrot.lane.b32.xlu0 %v1827, 39
    %v1872 = vpop.permute.xlu0 %1871
    %1873 = vrot.lane.b32.xlu0 %v1828, 39
    %v1874 = vpop.permute.xlu0 %1873
    %1875 = vrot.lane.b32.xlu0 %v1829, 39
    %v1876 = vpop.permute.xlu0 %1875
    %1877 = vrot.lane.b32.xlu0 %v1830, 39
    %v1878 = vpop.permute.xlu0 %1877
    %vm1895 = vcmask 343352
    %1896 = vst.msk [vmem:[#allocation4] sm:$0xff] %vm1895, %v1848
    %1897 = vst.msk [vmem:[#allocation4 + $0x8] sm:$0xff] %vm1895, %v1850
    %1898 = vst.msk [vmem:[#allocation4 + $0x10] sm:$0xff] %vm1895, %v1852
    %1899 = vst.msk [vmem:[#allocation4 + $0x18] sm:$0xff] %vm1895, %v1854
    %1900 = vst.msk [vmem:[#allocation4 + $0x20] sm:$0xff] %vm1895, %v1856
    %1901 = vst.msk [vmem:[#allocation4 + $0x28] sm:$0xff] %vm1895, %v1858
    %1902 = vst.msk [vmem:[#allocation4 + $0x30] sm:$0xff] %vm1895, %v1860
    %1903 = vst.msk [vmem:[#allocation4 + $0x38] sm:$0xff] %vm1895, %v1862
    %1904 = vst.msk [vmem:[#allocation4 + $0x40] sm:$0xff] %vm1895, %v1864
    %1905 = vst.msk [vmem:[#allocation4 + $0x48] sm:$0xff] %vm1895, %v1866
    %1906 = vst.msk [vmem:[#allocation4 + $0x50] sm:$0xff] %vm1895, %v1868
    %1907 = vst.msk [vmem:[#allocation4 + $0x58] sm:$0xff] %vm1895, %v1870
    %1908 = vst.msk [vmem:[#allocation4 + $0x60] sm:$0xff] %vm1895, %v1872
    %1909 = vst.msk [vmem:[#allocation4 + $0x68] sm:$0xff] %vm1895, %v1874
    %1910 = vst.msk [vmem:[#allocation4 + $0x70] sm:$0xff] %vm1895, %v1876
    %1911 = vst.msk [vmem:[#allocation4 + $0x78] sm:$0xff] %vm1895, %v1878
    %v1912 = vld [vmem:[%s1717 + $0x2] sm:$0xff]
    %v1913 = vld [vmem:[%s1717 + $0x12] sm:$0xff]
    %v1914 = vld [vmem:[%s1717 + $0x22] sm:$0xff]
    %v1915 = vld [vmem:[%s1717 + $0x32] sm:$0xff]
    %v1916 = vld [vmem:[%s1717 + $0x42] sm:$0xff]
    %v1917 = vld [vmem:[%s1717 + $0x52] sm:$0xff]
    %v1918 = vld [vmem:[%s1717 + $0x62] sm:$0xff]
    %v1919 = vld [vmem:[%s1717 + $0x72] sm:$0xff]
    %v1920 = vld [vmem:[%s1717 + $0xb2] sm:$0xff]
    %v1921 = vld [vmem:[%s1717 + $0xc2] sm:$0xff]
    %v1922 = vld [vmem:[%s1717 + $0xd2] sm:$0xff]
    %v1923 = vld [vmem:[%s1717 + $0xe2] sm:$0xff]
    %v1924 = vld [vmem:[%s1717 + $0xf2] sm:$0xff]
    %v1925 = vld [vmem:[%s1717 + $0x102] sm:$0xff]
    %v1926 = vld [vmem:[%s1717 + $0x112] sm:$0xff]
    %v1927 = vld [vmem:[%s1717 + $0x122] sm:$0xff]
    %1944 = vrot.lane.b32.xlu0 %v1912, 42
    %v1945 = vpop.permute.xlu0 %1944
    %1946 = vrot.lane.b32.xlu0 %v1913, 42
    %v1947 = vpop.permute.xlu0 %1946
    %1948 = vrot.lane.b32.xlu0 %v1914, 42
    %v1949 = vpop.permute.xlu0 %1948
    %1950 = vrot.lane.b32.xlu0 %v1915, 42
    %v1951 = vpop.permute.xlu0 %1950
    %1952 = vrot.lane.b32.xlu0 %v1916, 42
    %v1953 = vpop.permute.xlu0 %1952
    %1954 = vrot.lane.b32.xlu0 %v1917, 42
    %v1955 = vpop.permute.xlu0 %1954
    %1956 = vrot.lane.b32.xlu0 %v1918, 42
    %v1957 = vpop.permute.xlu0 %1956
    %1958 = vrot.lane.b32.xlu0 %v1919, 42
    %v1959 = vpop.permute.xlu0 %1958
    %1960 = vrot.lane.b32.xlu0 %v1920, 42
    %v1961 = vpop.permute.xlu0 %1960
    %1962 = vrot.lane.b32.xlu0 %v1921, 42
    %v1963 = vpop.permute.xlu0 %1962
    %1964 = vrot.lane.b32.xlu0 %v1922, 42
    %v1965 = vpop.permute.xlu0 %1964
    %1966 = vrot.lane.b32.xlu0 %v1923, 42
    %v1967 = vpop.permute.xlu0 %1966
    %1968 = vrot.lane.b32.xlu0 %v1924, 42
    %v1969 = vpop.permute.xlu0 %1968
    %1970 = vrot.lane.b32.xlu0 %v1925, 42
    %v1971 = vpop.permute.xlu0 %1970
    %1972 = vrot.lane.b32.xlu0 %v1926, 42
    %v1973 = vpop.permute.xlu0 %1972
    %1974 = vrot.lane.b32.xlu0 %v1927, 42
    %v1975 = vpop.permute.xlu0 %1974
    %vm1992 = vcmask 367952
    %1993 = vst.msk [vmem:[#allocation4] sm:$0xff] %vm1992, %v1945
    %1994 = vst.msk [vmem:[#allocation4 + $0x8] sm:$0xff] %vm1992, %v1947
    %1995 = vst.msk [vmem:[#allocation4 + $0x10] sm:$0xff] %vm1992, %v1949
    %1996 = vst.msk [vmem:[#allocation4 + $0x18] sm:$0xff] %vm1992, %v1951
    %1997 = vst.msk [vmem:[#allocation4 + $0x20] sm:$0xff] %vm1992, %v1953
    %1998 = vst.msk [vmem:[#allocation4 + $0x28] sm:$0xff] %vm1992, %v1955
    %1999 = vst.msk [vmem:[#allocation4 + $0x30] sm:$0xff] %vm1992, %v1957
    %2000 = vst.msk [vmem:[#allocation4 + $0x38] sm:$0xff] %vm1992, %v1959
    %2001 = vst.msk [vmem:[#allocation4 + $0x40] sm:$0xff] %vm1992, %v1961
    %2002 = vst.msk [vmem:[#allocation4 + $0x48] sm:$0xff] %vm1992, %v1963
    %2003 = vst.msk [vmem:[#allocation4 + $0x50] sm:$0xff] %vm1992, %v1965
    %2004 = vst.msk [vmem:[#allocation4 + $0x58] sm:$0xff] %vm1992, %v1967
    %2005 = vst.msk [vmem:[#allocation4 + $0x60] sm:$0xff] %vm1992, %v1969
    %2006 = vst.msk [vmem:[#allocation4 + $0x68] sm:$0xff] %vm1992, %v1971
    %2007 = vst.msk [vmem:[#allocation4 + $0x70] sm:$0xff] %vm1992, %v1973
    %2008 = vst.msk [vmem:[#allocation4 + $0x78] sm:$0xff] %vm1992, %v1975
    %v2009 = vld [vmem:[%s1717 + $0x3] sm:$0xff]
    %v2010 = vld [vmem:[%s1717 + $0x13] sm:$0xff]
    %v2011 = vld [vmem:[%s1717 + $0x23] sm:$0xff]
    %v2012 = vld [vmem:[%s1717 + $0x33] sm:$0xff]
    %v2013 = vld [vmem:[%s1717 + $0x43] sm:$0xff]
    %v2014 = vld [vmem:[%s1717 + $0x53] sm:$0xff]
    %v2015 = vld [vmem:[%s1717 + $0x63] sm:$0xff]
    %v2016 = vld [vmem:[%s1717 + $0x73] sm:$0xff]
    %v2017 = vld [vmem:[%s1717 + $0xb3] sm:$0xff]
    %v2018 = vld [vmem:[%s1717 + $0xc3] sm:$0xff]
    %v2019 = vld [vmem:[%s1717 + $0xd3] sm:$0xff]
    %v2020 = vld [vmem:[%s1717 + $0xe3] sm:$0xff]
    %v2021 = vld [vmem:[%s1717 + $0xf3] sm:$0xff]
    %v2022 = vld [vmem:[%s1717 + $0x103] sm:$0xff]
    %v2023 = vld [vmem:[%s1717 + $0x113] sm:$0xff]
    %v2024 = vld [vmem:[%s1717 + $0x123] sm:$0xff]
    %2041 = vrot.lane.b32.xlu0 %v2009, 45
    %v2042 = vpop.permute.xlu0 %2041
    %2043 = vrot.lane.b32.xlu0 %v2010, 45
    %v2044 = vpop.permute.xlu0 %2043
    %2045 = vrot.lane.b32.xlu0 %v2011, 45
    %v2046 = vpop.permute.xlu0 %2045
    %2047 = vrot.lane.b32.xlu0 %v2012, 45
    %v2048 = vpop.permute.xlu0 %2047
    %2049 = vrot.lane.b32.xlu0 %v2013, 45
    %v2050 = vpop.permute.xlu0 %2049
    %2051 = vrot.lane.b32.xlu0 %v2014, 45
    %v2052 = vpop.permute.xlu0 %2051
    %2053 = vrot.lane.b32.xlu0 %v2015, 45
    %v2054 = vpop.permute.xlu0 %2053
    %2055 = vrot.lane.b32.xlu0 %v2016, 45
    %v2056 = vpop.permute.xlu0 %2055
    %2057 = vrot.lane.b32.xlu0 %v2017, 45
    %v2058 = vpop.permute.xlu0 %2057
    %2059 = vrot.lane.b32.xlu0 %v2018, 45
    %v2060 = vpop.permute.xlu0 %2059
    %2061 = vrot.lane.b32.xlu0 %v2019, 45
    %v2062 = vpop.permute.xlu0 %2061
    %2063 = vrot.lane.b32.xlu0 %v2020, 45
    %v2064 = vpop.permute.xlu0 %2063
    %2065 = vrot.lane.b32.xlu0 %v2021, 45
    %v2066 = vpop.permute.xlu0 %2065
    %2067 = vrot.lane.b32.xlu0 %v2022, 45
    %v2068 = vpop.permute.xlu0 %2067
    %2069 = vrot.lane.b32.xlu0 %v2023, 45
    %v2070 = vpop.permute.xlu0 %2069
    %2071 = vrot.lane.b32.xlu0 %v2024, 45
    %v2072 = vpop.permute.xlu0 %2071
    %vm2089 = vcmask 392552
    %2090 = vst.msk [vmem:[#allocation4] sm:$0xff] %vm2089, %v2042
    %2091 = vst.msk [vmem:[#allocation4 + $0x8] sm:$0xff] %vm2089, %v2044
    %2092 = vst.msk [vmem:[#allocation4 + $0x10] sm:$0xff] %vm2089, %v2046
    %2093 = vst.msk [vmem:[#allocation4 + $0x18] sm:$0xff] %vm2089, %v2048
    %2094 = vst.msk [vmem:[#allocation4 + $0x20] sm:$0xff] %vm2089, %v2050
    %2095 = vst.msk [vmem:[#allocation4 + $0x28] sm:$0xff] %vm2089, %v2052
    %2096 = vst.msk [vmem:[#allocation4 + $0x30] sm:$0xff] %vm2089, %v2054
    %2097 = vst.msk [vmem:[#allocation4 + $0x38] sm:$0xff] %vm2089, %v2056
    %2098 = vst.msk [vmem:[#allocation4 + $0x40] sm:$0xff] %vm2089, %v2058
    %2099 = vst.msk [vmem:[#allocation4 + $0x48] sm:$0xff] %vm2089, %v2060
    %2100 = vst.msk [vmem:[#allocation4 + $0x50] sm:$0xff] %vm2089, %v2062
    %2101 = vst.msk [vmem:[#allocation4 + $0x58] sm:$0xff] %vm2089, %v2064
    %2102 = vst.msk [vmem:[#allocation4 + $0x60] sm:$0xff] %vm2089, %v2066
    %2103 = vst.msk [vmem:[#allocation4 + $0x68] sm:$0xff] %vm2089, %v2068
    %2104 = vst.msk [vmem:[#allocation4 + $0x70] sm:$0xff] %vm2089, %v2070
    %2105 = vst.msk [vmem:[#allocation4 + $0x78] sm:$0xff] %vm2089, %v2072
    %v2106 = vld [vmem:[#allocation4] sm:$0xff]
    %v2107 = vld [vmem:[#allocation4 + $0x8] sm:$0xff]
    %v2108 = vld [vmem:[#allocation4 + $0x10] sm:$0xff]
    %v2109 = vld [vmem:[#allocation4 + $0x18] sm:$0xff]
    %v2110 = vld [vmem:[#allocation4 + $0x20] sm:$0xff]
    %v2111 = vld [vmem:[#allocation4 + $0x28] sm:$0xff]
    %v2112 = vld [vmem:[#allocation4 + $0x30] sm:$0xff]
    %v2113 = vld [vmem:[#allocation4 + $0x38] sm:$0xff]
    %v2114 = vld [vmem:[#allocation4 + $0x40] sm:$0xff]
    %v2115 = vld [vmem:[#allocation4 + $0x48] sm:$0xff]
    %v2116 = vld [vmem:[#allocation4 + $0x50] sm:$0xff]
    %v2117 = vld [vmem:[#allocation4 + $0x58] sm:$0xff]
    %v2118 = vld [vmem:[#allocation4 + $0x60] sm:$0xff]
    %v2119 = vld [vmem:[#allocation4 + $0x68] sm:$0xff]
    %v2120 = vld [vmem:[#allocation4 + $0x70] sm:$0xff]
    %v2121 = vld [vmem:[#allocation4 + $0x78] sm:$0xff]
    %v2122 = vpack.c.bf16 %v2107, %v2106
    %v2123 = vpack.c.bf16 %v2109, %v2108
    %v2124 = vpack.c.bf16 %v2111, %v2110
    %v2125 = vpack.c.bf16 %v2113, %v2112
    %v2126 = vpack.c.bf16 %v2115, %v2114
    %v2127 = vpack.c.bf16 %v2117, %v2116
    %v2128 = vpack.c.bf16 %v2119, %v2118
    %v2129 = vpack.c.bf16 %v2121, %v2120
    %v2130 = vld [vmem:[#allocation12] sm:$0xf]
    %v2131 = vld [vmem:[#allocation12 + $0x4] sm:$0xf]
    %v2132 = vld [vmem:[#allocation12 + $0x8] sm:$0xf]
    %v2133 = vld [vmem:[#allocation12 + $0xc] sm:$0xf]
    %v2134 = vld [vmem:[#allocation12 + $0x10] sm:$0xf]
    %v2135 = vld [vmem:[#allocation12 + $0x14] sm:$0xf]
    %v2136 = vld [vmem:[#allocation13] sm:$0x1]
    %v2138 = vperm.slane %v2136, 0
    %v2146 = vunpack.c.l.b16 %v2130
    %v2147 = vunpack.c.l.b16 %v2131
    %v2148 = vunpack.c.l.b16 %v2132
    %v2149 = vunpack.c.l.b16 %v2133
    %v2150 = vunpack.c.l.b16 %v2134
    %v2151 = vunpack.c.l.b16 %v2135
    %v2152 = vpack.c.b16 %v2147, %v2146
    %v2153 = vpack.c.b16 %v2149, %v2148
    %v2154 = vpack.c.b16 %v2151, %v2150
    %vm2158 = vcmask 392192
    %v2160 = vsel %vm2158, %v2122, 0
    %v2163 = vsel %vm2158, %v2123, 0
    %v2166 = vsel %vm2158, %v2124, 0
    %v2169 = vsel %vm2158, %v2125, 0
    %v2172 = vsel %vm2158, %v2126, 0
    %v2175 = vsel %vm2158, %v2127, 0
    %v2178 = vsel %vm2158, %v2128, 0
    %v2181 = vsel %vm2158, %v2129, 0
    %2183 = vmatpush.bf16.msra.mxu0 0
    %2184 = vmatpush.bf16.msra.mxu0 0
    %2185 = vmatpush.bf16.msra.mxu0 0
    %2186 = vmatpush.bf16.msra.mxu0 0
    %2187 = vmatpush.bf16.msra.mxu0 0
    %2188 = vmatpush.bf16.msra.mxu0 %v2154
    %2189 = vmatpush.bf16.msra.mxu0 %v2153
    %2190 = vmatpush.bf16.msra.mxu0 %v2152
    %2191 = vmatmul.bf16.gmra.mxu0 %v2160
    %v2192 = vpop.f32.mrf.mxu0
    %v2193 = vadd.f32 %v2138, %v2192
    %v2194 = vpop.f32.mrf.mxu0
    %v2195 = vadd.f32 %v2138, %v2194
    %2196 = vmatmul.bf16.gmra.mxu0 %v2163
    %v2197 = vpop.f32.mrf.mxu0
    %v2198 = vadd.f32 %v2138, %v2197
    %v2199 = vpop.f32.mrf.mxu0
    %v2200 = vadd.f32 %v2138, %v2199
    %2201 = vmatmul.bf16.gmra.mxu0 %v2166
    %v2202 = vpop.f32.mrf.mxu0
    %v2203 = vadd.f32 %v2138, %v2202
    %v2204 = vpop.f32.mrf.mxu0
    %v2205 = vadd.f32 %v2138, %v2204
    %2206 = vmatmul.bf16.gmra.mxu0 %v2169
    %v2207 = vpop.f32.mrf.mxu0
    %v2208 = vadd.f32 %v2138, %v2207
    %v2209 = vpop.f32.mrf.mxu0
    %v2210 = vadd.f32 %v2138, %v2209
    %2211 = vmatmul.bf16.gmra.mxu0 %v2172
    %v2212 = vpop.f32.mrf.mxu0
    %v2213 = vadd.f32 %v2138, %v2212
    %v2214 = vpop.f32.mrf.mxu0
    %v2215 = vadd.f32 %v2138, %v2214
    %2216 = vmatmul.bf16.gmra.mxu0 %v2175
    %v2217 = vpop.f32.mrf.mxu0
    %v2218 = vadd.f32 %v2138, %v2217
    %v2219 = vpop.f32.mrf.mxu0
    %v2220 = vadd.f32 %v2138, %v2219
    %2221 = vmatmul.bf16.gmra.mxu0 %v2178
    %v2222 = vpop.f32.mrf.mxu0
    %v2223 = vadd.f32 %v2138, %v2222
    %v2224 = vpop.f32.mrf.mxu0
    %v2225 = vadd.f32 %v2138, %v2224
    %2226 = vmatmul.bf16.gmra.mxu0 %v2181
    %v2227 = vpop.f32.mrf.mxu0
    %v2228 = vadd.f32 %v2138, %v2227
    %v2229 = vpop.f32.mrf.mxu0
    %v2230 = vadd.f32 %v2138, %v2229
    %2231 = vdwg.mxu0
    %v2232 = vmax.f32 %v2193, 0.0
    %v2233 = vmax.f32 %v2195, 0.0
    %v2234 = vmax.f32 %v2198, 0.0
    %v2235 = vmax.f32 %v2200, 0.0
    %v2236 = vmax.f32 %v2203, 0.0
    %v2237 = vmax.f32 %v2205, 0.0
    %v2238 = vmax.f32 %v2208, 0.0
    %v2239 = vmax.f32 %v2210, 0.0
    %v2240 = vmax.f32 %v2213, 0.0
    %v2241 = vmax.f32 %v2215, 0.0
    %v2242 = vmax.f32 %v2218, 0.0
    %v2243 = vmax.f32 %v2220, 0.0
    %v2244 = vmax.f32 %v2223, 0.0
    %v2245 = vmax.f32 %v2225, 0.0
    %v2246 = vmax.f32 %v2228, 0.0
    %v2247 = vmax.f32 %v2230, 0.0
    %v2248 = vld [vmem:[#allocation15] sm:$0x1]
    %v2249 = vld [vmem:[#allocation16] sm:$0x1]
    %v2250 = vadd.f32 %v2232, %v2233
    %v2251 = vadd.f32 %v2250, %v2234
    %v2252 = vadd.f32 %v2251, %v2235
    %v2253 = vadd.f32 %v2252, %v2236
    %v2254 = vadd.f32 %v2253, %v2237
    %v2255 = vadd.f32 %v2254, %v2238
    %v2256 = vadd.f32 %v2255, %v2239
    %v2257 = vadd.f32 %v2256, %v2240
    %v2258 = vadd.f32 %v2257, %v2241
    %v2259 = vadd.f32 %v2258, %v2242
    %v2260 = vadd.f32 %v2259, %v2243
    %v2261 = vadd.f32 %v2260, %v2244
    %v2262 = vadd.f32 %v2261, %v2245
    %v2263 = vadd.f32 %v2262, %v2246
    %v2264 = vadd.f32 %v2263, %v2247
    %v2265 = vrot.slane %v2264, 4
    %v2266 = vadd.f32 %v2264, %v2265
    %v2267 = vrot.slane %v2266, 2
    %v2268 = vadd.f32 %v2266, %v2267
    %v2269 = vrot.slane %v2268, 1
    %v2270 = vadd.f32 %v2268, %v2269
    %v2271 = vmul.f32 %v2270, 0.0078125
    %v2272 = vsub.f32 %v2232, %v2271
    %v2273 = vsub.f32 %v2233, %v2271
    %v2274 = vsub.f32 %v2234, %v2271
    %v2275 = vsub.f32 %v2235, %v2271
    %v2276 = vsub.f32 %v2236, %v2271
    %v2277 = vsub.f32 %v2237, %v2271
    %v2278 = vsub.f32 %v2238, %v2271
    %v2279 = vsub.f32 %v2239, %v2271
    %v2280 = vsub.f32 %v2240, %v2271
    %v2281 = vsub.f32 %v2241, %v2271
    %v2282 = vsub.f32 %v2242, %v2271
    %v2283 = vsub.f32 %v2243, %v2271
    %v2284 = vsub.f32 %v2244, %v2271
    %v2285 = vsub.f32 %v2245, %v2271
    %v2286 = vsub.f32 %v2246, %v2271
    %v2287 = vsub.f32 %v2247, %v2271
    %v2288 = vmul.f32 %v2272, %v2272
    %v2289 = vmul.f32 %v2273, %v2273
    %v2290 = vmul.f32 %v2274, %v2274
    %v2291 = vmul.f32 %v2275, %v2275
    %v2292 = vmul.f32 %v2276, %v2276
    %v2293 = vmul.f32 %v2277, %v2277
    %v2294 = vmul.f32 %v2278, %v2278
    %v2295 = vmul.f32 %v2279, %v2279
    %v2296 = vmul.f32 %v2280, %v2280
    %v2297 = vmul.f32 %v2281, %v2281
    %v2298 = vmul.f32 %v2282, %v2282
    %v2299 = vmul.f32 %v2283, %v2283
    %v2300 = vmul.f32 %v2284, %v2284
    %v2301 = vmul.f32 %v2285, %v2285
    %v2302 = vmul.f32 %v2286, %v2286
    %v2303 = vmul.f32 %v2287, %v2287
    %v2304 = vadd.f32 %v2288, %v2289
    %v2305 = vadd.f32 %v2304, %v2290
    %v2306 = vadd.f32 %v2305, %v2291
    %v2307 = vadd.f32 %v2306, %v2292
    %v2308 = vadd.f32 %v2307, %v2293
    %v2309 = vadd.f32 %v2308, %v2294
    %v2310 = vadd.f32 %v2309, %v2295
    %v2311 = vadd.f32 %v2310, %v2296
    %v2312 = vadd.f32 %v2311, %v2297
    %v2313 = vadd.f32 %v2312, %v2298
    %v2314 = vadd.f32 %v2313, %v2299
    %v2315 = vadd.f32 %v2314, %v2300
    %v2316 = vadd.f32 %v2315, %v2301
    %v2317 = vadd.f32 %v2316, %v2302
    %v2318 = vadd.f32 %v2317, %v2303
    %v2319 = vrot.slane %v2318, 4
    %v2320 = vadd.f32 %v2318, %v2319
    %v2321 = vrot.slane %v2320, 2
    %v2322 = vadd.f32 %v2320, %v2321
    %v2323 = vrot.slane %v2322, 1
    %v2324 = vadd.f32 %v2322, %v2323
    %v2325 = vmul.f32 %v2324, 0.0078125
    %v2326 = vadd.f32 %v2325, 1e-05
    %v2327 = vrsqrt.pop %v2326
    %v2328 = vmul.f32 %v2327, %v2326
    %v2329 = vmul.f32 %v2328, %v2327
    %v2330 = vmul.f32 0.5, %v2329
    %v2331 = vsub.f32 1.5, %v2330
    %v2332 = vmul.f32 %v2327, %v2331
    %vm2333 = vweird.f32 %v2326
    %vm2334 = vweird.f32 %v2327
    %vm2335 = vmor %vm2333, %vm2334
    %v2336 = vsel %vm2335, %v2327, %v2332
    %v2337 = vmul.f32 %v2272, %v2336
    %v2338 = vmul.f32 %v2273, %v2336
    %v2339 = vmul.f32 %v2274, %v2336
    %v2340 = vmul.f32 %v2275, %v2336
    %v2341 = vmul.f32 %v2276, %v2336
    %v2342 = vmul.f32 %v2277, %v2336
    %v2343 = vmul.f32 %v2278, %v2336
    %v2344 = vmul.f32 %v2279, %v2336
    %v2345 = vmul.f32 %v2280, %v2336
    %v2346 = vmul.f32 %v2281, %v2336
    %v2347 = vmul.f32 %v2282, %v2336
    %v2348 = vmul.f32 %v2283, %v2336
    %v2349 = vmul.f32 %v2284, %v2336
    %v2350 = vmul.f32 %v2285, %v2336
    %v2351 = vmul.f32 %v2286, %v2336
    %v2352 = vmul.f32 %v2287, %v2336
    %v2354 = vperm.slane %v2248, 0
    %v2356 = vmul.f32 %v2337, %v2354
    %v2357 = vmul.f32 %v2338, %v2354
    %v2358 = vmul.f32 %v2339, %v2354
    %v2359 = vmul.f32 %v2340, %v2354
    %v2360 = vmul.f32 %v2341, %v2354
    %v2361 = vmul.f32 %v2342, %v2354
    %v2362 = vmul.f32 %v2343, %v2354
    %v2363 = vmul.f32 %v2344, %v2354
    %v2364 = vmul.f32 %v2345, %v2354
    %v2365 = vmul.f32 %v2346, %v2354
    %v2366 = vmul.f32 %v2347, %v2354
    %v2367 = vmul.f32 %v2348, %v2354
    %v2368 = vmul.f32 %v2349, %v2354
    %v2369 = vmul.f32 %v2350, %v2354
    %v2370 = vmul.f32 %v2351, %v2354
    %v2371 = vmul.f32 %v2352, %v2354
    %v2373 = vperm.slane %v2249, 0
    %v2375 = vadd.f32 %v2356, %v2373
    %v2376 = vadd.f32 %v2357, %v2373
    %v2377 = vadd.f32 %v2358, %v2373
    %v2378 = vadd.f32 %v2359, %v2373
    %v2379 = vadd.f32 %v2360, %v2373
    %v2380 = vadd.f32 %v2361, %v2373
    %v2381 = vadd.f32 %v2362, %v2373
    %v2382 = vadd.f32 %v2363, %v2373
    %v2383 = vadd.f32 %v2364, %v2373
    %v2384 = vadd.f32 %v2365, %v2373
    %v2385 = vadd.f32 %v2366, %v2373
    %v2386 = vadd.f32 %v2367, %v2373
    %v2387 = vadd.f32 %v2368, %v2373
    %v2388 = vadd.f32 %v2369, %v2373
    %v2389 = vadd.f32 %v2370, %v2373
    %v2390 = vadd.f32 %v2371, %v2373
    %2391 = vst [vmem:[#allocation3] sm:$0xff] 0.0
    %2392 = vst [vmem:[#allocation3 + $0x8] sm:$0x7] 0.0
    %2393 = vst [vmem:[#allocation3 + $0xb0] sm:$0xff] 0.0
    %2394 = vst [vmem:[#allocation3 + $0xb8] sm:$0x7] 0.0
    %s2395 = scalar_lea.vmem [#allocation3], 144
    %2396 = vst [vmem:[%s2395] sm:$0xff] 0.0
    %2397 = vst [vmem:[%s2395 + $0x8] sm:$0x7] 0.0
    %2398 = vst [vmem:[%s2395 + $0x10] sm:$0xff] 0.0
    %2399 = vst [vmem:[%s2395 + $0x18] sm:$0x7] 0.0
    %2400 = vst [vmem:[%s2395 + $0xb0] sm:$0xff] 0.0
    %2401 = vst [vmem:[%s2395 + $0xb8] sm:$0x7] 0.0
    %2402 = vst [vmem:[%s2395 + $0xc0] sm:$0xff] 0.0
    %2403 = vst [vmem:[%s2395 + $0xc8] sm:$0x7] 0.0
    %2404 = vst [vmem:[#allocation3] sm:$0x1] 0.0
    %2405 = vst [vmem:[#allocation3 + $0x10] sm:$0x1] 0.0
    %2406 = vst [vmem:[#allocation3 + $0x20] sm:$0x1] 0.0
    %2407 = vst [vmem:[#allocation3 + $0x30] sm:$0x1] 0.0
    %2408 = vst [vmem:[#allocation3 + $0x40] sm:$0x1] 0.0
    %2409 = vst [vmem:[#allocation3 + $0x50] sm:$0x1] 0.0
    %2410 = vst [vmem:[#allocation3 + $0x60] sm:$0x1] 0.0
    %2411 = vst [vmem:[#allocation3 + $0x70] sm:$0x1] 0.0
    %2412 = vst [vmem:[#allocation3 + $0x80] sm:$0x1] 0.0
    %2413 = vst [vmem:[#allocation3 + $0x90] sm:$0x1] 0.0
    %2414 = vst [vmem:[#allocation3 + $0xa0] sm:$0x1] 0.0
    %2415 = vst [vmem:[#allocation3 + $0xb0] sm:$0x1] 0.0
    %2416 = vst [vmem:[#allocation3 + $0xc0] sm:$0x1] 0.0
    %2417 = vst [vmem:[#allocation3 + $0xd0] sm:$0x1] 0.0
    %2418 = vst [vmem:[#allocation3 + $0xe0] sm:$0x1] 0.0
    %2419 = vst [vmem:[#allocation3 + $0xf0] sm:$0x1] 0.0
    %2420 = vst [vmem:[#allocation3 + $0x100] sm:$0x1] 0.0
    %2421 = vst [vmem:[#allocation3 + $0x110] sm:$0x1] 0.0
    %2422 = vst [vmem:[#allocation3 + $0x120] sm:$0x1] 0.0
    %2423 = vst [vmem:[#allocation3 + $0x130] sm:$0x1] 0.0
    %2424 = vst [vmem:[#allocation3 + $0x140] sm:$0x1] 0.0
    %2425 = vst [vmem:[#allocation3 + $0x150] sm:$0x1] 0.0
    %2426 = vst [vmem:[#allocation3 + $0x9] sm:$0x3] 0.0
    %2427 = vst [vmem:[#allocation3 + $0x19] sm:$0x3] 0.0
    %2428 = vst [vmem:[#allocation3 + $0x29] sm:$0x3] 0.0
    %2429 = vst [vmem:[#allocation3 + $0x39] sm:$0x3] 0.0
    %2430 = vst [vmem:[#allocation3 + $0x49] sm:$0x3] 0.0
    %2431 = vst [vmem:[#allocation3 + $0x59] sm:$0x3] 0.0
    %2432 = vst [vmem:[#allocation3 + $0x69] sm:$0x3] 0.0
    %2433 = vst [vmem:[#allocation3 + $0x79] sm:$0x3] 0.0
    %2434 = vst [vmem:[#allocation3 + $0x89] sm:$0x3] 0.0
    %2435 = vst [vmem:[#allocation3 + $0x99] sm:$0x3] 0.0
    %2436 = vst [vmem:[#allocation3 + $0xa9] sm:$0x3] 0.0
    %2437 = vst [vmem:[#allocation3 + $0xb9] sm:$0x3] 0.0
    %2438 = vst [vmem:[#allocation3 + $0xc9] sm:$0x3] 0.0
    %2439 = vst [vmem:[#allocation3 + $0xd9] sm:$0x3] 0.0
    %2440 = vst [vmem:[#allocation3 + $0xe9] sm:$0x3] 0.0
    %2441 = vst [vmem:[#allocation3 + $0xf9] sm:$0x3] 0.0
    %2442 = vst [vmem:[#allocation3 + $0x109] sm:$0x3] 0.0
    %2443 = vst [vmem:[#allocation3 + $0x119] sm:$0x3] 0.0
    %2444 = vst [vmem:[#allocation3 + $0x129] sm:$0x3] 0.0
    %2445 = vst [vmem:[#allocation3 + $0x139] sm:$0x3] 0.0
    %2446 = vst [vmem:[#allocation3 + $0x149] sm:$0x3] 0.0
    %2447 = vst [vmem:[#allocation3 + $0x159] sm:$0x3] 0.0
    %s2448 = scalar_lea.vmem [#allocation3], 16
    %2449 = vst [vmem:[%s2448 + $0x1] sm:$0xff] %v2375
    %2450 = vst [vmem:[%s2448 + $0x11] sm:$0xff] %v2376
    %2451 = vst [vmem:[%s2448 + $0x21] sm:$0xff] %v2377
    %2452 = vst [vmem:[%s2448 + $0x31] sm:$0xff] %v2378
    %2453 = vst [vmem:[%s2448 + $0x41] sm:$0xff] %v2379
    %2454 = vst [vmem:[%s2448 + $0x51] sm:$0xff] %v2380
    %2455 = vst [vmem:[%s2448 + $0x61] sm:$0xff] %v2381
    %2456 = vst [vmem:[%s2448 + $0x71] sm:$0xff] %v2382
    %2457 = vst [vmem:[%s2448 + $0xb1] sm:$0xff] %v2383
    %2458 = vst [vmem:[%s2448 + $0xc1] sm:$0xff] %v2384
    %2459 = vst [vmem:[%s2448 + $0xd1] sm:$0xff] %v2385
    %2460 = vst [vmem:[%s2448 + $0xe1] sm:$0xff] %v2386
    %2461 = vst [vmem:[%s2448 + $0xf1] sm:$0xff] %v2387
    %2462 = vst [vmem:[%s2448 + $0x101] sm:$0xff] %v2388
    %2463 = vst [vmem:[%s2448 + $0x111] sm:$0xff] %v2389
    %2464 = vst [vmem:[%s2448 + $0x121] sm:$0xff] %v2390
    %v2465 = vld [vmem:[#allocation3] sm:$0xff]
    %v2466 = vld [vmem:[#allocation3 + $0x10] sm:$0xff]
    %v2467 = vld [vmem:[#allocation3 + $0x20] sm:$0xff]
    %v2468 = vld [vmem:[#allocation3 + $0x30] sm:$0xff]
    %v2469 = vld [vmem:[#allocation3 + $0x40] sm:$0xff]
    %v2470 = vld [vmem:[#allocation3 + $0x50] sm:$0xff]
    %v2471 = vld [vmem:[#allocation3 + $0x60] sm:$0xff]
    %v2472 = vld [vmem:[#allocation3 + $0x70] sm:$0xff]
    %v2473 = vld [vmem:[#allocation3 + $0xb0] sm:$0xff]
    %v2474 = vld [vmem:[#allocation3 + $0xc0] sm:$0xff]
    %v2475 = vld [vmem:[#allocation3 + $0xd0] sm:$0xff]
    %v2476 = vld [vmem:[#allocation3 + $0xe0] sm:$0xff]
    %v2477 = vld [vmem:[#allocation3 + $0xf0] sm:$0xff]
    %v2478 = vld [vmem:[#allocation3 + $0x100] sm:$0xff]
    %v2479 = vld [vmem:[#allocation3 + $0x110] sm:$0xff]
    %v2480 = vld [vmem:[#allocation3 + $0x120] sm:$0xff]
    %v2481 = vpack.c.bf16 %v2465, %v2465
    %v2482 = vpack.c.bf16 %v2466, %v2466
    %v2483 = vpack.c.bf16 %v2467, %v2467
    %v2484 = vpack.c.bf16 %v2468, %v2468
    %v2485 = vpack.c.bf16 %v2469, %v2469
    %v2486 = vpack.c.bf16 %v2470, %v2470
    %v2487 = vpack.c.bf16 %v2471, %v2471
    %v2488 = vpack.c.bf16 %v2472, %v2472
    %v2489 = vpack.c.bf16 %v2473, %v2473
    %v2490 = vpack.c.bf16 %v2474, %v2474
    %v2491 = vpack.c.bf16 %v2475, %v2475
    %v2492 = vpack.c.bf16 %v2476, %v2476
    %v2493 = vpack.c.bf16 %v2477, %v2477
    %v2494 = vpack.c.bf16 %v2478, %v2478
    %v2495 = vpack.c.bf16 %v2479, %v2479
    %v2496 = vpack.c.bf16 %v2480, %v2480
    %v2497 = vld [vmem:[#allocation3 + $0x1] sm:$0xff]
    %v2498 = vld [vmem:[#allocation3 + $0x11] sm:$0xff]
    %v2499 = vld [vmem:[#allocation3 + $0x21] sm:$0xff]
    %v2500 = vld [vmem:[#allocation3 + $0x31] sm:$0xff]
    %v2501 = vld [vmem:[#allocation3 + $0x41] sm:$0xff]
    %v2502 = vld [vmem:[#allocation3 + $0x51] sm:$0xff]
    %v2503 = vld [vmem:[#allocation3 + $0x61] sm:$0xff]
    %v2504 = vld [vmem:[#allocation3 + $0x71] sm:$0xff]
    %v2505 = vld [vmem:[#allocation3 + $0xb1] sm:$0xff]
    %v2506 = vld [vmem:[#allocation3 + $0xc1] sm:$0xff]
    %v2507 = vld [vmem:[#allocation3 + $0xd1] sm:$0xff]
    %v2508 = vld [vmem:[#allocation3 + $0xe1] sm:$0xff]
    %v2509 = vld [vmem:[#allocation3 + $0xf1] sm:$0xff]
    %v2510 = vld [vmem:[#allocation3 + $0x101] sm:$0xff]
    %v2511 = vld [vmem:[#allocation3 + $0x111] sm:$0xff]
    %v2512 = vld [vmem:[#allocation3 + $0x121] sm:$0xff]
    %v2513 = vpack.c.bf16 %v2497, %v2497
    %v2514 = vpack.c.bf16 %v2498, %v2498
    %v2515 = vpack.c.bf16 %v2499, %v2499
    %v2516 = vpack.c.bf16 %v2500, %v2500
    %v2517 = vpack.c.bf16 %v2501, %v2501
    %v2518 = vpack.c.bf16 %v2502, %v2502
    %v2519 = vpack.c.bf16 %v2503, %v2503
    %v2520 = vpack.c.bf16 %v2504, %v2504
    %v2521 = vpack.c.bf16 %v2505, %v2505
    %v2522 = vpack.c.bf16 %v2506, %v2506
    %v2523 = vpack.c.bf16 %v2507, %v2507
    %v2524 = vpack.c.bf16 %v2508, %v2508
    %v2525 = vpack.c.bf16 %v2509, %v2509
    %v2526 = vpack.c.bf16 %v2510, %v2510
    %v2527 = vpack.c.bf16 %v2511, %v2511
    %v2528 = vpack.c.bf16 %v2512, %v2512
    %v2529 = vld [vmem:[#allocation3 + $0x2] sm:$0xff]
    %v2530 = vld [vmem:[#allocation3 + $0x12] sm:$0xff]
    %v2531 = vld [vmem:[#allocation3 + $0x22] sm:$0xff]
    %v2532 = vld [vmem:[#allocation3 + $0x32] sm:$0xff]
    %v2533 = vld [vmem:[#allocation3 + $0x42] sm:$0xff]
    %v2534 = vld [vmem:[#allocation3 + $0x52] sm:$0xff]
    %v2535 = vld [vmem:[#allocation3 + $0x62] sm:$0xff]
    %v2536 = vld [vmem:[#allocation3 + $0x72] sm:$0xff]
    %v2537 = vld [vmem:[#allocation3 + $0xb2] sm:$0xff]
    %v2538 = vld [vmem:[#allocation3 + $0xc2] sm:$0xff]
    %v2539 = vld [vmem:[#allocation3 + $0xd2] sm:$0xff]
    %v2540 = vld [vmem:[#allocation3 + $0xe2] sm:$0xff]
    %v2541 = vld [vmem:[#allocation3 + $0xf2] sm:$0xff]
    %v2542 = vld [vmem:[#allocation3 + $0x102] sm:$0xff]
    %v2543 = vld [vmem:[#allocation3 + $0x112] sm:$0xff]
    %v2544 = vld [vmem:[#allocation3 + $0x122] sm:$0xff]
    %v2545 = vpack.c.bf16 %v2529, %v2529
    %v2546 = vpack.c.bf16 %v2530, %v2530
    %v2547 = vpack.c.bf16 %v2531, %v2531
    %v2548 = vpack.c.bf16 %v2532, %v2532
    %v2549 = vpack.c.bf16 %v2533, %v2533
    %v2550 = vpack.c.bf16 %v2534, %v2534
    %v2551 = vpack.c.bf16 %v2535, %v2535
    %v2552 = vpack.c.bf16 %v2536, %v2536
    %v2553 = vpack.c.bf16 %v2537, %v2537
    %v2554 = vpack.c.bf16 %v2538, %v2538
    %v2555 = vpack.c.bf16 %v2539, %v2539
    %v2556 = vpack.c.bf16 %v2540, %v2540
    %v2557 = vpack.c.bf16 %v2541, %v2541
    %v2558 = vpack.c.bf16 %v2542, %v2542
    %v2559 = vpack.c.bf16 %v2543, %v2543
    %v2560 = vpack.c.bf16 %v2544, %v2544
    %v2561 = vld [vmem:[#allocation3 + $0x3] sm:$0xff]
    %v2562 = vld [vmem:[#allocation3 + $0x13] sm:$0xff]
    %v2563 = vld [vmem:[#allocation3 + $0x23] sm:$0xff]
    %v2564 = vld [vmem:[#allocation3 + $0x33] sm:$0xff]
    %v2565 = vld [vmem:[#allocation3 + $0x43] sm:$0xff]
    %v2566 = vld [vmem:[#allocation3 + $0x53] sm:$0xff]
    %v2567 = vld [vmem:[#allocation3 + $0x63] sm:$0xff]
    %v2568 = vld [vmem:[#allocation3 + $0x73] sm:$0xff]
    %v2569 = vld [vmem:[#allocation3 + $0xb3] sm:$0xff]
    %v2570 = vld [vmem:[#allocation3 + $0xc3] sm:$0xff]
    %v2571 = vld [vmem:[#allocation3 + $0xd3] sm:$0xff]
    %v2572 = vld [vmem:[#allocation3 + $0xe3] sm:$0xff]
    %v2573 = vld [vmem:[#allocation3 + $0xf3] sm:$0xff]
    %v2574 = vld [vmem:[#allocation3 + $0x103] sm:$0xff]
    %v2575 = vld [vmem:[#allocation3 + $0x113] sm:$0xff]
    %v2576 = vld [vmem:[#allocation3 + $0x123] sm:$0xff]
    %v2577 = vpack.c.bf16 %v2561, %v2561
    %v2578 = vpack.c.bf16 %v2562, %v2562
    %v2579 = vpack.c.bf16 %v2563, %v2563
    %v2580 = vpack.c.bf16 %v2564, %v2564
    %v2581 = vpack.c.bf16 %v2565, %v2565
    %v2582 = vpack.c.bf16 %v2566, %v2566
    %v2583 = vpack.c.bf16 %v2567, %v2567
    %v2584 = vpack.c.bf16 %v2568, %v2568
    %v2585 = vpack.c.bf16 %v2569, %v2569
    %v2586 = vpack.c.bf16 %v2570, %v2570
    %v2587 = vpack.c.bf16 %v2571, %v2571
    %v2588 = vpack.c.bf16 %v2572, %v2572
    %v2589 = vpack.c.bf16 %v2573, %v2573
    %v2590 = vpack.c.bf16 %v2574, %v2574
    %v2591 = vpack.c.bf16 %v2575, %v2575
    %v2592 = vpack.c.bf16 %v2576, %v2576
    %v2609 = vunpack.c.l.b16 %v2481
    %v2610 = vunpack.c.l.b16 %v2482
    %v2611 = vunpack.c.l.b16 %v2483
    %v2612 = vunpack.c.l.b16 %v2484
    %v2613 = vunpack.c.l.b16 %v2485
    %v2614 = vunpack.c.l.b16 %v2486
    %v2615 = vunpack.c.l.b16 %v2487
    %v2616 = vunpack.c.l.b16 %v2488
    %v2617 = vunpack.c.l.b16 %v2489
    %v2618 = vunpack.c.l.b16 %v2490
    %v2619 = vunpack.c.l.b16 %v2491
    %v2620 = vunpack.c.l.b16 %v2492
    %v2621 = vunpack.c.l.b16 %v2493
    %v2622 = vunpack.c.l.b16 %v2494
    %v2623 = vunpack.c.l.b16 %v2495
    %v2624 = vunpack.c.l.b16 %v2496
    %v2625 = vpack.c.b16 %v2610, %v2609
    %v2626 = vpack.c.b16 %v2612, %v2611
    %v2627 = vpack.c.b16 %v2614, %v2613
    %v2628 = vpack.c.b16 %v2616, %v2615
    %v2629 = vpack.c.b16 %v2618, %v2617
    %v2630 = vpack.c.b16 %v2620, %v2619
    %v2631 = vpack.c.b16 %v2622, %v2621
    %v2632 = vpack.c.b16 %v2624, %v2623
    %v2657 = vunpack.c.l.b16 %v2513
    %v2658 = vunpack.c.l.b16 %v2514
    %v2659 = vunpack.c.l.b16 %v2515
    %v2660 = vunpack.c.l.b16 %v2516
    %v2661 = vunpack.c.l.b16 %v2517
    %v2662 = vunpack.c.l.b16 %v2518
    %v2663 = vunpack.c.l.b16 %v2519
    %v2664 = vunpack.c.l.b16 %v2520
    %v2665 = vunpack.c.l.b16 %v2521
    %v2666 = vunpack.c.l.b16 %v2522
    %v2667 = vunpack.c.l.b16 %v2523
    %v2668 = vunpack.c.l.b16 %v2524
    %v2669 = vunpack.c.l.b16 %v2525
    %v2670 = vunpack.c.l.b16 %v2526
    %v2671 = vunpack.c.l.b16 %v2527
    %v2672 = vunpack.c.l.b16 %v2528
    %v2673 = vpack.c.b16 %v2658, %v2657
    %v2674 = vpack.c.b16 %v2660, %v2659
    %v2675 = vpack.c.b16 %v2662, %v2661
    %v2676 = vpack.c.b16 %v2664, %v2663
    %v2677 = vpack.c.b16 %v2666, %v2665
    %v2678 = vpack.c.b16 %v2668, %v2667
    %v2679 = vpack.c.b16 %v2670, %v2669
    %v2680 = vpack.c.b16 %v2672, %v2671
    %v2705 = vunpack.c.l.b16 %v2545
    %v2706 = vunpack.c.l.b16 %v2546
    %v2707 = vunpack.c.l.b16 %v2547
    %v2708 = vunpack.c.l.b16 %v2548
    %v2709 = vunpack.c.l.b16 %v2549
    %v2710 = vunpack.c.l.b16 %v2550
    %v2711 = vunpack.c.l.b16 %v2551
    %v2712 = vunpack.c.l.b16 %v2552
    %v2713 = vunpack.c.l.b16 %v2553
    %v2714 = vunpack.c.l.b16 %v2554
    %v2715 = vunpack.c.l.b16 %v2555
    %v2716 = vunpack.c.l.b16 %v2556
    %v2717 = vunpack.c.l.b16 %v2557
    %v2718 = vunpack.c.l.b16 %v2558
    %v2719 = vunpack.c.l.b16 %v2559
    %v2720 = vunpack.c.l.b16 %v2560
    %v2721 = vpack.c.b16 %v2706, %v2705
    %v2722 = vpack.c.b16 %v2708, %v2707
    %v2723 = vpack.c.b16 %v2710, %v2709
    %v2724 = vpack.c.b16 %v2712, %v2711
    %v2725 = vpack.c.b16 %v2714, %v2713
    %v2726 = vpack.c.b16 %v2716, %v2715
    %v2727 = vpack.c.b16 %v2718, %v2717
    %v2728 = vpack.c.b16 %v2720, %v2719
    %v2753 = vunpack.c.l.b16 %v2577
    %v2754 = vunpack.c.l.b16 %v2578
    %v2755 = vunpack.c.l.b16 %v2579
    %v2756 = vunpack.c.l.b16 %v2580
    %v2757 = vunpack.c.l.b16 %v2581
    %v2758 = vunpack.c.l.b16 %v2582
    %v2759 = vunpack.c.l.b16 %v2583
    %v2760 = vunpack.c.l.b16 %v2584
    %v2761 = vunpack.c.l.b16 %v2585
    %v2762 = vunpack.c.l.b16 %v2586
    %v2763 = vunpack.c.l.b16 %v2587
    %v2764 = vunpack.c.l.b16 %v2588
    %v2765 = vunpack.c.l.b16 %v2589
    %v2766 = vunpack.c.l.b16 %v2590
    %v2767 = vunpack.c.l.b16 %v2591
    %v2768 = vunpack.c.l.b16 %v2592
    %v2769 = vpack.c.b16 %v2754, %v2753
    %v2770 = vpack.c.b16 %v2756, %v2755
    %v2771 = vpack.c.b16 %v2758, %v2757
    %v2772 = vpack.c.b16 %v2760, %v2759
    %v2773 = vpack.c.b16 %v2762, %v2761
    %v2774 = vpack.c.b16 %v2764, %v2763
    %v2775 = vpack.c.b16 %v2766, %v2765
    %v2776 = vpack.c.b16 %v2768, %v2767
    %v2785 = vld [vmem:[#allocation18] sm:$0xf]
    %v2786 = vld [vmem:[#allocation18 + $0x4] sm:$0xf]
    %v2787 = vld [vmem:[#allocation18 + $0x8] sm:$0xf]
    %v2788 = vld [vmem:[#allocation18 + $0xc] sm:$0xf]
    %v2789 = vld [vmem:[#allocation18 + $0x10] sm:$0xf]
    %v2790 = vld [vmem:[#allocation18 + $0x14] sm:$0xf]
    %v2791 = vld [vmem:[#allocation18 + $0x18] sm:$0xf]
    %v2792 = vld [vmem:[#allocation18 + $0x1c] sm:$0xf]
    %v2793 = vld [vmem:[#allocation18 + $0x20] sm:$0xf]
    %v2794 = vld [vmem:[#allocation18 + $0x24] sm:$0xf]
    %v2795 = vld [vmem:[#allocation18 + $0x28] sm:$0xf]
    %v2796 = vld [vmem:[#allocation18 + $0x2c] sm:$0xf]
    %v2797 = vld [vmem:[#allocation18 + $0x30] sm:$0xf]
    %v2798 = vld [vmem:[#allocation18 + $0x34] sm:$0xf]
    %v2799 = vld [vmem:[#allocation18 + $0x38] sm:$0xf]
    %v2800 = vld [vmem:[#allocation18 + $0x3c] sm:$0xf]
    %v2801 = vld [vmem:[#allocation18 + $0x40] sm:$0xf]
    %v2802 = vld [vmem:[#allocation18 + $0x44] sm:$0xf]
    %v2803 = vld [vmem:[#allocation18 + $0x48] sm:$0xf]
    %v2804 = vld [vmem:[#allocation18 + $0x4c] sm:$0xf]
    %v2805 = vld [vmem:[#allocation18 + $0x50] sm:$0xf]
    %v2806 = vld [vmem:[#allocation18 + $0x54] sm:$0xf]
    %v2807 = vld [vmem:[#allocation18 + $0x58] sm:$0xf]
    %v2808 = vld [vmem:[#allocation18 + $0x5c] sm:$0xf]
    %v2809 = vld [vmem:[#allocation18 + $0x60] sm:$0xf]
    %v2810 = vld [vmem:[#allocation18 + $0x64] sm:$0xf]
    %v2811 = vld [vmem:[#allocation18 + $0x68] sm:$0xf]
    %v2812 = vld [vmem:[#allocation18 + $0x6c] sm:$0xf]
    %v2813 = vld [vmem:[#allocation18 + $0x70] sm:$0xf]
    %v2814 = vld [vmem:[#allocation18 + $0x74] sm:$0xf]
    %v2815 = vld [vmem:[#allocation18 + $0x78] sm:$0xf]
    %v2816 = vld [vmem:[#allocation18 + $0x7c] sm:$0xf]
    %v2817 = vld [vmem:[#allocation18 + $0x80] sm:$0xf]
    %v2818 = vld [vmem:[#allocation18 + $0x84] sm:$0xf]
    %v2819 = vld [vmem:[#allocation18 + $0x88] sm:$0xf]
    %v2820 = vld [vmem:[#allocation18 + $0x8c] sm:$0xf]
    %v2821 = vld [vmem:[#allocation18 + $0x90] sm:$0xf]
    %v2822 = vld [vmem:[#allocation18 + $0x94] sm:$0xf]
    %v2823 = vld [vmem:[#allocation18 + $0x98] sm:$0xf]
    %v2824 = vld [vmem:[#allocation18 + $0x9c] sm:$0xf]
    %v2825 = vld [vmem:[#allocation18 + $0xa0] sm:$0xf]
    %v2826 = vld [vmem:[#allocation18 + $0xa4] sm:$0xf]
    %v2827 = vld [vmem:[#allocation18 + $0xa8] sm:$0xf]
    %v2828 = vld [vmem:[#allocation18 + $0xac] sm:$0xf]
    %v2829 = vld [vmem:[#allocation18 + $0xb0] sm:$0xf]
    %v2830 = vld [vmem:[#allocation18 + $0xb4] sm:$0xf]
    %v2831 = vld [vmem:[#allocation18 + $0xb8] sm:$0xf]
    %v2832 = vld [vmem:[#allocation18 + $0xbc] sm:$0xf]
    %v2833 = vld [vmem:[#allocation18 + $0xc0] sm:$0xf]
    %v2834 = vld [vmem:[#allocation18 + $0xc4] sm:$0xf]
    %v2835 = vld [vmem:[#allocation18 + $0xc8] sm:$0xf]
    %v2836 = vld [vmem:[#allocation18 + $0xcc] sm:$0xf]
    %v2837 = vld [vmem:[#allocation18 + $0xd0] sm:$0xf]
    %v2838 = vld [vmem:[#allocation18 + $0xd4] sm:$0xf]
    %v2839 = vld [vmem:[#allocation18 + $0xd8] sm:$0xf]
    %v2840 = vld [vmem:[#allocation18 + $0xdc] sm:$0xf]
    %v2841 = vld [vmem:[#allocation18 + $0xe0] sm:$0xf]
    %v2842 = vld [vmem:[#allocation18 + $0xe4] sm:$0xf]
    %v2843 = vld [vmem:[#allocation18 + $0xe8] sm:$0xf]
    %v2844 = vld [vmem:[#allocation18 + $0xec] sm:$0xf]
    %v2845 = vld [vmem:[#allocation18 + $0xf0] sm:$0xf]
    %v2846 = vld [vmem:[#allocation18 + $0xf4] sm:$0xf]
    %v2847 = vld [vmem:[#allocation18 + $0xf8] sm:$0xf]
    %v2848 = vld [vmem:[#allocation18 + $0xfc] sm:$0xf]
    %v2849 = vld [vmem:[%s2448] sm:$0xff]
    %v2850 = vld [vmem:[%s2448 + $0x10] sm:$0xff]
    %v2851 = vld [vmem:[%s2448 + $0x20] sm:$0xff]
    %v2852 = vld [vmem:[%s2448 + $0x30] sm:$0xff]
    %v2853 = vld [vmem:[%s2448 + $0x40] sm:$0xff]
    %v2854 = vld [vmem:[%s2448 + $0x50] sm:$0xff]
    %v2855 = vld [vmem:[%s2448 + $0x60] sm:$0xff]
    %v2856 = vld [vmem:[%s2448 + $0x70] sm:$0xff]
    %v2857 = vld [vmem:[%s2448 + $0xb0] sm:$0xff]
    %v2858 = vld [vmem:[%s2448 + $0xc0] sm:$0xff]
    %v2859 = vld [vmem:[%s2448 + $0xd0] sm:$0xff]
    %v2860 = vld [vmem:[%s2448 + $0xe0] sm:$0xff]
    %v2861 = vld [vmem:[%s2448 + $0xf0] sm:$0xff]
    %v2862 = vld [vmem:[%s2448 + $0x100] sm:$0xff]
    %v2863 = vld [vmem:[%s2448 + $0x110] sm:$0xff]
    %v2864 = vld [vmem:[%s2448 + $0x120] sm:$0xff]
    %v2865 = vpack.c.bf16 %v2849, %v2849
    %v2866 = vpack.c.bf16 %v2850, %v2850
    %v2867 = vpack.c.bf16 %v2851, %v2851
    %v2868 = vpack.c.bf16 %v2852, %v2852
    %v2869 = vpack.c.bf16 %v2853, %v2853
    %v2870 = vpack.c.bf16 %v2854, %v2854
    %v2871 = vpack.c.bf16 %v2855, %v2855
    %v2872 = vpack.c.bf16 %v2856, %v2856
    %v2873 = vpack.c.bf16 %v2857, %v2857
    %v2874 = vpack.c.bf16 %v2858, %v2858
    %v2875 = vpack.c.bf16 %v2859, %v2859
    %v2876 = vpack.c.bf16 %v2860, %v2860
    %v2877 = vpack.c.bf16 %v2861, %v2861
    %v2878 = vpack.c.bf16 %v2862, %v2862
    %v2879 = vpack.c.bf16 %v2863, %v2863
    %v2880 = vpack.c.bf16 %v2864, %v2864
    %v2881 = vld [vmem:[%s2448 + $0x1] sm:$0xff]
    %v2882 = vld [vmem:[%s2448 + $0x11] sm:$0xff]
    %v2883 = vld [vmem:[%s2448 + $0x21] sm:$0xff]
    %v2884 = vld [vmem:[%s2448 + $0x31] sm:$0xff]
    %v2885 = vld [vmem:[%s2448 + $0x41] sm:$0xff]
    %v2886 = vld [vmem:[%s2448 + $0x51] sm:$0xff]
    %v2887 = vld [vmem:[%s2448 + $0x61] sm:$0xff]
    %v2888 = vld [vmem:[%s2448 + $0x71] sm:$0xff]
    %v2889 = vld [vmem:[%s2448 + $0xb1] sm:$0xff]
    %v2890 = vld [vmem:[%s2448 + $0xc1] sm:$0xff]
    %v2891 = vld [vmem:[%s2448 + $0xd1] sm:$0xff]
    %v2892 = vld [vmem:[%s2448 + $0xe1] sm:$0xff]
    %v2893 = vld [vmem:[%s2448 + $0xf1] sm:$0xff]
    %v2894 = vld [vmem:[%s2448 + $0x101] sm:$0xff]
    %v2895 = vld [vmem:[%s2448 + $0x111] sm:$0xff]
    %v2896 = vld [vmem:[%s2448 + $0x121] sm:$0xff]
    %v2897 = vpack.c.bf16 %v2881, %v2881
    %v2898 = vpack.c.bf16 %v2882, %v2882
    %v2899 = vpack.c.bf16 %v2883, %v2883
    %v2900 = vpack.c.bf16 %v2884, %v2884
    %v2901 = vpack.c.bf16 %v2885, %v2885
    %v2902 = vpack.c.bf16 %v2886, %v2886
    %v2903 = vpack.c.bf16 %v2887, %v2887
    %v2904 = vpack.c.bf16 %v2888, %v2888
    %v2905 = vpack.c.bf16 %v2889, %v2889
    %v2906 = vpack.c.bf16 %v2890, %v2890
    %v2907 = vpack.c.bf16 %v2891, %v2891
    %v2908 = vpack.c.bf16 %v2892, %v2892
    %v2909 = vpack.c.bf16 %v2893, %v2893
    %v2910 = vpack.c.bf16 %v2894, %v2894
    %v2911 = vpack.c.bf16 %v2895, %v2895
    %v2912 = vpack.c.bf16 %v2896, %v2896
    %v2913 = vld [vmem:[%s2448 + $0x2] sm:$0xff]
    %v2914 = vld [vmem:[%s2448 + $0x12] sm:$0xff]
    %v2915 = vld [vmem:[%s2448 + $0x22] sm:$0xff]
    %v2916 = vld [vmem:[%s2448 + $0x32] sm:$0xff]
    %v2917 = vld [vmem:[%s2448 + $0x42] sm:$0xff]
    %v2918 = vld [vmem:[%s2448 + $0x52] sm:$0xff]
    %v2919 = vld [vmem:[%s2448 + $0x62] sm:$0xff]
    %v2920 = vld [vmem:[%s2448 + $0x72] sm:$0xff]
    %v2921 = vld [vmem:[%s2448 + $0xb2] sm:$0xff]
    %v2922 = vld [vmem:[%s2448 + $0xc2] sm:$0xff]
    %v2923 = vld [vmem:[%s2448 + $0xd2] sm:$0xff]
    %v2924 = vld [vmem:[%s2448 + $0xe2] sm:$0xff]
    %v2925 = vld [vmem:[%s2448 + $0xf2] sm:$0xff]
    %v2926 = vld [vmem:[%s2448 + $0x102] sm:$0xff]
    %v2927 = vld [vmem:[%s2448 + $0x112] sm:$0xff]
    %v2928 = vld [vmem:[%s2448 + $0x122] sm:$0xff]
    %v2929 = vpack.c.bf16 %v2913, %v2913
    %v2930 = vpack.c.bf16 %v2914, %v2914
    %v2931 = vpack.c.bf16 %v2915, %v2915
    %v2932 = vpack.c.bf16 %v2916, %v2916
    %v2933 = vpack.c.bf16 %v2917, %v2917
    %v2934 = vpack.c.bf16 %v2918, %v2918
    %v2935 = vpack.c.bf16 %v2919, %v2919
    %v2936 = vpack.c.bf16 %v2920, %v2920
    %v2937 = vpack.c.bf16 %v2921, %v2921
    %v2938 = vpack.c.bf16 %v2922, %v2922
    %v2939 = vpack.c.bf16 %v2923, %v2923
    %v2940 = vpack.c.bf16 %v2924, %v2924
    %v2941 = vpack.c.bf16 %v2925, %v2925
    %v2942 = vpack.c.bf16 %v2926, %v2926
    %v2943 = vpack.c.bf16 %v2927, %v2927
    %v2944 = vpack.c.bf16 %v2928, %v2928
    %v2945 = vld [vmem:[%s2448 + $0x3] sm:$0xff]
    %v2946 = vld [vmem:[%s2448 + $0x13] sm:$0xff]
    %v2947 = vld [vmem:[%s2448 + $0x23] sm:$0xff]
    %v2948 = vld [vmem:[%s2448 + $0x33] sm:$0xff]
    %v2949 = vld [vmem:[%s2448 + $0x43] sm:$0xff]
    %v2950 = vld [vmem:[%s2448 + $0x53] sm:$0xff]
    %v2951 = vld [vmem:[%s2448 + $0x63] sm:$0xff]
    %v2952 = vld [vmem:[%s2448 + $0x73] sm:$0xff]
    %v2953 = vld [vmem:[%s2448 + $0xb3] sm:$0xff]
    %v2954 = vld [vmem:[%s2448 + $0xc3] sm:$0xff]
    %v2955 = vld [vmem:[%s2448 + $0xd3] sm:$0xff]
    %v2956 = vld [vmem:[%s2448 + $0xe3] sm:$0xff]
    %v2957 = vld [vmem:[%s2448 + $0xf3] sm:$0xff]
    %v2958 = vld [vmem:[%s2448 + $0x103] sm:$0xff]
    %v2959 = vld [vmem:[%s2448 + $0x113] sm:$0xff]
    %v2960 = vld [vmem:[%s2448 + $0x123] sm:$0xff]
    %v2961 = vpack.c.bf16 %v2945, %v2945
    %v2962 = vpack.c.bf16 %v2946, %v2946
    %v2963 = vpack.c.bf16 %v2947, %v2947
    %v2964 = vpack.c.bf16 %v2948, %v2948
    %v2965 = vpack.c.bf16 %v2949, %v2949
    %v2966 = vpack.c.bf16 %v2950, %v2950
    %v2967 = vpack.c.bf16 %v2951, %v2951
    %v2968 = vpack.c.bf16 %v2952, %v2952
    %v2969 = vpack.c.bf16 %v2953, %v2953
    %v2970 = vpack.c.bf16 %v2954, %v2954
    %v2971 = vpack.c.bf16 %v2955, %v2955
    %v2972 = vpack.c.bf16 %v2956, %v2956
    %v2973 = vpack.c.bf16 %v2957, %v2957
    %v2974 = vpack.c.bf16 %v2958, %v2958
    %v2975 = vpack.c.bf16 %v2959, %v2959
    %v2976 = vpack.c.bf16 %v2960, %v2960
    %v2993 = vunpack.c.l.b16 %v2865
    %v2994 = vunpack.c.l.b16 %v2866
    %v2995 = vunpack.c.l.b16 %v2867
    %v2996 = vunpack.c.l.b16 %v2868
    %v2997 = vunpack.c.l.b16 %v2869
    %v2998 = vunpack.c.l.b16 %v2870
    %v2999 = vunpack.c.l.b16 %v2871
    %v3000 = vunpack.c.l.b16 %v2872
    %v3001 = vunpack.c.l.b16 %v2873
    %v3002 = vunpack.c.l.b16 %v2874
    %v3003 = vunpack.c.l.b16 %v2875
    %v3004 = vunpack.c.l.b16 %v2876
    %v3005 = vunpack.c.l.b16 %v2877
    %v3006 = vunpack.c.l.b16 %v2878
    %v3007 = vunpack.c.l.b16 %v2879
    %v3008 = vunpack.c.l.b16 %v2880
    %v3009 = vpack.c.b16 %v2994, %v2993
    %v3010 = vpack.c.b16 %v2996, %v2995
    %v3011 = vpack.c.b16 %v2998, %v2997
    %v3012 = vpack.c.b16 %v3000, %v2999
    %v3013 = vpack.c.b16 %v3002, %v3001
    %v3014 = vpack.c.b16 %v3004, %v3003
    %v3015 = vpack.c.b16 %v3006, %v3005
    %v3016 = vpack.c.b16 %v3008, %v3007
    %v3041 = vunpack.c.l.b16 %v2897
    %v3042 = vunpack.c.l.b16 %v2898
    %v3043 = vunpack.c.l.b16 %v2899
    %v3044 = vunpack.c.l.b16 %v2900
    %v3045 = vunpack.c.l.b16 %v2901
    %v3046 = vunpack.c.l.b16 %v2902
    %v3047 = vunpack.c.l.b16 %v2903
    %v3048 = vunpack.c.l.b16 %v2904
    %v3049 = vunpack.c.l.b16 %v2905
    %v3050 = vunpack.c.l.b16 %v2906
    %v3051 = vunpack.c.l.b16 %v2907
    %v3052 = vunpack.c.l.b16 %v2908
    %v3053 = vunpack.c.l.b16 %v2909
    %v3054 = vunpack.c.l.b16 %v2910
    %v3055 = vunpack.c.l.b16 %v2911
    %v3056 = vunpack.c.l.b16 %v2912
    %v3057 = vpack.c.b16 %v3042, %v3041
    %v3058 = vpack.c.b16 %v3044, %v3043
    %v3059 = vpack.c.b16 %v3046, %v3045
    %v3060 = vpack.c.b16 %v3048, %v3047
    %v3061 = vpack.c.b16 %v3050, %v3049
    %v3062 = vpack.c.b16 %v3052, %v3051
    %v3063 = vpack.c.b16 %v3054, %v3053
    %v3064 = vpack.c.b16 %v3056, %v3055
    %v3089 = vunpack.c.l.b16 %v2929
    %v3090 = vunpack.c.l.b16 %v2930
    %v3091 = vunpack.c.l.b16 %v2931
    %v3092 = vunpack.c.l.b16 %v2932
    %v3093 = vunpack.c.l.b16 %v2933
    %v3094 = vunpack.c.l.b16 %v2934
    %v3095 = vunpack.c.l.b16 %v2935
    %v3096 = vunpack.c.l.b16 %v2936
    %v3097 = vunpack.c.l.b16 %v2937
    %v3098 = vunpack.c.l.b16 %v2938
    %v3099 = vunpack.c.l.b16 %v2939
    %v3100 = vunpack.c.l.b16 %v2940
    %v3101 = vunpack.c.l.b16 %v2941
    %v3102 = vunpack.c.l.b16 %v2942
    %v3103 = vunpack.c.l.b16 %v2943
    %v3104 = vunpack.c.l.b16 %v2944
    %v3105 = vpack.c.b16 %v3090, %v3089
    %v3106 = vpack.c.b16 %v3092, %v3091
    %v3107 = vpack.c.b16 %v3094, %v3093
    %v3108 = vpack.c.b16 %v3096, %v3095
    %v3109 = vpack.c.b16 %v3098, %v3097
    %v3110 = vpack.c.b16 %v3100, %v3099
    %v3111 = vpack.c.b16 %v3102, %v3101
    %v3112 = vpack.c.b16 %v3104, %v3103
    %v3137 = vunpack.c.l.b16 %v2961
    %v3138 = vunpack.c.l.b16 %v2962
    %v3139 = vunpack.c.l.b16 %v2963
    %v3140 = vunpack.c.l.b16 %v2964
    %v3141 = vunpack.c.l.b16 %v2965
    %v3142 = vunpack.c.l.b16 %v2966
    %v3143 = vunpack.c.l.b16 %v2967
    %v3144 = vunpack.c.l.b16 %v2968
    %v3145 = vunpack.c.l.b16 %v2969
    %v3146 = vunpack.c.l.b16 %v2970
    %v3147 = vunpack.c.l.b16 %v2971
    %v3148 = vunpack.c.l.b16 %v2972
    %v3149 = vunpack.c.l.b16 %v2973
    %v3150 = vunpack.c.l.b16 %v2974
    %v3151 = vunpack.c.l.b16 %v2975
    %v3152 = vunpack.c.l.b16 %v2976
    %v3153 = vpack.c.b16 %v3138, %v3137
    %v3154 = vpack.c.b16 %v3140, %v3139
    %v3155 = vpack.c.b16 %v3142, %v3141
    %v3156 = vpack.c.b16 %v3144, %v3143
    %v3157 = vpack.c.b16 %v3146, %v3145
    %v3158 = vpack.c.b16 %v3148, %v3147
    %v3159 = vpack.c.b16 %v3150, %v3149
    %v3160 = vpack.c.b16 %v3152, %v3151
    %s3169 = scalar_lea.vmem [#allocation18], 256
    %v3170 = vld [vmem:[%s3169] sm:$0xf]
    %v3171 = vld [vmem:[%s3169 + $0x4] sm:$0xf]
    %v3172 = vld [vmem:[%s3169 + $0x8] sm:$0xf]
    %v3173 = vld [vmem:[%s3169 + $0xc] sm:$0xf]
    %v3174 = vld [vmem:[%s3169 + $0x10] sm:$0xf]
    %v3175 = vld [vmem:[%s3169 + $0x14] sm:$0xf]
    %v3176 = vld [vmem:[%s3169 + $0x18] sm:$0xf]
    %v3177 = vld [vmem:[%s3169 + $0x1c] sm:$0xf]
    %v3178 = vld [vmem:[%s3169 + $0x20] sm:$0xf]
    %v3179 = vld [vmem:[%s3169 + $0x24] sm:$0xf]
    %v3180 = vld [vmem:[%s3169 + $0x28] sm:$0xf]
    %v3181 = vld [vmem:[%s3169 + $0x2c] sm:$0xf]
    %v3182 = vld [vmem:[%s3169 + $0x30] sm:$0xf]
    %v3183 = vld [vmem:[%s3169 + $0x34] sm:$0xf]
    %v3184 = vld [vmem:[%s3169 + $0x38] sm:$0xf]
    %v3185 = vld [vmem:[%s3169 + $0x3c] sm:$0xf]
    %v3186 = vld [vmem:[%s3169 + $0x40] sm:$0xf]
    %v3187 = vld [vmem:[%s3169 + $0x44] sm:$0xf]
    %v3188 = vld [vmem:[%s3169 + $0x48] sm:$0xf]
    %v3189 = vld [vmem:[%s3169 + $0x4c] sm:$0xf]
    %v3190 = vld [vmem:[%s3169 + $0x50] sm:$0xf]
    %v3191 = vld [vmem:[%s3169 + $0x54] sm:$0xf]
    %v3192 = vld [vmem:[%s3169 + $0x58] sm:$0xf]
    %v3193 = vld [vmem:[%s3169 + $0x5c] sm:$0xf]
    %v3194 = vld [vmem:[%s3169 + $0x60] sm:$0xf]
    %v3195 = vld [vmem:[%s3169 + $0x64] sm:$0xf]
    %v3196 = vld [vmem:[%s3169 + $0x68] sm:$0xf]
    %v3197 = vld [vmem:[%s3169 + $0x6c] sm:$0xf]
    %v3198 = vld [vmem:[%s3169 + $0x70] sm:$0xf]
    %v3199 = vld [vmem:[%s3169 + $0x74] sm:$0xf]
    %v3200 = vld [vmem:[%s3169 + $0x78] sm:$0xf]
    %v3201 = vld [vmem:[%s3169 + $0x7c] sm:$0xf]
    %v3202 = vld [vmem:[%s3169 + $0x80] sm:$0xf]
    %v3203 = vld [vmem:[%s3169 + $0x84] sm:$0xf]
    %v3204 = vld [vmem:[%s3169 + $0x88] sm:$0xf]
    %v3205 = vld [vmem:[%s3169 + $0x8c] sm:$0xf]
    %v3206 = vld [vmem:[%s3169 + $0x90] sm:$0xf]
    %v3207 = vld [vmem:[%s3169 + $0x94] sm:$0xf]
    %v3208 = vld [vmem:[%s3169 + $0x98] sm:$0xf]
    %v3209 = vld [vmem:[%s3169 + $0x9c] sm:$0xf]
    %v3210 = vld [vmem:[%s3169 + $0xa0] sm:$0xf]
    %v3211 = vld [vmem:[%s3169 + $0xa4] sm:$0xf]
    %v3212 = vld [vmem:[%s3169 + $0xa8] sm:$0xf]
    %v3213 = vld [vmem:[%s3169 + $0xac] sm:$0xf]
    %v3214 = vld [vmem:[%s3169 + $0xb0] sm:$0xf]
    %v3215 = vld [vmem:[%s3169 + $0xb4] sm:$0xf]
    %v3216 = vld [vmem:[%s3169 + $0xb8] sm:$0xf]
    %v3217 = vld [vmem:[%s3169 + $0xbc] sm:$0xf]
    %v3218 = vld [vmem:[%s3169 + $0xc0] sm:$0xf]
    %v3219 = vld [vmem:[%s3169 + $0xc4] sm:$0xf]
    %v3220 = vld [vmem:[%s3169 + $0xc8] sm:$0xf]
    %v3221 = vld [vmem:[%s3169 + $0xcc] sm:$0xf]
    %v3222 = vld [vmem:[%s3169 + $0xd0] sm:$0xf]
    %v3223 = vld [vmem:[%s3169 + $0xd4] sm:$0xf]
    %v3224 = vld [vmem:[%s3169 + $0xd8] sm:$0xf]
    %v3225 = vld [vmem:[%s3169 + $0xdc] sm:$0xf]
    %v3226 = vld [vmem:[%s3169 + $0xe0] sm:$0xf]
    %v3227 = vld [vmem:[%s3169 + $0xe4] sm:$0xf]
    %v3228 = vld [vmem:[%s3169 + $0xe8] sm:$0xf]
    %v3229 = vld [vmem:[%s3169 + $0xec] sm:$0xf]
    %v3230 = vld [vmem:[%s3169 + $0xf0] sm:$0xf]
    %v3231 = vld [vmem:[%s3169 + $0xf4] sm:$0xf]
    %v3232 = vld [vmem:[%s3169 + $0xf8] sm:$0xf]
    %v3233 = vld [vmem:[%s3169 + $0xfc] sm:$0xf]
    %v3298 = vunpack.c.l.b16 %v3170
    %v3299 = vunpack.c.l.b16 %v3171
    %v3300 = vunpack.c.l.b16 %v3172
    %v3301 = vunpack.c.l.b16 %v3173
    %v3302 = vunpack.c.l.b16 %v3174
    %v3303 = vunpack.c.l.b16 %v3175
    %v3304 = vunpack.c.l.b16 %v3176
    %v3305 = vunpack.c.l.b16 %v3177
    %v3306 = vunpack.c.l.b16 %v3178
    %v3307 = vunpack.c.l.b16 %v3179
    %v3308 = vunpack.c.l.b16 %v3180
    %v3309 = vunpack.c.l.b16 %v3181
    %v3310 = vunpack.c.l.b16 %v3182
    %v3311 = vunpack.c.l.b16 %v3183
    %v3312 = vunpack.c.l.b16 %v3184
    %v3313 = vunpack.c.l.b16 %v3185
    %v3314 = vunpack.c.l.b16 %v3186
    %v3315 = vunpack.c.l.b16 %v3187
    %v3316 = vunpack.c.l.b16 %v3188
    %v3317 = vunpack.c.l.b16 %v3189
    %v3318 = vunpack.c.l.b16 %v3190
    %v3319 = vunpack.c.l.b16 %v3191
    %v3320 = vunpack.c.l.b16 %v3192
    %v3321 = vunpack.c.l.b16 %v3193
    %v3322 = vunpack.c.l.b16 %v3194
    %v3323 = vunpack.c.l.b16 %v3195
    %v3324 = vunpack.c.l.b16 %v3196
    %v3325 = vunpack.c.l.b16 %v3197
    %v3326 = vunpack.c.l.b16 %v3198
    %v3327 = vunpack.c.l.b16 %v3199
    %v3328 = vunpack.c.l.b16 %v3200
    %v3329 = vunpack.c.l.b16 %v3201
    %v3330 = vunpack.c.l.b16 %v3202
    %v3331 = vunpack.c.l.b16 %v3203
    %v3332 = vunpack.c.l.b16 %v3204
    %v3333 = vunpack.c.l.b16 %v3205
    %v3334 = vunpack.c.l.b16 %v3206
    %v3335 = vunpack.c.l.b16 %v3207
    %v3336 = vunpack.c.l.b16 %v3208
    %v3337 = vunpack.c.l.b16 %v3209
    %v3338 = vunpack.c.l.b16 %v3210
    %v3339 = vunpack.c.l.b16 %v3211
    %v3340 = vunpack.c.l.b16 %v3212
    %v3341 = vunpack.c.l.b16 %v3213
    %v3342 = vunpack.c.l.b16 %v3214
    %v3343 = vunpack.c.l.b16 %v3215
    %v3344 = vunpack.c.l.b16 %v3216
    %v3345 = vunpack.c.l.b16 %v3217
    %v3346 = vunpack.c.l.b16 %v3218
    %v3347 = vunpack.c.l.b16 %v3219
    %v3348 = vunpack.c.l.b16 %v3220
    %v3349 = vunpack.c.l.b16 %v3221
    %v3350 = vunpack.c.l.b16 %v3222
    %v3351 = vunpack.c.l.b16 %v3223
    %v3352 = vunpack.c.l.b16 %v3224
    %v3353 = vunpack.c.l.b16 %v3225
    %v3354 = vunpack.c.l.b16 %v3226
    %v3355 = vunpack.c.l.b16 %v3227
    %v3356 = vunpack.c.l.b16 %v3228
    %v3357 = vunpack.c.l.b16 %v3229
    %v3358 = vunpack.c.l.b16 %v3230
    %v3359 = vunpack.c.l.b16 %v3231
    %v3360 = vunpack.c.l.b16 %v3232
    %v3361 = vunpack.c.l.b16 %v3233
    %v3362 = vpack.c.b16 %v3299, %v3298
    %v3363 = vpack.c.b16 %v3301, %v3300
    %v3364 = vpack.c.b16 %v3303, %v3302
    %v3365 = vpack.c.b16 %v3305, %v3304
    %v3366 = vpack.c.b16 %v3307, %v3306
    %v3367 = vpack.c.b16 %v3309, %v3308
    %v3368 = vpack.c.b16 %v3311, %v3310
    %v3369 = vpack.c.b16 %v3313, %v3312
    %v3370 = vpack.c.b16 %v3315, %v3314
    %v3371 = vpack.c.b16 %v3317, %v3316
    %v3372 = vpack.c.b16 %v3319, %v3318
    %v3373 = vpack.c.b16 %v3321, %v3320
    %v3374 = vpack.c.b16 %v3323, %v3322
    %v3375 = vpack.c.b16 %v3325, %v3324
    %v3376 = vpack.c.b16 %v3327, %v3326
    %v3377 = vpack.c.b16 %v3329, %v3328
    %v3378 = vpack.c.b16 %v3331, %v3330
    %v3379 = vpack.c.b16 %v3333, %v3332
    %v3380 = vpack.c.b16 %v3335, %v3334
    %v3381 = vpack.c.b16 %v3337, %v3336
    %v3382 = vpack.c.b16 %v3339, %v3338
    %v3383 = vpack.c.b16 %v3341, %v3340
    %v3384 = vpack.c.b16 %v3343, %v3342
    %v3385 = vpack.c.b16 %v3345, %v3344
    %v3386 = vpack.c.b16 %v3347, %v3346
    %v3387 = vpack.c.b16 %v3349, %v3348
    %v3388 = vpack.c.b16 %v3351, %v3350
    %v3389 = vpack.c.b16 %v3353, %v3352
    %v3390 = vpack.c.b16 %v3355, %v3354
    %v3391 = vpack.c.b16 %v3357, %v3356
    %v3392 = vpack.c.b16 %v3359, %v3358
    %v3393 = vpack.c.b16 %v3361, %v3360
    %3426 = vmatpush.bf16.msra.mxu0 %v3369
    %3427 = vmatpush.bf16.msra.mxu0 %v3368
    %3428 = vmatpush.bf16.msra.mxu0 %v3367
    %3429 = vmatpush.bf16.msra.mxu0 %v3366
    %3430 = vmatpush.bf16.msra.mxu0 %v3365
    %3431 = vmatpush.bf16.msra.mxu0 %v3364
    %3432 = vmatpush.bf16.msra.mxu0 %v3363
    %3433 = vmatpush.bf16.msra.mxu0 %v3362
    %3434 = vmatmul.bf16.gmra.mxu0 %v3009
    %v3435 = vpop.f32.mrf.mxu0
    %v3436 = vadd.f32 0.0, %v3435
    %v3437 = vpop.f32.mrf.mxu0
    %v3438 = vadd.f32 0.0, %v3437
    %3439 = vmatmul.bf16.gmra.mxu0 %v3010
    %v3440 = vpop.f32.mrf.mxu0
    %v3441 = vadd.f32 0.0, %v3440
    %v3442 = vpop.f32.mrf.mxu0
    %v3443 = vadd.f32 0.0, %v3442
    %3444 = vmatmul.bf16.gmra.mxu0 %v3011
    %v3445 = vpop.f32.mrf.mxu0
    %v3446 = vadd.f32 0.0, %v3445
    %v3447 = vpop.f32.mrf.mxu0
    %v3448 = vadd.f32 0.0, %v3447
    %3449 = vmatmul.bf16.gmra.mxu0 %v3012
    %v3450 = vpop.f32.mrf.mxu0
    %v3451 = vadd.f32 0.0, %v3450
    %v3452 = vpop.f32.mrf.mxu0
    %v3453 = vadd.f32 0.0, %v3452
    %3454 = vmatmul.bf16.gmra.mxu0 %v3013
    %v3455 = vpop.f32.mrf.mxu0
    %v3456 = vadd.f32 0.0, %v3455
    %v3457 = vpop.f32.mrf.mxu0
    %v3458 = vadd.f32 0.0, %v3457
    %3459 = vmatmul.bf16.gmra.mxu0 %v3014
    %v3460 = vpop.f32.mrf.mxu0
    %v3461 = vadd.f32 0.0, %v3460
    %v3462 = vpop.f32.mrf.mxu0
    %v3463 = vadd.f32 0.0, %v3462
    %3464 = vmatmul.bf16.gmra.mxu0 %v3015
    %v3465 = vpop.f32.mrf.mxu0
    %v3466 = vadd.f32 0.0, %v3465
    %v3467 = vpop.f32.mrf.mxu0
    %v3468 = vadd.f32 0.0, %v3467
    %3469 = vmatmul.bf16.gmra.mxu0 %v3016
    %v3470 = vpop.f32.mrf.mxu0
    %v3471 = vadd.f32 0.0, %v3470
    %v3472 = vpop.f32.mrf.mxu0
    %v3473 = vadd.f32 0.0, %v3472
    %3474 = vdwg.mxu0
    %3475 = vmatpush.bf16.msra.mxu0 %v3377
    %3476 = vmatpush.bf16.msra.mxu0 %v3376
    %3477 = vmatpush.bf16.msra.mxu0 %v3375
    %3478 = vmatpush.bf16.msra.mxu0 %v3374
    %3479 = vmatpush.bf16.msra.mxu0 %v3373
    %3480 = vmatpush.bf16.msra.mxu0 %v3372
    %3481 = vmatpush.bf16.msra.mxu0 %v3371
    %3482 = vmatpush.bf16.msra.mxu0 %v3370
    %3483 = vmatmul.bf16.gmra.mxu0 %v3057
    %v3484 = vpop.f32.mrf.mxu0
    %v3485 = vadd.f32 %v3436, %v3484
    %v3486 = vpop.f32.mrf.mxu0
    %v3487 = vadd.f32 %v3438, %v3486
    %3488 = vmatmul.bf16.gmra.mxu0 %v3058
    %v3489 = vpop.f32.mrf.mxu0
    %v3490 = vadd.f32 %v3441, %v3489
    %v3491 = vpop.f32.mrf.mxu0
    %v3492 = vadd.f32 %v3443, %v3491
    %3493 = vmatmul.bf16.gmra.mxu0 %v3059
    %v3494 = vpop.f32.mrf.mxu0
    %v3495 = vadd.f32 %v3446, %v3494
    %v3496 = vpop.f32.mrf.mxu0
    %v3497 = vadd.f32 %v3448, %v3496
    %3498 = vmatmul.bf16.gmra.mxu0 %v3060
    %v3499 = vpop.f32.mrf.mxu0
    %v3500 = vadd.f32 %v3451, %v3499
    %v3501 = vpop.f32.mrf.mxu0
    %v3502 = vadd.f32 %v3453, %v3501
    %3503 = vmatmul.bf16.gmra.mxu0 %v3061
    %v3504 = vpop.f32.mrf.mxu0
    %v3505 = vadd.f32 %v3456, %v3504
    %v3506 = vpop.f32.mrf.mxu0
    %v3507 = vadd.f32 %v3458, %v3506
    %3508 = vmatmul.bf16.gmra.mxu0 %v3062
    %v3509 = vpop.f32.mrf.mxu0
    %v3510 = vadd.f32 %v3461, %v3509
    %v3511 = vpop.f32.mrf.mxu0
    %v3512 = vadd.f32 %v3463, %v3511
    %3513 = vmatmul.bf16.gmra.mxu0 %v3063
    %v3514 = vpop.f32.mrf.mxu0
    %v3515 = vadd.f32 %v3466, %v3514
    %v3516 = vpop.f32.mrf.mxu0
    %v3517 = vadd.f32 %v3468, %v3516
    %3518 = vmatmul.bf16.gmra.mxu0 %v3064
    %v3519 = vpop.f32.mrf.mxu0
    %v3520 = vadd.f32 %v3471, %v3519
    %v3521 = vpop.f32.mrf.mxu0
    %v3522 = vadd.f32 %v3473, %v3521
    %3523 = vdwg.mxu0
    %3524 = vmatpush.bf16.msra.mxu0 %v3385
    %3525 = vmatpush.bf16.msra.mxu0 %v3384
    %3526 = vmatpush.bf16.msra.mxu0 %v3383
    %3527 = vmatpush.bf16.msra.mxu0 %v3382
    %3528 = vmatpush.bf16.msra.mxu0 %v3381
    %3529 = vmatpush.bf16.msra.mxu0 %v3380
    %3530 = vmatpush.bf16.msra.mxu0 %v3379
    %3531 = vmatpush.bf16.msra.mxu0 %v3378
    %3532 = vmatmul.bf16.gmra.mxu0 %v3105
    %v3533 = vpop.f32.mrf.mxu0
    %v3534 = vadd.f32 %v3485, %v3533
    %v3535 = vpop.f32.mrf.mxu0
    %v3536 = vadd.f32 %v3487, %v3535
    %3537 = vmatmul.bf16.gmra.mxu0 %v3106
    %v3538 = vpop.f32.mrf.mxu0
    %v3539 = vadd.f32 %v3490, %v3538
    %v3540 = vpop.f32.mrf.mxu0
    %v3541 = vadd.f32 %v3492, %v3540
    %3542 = vmatmul.bf16.gmra.mxu0 %v3107
    %v3543 = vpop.f32.mrf.mxu0
    %v3544 = vadd.f32 %v3495, %v3543
    %v3545 = vpop.f32.mrf.mxu0
    %v3546 = vadd.f32 %v3497, %v3545
    %3547 = vmatmul.bf16.gmra.mxu0 %v3108
    %v3548 = vpop.f32.mrf.mxu0
    %v3549 = vadd.f32 %v3500, %v3548
    %v3550 = vpop.f32.mrf.mxu0
    %v3551 = vadd.f32 %v3502, %v3550
    %3552 = vmatmul.bf16.gmra.mxu0 %v3109
    %v3553 = vpop.f32.mrf.mxu0
    %v3554 = vadd.f32 %v3505, %v3553
    %v3555 = vpop.f32.mrf.mxu0
    %v3556 = vadd.f32 %v3507, %v3555
    %3557 = vmatmul.bf16.gmra.mxu0 %v3110
    %v3558 = vpop.f32.mrf.mxu0
    %v3559 = vadd.f32 %v3510, %v3558
    %v3560 = vpop.f32.mrf.mxu0
    %v3561 = vadd.f32 %v3512, %v3560
    %3562 = vmatmul.bf16.gmra.mxu0 %v3111
    %v3563 = vpop.f32.mrf.mxu0
    %v3564 = vadd.f32 %v3515, %v3563
    %v3565 = vpop.f32.mrf.mxu0
    %v3566 = vadd.f32 %v3517, %v3565
    %3567 = vmatmul.bf16.gmra.mxu0 %v3112
    %v3568 = vpop.f32.mrf.mxu0
    %v3569 = vadd.f32 %v3520, %v3568
    %v3570 = vpop.f32.mrf.mxu0
    %v3571 = vadd.f32 %v3522, %v3570
    %3572 = vdwg.mxu0
    %3573 = vmatpush.bf16.msra.mxu0 %v3393
    %3574 = vmatpush.bf16.msra.mxu0 %v3392
    %3575 = vmatpush.bf16.msra.mxu0 %v3391
    %3576 = vmatpush.bf16.msra.mxu0 %v3390
    %3577 = vmatpush.bf16.msra.mxu0 %v3389
    %3578 = vmatpush.bf16.msra.mxu0 %v3388
    %3579 = vmatpush.bf16.msra.mxu0 %v3387
    %3580 = vmatpush.bf16.msra.mxu0 %v3386
    %3581 = vmatmul.bf16.gmra.mxu0 %v3153
    %v3582 = vpop.f32.mrf.mxu0
    %v3583 = vadd.f32 %v3534, %v3582
    %v3584 = vpop.f32.mrf.mxu0
    %v3585 = vadd.f32 %v3536, %v3584
    %3586 = vmatmul.bf16.gmra.mxu0 %v3154
    %v3587 = vpop.f32.mrf.mxu0
    %v3588 = vadd.f32 %v3539, %v3587
    %v3589 = vpop.f32.mrf.mxu0
    %v3590 = vadd.f32 %v3541, %v3589
    %3591 = vmatmul.bf16.gmra.mxu0 %v3155
    %v3592 = vpop.f32.mrf.mxu0
    %v3593 = vadd.f32 %v3544, %v3592
    %v3594 = vpop.f32.mrf.mxu0
    %v3595 = vadd.f32 %v3546, %v3594
    %3596 = vmatmul.bf16.gmra.mxu0 %v3156
    %v3597 = vpop.f32.mrf.mxu0
    %v3598 = vadd.f32 %v3549, %v3597
    %v3599 = vpop.f32.mrf.mxu0
    %v3600 = vadd.f32 %v3551, %v3599
    %3601 = vmatmul.bf16.gmra.mxu0 %v3157
    %v3602 = vpop.f32.mrf.mxu0
    %v3603 = vadd.f32 %v3554, %v3602
    %v3604 = vpop.f32.mrf.mxu0
    %v3605 = vadd.f32 %v3556, %v3604
    %3606 = vmatmul.bf16.gmra.mxu0 %v3158
    %v3607 = vpop.f32.mrf.mxu0
    %v3608 = vadd.f32 %v3559, %v3607
    %v3609 = vpop.f32.mrf.mxu0
    %v3610 = vadd.f32 %v3561, %v3609
    %3611 = vmatmul.bf16.gmra.mxu0 %v3159
    %v3612 = vpop.f32.mrf.mxu0
    %v3613 = vadd.f32 %v3564, %v3612
    %v3614 = vpop.f32.mrf.mxu0
    %v3615 = vadd.f32 %v3566, %v3614
    %3616 = vmatmul.bf16.gmra.mxu0 %v3160
    %v3617 = vpop.f32.mrf.mxu0
    %v3618 = vadd.f32 %v3569, %v3617
    %v3619 = vpop.f32.mrf.mxu0
    %v3620 = vadd.f32 %v3571, %v3619
    %3621 = vdwg.mxu0
    %v3686 = vunpack.c.l.b16 %v2785
    %v3687 = vunpack.c.l.b16 %v2786
    %v3688 = vunpack.c.l.b16 %v2787
    %v3689 = vunpack.c.l.b16 %v2788
    %v3690 = vunpack.c.l.b16 %v2789
    %v3691 = vunpack.c.l.b16 %v2790
    %v3692 = vunpack.c.l.b16 %v2791
    %v3693 = vunpack.c.l.b16 %v2792
    %v3694 = vunpack.c.l.b16 %v2793
    %v3695 = vunpack.c.l.b16 %v2794
    %v3696 = vunpack.c.l.b16 %v2795
    %v3697 = vunpack.c.l.b16 %v2796
    %v3698 = vunpack.c.l.b16 %v2797
    %v3699 = vunpack.c.l.b16 %v2798
    %v3700 = vunpack.c.l.b16 %v2799
    %v3701 = vunpack.c.l.b16 %v2800
    %v3702 = vunpack.c.l.b16 %v2801
    %v3703 = vunpack.c.l.b16 %v2802
    %v3704 = vunpack.c.l.b16 %v2803
    %v3705 = vunpack.c.l.b16 %v2804
    %v3706 = vunpack.c.l.b16 %v2805
    %v3707 = vunpack.c.l.b16 %v2806
    %v3708 = vunpack.c.l.b16 %v2807
    %v3709 = vunpack.c.l.b16 %v2808
    %v3710 = vunpack.c.l.b16 %v2809
    %v3711 = vunpack.c.l.b16 %v2810
    %v3712 = vunpack.c.l.b16 %v2811
    %v3713 = vunpack.c.l.b16 %v2812
    %v3714 = vunpack.c.l.b16 %v2813
    %v3715 = vunpack.c.l.b16 %v2814
    %v3716 = vunpack.c.l.b16 %v2815
    %v3717 = vunpack.c.l.b16 %v2816
    %v3718 = vunpack.c.l.b16 %v2817
    %v3719 = vunpack.c.l.b16 %v2818
    %v3720 = vunpack.c.l.b16 %v2819
    %v3721 = vunpack.c.l.b16 %v2820
    %v3722 = vunpack.c.l.b16 %v2821
    %v3723 = vunpack.c.l.b16 %v2822
    %v3724 = vunpack.c.l.b16 %v2823
    %v3725 = vunpack.c.l.b16 %v2824
    %v3726 = vunpack.c.l.b16 %v2825
    %v3727 = vunpack.c.l.b16 %v2826
    %v3728 = vunpack.c.l.b16 %v2827
    %v3729 = vunpack.c.l.b16 %v2828
    %v3730 = vunpack.c.l.b16 %v2829
    %v3731 = vunpack.c.l.b16 %v2830
    %v3732 = vunpack.c.l.b16 %v2831
    %v3733 = vunpack.c.l.b16 %v2832
    %v3734 = vunpack.c.l.b16 %v2833
    %v3735 = vunpack.c.l.b16 %v2834
    %v3736 = vunpack.c.l.b16 %v2835
    %v3737 = vunpack.c.l.b16 %v2836
    %v3738 = vunpack.c.l.b16 %v2837
    %v3739 = vunpack.c.l.b16 %v2838
    %v3740 = vunpack.c.l.b16 %v2839
    %v3741 = vunpack.c.l.b16 %v2840
    %v3742 = vunpack.c.l.b16 %v2841
    %v3743 = vunpack.c.l.b16 %v2842
    %v3744 = vunpack.c.l.b16 %v2843
    %v3745 = vunpack.c.l.b16 %v2844
    %v3746 = vunpack.c.l.b16 %v2845
    %v3747 = vunpack.c.l.b16 %v2846
    %v3748 = vunpack.c.l.b16 %v2847
    %v3749 = vunpack.c.l.b16 %v2848
    %v3750 = vpack.c.b16 %v3687, %v3686
    %v3751 = vpack.c.b16 %v3689, %v3688
    %v3752 = vpack.c.b16 %v3691, %v3690
    %v3753 = vpack.c.b16 %v3693, %v3692
    %v3754 = vpack.c.b16 %v3695, %v3694
    %v3755 = vpack.c.b16 %v3697, %v3696
    %v3756 = vpack.c.b16 %v3699, %v3698
    %v3757 = vpack.c.b16 %v3701, %v3700
    %v3758 = vpack.c.b16 %v3703, %v3702
    %v3759 = vpack.c.b16 %v3705, %v3704
    %v3760 = vpack.c.b16 %v3707, %v3706
    %v3761 = vpack.c.b16 %v3709, %v3708
    %v3762 = vpack.c.b16 %v3711, %v3710
    %v3763 = vpack.c.b16 %v3713, %v3712
    %v3764 = vpack.c.b16 %v3715, %v3714
    %v3765 = vpack.c.b16 %v3717, %v3716
    %v3766 = vpack.c.b16 %v3719, %v3718
    %v3767 = vpack.c.b16 %v3721, %v3720
    %v3768 = vpack.c.b16 %v3723, %v3722
    %v3769 = vpack.c.b16 %v3725, %v3724
    %v3770 = vpack.c.b16 %v3727, %v3726
    %v3771 = vpack.c.b16 %v3729, %v3728
    %v3772 = vpack.c.b16 %v3731, %v3730
    %v3773 = vpack.c.b16 %v3733, %v3732
    %v3774 = vpack.c.b16 %v3735, %v3734
    %v3775 = vpack.c.b16 %v3737, %v3736
    %v3776 = vpack.c.b16 %v3739, %v3738
    %v3777 = vpack.c.b16 %v3741, %v3740
    %v3778 = vpack.c.b16 %v3743, %v3742
    %v3779 = vpack.c.b16 %v3745, %v3744
    %v3780 = vpack.c.b16 %v3747, %v3746
    %v3781 = vpack.c.b16 %v3749, %v3748
    %3814 = vmatpush.bf16.msra.mxu0 %v3757
    %3815 = vmatpush.bf16.msra.mxu0 %v3756
    %3816 = vmatpush.bf16.msra.mxu0 %v3755
    %3817 = vmatpush.bf16.msra.mxu0 %v3754
    %3818 = vmatpush.bf16.msra.mxu0 %v3753
    %3819 = vmatpush.bf16.msra.mxu0 %v3752
    %3820 = vmatpush.bf16.msra.mxu0 %v3751
    %3821 = vmatpush.bf16.msra.mxu0 %v3750
    %3822 = vmatmul.bf16.gmra.mxu0 %v2625
    %v3823 = vpop.f32.mrf.mxu0
    %v3824 = vadd.f32 %v3583, %v3823
    %v3825 = vpop.f32.mrf.mxu0
    %v3826 = vadd.f32 %v3585, %v3825
    %3827 = vmatmul.bf16.gmra.mxu0 %v2626
    %v3828 = vpop.f32.mrf.mxu0
    %v3829 = vadd.f32 %v3588, %v3828
    %v3830 = vpop.f32.mrf.mxu0
    %v3831 = vadd.f32 %v3590, %v3830
    %3832 = vmatmul.bf16.gmra.mxu0 %v2627
    %v3833 = vpop.f32.mrf.mxu0
    %v3834 = vadd.f32 %v3593, %v3833
    %v3835 = vpop.f32.mrf.mxu0
    %v3836 = vadd.f32 %v3595, %v3835
    %3837 = vmatmul.bf16.gmra.mxu0 %v2628
    %v3838 = vpop.f32.mrf.mxu0
    %v3839 = vadd.f32 %v3598, %v3838
    %v3840 = vpop.f32.mrf.mxu0
    %v3841 = vadd.f32 %v3600, %v3840
    %3842 = vmatmul.bf16.gmra.mxu0 %v2629
    %v3843 = vpop.f32.mrf.mxu0
    %v3844 = vadd.f32 %v3603, %v3843
    %v3845 = vpop.f32.mrf.mxu0
    %v3846 = vadd.f32 %v3605, %v3845
    %3847 = vmatmul.bf16.gmra.mxu0 %v2630
    %v3848 = vpop.f32.mrf.mxu0
    %v3849 = vadd.f32 %v3608, %v3848
    %v3850 = vpop.f32.mrf.mxu0
    %v3851 = vadd.f32 %v3610, %v3850
    %3852 = vmatmul.bf16.gmra.mxu0 %v2631
    %v3853 = vpop.f32.mrf.mxu0
    %v3854 = vadd.f32 %v3613, %v3853
    %v3855 = vpop.f32.mrf.mxu0
    %v3856 = vadd.f32 %v3615, %v3855
    %3857 = vmatmul.bf16.gmra.mxu0 %v2632
    %v3858 = vpop.f32.mrf.mxu0
    %v3859 = vadd.f32 %v3618, %v3858
    %v3860 = vpop.f32.mrf.mxu0
    %v3861 = vadd.f32 %v3620, %v3860
    %3862 = vdwg.mxu0
    %3863 = vmatpush.bf16.msra.mxu0 %v3765
    %3864 = vmatpush.bf16.msra.mxu0 %v3764
    %3865 = vmatpush.bf16.msra.mxu0 %v3763
    %3866 = vmatpush.bf16.msra.mxu0 %v3762
    %3867 = vmatpush.bf16.msra.mxu0 %v3761
    %3868 = vmatpush.bf16.msra.mxu0 %v3760
    %3869 = vmatpush.bf16.msra.mxu0 %v3759
    %3870 = vmatpush.bf16.msra.mxu0 %v3758
    %3871 = vmatmul.bf16.gmra.mxu0 %v2673
    %v3872 = vpop.f32.mrf.mxu0
    %v3873 = vadd.f32 %v3824, %v3872
    %v3874 = vpop.f32.mrf.mxu0
    %v3875 = vadd.f32 %v3826, %v3874
    %3876 = vmatmul.bf16.gmra.mxu0 %v2674
    %v3877 = vpop.f32.mrf.mxu0
    %v3878 = vadd.f32 %v3829, %v3877
    %v3879 = vpop.f32.mrf.mxu0
    %v3880 = vadd.f32 %v3831, %v3879
    %3881 = vmatmul.bf16.gmra.mxu0 %v2675
    %v3882 = vpop.f32.mrf.mxu0
    %v3883 = vadd.f32 %v3834, %v3882
    %v3884 = vpop.f32.mrf.mxu0
    %v3885 = vadd.f32 %v3836, %v3884
    %3886 = vmatmul.bf16.gmra.mxu0 %v2676
    %v3887 = vpop.f32.mrf.mxu0
    %v3888 = vadd.f32 %v3839, %v3887
    %v3889 = vpop.f32.mrf.mxu0
    %v3890 = vadd.f32 %v3841, %v3889
    %3891 = vmatmul.bf16.gmra.mxu0 %v2677
    %v3892 = vpop.f32.mrf.mxu0
    %v3893 = vadd.f32 %v3844, %v3892
    %v3894 = vpop.f32.mrf.mxu0
    %v3895 = vadd.f32 %v3846, %v3894
    %3896 = vmatmul.bf16.gmra.mxu0 %v2678
    %v3897 = vpop.f32.mrf.mxu0
    %v3898 = vadd.f32 %v3849, %v3897
    %v3899 = vpop.f32.mrf.mxu0
    %v3900 = vadd.f32 %v3851, %v3899
    %3901 = vmatmul.bf16.gmra.mxu0 %v2679
    %v3902 = vpop.f32.mrf.mxu0
    %v3903 = vadd.f32 %v3854, %v3902
    %v3904 = vpop.f32.mrf.mxu0
    %v3905 = vadd.f32 %v3856, %v3904
    %3906 = vmatmul.bf16.gmra.mxu0 %v2680
    %v3907 = vpop.f32.mrf.mxu0
    %v3908 = vadd.f32 %v3859, %v3907
    %v3909 = vpop.f32.mrf.mxu0
    %v3910 = vadd.f32 %v3861, %v3909
    %3911 = vdwg.mxu0
    %3912 = vmatpush.bf16.msra.mxu0 %v3773
    %3913 = vmatpush.bf16.msra.mxu0 %v3772
    %3914 = vmatpush.bf16.msra.mxu0 %v3771
    %3915 = vmatpush.bf16.msra.mxu0 %v3770
    %3916 = vmatpush.bf16.msra.mxu0 %v3769
    %3917 = vmatpush.bf16.msra.mxu0 %v3768
    %3918 = vmatpush.bf16.msra.mxu0 %v3767
    %3919 = vmatpush.bf16.msra.mxu0 %v3766
    %3920 = vmatmul.bf16.gmra.mxu0 %v2721
    %v3921 = vpop.f32.mrf.mxu0
    %v3922 = vadd.f32 %v3873, %v3921
    %v3923 = vpop.f32.mrf.mxu0
    %v3924 = vadd.f32 %v3875, %v3923
    %3925 = vmatmul.bf16.gmra.mxu0 %v2722
    %v3926 = vpop.f32.mrf.mxu0
    %v3927 = vadd.f32 %v3878, %v3926
    %v3928 = vpop.f32.mrf.mxu0
    %v3929 = vadd.f32 %v3880, %v3928
    %3930 = vmatmul.bf16.gmra.mxu0 %v2723
    %v3931 = vpop.f32.mrf.mxu0
    %v3932 = vadd.f32 %v3883, %v3931
    %v3933 = vpop.f32.mrf.mxu0
    %v3934 = vadd.f32 %v3885, %v3933
    %3935 = vmatmul.bf16.gmra.mxu0 %v2724
    %v3936 = vpop.f32.mrf.mxu0
    %v3937 = vadd.f32 %v3888, %v3936
    %v3938 = vpop.f32.mrf.mxu0
    %v3939 = vadd.f32 %v3890, %v3938
    %3940 = vmatmul.bf16.gmra.mxu0 %v2725
    %v3941 = vpop.f32.mrf.mxu0
    %v3942 = vadd.f32 %v3893, %v3941
    %v3943 = vpop.f32.mrf.mxu0
    %v3944 = vadd.f32 %v3895, %v3943
    %3945 = vmatmul.bf16.gmra.mxu0 %v2726
    %v3946 = vpop.f32.mrf.mxu0
    %v3947 = vadd.f32 %v3898, %v3946
    %v3948 = vpop.f32.mrf.mxu0
    %v3949 = vadd.f32 %v3900, %v3948
    %3950 = vmatmul.bf16.gmra.mxu0 %v2727
    %v3951 = vpop.f32.mrf.mxu0
    %v3952 = vadd.f32 %v3903, %v3951
    %v3953 = vpop.f32.mrf.mxu0
    %v3954 = vadd.f32 %v3905, %v3953
    %3955 = vmatmul.bf16.gmra.mxu0 %v2728
    %v3956 = vpop.f32.mrf.mxu0
    %v3957 = vadd.f32 %v3908, %v3956
    %v3958 = vpop.f32.mrf.mxu0
    %v3959 = vadd.f32 %v3910, %v3958
    %3960 = vdwg.mxu0
    %3961 = vmatpush.bf16.msra.mxu0 %v3781
    %3962 = vmatpush.bf16.msra.mxu0 %v3780
    %3963 = vmatpush.bf16.msra.mxu0 %v3779
    %3964 = vmatpush.bf16.msra.mxu0 %v3778
    %3965 = vmatpush.bf16.msra.mxu0 %v3777
    %3966 = vmatpush.bf16.msra.mxu0 %v3776
    %3967 = vmatpush.bf16.msra.mxu0 %v3775
    %3968 = vmatpush.bf16.msra.mxu0 %v3774
    %3969 = vmatmul.bf16.gmra.mxu0 %v2769
    %v3970 = vpop.f32.mrf.mxu0
    %v3971 = vadd.f32 %v3922, %v3970
    %v3972 = vpop.f32.mrf.mxu0
    %v3973 = vadd.f32 %v3924, %v3972
    %3974 = vmatmul.bf16.gmra.mxu0 %v2770
    %v3975 = vpop.f32.mrf.mxu0
    %v3976 = vadd.f32 %v3927, %v3975
    %v3977 = vpop.f32.mrf.mxu0
    %v3978 = vadd.f32 %v3929, %v3977
    %3979 = vmatmul.bf16.gmra.mxu0 %v2771
    %v3980 = vpop.f32.mrf.mxu0
    %v3981 = vadd.f32 %v3932, %v3980
    %v3982 = vpop.f32.mrf.mxu0
    %v3983 = vadd.f32 %v3934, %v3982
    %3984 = vmatmul.bf16.gmra.mxu0 %v2772
    %v3985 = vpop.f32.mrf.mxu0
    %v3986 = vadd.f32 %v3937, %v3985
    %v3987 = vpop.f32.mrf.mxu0
    %v3988 = vadd.f32 %v3939, %v3987
    %3989 = vmatmul.bf16.gmra.mxu0 %v2773
    %v3990 = vpop.f32.mrf.mxu0
    %v3991 = vadd.f32 %v3942, %v3990
    %v3992 = vpop.f32.mrf.mxu0
    %v3993 = vadd.f32 %v3944, %v3992
    %3994 = vmatmul.bf16.gmra.mxu0 %v2774
    %v3995 = vpop.f32.mrf.mxu0
    %v3996 = vadd.f32 %v3947, %v3995
    %v3997 = vpop.f32.mrf.mxu0
    %v3998 = vadd.f32 %v3949, %v3997
    %3999 = vmatmul.bf16.gmra.mxu0 %v2775
    %v4000 = vpop.f32.mrf.mxu0
    %v4001 = vadd.f32 %v3952, %v4000
    %v4002 = vpop.f32.mrf.mxu0
    %v4003 = vadd.f32 %v3954, %v4002
    %4004 = vmatmul.bf16.gmra.mxu0 %v2776
    %v4005 = vpop.f32.mrf.mxu0
    %v4006 = vadd.f32 %v3957, %v4005
    %v4007 = vpop.f32.mrf.mxu0
    %v4008 = vadd.f32 %v3959, %v4007
    %4009 = vdwg.mxu0
    %s4010 = scalar_lea.vmem [#allocation3], 32
    %v4011 = vld [vmem:[%s4010] sm:$0xff]
    %v4012 = vld [vmem:[%s4010 + $0x10] sm:$0xff]
    %v4013 = vld [vmem:[%s4010 + $0x20] sm:$0xff]
    %v4014 = vld [vmem:[%s4010 + $0x30] sm:$0xff]
    %v4015 = vld [vmem:[%s4010 + $0x40] sm:$0xff]
    %v4016 = vld [vmem:[%s4010 + $0x50] sm:$0xff]
    %v4017 = vld [vmem:[%s4010 + $0x60] sm:$0xff]
    %v4018 = vld [vmem:[%s4010 + $0x70] sm:$0xff]
    %v4019 = vld [vmem:[%s4010 + $0xb0] sm:$0xff]
    %v4020 = vld [vmem:[%s4010 + $0xc0] sm:$0xff]
    %v4021 = vld [vmem:[%s4010 + $0xd0] sm:$0xff]
    %v4022 = vld [vmem:[%s4010 + $0xe0] sm:$0xff]
    %v4023 = vld [vmem:[%s4010 + $0xf0] sm:$0xff]
    %v4024 = vld [vmem:[%s4010 + $0x100] sm:$0xff]
    %v4025 = vld [vmem:[%s4010 + $0x110] sm:$0xff]
    %v4026 = vld [vmem:[%s4010 + $0x120] sm:$0xff]
    %v4027 = vpack.c.bf16 %v4011, %v4011
    %v4028 = vpack.c.bf16 %v4012, %v4012
    %v4029 = vpack.c.bf16 %v4013, %v4013
    %v4030 = vpack.c.bf16 %v4014, %v4014
    %v4031 = vpack.c.bf16 %v4015, %v4015
    %v4032 = vpack.c.bf16 %v4016, %v4016
    %v4033 = vpack.c.bf16 %v4017, %v4017
    %v4034 = vpack.c.bf16 %v4018, %v4018
    %v4035 = vpack.c.bf16 %v4019, %v4019
    %v4036 = vpack.c.bf16 %v4020, %v4020
    %v4037 = vpack.c.bf16 %v4021, %v4021
    %v4038 = vpack.c.bf16 %v4022, %v4022
    %v4039 = vpack.c.bf16 %v4023, %v4023
    %v4040 = vpack.c.bf16 %v4024, %v4024
    %v4041 = vpack.c.bf16 %v4025, %v4025
    %v4042 = vpack.c.bf16 %v4026, %v4026
    %v4043 = vld [vmem:[%s4010 + $0x1] sm:$0xff]
    %v4044 = vld [vmem:[%s4010 + $0x11] sm:$0xff]
    %v4045 = vld [vmem:[%s4010 + $0x21] sm:$0xff]
    %v4046 = vld [vmem:[%s4010 + $0x31] sm:$0xff]
    %v4047 = vld [vmem:[%s4010 + $0x41] sm:$0xff]
    %v4048 = vld [vmem:[%s4010 + $0x51] sm:$0xff]
    %v4049 = vld [vmem:[%s4010 + $0x61] sm:$0xff]
    %v4050 = vld [vmem:[%s4010 + $0x71] sm:$0xff]
    %v4051 = vld [vmem:[%s4010 + $0xb1] sm:$0xff]
    %v4052 = vld [vmem:[%s4010 + $0xc1] sm:$0xff]
    %v4053 = vld [vmem:[%s4010 + $0xd1] sm:$0xff]
    %v4054 = vld [vmem:[%s4010 + $0xe1] sm:$0xff]
    %v4055 = vld [vmem:[%s4010 + $0xf1] sm:$0xff]
    %v4056 = vld [vmem:[%s4010 + $0x101] sm:$0xff]
    %v4057 = vld [vmem:[%s4010 + $0x111] sm:$0xff]
    %v4058 = vld [vmem:[%s4010 + $0x121] sm:$0xff]
    %v4059 = vpack.c.bf16 %v4043, %v4043
    %v4060 = vpack.c.bf16 %v4044, %v4044
    %v4061 = vpack.c.bf16 %v4045, %v4045
    %v4062 = vpack.c.bf16 %v4046, %v4046
    %v4063 = vpack.c.bf16 %v4047, %v4047
    %v4064 = vpack.c.bf16 %v4048, %v4048
    %v4065 = vpack.c.bf16 %v4049, %v4049
    %v4066 = vpack.c.bf16 %v4050, %v4050
    %v4067 = vpack.c.bf16 %v4051, %v4051
    %v4068 = vpack.c.bf16 %v4052, %v4052
    %v4069 = vpack.c.bf16 %v4053, %v4053
    %v4070 = vpack.c.bf16 %v4054, %v4054
    %v4071 = vpack.c.bf16 %v4055, %v4055
    %v4072 = vpack.c.bf16 %v4056, %v4056
    %v4073 = vpack.c.bf16 %v4057, %v4057
    %v4074 = vpack.c.bf16 %v4058, %v4058
    %v4075 = vld [vmem:[%s4010 + $0x2] sm:$0xff]
    %v4076 = vld [vmem:[%s4010 + $0x12] sm:$0xff]
    %v4077 = vld [vmem:[%s4010 + $0x22] sm:$0xff]
    %v4078 = vld [vmem:[%s4010 + $0x32] sm:$0xff]
    %v4079 = vld [vmem:[%s4010 + $0x42] sm:$0xff]
    %v4080 = vld [vmem:[%s4010 + $0x52] sm:$0xff]
    %v4081 = vld [vmem:[%s4010 + $0x62] sm:$0xff]
    %v4082 = vld [vmem:[%s4010 + $0x72] sm:$0xff]
    %v4083 = vld [vmem:[%s4010 + $0xb2] sm:$0xff]
    %v4084 = vld [vmem:[%s4010 + $0xc2] sm:$0xff]
    %v4085 = vld [vmem:[%s4010 + $0xd2] sm:$0xff]
    %v4086 = vld [vmem:[%s4010 + $0xe2] sm:$0xff]
    %v4087 = vld [vmem:[%s4010 + $0xf2] sm:$0xff]
    %v4088 = vld [vmem:[%s4010 + $0x102] sm:$0xff]
    %v4089 = vld [vmem:[%s4010 + $0x112] sm:$0xff]
    %v4090 = vld [vmem:[%s4010 + $0x122] sm:$0xff]
    %v4091 = vpack.c.bf16 %v4075, %v4075
    %v4092 = vpack.c.bf16 %v4076, %v4076
    %v4093 = vpack.c.bf16 %v4077, %v4077
    %v4094 = vpack.c.bf16 %v4078, %v4078
    %v4095 = vpack.c.bf16 %v4079, %v4079
    %v4096 = vpack.c.bf16 %v4080, %v4080
    %v4097 = vpack.c.bf16 %v4081, %v4081
    %v4098 = vpack.c.bf16 %v4082, %v4082
    %v4099 = vpack.c.bf16 %v4083, %v4083
    %v4100 = vpack.c.bf16 %v4084, %v4084
    %v4101 = vpack.c.bf16 %v4085, %v4085
    %v4102 = vpack.c.bf16 %v4086, %v4086
    %v4103 = vpack.c.bf16 %v4087, %v4087
    %v4104 = vpack.c.bf16 %v4088, %v4088
    %v4105 = vpack.c.bf16 %v4089, %v4089
    %v4106 = vpack.c.bf16 %v4090, %v4090
    %v4107 = vld [vmem:[%s4010 + $0x3] sm:$0xff]
    %v4108 = vld [vmem:[%s4010 + $0x13] sm:$0xff]
    %v4109 = vld [vmem:[%s4010 + $0x23] sm:$0xff]
    %v4110 = vld [vmem:[%s4010 + $0x33] sm:$0xff]
    %v4111 = vld [vmem:[%s4010 + $0x43] sm:$0xff]
    %v4112 = vld [vmem:[%s4010 + $0x53] sm:$0xff]
    %v4113 = vld [vmem:[%s4010 + $0x63] sm:$0xff]
    %v4114 = vld [vmem:[%s4010 + $0x73] sm:$0xff]
    %v4115 = vld [vmem:[%s4010 + $0xb3] sm:$0xff]
    %v4116 = vld [vmem:[%s4010 + $0xc3] sm:$0xff]
    %v4117 = vld [vmem:[%s4010 + $0xd3] sm:$0xff]
    %v4118 = vld [vmem:[%s4010 + $0xe3] sm:$0xff]
    %v4119 = vld [vmem:[%s4010 + $0xf3] sm:$0xff]
    %v4120 = vld [vmem:[%s4010 + $0x103] sm:$0xff]
    %v4121 = vld [vmem:[%s4010 + $0x113] sm:$0xff]
    %v4122 = vld [vmem:[%s4010 + $0x123] sm:$0xff]
    %v4123 = vpack.c.bf16 %v4107, %v4107
    %v4124 = vpack.c.bf16 %v4108, %v4108
    %v4125 = vpack.c.bf16 %v4109, %v4109
    %v4126 = vpack.c.bf16 %v4110, %v4110
    %v4127 = vpack.c.bf16 %v4111, %v4111
    %v4128 = vpack.c.bf16 %v4112, %v4112
    %v4129 = vpack.c.bf16 %v4113, %v4113
    %v4130 = vpack.c.bf16 %v4114, %v4114
    %v4131 = vpack.c.bf16 %v4115, %v4115
    %v4132 = vpack.c.bf16 %v4116, %v4116
    %v4133 = vpack.c.bf16 %v4117, %v4117
    %v4134 = vpack.c.bf16 %v4118, %v4118
    %v4135 = vpack.c.bf16 %v4119, %v4119
    %v4136 = vpack.c.bf16 %v4120, %v4120
    %v4137 = vpack.c.bf16 %v4121, %v4121
    %v4138 = vpack.c.bf16 %v4122, %v4122
    %v4155 = vunpack.c.l.b16 %v4027
    %v4156 = vunpack.c.l.b16 %v4028
    %v4157 = vunpack.c.l.b16 %v4029
    %v4158 = vunpack.c.l.b16 %v4030
    %v4159 = vunpack.c.l.b16 %v4031
    %v4160 = vunpack.c.l.b16 %v4032
    %v4161 = vunpack.c.l.b16 %v4033
    %v4162 = vunpack.c.l.b16 %v4034
    %v4163 = vunpack.c.l.b16 %v4035
    %v4164 = vunpack.c.l.b16 %v4036
    %v4165 = vunpack.c.l.b16 %v4037
    %v4166 = vunpack.c.l.b16 %v4038
    %v4167 = vunpack.c.l.b16 %v4039
    %v4168 = vunpack.c.l.b16 %v4040
    %v4169 = vunpack.c.l.b16 %v4041
    %v4170 = vunpack.c.l.b16 %v4042
    %v4171 = vpack.c.b16 %v4156, %v4155
    %v4172 = vpack.c.b16 %v4158, %v4157
    %v4173 = vpack.c.b16 %v4160, %v4159
    %v4174 = vpack.c.b16 %v4162, %v4161
    %v4175 = vpack.c.b16 %v4164, %v4163
    %v4176 = vpack.c.b16 %v4166, %v4165
    %v4177 = vpack.c.b16 %v4168, %v4167
    %v4178 = vpack.c.b16 %v4170, %v4169
    %v4203 = vunpack.c.l.b16 %v4059
    %v4204 = vunpack.c.l.b16 %v4060
    %v4205 = vunpack.c.l.b16 %v4061
    %v4206 = vunpack.c.l.b16 %v4062
    %v4207 = vunpack.c.l.b16 %v4063
    %v4208 = vunpack.c.l.b16 %v4064
    %v4209 = vunpack.c.l.b16 %v4065
    %v4210 = vunpack.c.l.b16 %v4066
    %v4211 = vunpack.c.l.b16 %v4067
    %v4212 = vunpack.c.l.b16 %v4068
    %v4213 = vunpack.c.l.b16 %v4069
    %v4214 = vunpack.c.l.b16 %v4070
    %v4215 = vunpack.c.l.b16 %v4071
    %v4216 = vunpack.c.l.b16 %v4072
    %v4217 = vunpack.c.l.b16 %v4073
    %v4218 = vunpack.c.l.b16 %v4074
    %v4219 = vpack.c.b16 %v4204, %v4203
    %v4220 = vpack.c.b16 %v4206, %v4205
    %v4221 = vpack.c.b16 %v4208, %v4207
    %v4222 = vpack.c.b16 %v4210, %v4209
    %v4223 = vpack.c.b16 %v4212, %v4211
    %v4224 = vpack.c.b16 %v4214, %v4213
    %v4225 = vpack.c.b16 %v4216, %v4215
    %v4226 = vpack.c.b16 %v4218, %v4217
    %v4251 = vunpack.c.l.b16 %v4091
    %v4252 = vunpack.c.l.b16 %v4092
    %v4253 = vunpack.c.l.b16 %v4093
    %v4254 = vunpack.c.l.b16 %v4094
    %v4255 = vunpack.c.l.b16 %v4095
    %v4256 = vunpack.c.l.b16 %v4096
    %v4257 = vunpack.c.l.b16 %v4097
    %v4258 = vunpack.c.l.b16 %v4098
    %v4259 = vunpack.c.l.b16 %v4099
    %v4260 = vunpack.c.l.b16 %v4100
    %v4261 = vunpack.c.l.b16 %v4101
    %v4262 = vunpack.c.l.b16 %v4102
    %v4263 = vunpack.c.l.b16 %v4103
    %v4264 = vunpack.c.l.b16 %v4104
    %v4265 = vunpack.c.l.b16 %v4105
    %v4266 = vunpack.c.l.b16 %v4106
    %v4267 = vpack.c.b16 %v4252, %v4251
    %v4268 = vpack.c.b16 %v4254, %v4253
    %v4269 = vpack.c.b16 %v4256, %v4255
    %v4270 = vpack.c.b16 %v4258, %v4257
    %v4271 = vpack.c.b16 %v4260, %v4259
    %v4272 = vpack.c.b16 %v4262, %v4261
    %v4273 = vpack.c.b16 %v4264, %v4263
    %v4274 = vpack.c.b16 %v4266, %v4265
    %v4299 = vunpack.c.l.b16 %v4123
    %v4300 = vunpack.c.l.b16 %v4124
    %v4301 = vunpack.c.l.b16 %v4125
    %v4302 = vunpack.c.l.b16 %v4126
    %v4303 = vunpack.c.l.b16 %v4127
    %v4304 = vunpack.c.l.b16 %v4128
    %v4305 = vunpack.c.l.b16 %v4129
    %v4306 = vunpack.c.l.b16 %v4130
    %v4307 = vunpack.c.l.b16 %v4131
    %v4308 = vunpack.c.l.b16 %v4132
    %v4309 = vunpack.c.l.b16 %v4133
    %v4310 = vunpack.c.l.b16 %v4134
    %v4311 = vunpack.c.l.b16 %v4135
    %v4312 = vunpack.c.l.b16 %v4136
    %v4313 = vunpack.c.l.b16 %v4137
    %v4314 = vunpack.c.l.b16 %v4138
    %v4315 = vpack.c.b16 %v4300, %v4299
    %v4316 = vpack.c.b16 %v4302, %v4301
    %v4317 = vpack.c.b16 %v4304, %v4303
    %v4318 = vpack.c.b16 %v4306, %v4305
    %v4319 = vpack.c.b16 %v4308, %v4307
    %v4320 = vpack.c.b16 %v4310, %v4309
    %v4321 = vpack.c.b16 %v4312, %v4311
    %v4322 = vpack.c.b16 %v4314, %v4313
    %s4331 = scalar_lea.vmem [#allocation18], 512
    %v4332 = vld [vmem:[%s4331] sm:$0xf]
    %v4333 = vld [vmem:[%s4331 + $0x4] sm:$0xf]
    %v4334 = vld [vmem:[%s4331 + $0x8] sm:$0xf]
    %v4335 = vld [vmem:[%s4331 + $0xc] sm:$0xf]
    %v4336 = vld [vmem:[%s4331 + $0x10] sm:$0xf]
    %v4337 = vld [vmem:[%s4331 + $0x14] sm:$0xf]
    %v4338 = vld [vmem:[%s4331 + $0x18] sm:$0xf]
    %v4339 = vld [vmem:[%s4331 + $0x1c] sm:$0xf]
    %v4340 = vld [vmem:[%s4331 + $0x20] sm:$0xf]
    %v4341 = vld [vmem:[%s4331 + $0x24] sm:$0xf]
    %v4342 = vld [vmem:[%s4331 + $0x28] sm:$0xf]
    %v4343 = vld [vmem:[%s4331 + $0x2c] sm:$0xf]
    %v4344 = vld [vmem:[%s4331 + $0x30] sm:$0xf]
    %v4345 = vld [vmem:[%s4331 + $0x34] sm:$0xf]
    %v4346 = vld [vmem:[%s4331 + $0x38] sm:$0xf]
    %v4347 = vld [vmem:[%s4331 + $0x3c] sm:$0xf]
    %v4348 = vld [vmem:[%s4331 + $0x40] sm:$0xf]
    %v4349 = vld [vmem:[%s4331 + $0x44] sm:$0xf]
    %v4350 = vld [vmem:[%s4331 + $0x48] sm:$0xf]
    %v4351 = vld [vmem:[%s4331 + $0x4c] sm:$0xf]
    %v4352 = vld [vmem:[%s4331 + $0x50] sm:$0xf]
    %v4353 = vld [vmem:[%s4331 + $0x54] sm:$0xf]
    %v4354 = vld [vmem:[%s4331 + $0x58] sm:$0xf]
    %v4355 = vld [vmem:[%s4331 + $0x5c] sm:$0xf]
    %v4356 = vld [vmem:[%s4331 + $0x60] sm:$0xf]
    %v4357 = vld [vmem:[%s4331 + $0x64] sm:$0xf]
    %v4358 = vld [vmem:[%s4331 + $0x68] sm:$0xf]
    %v4359 = vld [vmem:[%s4331 + $0x6c] sm:$0xf]
    %v4360 = vld [vmem:[%s4331 + $0x70] sm:$0xf]
    %v4361 = vld [vmem:[%s4331 + $0x74] sm:$0xf]
    %v4362 = vld [vmem:[%s4331 + $0x78] sm:$0xf]
    %v4363 = vld [vmem:[%s4331 + $0x7c] sm:$0xf]
    %v4364 = vld [vmem:[%s4331 + $0x80] sm:$0xf]
    %v4365 = vld [vmem:[%s4331 + $0x84] sm:$0xf]
    %v4366 = vld [vmem:[%s4331 + $0x88] sm:$0xf]
    %v4367 = vld [vmem:[%s4331 + $0x8c] sm:$0xf]
    %v4368 = vld [vmem:[%s4331 + $0x90] sm:$0xf]
    %v4369 = vld [vmem:[%s4331 + $0x94] sm:$0xf]
    %v4370 = vld [vmem:[%s4331 + $0x98] sm:$0xf]
    %v4371 = vld [vmem:[%s4331 + $0x9c] sm:$0xf]
    %v4372 = vld [vmem:[%s4331 + $0xa0] sm:$0xf]
    %v4373 = vld [vmem:[%s4331 + $0xa4] sm:$0xf]
    %v4374 = vld [vmem:[%s4331 + $0xa8] sm:$0xf]
    %v4375 = vld [vmem:[%s4331 + $0xac] sm:$0xf]
    %v4376 = vld [vmem:[%s4331 + $0xb0] sm:$0xf]
    %v4377 = vld [vmem:[%s4331 + $0xb4] sm:$0xf]
    %v4378 = vld [vmem:[%s4331 + $0xb8] sm:$0xf]
    %v4379 = vld [vmem:[%s4331 + $0xbc] sm:$0xf]
    %v4380 = vld [vmem:[%s4331 + $0xc0] sm:$0xf]
    %v4381 = vld [vmem:[%s4331 + $0xc4] sm:$0xf]
    %v4382 = vld [vmem:[%s4331 + $0xc8] sm:$0xf]
    %v4383 = vld [vmem:[%s4331 + $0xcc] sm:$0xf]
    %v4384 = vld [vmem:[%s4331 + $0xd0] sm:$0xf]
    %v4385 = vld [vmem:[%s4331 + $0xd4] sm:$0xf]
    %v4386 = vld [vmem:[%s4331 + $0xd8] sm:$0xf]
    %v4387 = vld [vmem:[%s4331 + $0xdc] sm:$0xf]
    %v4388 = vld [vmem:[%s4331 + $0xe0] sm:$0xf]
    %v4389 = vld [vmem:[%s4331 + $0xe4] sm:$0xf]
    %v4390 = vld [vmem:[%s4331 + $0xe8] sm:$0xf]
    %v4391 = vld [vmem:[%s4331 + $0xec] sm:$0xf]
    %v4392 = vld [vmem:[%s4331 + $0xf0] sm:$0xf]
    %v4393 = vld [vmem:[%s4331 + $0xf4] sm:$0xf]
    %v4394 = vld [vmem:[%s4331 + $0xf8] sm:$0xf]
    %v4395 = vld [vmem:[%s4331 + $0xfc] sm:$0xf]
    %v4460 = vunpack.c.l.b16 %v4332
    %v4461 = vunpack.c.l.b16 %v4333
    %v4462 = vunpack.c.l.b16 %v4334
    %v4463 = vunpack.c.l.b16 %v4335
    %v4464 = vunpack.c.l.b16 %v4336
    %v4465 = vunpack.c.l.b16 %v4337
    %v4466 = vunpack.c.l.b16 %v4338
    %v4467 = vunpack.c.l.b16 %v4339
    %v4468 = vunpack.c.l.b16 %v4340
    %v4469 = vunpack.c.l.b16 %v4341
    %v4470 = vunpack.c.l.b16 %v4342
    %v4471 = vunpack.c.l.b16 %v4343
    %v4472 = vunpack.c.l.b16 %v4344
    %v4473 = vunpack.c.l.b16 %v4345
    %v4474 = vunpack.c.l.b16 %v4346
    %v4475 = vunpack.c.l.b16 %v4347
    %v4476 = vunpack.c.l.b16 %v4348
    %v4477 = vunpack.c.l.b16 %v4349
    %v4478 = vunpack.c.l.b16 %v4350
    %v4479 = vunpack.c.l.b16 %v4351
    %v4480 = vunpack.c.l.b16 %v4352
    %v4481 = vunpack.c.l.b16 %v4353
    %v4482 = vunpack.c.l.b16 %v4354
    %v4483 = vunpack.c.l.b16 %v4355
    %v4484 = vunpack.c.l.b16 %v4356
    %v4485 = vunpack.c.l.b16 %v4357
    %v4486 = vunpack.c.l.b16 %v4358
    %v4487 = vunpack.c.l.b16 %v4359
    %v4488 = vunpack.c.l.b16 %v4360
    %v4489 = vunpack.c.l.b16 %v4361
    %v4490 = vunpack.c.l.b16 %v4362
    %v4491 = vunpack.c.l.b16 %v4363
    %v4492 = vunpack.c.l.b16 %v4364
    %v4493 = vunpack.c.l.b16 %v4365
    %v4494 = vunpack.c.l.b16 %v4366
    %v4495 = vunpack.c.l.b16 %v4367
    %v4496 = vunpack.c.l.b16 %v4368
    %v4497 = vunpack.c.l.b16 %v4369
    %v4498 = vunpack.c.l.b16 %v4370
    %v4499 = vunpack.c.l.b16 %v4371
    %v4500 = vunpack.c.l.b16 %v4372
    %v4501 = vunpack.c.l.b16 %v4373
    %v4502 = vunpack.c.l.b16 %v4374
    %v4503 = vunpack.c.l.b16 %v4375
    %v4504 = vunpack.c.l.b16 %v4376
    %v4505 = vunpack.c.l.b16 %v4377
    %v4506 = vunpack.c.l.b16 %v4378
    %v4507 = vunpack.c.l.b16 %v4379
    %v4508 = vunpack.c.l.b16 %v4380
    %v4509 = vunpack.c.l.b16 %v4381
    %v4510 = vunpack.c.l.b16 %v4382
    %v4511 = vunpack.c.l.b16 %v4383
    %v4512 = vunpack.c.l.b16 %v4384
    %v4513 = vunpack.c.l.b16 %v4385
    %v4514 = vunpack.c.l.b16 %v4386
    %v4515 = vunpack.c.l.b16 %v4387
    %v4516 = vunpack.c.l.b16 %v4388
    %v4517 = vunpack.c.l.b16 %v4389
    %v4518 = vunpack.c.l.b16 %v4390
    %v4519 = vunpack.c.l.b16 %v4391
    %v4520 = vunpack.c.l.b16 %v4392
    %v4521 = vunpack.c.l.b16 %v4393
    %v4522 = vunpack.c.l.b16 %v4394
    %v4523 = vunpack.c.l.b16 %v4395
    %v4524 = vpack.c.b16 %v4461, %v4460
    %v4525 = vpack.c.b16 %v4463, %v4462
    %v4526 = vpack.c.b16 %v4465, %v4464
    %v4527 = vpack.c.b16 %v4467, %v4466
    %v4528 = vpack.c.b16 %v4469, %v4468
    %v4529 = vpack.c.b16 %v4471, %v4470
    %v4530 = vpack.c.b16 %v4473, %v4472
    %v4531 = vpack.c.b16 %v4475, %v4474
    %v4532 = vpack.c.b16 %v4477, %v4476
    %v4533 = vpack.c.b16 %v4479, %v4478
    %v4534 = vpack.c.b16 %v4481, %v4480
    %v4535 = vpack.c.b16 %v4483, %v4482
    %v4536 = vpack.c.b16 %v4485, %v4484
    %v4537 = vpack.c.b16 %v4487, %v4486
    %v4538 = vpack.c.b16 %v4489, %v4488
    %v4539 = vpack.c.b16 %v4491, %v4490
    %v4540 = vpack.c.b16 %v4493, %v4492
    %v4541 = vpack.c.b16 %v4495, %v4494
    %v4542 = vpack.c.b16 %v4497, %v4496
    %v4543 = vpack.c.b16 %v4499, %v4498
    %v4544 = vpack.c.b16 %v4501, %v4500
    %v4545 = vpack.c.b16 %v4503, %v4502
    %v4546 = vpack.c.b16 %v4505, %v4504
    %v4547 = vpack.c.b16 %v4507, %v4506
    %v4548 = vpack.c.b16 %v4509, %v4508
    %v4549 = vpack.c.b16 %v4511, %v4510
    %v4550 = vpack.c.b16 %v4513, %v4512
    %v4551 = vpack.c.b16 %v4515, %v4514
    %v4552 = vpack.c.b16 %v4517, %v4516
    %v4553 = vpack.c.b16 %v4519, %v4518
    %v4554 = vpack.c.b16 %v4521, %v4520
    %v4555 = vpack.c.b16 %v4523, %v4522
    %4588 = vmatpush.bf16.msra.mxu0 %v4531
    %4589 = vmatpush.bf16.msra.mxu0 %v4530
    %4590 = vmatpush.bf16.msra.mxu0 %v4529
    %4591 = vmatpush.bf16.msra.mxu0 %v4528
    %4592 = vmatpush.bf16.msra.mxu0 %v4527
    %4593 = vmatpush.bf16.msra.mxu0 %v4526
    %4594 = vmatpush.bf16.msra.mxu0 %v4525
    %4595 = vmatpush.bf16.msra.mxu0 %v4524
    %4596 = vmatmul.bf16.gmra.mxu0 %v4171
    %v4597 = vpop.f32.mrf.mxu0
    %v4598 = vadd.f32 0.0, %v4597
    %v4599 = vpop.f32.mrf.mxu0
    %v4600 = vadd.f32 0.0, %v4599
    %4601 = vmatmul.bf16.gmra.mxu0 %v4172
    %v4602 = vpop.f32.mrf.mxu0
    %v4603 = vadd.f32 0.0, %v4602
    %v4604 = vpop.f32.mrf.mxu0
    %v4605 = vadd.f32 0.0, %v4604
    %4606 = vmatmul.bf16.gmra.mxu0 %v4173
    %v4607 = vpop.f32.mrf.mxu0
    %v4608 = vadd.f32 0.0, %v4607
    %v4609 = vpop.f32.mrf.mxu0
    %v4610 = vadd.f32 0.0, %v4609
    %4611 = vmatmul.bf16.gmra.mxu0 %v4174
    %v4612 = vpop.f32.mrf.mxu0
    %v4613 = vadd.f32 0.0, %v4612
    %v4614 = vpop.f32.mrf.mxu0
    %v4615 = vadd.f32 0.0, %v4614
    %4616 = vmatmul.bf16.gmra.mxu0 %v4175
    %v4617 = vpop.f32.mrf.mxu0
    %v4618 = vadd.f32 0.0, %v4617
    %v4619 = vpop.f32.mrf.mxu0
    %v4620 = vadd.f32 0.0, %v4619
    %4621 = vmatmul.bf16.gmra.mxu0 %v4176
    %v4622 = vpop.f32.mrf.mxu0
    %v4623 = vadd.f32 0.0, %v4622
    %v4624 = vpop.f32.mrf.mxu0
    %v4625 = vadd.f32 0.0, %v4624
    %4626 = vmatmul.bf16.gmra.mxu0 %v4177
    %v4627 = vpop.f32.mrf.mxu0
    %v4628 = vadd.f32 0.0, %v4627
    %v4629 = vpop.f32.mrf.mxu0
    %v4630 = vadd.f32 0.0, %v4629
    %4631 = vmatmul.bf16.gmra.mxu0 %v4178
    %v4632 = vpop.f32.mrf.mxu0
    %v4633 = vadd.f32 0.0, %v4632
    %v4634 = vpop.f32.mrf.mxu0
    %v4635 = vadd.f32 0.0, %v4634
    %4636 = vdwg.mxu0
    %4637 = vmatpush.bf16.msra.mxu0 %v4539
    %4638 = vmatpush.bf16.msra.mxu0 %v4538
    %4639 = vmatpush.bf16.msra.mxu0 %v4537
    %4640 = vmatpush.bf16.msra.mxu0 %v4536
    %4641 = vmatpush.bf16.msra.mxu0 %v4535
    %4642 = vmatpush.bf16.msra.mxu0 %v4534
    %4643 = vmatpush.bf16.msra.mxu0 %v4533
    %4644 = vmatpush.bf16.msra.mxu0 %v4532
    %4645 = vmatmul.bf16.gmra.mxu0 %v4219
    %v4646 = vpop.f32.mrf.mxu0
    %v4647 = vadd.f32 %v4598, %v4646
    %v4648 = vpop.f32.mrf.mxu0
    %v4649 = vadd.f32 %v4600, %v4648
    %4650 = vmatmul.bf16.gmra.mxu0 %v4220
    %v4651 = vpop.f32.mrf.mxu0
    %v4652 = vadd.f32 %v4603, %v4651
    %v4653 = vpop.f32.mrf.mxu0
    %v4654 = vadd.f32 %v4605, %v4653
    %4655 = vmatmul.bf16.gmra.mxu0 %v4221
    %v4656 = vpop.f32.mrf.mxu0
    %v4657 = vadd.f32 %v4608, %v4656
    %v4658 = vpop.f32.mrf.mxu0
    %v4659 = vadd.f32 %v4610, %v4658
    %4660 = vmatmul.bf16.gmra.mxu0 %v4222
    %v4661 = vpop.f32.mrf.mxu0
    %v4662 = vadd.f32 %v4613, %v4661
    %v4663 = vpop.f32.mrf.mxu0
    %v4664 = vadd.f32 %v4615, %v4663
    %4665 = vmatmul.bf16.gmra.mxu0 %v4223
    %v4666 = vpop.f32.mrf.mxu0
    %v4667 = vadd.f32 %v4618, %v4666
    %v4668 = vpop.f32.mrf.mxu0
    %v4669 = vadd.f32 %v4620, %v4668
    %4670 = vmatmul.bf16.gmra.mxu0 %v4224
    %v4671 = vpop.f32.mrf.mxu0
    %v4672 = vadd.f32 %v4623, %v4671
    %v4673 = vpop.f32.mrf.mxu0
    %v4674 = vadd.f32 %v4625, %v4673
    %4675 = vmatmul.bf16.gmra.mxu0 %v4225
    %v4676 = vpop.f32.mrf.mxu0
    %v4677 = vadd.f32 %v4628, %v4676
    %v4678 = vpop.f32.mrf.mxu0
    %v4679 = vadd.f32 %v4630, %v4678
    %4680 = vmatmul.bf16.gmra.mxu0 %v4226
    %v4681 = vpop.f32.mrf.mxu0
    %v4682 = vadd.f32 %v4633, %v4681
    %v4683 = vpop.f32.mrf.mxu0
    %v4684 = vadd.f32 %v4635, %v4683
    %4685 = vdwg.mxu0
    %4686 = vmatpush.bf16.msra.mxu0 %v4547
    %4687 = vmatpush.bf16.msra.mxu0 %v4546
    %4688 = vmatpush.bf16.msra.mxu0 %v4545
    %4689 = vmatpush.bf16.msra.mxu0 %v4544
    %4690 = vmatpush.bf16.msra.mxu0 %v4543
    %4691 = vmatpush.bf16.msra.mxu0 %v4542
    %4692 = vmatpush.bf16.msra.mxu0 %v4541
    %4693 = vmatpush.bf16.msra.mxu0 %v4540
    %4694 = vmatmul.bf16.gmra.mxu0 %v4267
    %v4695 = vpop.f32.mrf.mxu0
    %v4696 = vadd.f32 %v4647, %v4695
    %v4697 = vpop.f32.mrf.mxu0
    %v4698 = vadd.f32 %v4649, %v4697
    %4699 = vmatmul.bf16.gmra.mxu0 %v4268
    %v4700 = vpop.f32.mrf.mxu0
    %v4701 = vadd.f32 %v4652, %v4700
    %v4702 = vpop.f32.mrf.mxu0
    %v4703 = vadd.f32 %v4654, %v4702
    %4704 = vmatmul.bf16.gmra.mxu0 %v4269
    %v4705 = vpop.f32.mrf.mxu0
    %v4706 = vadd.f32 %v4657, %v4705
    %v4707 = vpop.f32.mrf.mxu0
    %v4708 = vadd.f32 %v4659, %v4707
    %4709 = vmatmul.bf16.gmra.mxu0 %v4270
    %v4710 = vpop.f32.mrf.mxu0
    %v4711 = vadd.f32 %v4662, %v4710
    %v4712 = vpop.f32.mrf.mxu0
    %v4713 = vadd.f32 %v4664, %v4712
    %4714 = vmatmul.bf16.gmra.mxu0 %v4271
    %v4715 = vpop.f32.mrf.mxu0
    %v4716 = vadd.f32 %v4667, %v4715
    %v4717 = vpop.f32.mrf.mxu0
    %v4718 = vadd.f32 %v4669, %v4717
    %4719 = vmatmul.bf16.gmra.mxu0 %v4272
    %v4720 = vpop.f32.mrf.mxu0
    %v4721 = vadd.f32 %v4672, %v4720
    %v4722 = vpop.f32.mrf.mxu0
    %v4723 = vadd.f32 %v4674, %v4722
    %4724 = vmatmul.bf16.gmra.mxu0 %v4273
    %v4725 = vpop.f32.mrf.mxu0
    %v4726 = vadd.f32 %v4677, %v4725
    %v4727 = vpop.f32.mrf.mxu0
    %v4728 = vadd.f32 %v4679, %v4727
    %4729 = vmatmul.bf16.gmra.mxu0 %v4274
    %v4730 = vpop.f32.mrf.mxu0
    %v4731 = vadd.f32 %v4682, %v4730
    %v4732 = vpop.f32.mrf.mxu0
    %v4733 = vadd.f32 %v4684, %v4732
    %4734 = vdwg.mxu0
    %4735 = vmatpush.bf16.msra.mxu0 %v4555
    %4736 = vmatpush.bf16.msra.mxu0 %v4554
    %4737 = vmatpush.bf16.msra.mxu0 %v4553
    %4738 = vmatpush.bf16.msra.mxu0 %v4552
    %4739 = vmatpush.bf16.msra.mxu0 %v4551
    %4740 = vmatpush.bf16.msra.mxu0 %v4550
    %4741 = vmatpush.bf16.msra.mxu0 %v4549
    %4742 = vmatpush.bf16.msra.mxu0 %v4548
    %4743 = vmatmul.bf16.gmra.mxu0 %v4315
    %v4744 = vpop.f32.mrf.mxu0
    %v4745 = vadd.f32 %v4696, %v4744
    %v4746 = vpop.f32.mrf.mxu0
    %v4747 = vadd.f32 %v4698, %v4746
    %4748 = vmatmul.bf16.gmra.mxu0 %v4316
    %v4749 = vpop.f32.mrf.mxu0
    %v4750 = vadd.f32 %v4701, %v4749
    %v4751 = vpop.f32.mrf.mxu0
    %v4752 = vadd.f32 %v4703, %v4751
    %4753 = vmatmul.bf16.gmra.mxu0 %v4317
    %v4754 = vpop.f32.mrf.mxu0
    %v4755 = vadd.f32 %v4706, %v4754
    %v4756 = vpop.f32.mrf.mxu0
    %v4757 = vadd.f32 %v4708, %v4756
    %4758 = vmatmul.bf16.gmra.mxu0 %v4318
    %v4759 = vpop.f32.mrf.mxu0
    %v4760 = vadd.f32 %v4711, %v4759
    %v4761 = vpop.f32.mrf.mxu0
    %v4762 = vadd.f32 %v4713, %v4761
    %4763 = vmatmul.bf16.gmra.mxu0 %v4319
    %v4764 = vpop.f32.mrf.mxu0
    %v4765 = vadd.f32 %v4716, %v4764
    %v4766 = vpop.f32.mrf.mxu0
    %v4767 = vadd.f32 %v4718, %v4766
    %4768 = vmatmul.bf16.gmra.mxu0 %v4320
    %v4769 = vpop.f32.mrf.mxu0
    %v4770 = vadd.f32 %v4721, %v4769
    %v4771 = vpop.f32.mrf.mxu0
    %v4772 = vadd.f32 %v4723, %v4771
    %4773 = vmatmul.bf16.gmra.mxu0 %v4321
    %v4774 = vpop.f32.mrf.mxu0
    %v4775 = vadd.f32 %v4726, %v4774
    %v4776 = vpop.f32.mrf.mxu0
    %v4777 = vadd.f32 %v4728, %v4776
    %4778 = vmatmul.bf16.gmra.mxu0 %v4322
    %v4779 = vpop.f32.mrf.mxu0
    %v4780 = vadd.f32 %v4731, %v4779
    %v4781 = vpop.f32.mrf.mxu0
    %v4782 = vadd.f32 %v4733, %v4781
    %4783 = vdwg.mxu0
    %v4784 = vadd.f32 %v3971, %v4745
    %v4785 = vadd.f32 %v3973, %v4747
    %v4786 = vadd.f32 %v3976, %v4750
    %v4787 = vadd.f32 %v3978, %v4752
    %v4788 = vadd.f32 %v3981, %v4755
    %v4789 = vadd.f32 %v3983, %v4757
    %v4790 = vadd.f32 %v3986, %v4760
    %v4791 = vadd.f32 %v3988, %v4762
    %v4792 = vadd.f32 %v3991, %v4765
    %v4793 = vadd.f32 %v3993, %v4767
    %v4794 = vadd.f32 %v3996, %v4770
    %v4795 = vadd.f32 %v3998, %v4772
    %v4796 = vadd.f32 %v4001, %v4775
    %v4797 = vadd.f32 %v4003, %v4777
    %v4798 = vadd.f32 %v4006, %v4780
    %v4799 = vadd.f32 %v4008, %v4782
    %s4800 = scalar_lea.vmem [#allocation3], 48
    %v4801 = vld [vmem:[%s4800] sm:$0xff]
    %v4802 = vld [vmem:[%s4800 + $0x10] sm:$0xff]
    %v4803 = vld [vmem:[%s4800 + $0x20] sm:$0xff]
    %v4804 = vld [vmem:[%s4800 + $0x30] sm:$0xff]
    %v4805 = vld [vmem:[%s4800 + $0x40] sm:$0xff]
    %v4806 = vld [vmem:[%s4800 + $0x50] sm:$0xff]
    %v4807 = vld [vmem:[%s4800 + $0x60] sm:$0xff]
    %v4808 = vld [vmem:[%s4800 + $0x70] sm:$0xff]
    %v4809 = vld [vmem:[%s4800 + $0xb0] sm:$0xff]
    %v4810 = vld [vmem:[%s4800 + $0xc0] sm:$0xff]
    %v4811 = vld [vmem:[%s4800 + $0xd0] sm:$0xff]
    %v4812 = vld [vmem:[%s4800 + $0xe0] sm:$0xff]
    %v4813 = vld [vmem:[%s4800 + $0xf0] sm:$0xff]
    %v4814 = vld [vmem:[%s4800 + $0x100] sm:$0xff]
    %v4815 = vld [vmem:[%s4800 + $0x110] sm:$0xff]
    %v4816 = vld [vmem:[%s4800 + $0x120] sm:$0xff]
    %v4817 = vpack.c.bf16 %v4801, %v4801
    %v4818 = vpack.c.bf16 %v4802, %v4802
    %v4819 = vpack.c.bf16 %v4803, %v4803
    %v4820 = vpack.c.bf16 %v4804, %v4804
    %v4821 = vpack.c.bf16 %v4805, %v4805
    %v4822 = vpack.c.bf16 %v4806, %v4806
    %v4823 = vpack.c.bf16 %v4807, %v4807
    %v4824 = vpack.c.bf16 %v4808, %v4808
    %v4825 = vpack.c.bf16 %v4809, %v4809
    %v4826 = vpack.c.bf16 %v4810, %v4810
    %v4827 = vpack.c.bf16 %v4811, %v4811
    %v4828 = vpack.c.bf16 %v4812, %v4812
    %v4829 = vpack.c.bf16 %v4813, %v4813
    %v4830 = vpack.c.bf16 %v4814, %v4814
    %v4831 = vpack.c.bf16 %v4815, %v4815
    %v4832 = vpack.c.bf16 %v4816, %v4816
    %v4833 = vld [vmem:[%s4800 + $0x1] sm:$0xff]
    %v4834 = vld [vmem:[%s4800 + $0x11] sm:$0xff]
    %v4835 = vld [vmem:[%s4800 + $0x21] sm:$0xff]
    %v4836 = vld [vmem:[%s4800 + $0x31] sm:$0xff]
    %v4837 = vld [vmem:[%s4800 + $0x41] sm:$0xff]
    %v4838 = vld [vmem:[%s4800 + $0x51] sm:$0xff]
    %v4839 = vld [vmem:[%s4800 + $0x61] sm:$0xff]
    %v4840 = vld [vmem:[%s4800 + $0x71] sm:$0xff]
    %v4841 = vld [vmem:[%s4800 + $0xb1] sm:$0xff]
    %v4842 = vld [vmem:[%s4800 + $0xc1] sm:$0xff]
    %v4843 = vld [vmem:[%s4800 + $0xd1] sm:$0xff]
    %v4844 = vld [vmem:[%s4800 + $0xe1] sm:$0xff]
    %v4845 = vld [vmem:[%s4800 + $0xf1] sm:$0xff]
    %v4846 = vld [vmem:[%s4800 + $0x101] sm:$0xff]
    %v4847 = vld [vmem:[%s4800 + $0x111] sm:$0xff]
    %v4848 = vld [vmem:[%s4800 + $0x121] sm:$0xff]
    %v4849 = vpack.c.bf16 %v4833, %v4833
    %v4850 = vpack.c.bf16 %v4834, %v4834
    %v4851 = vpack.c.bf16 %v4835, %v4835
    %v4852 = vpack.c.bf16 %v4836, %v4836
    %v4853 = vpack.c.bf16 %v4837, %v4837
    %v4854 = vpack.c.bf16 %v4838, %v4838
    %v4855 = vpack.c.bf16 %v4839, %v4839
    %v4856 = vpack.c.bf16 %v4840, %v4840
    %v4857 = vpack.c.bf16 %v4841, %v4841
    %v4858 = vpack.c.bf16 %v4842, %v4842
    %v4859 = vpack.c.bf16 %v4843, %v4843
    %v4860 = vpack.c.bf16 %v4844, %v4844
    %v4861 = vpack.c.bf16 %v4845, %v4845
    %v4862 = vpack.c.bf16 %v4846, %v4846
    %v4863 = vpack.c.bf16 %v4847, %v4847
    %v4864 = vpack.c.bf16 %v4848, %v4848
    %v4865 = vld [vmem:[%s4800 + $0x2] sm:$0xff]
    %v4866 = vld [vmem:[%s4800 + $0x12] sm:$0xff]
    %v4867 = vld [vmem:[%s4800 + $0x22] sm:$0xff]
    %v4868 = vld [vmem:[%s4800 + $0x32] sm:$0xff]
    %v4869 = vld [vmem:[%s4800 + $0x42] sm:$0xff]
    %v4870 = vld [vmem:[%s4800 + $0x52] sm:$0xff]
    %v4871 = vld [vmem:[%s4800 + $0x62] sm:$0xff]
    %v4872 = vld [vmem:[%s4800 + $0x72] sm:$0xff]
    %v4873 = vld [vmem:[%s4800 + $0xb2] sm:$0xff]
    %v4874 = vld [vmem:[%s4800 + $0xc2] sm:$0xff]
    %v4875 = vld [vmem:[%s4800 + $0xd2] sm:$0xff]
    %v4876 = vld [vmem:[%s4800 + $0xe2] sm:$0xff]
    %v4877 = vld [vmem:[%s4800 + $0xf2] sm:$0xff]
    %v4878 = vld [vmem:[%s4800 + $0x102] sm:$0xff]
    %v4879 = vld [vmem:[%s4800 + $0x112] sm:$0xff]
    %v4880 = vld [vmem:[%s4800 + $0x122] sm:$0xff]
    %v4881 = vpack.c.bf16 %v4865, %v4865
    %v4882 = vpack.c.bf16 %v4866, %v4866
    %v4883 = vpack.c.bf16 %v4867, %v4867
    %v4884 = vpack.c.bf16 %v4868, %v4868
    %v4885 = vpack.c.bf16 %v4869, %v4869
    %v4886 = vpack.c.bf16 %v4870, %v4870
    %v4887 = vpack.c.bf16 %v4871, %v4871
    %v4888 = vpack.c.bf16 %v4872, %v4872
    %v4889 = vpack.c.bf16 %v4873, %v4873
    %v4890 = vpack.c.bf16 %v4874, %v4874
    %v4891 = vpack.c.bf16 %v4875, %v4875
    %v4892 = vpack.c.bf16 %v4876, %v4876
    %v4893 = vpack.c.bf16 %v4877, %v4877
    %v4894 = vpack.c.bf16 %v4878, %v4878
    %v4895 = vpack.c.bf16 %v4879, %v4879
    %v4896 = vpack.c.bf16 %v4880, %v4880
    %v4897 = vld [vmem:[%s4800 + $0x3] sm:$0xff]
    %v4898 = vld [vmem:[%s4800 + $0x13] sm:$0xff]
    %v4899 = vld [vmem:[%s4800 + $0x23] sm:$0xff]
    %v4900 = vld [vmem:[%s4800 + $0x33] sm:$0xff]
    %v4901 = vld [vmem:[%s4800 + $0x43] sm:$0xff]
    %v4902 = vld [vmem:[%s4800 + $0x53] sm:$0xff]
    %v4903 = vld [vmem:[%s4800 + $0x63] sm:$0xff]
    %v4904 = vld [vmem:[%s4800 + $0x73] sm:$0xff]
    %v4905 = vld [vmem:[%s4800 + $0xb3] sm:$0xff]
    %v4906 = vld [vmem:[%s4800 + $0xc3] sm:$0xff]
    %v4907 = vld [vmem:[%s4800 + $0xd3] sm:$0xff]
    %v4908 = vld [vmem:[%s4800 + $0xe3] sm:$0xff]
    %v4909 = vld [vmem:[%s4800 + $0xf3] sm:$0xff]
    %v4910 = vld [vmem:[%s4800 + $0x103] sm:$0xff]
    %v4911 = vld [vmem:[%s4800 + $0x113] sm:$0xff]
    %v4912 = vld [vmem:[%s4800 + $0x123] sm:$0xff]
    %v4913 = vpack.c.bf16 %v4897, %v4897
    %v4914 = vpack.c.bf16 %v4898, %v4898
    %v4915 = vpack.c.bf16 %v4899, %v4899
    %v4916 = vpack.c.bf16 %v4900, %v4900
    %v4917 = vpack.c.bf16 %v4901, %v4901
    %v4918 = vpack.c.bf16 %v4902, %v4902
    %v4919 = vpack.c.bf16 %v4903, %v4903
    %v4920 = vpack.c.bf16 %v4904, %v4904
    %v4921 = vpack.c.bf16 %v4905, %v4905
    %v4922 = vpack.c.bf16 %v4906, %v4906
    %v4923 = vpack.c.bf16 %v4907, %v4907
    %v4924 = vpack.c.bf16 %v4908, %v4908
    %v4925 = vpack.c.bf16 %v4909, %v4909
    %v4926 = vpack.c.bf16 %v4910, %v4910
    %v4927 = vpack.c.bf16 %v4911, %v4911
    %v4928 = vpack.c.bf16 %v4912, %v4912
    %v4945 = vunpack.c.l.b16 %v4817
    %v4946 = vunpack.c.l.b16 %v4818
    %v4947 = vunpack.c.l.b16 %v4819
    %v4948 = vunpack.c.l.b16 %v4820
    %v4949 = vunpack.c.l.b16 %v4821
    %v4950 = vunpack.c.l.b16 %v4822
    %v4951 = vunpack.c.l.b16 %v4823
    %v4952 = vunpack.c.l.b16 %v4824
    %v4953 = vunpack.c.l.b16 %v4825
    %v4954 = vunpack.c.l.b16 %v4826
    %v4955 = vunpack.c.l.b16 %v4827
    %v4956 = vunpack.c.l.b16 %v4828
    %v4957 = vunpack.c.l.b16 %v4829
    %v4958 = vunpack.c.l.b16 %v4830
    %v4959 = vunpack.c.l.b16 %v4831
    %v4960 = vunpack.c.l.b16 %v4832
    %v4961 = vpack.c.b16 %v4946, %v4945
    %v4962 = vpack.c.b16 %v4948, %v4947
    %v4963 = vpack.c.b16 %v4950, %v4949
    %v4964 = vpack.c.b16 %v4952, %v4951
    %v4965 = vpack.c.b16 %v4954, %v4953
    %v4966 = vpack.c.b16 %v4956, %v4955
    %v4967 = vpack.c.b16 %v4958, %v4957
    %v4968 = vpack.c.b16 %v4960, %v4959
    %v4993 = vunpack.c.l.b16 %v4849
    %v4994 = vunpack.c.l.b16 %v4850
    %v4995 = vunpack.c.l.b16 %v4851
    %v4996 = vunpack.c.l.b16 %v4852
    %v4997 = vunpack.c.l.b16 %v4853
    %v4998 = vunpack.c.l.b16 %v4854
    %v4999 = vunpack.c.l.b16 %v4855
    %v5000 = vunpack.c.l.b16 %v4856
    %v5001 = vunpack.c.l.b16 %v4857
    %v5002 = vunpack.c.l.b16 %v4858
    %v5003 = vunpack.c.l.b16 %v4859
    %v5004 = vunpack.c.l.b16 %v4860
    %v5005 = vunpack.c.l.b16 %v4861
    %v5006 = vunpack.c.l.b16 %v4862
    %v5007 = vunpack.c.l.b16 %v4863
    %v5008 = vunpack.c.l.b16 %v4864
    %v5009 = vpack.c.b16 %v4994, %v4993
    %v5010 = vpack.c.b16 %v4996, %v4995
    %v5011 = vpack.c.b16 %v4998, %v4997
    %v5012 = vpack.c.b16 %v5000, %v4999
    %v5013 = vpack.c.b16 %v5002, %v5001
    %v5014 = vpack.c.b16 %v5004, %v5003
    %v5015 = vpack.c.b16 %v5006, %v5005
    %v5016 = vpack.c.b16 %v5008, %v5007
    %v5041 = vunpack.c.l.b16 %v4881
    %v5042 = vunpack.c.l.b16 %v4882
    %v5043 = vunpack.c.l.b16 %v4883
    %v5044 = vunpack.c.l.b16 %v4884
    %v5045 = vunpack.c.l.b16 %v4885
    %v5046 = vunpack.c.l.b16 %v4886
    %v5047 = vunpack.c.l.b16 %v4887
    %v5048 = vunpack.c.l.b16 %v4888
    %v5049 = vunpack.c.l.b16 %v4889
    %v5050 = vunpack.c.l.b16 %v4890
    %v5051 = vunpack.c.l.b16 %v4891
    %v5052 = vunpack.c.l.b16 %v4892
    %v5053 = vunpack.c.l.b16 %v4893
    %v5054 = vunpack.c.l.b16 %v4894
    %v5055 = vunpack.c.l.b16 %v4895
    %v5056 = vunpack.c.l.b16 %v4896
    %v5057 = vpack.c.b16 %v5042, %v5041
    %v5058 = vpack.c.b16 %v5044, %v5043
    %v5059 = vpack.c.b16 %v5046, %v5045
    %v5060 = vpack.c.b16 %v5048, %v5047
    %v5061 = vpack.c.b16 %v5050, %v5049
    %v5062 = vpack.c.b16 %v5052, %v5051
    %v5063 = vpack.c.b16 %v5054, %v5053
    %v5064 = vpack.c.b16 %v5056, %v5055
    %v5089 = vunpack.c.l.b16 %v4913
    %v5090 = vunpack.c.l.b16 %v4914
    %v5091 = vunpack.c.l.b16 %v4915
    %v5092 = vunpack.c.l.b16 %v4916
    %v5093 = vunpack.c.l.b16 %v4917
    %v5094 = vunpack.c.l.b16 %v4918
    %v5095 = vunpack.c.l.b16 %v4919
    %v5096 = vunpack.c.l.b16 %v4920
    %v5097 = vunpack.c.l.b16 %v4921
    %v5098 = vunpack.c.l.b16 %v4922
    %v5099 = vunpack.c.l.b16 %v4923
    %v5100 = vunpack.c.l.b16 %v4924
    %v5101 = vunpack.c.l.b16 %v4925
    %v5102 = vunpack.c.l.b16 %v4926
    %v5103 = vunpack.c.l.b16 %v4927
    %v5104 = vunpack.c.l.b16 %v4928
    %v5105 = vpack.c.b16 %v5090, %v5089
    %v5106 = vpack.c.b16 %v5092, %v5091
    %v5107 = vpack.c.b16 %v5094, %v5093
    %v5108 = vpack.c.b16 %v5096, %v5095
    %v5109 = vpack.c.b16 %v5098, %v5097
    %v5110 = vpack.c.b16 %v5100, %v5099
    %v5111 = vpack.c.b16 %v5102, %v5101
    %v5112 = vpack.c.b16 %v5104, %v5103
    %s5121 = scalar_lea.vmem [#allocation18], 768
    %v5122 = vld [vmem:[%s5121] sm:$0xf]
    %v5123 = vld [vmem:[%s5121 + $0x4] sm:$0xf]
    %v5124 = vld [vmem:[%s5121 + $0x8] sm:$0xf]
    %v5125 = vld [vmem:[%s5121 + $0xc] sm:$0xf]
    %v5126 = vld [vmem:[%s5121 + $0x10] sm:$0xf]
    %v5127 = vld [vmem:[%s5121 + $0x14] sm:$0xf]
    %v5128 = vld [vmem:[%s5121 + $0x18] sm:$0xf]
    %v5129 = vld [vmem:[%s5121 + $0x1c] sm:$0xf]
    %v5130 = vld [vmem:[%s5121 + $0x20] sm:$0xf]
    %v5131 = vld [vmem:[%s5121 + $0x24] sm:$0xf]
    %v5132 = vld [vmem:[%s5121 + $0x28] sm:$0xf]
    %v5133 = vld [vmem:[%s5121 + $0x2c] sm:$0xf]
    %v5134 = vld [vmem:[%s5121 + $0x30] sm:$0xf]
    %v5135 = vld [vmem:[%s5121 + $0x34] sm:$0xf]
    %v5136 = vld [vmem:[%s5121 + $0x38] sm:$0xf]
    %v5137 = vld [vmem:[%s5121 + $0x3c] sm:$0xf]
    %v5138 = vld [vmem:[%s5121 + $0x40] sm:$0xf]
    %v5139 = vld [vmem:[%s5121 + $0x44] sm:$0xf]
    %v5140 = vld [vmem:[%s5121 + $0x48] sm:$0xf]
    %v5141 = vld [vmem:[%s5121 + $0x4c] sm:$0xf]
    %v5142 = vld [vmem:[%s5121 + $0x50] sm:$0xf]
    %v5143 = vld [vmem:[%s5121 + $0x54] sm:$0xf]
    %v5144 = vld [vmem:[%s5121 + $0x58] sm:$0xf]
    %v5145 = vld [vmem:[%s5121 + $0x5c] sm:$0xf]
    %v5146 = vld [vmem:[%s5121 + $0x60] sm:$0xf]
    %v5147 = vld [vmem:[%s5121 + $0x64] sm:$0xf]
    %v5148 = vld [vmem:[%s5121 + $0x68] sm:$0xf]
    %v5149 = vld [vmem:[%s5121 + $0x6c] sm:$0xf]
    %v5150 = vld [vmem:[%s5121 + $0x70] sm:$0xf]
    %v5151 = vld [vmem:[%s5121 + $0x74] sm:$0xf]
    %v5152 = vld [vmem:[%s5121 + $0x78] sm:$0xf]
    %v5153 = vld [vmem:[%s5121 + $0x7c] sm:$0xf]
    %v5154 = vld [vmem:[%s5121 + $0x80] sm:$0xf]
    %v5155 = vld [vmem:[%s5121 + $0x84] sm:$0xf]
    %v5156 = vld [vmem:[%s5121 + $0x88] sm:$0xf]
    %v5157 = vld [vmem:[%s5121 + $0x8c] sm:$0xf]
    %v5158 = vld [vmem:[%s5121 + $0x90] sm:$0xf]
    %v5159 = vld [vmem:[%s5121 + $0x94] sm:$0xf]
    %v5160 = vld [vmem:[%s5121 + $0x98] sm:$0xf]
    %v5161 = vld [vmem:[%s5121 + $0x9c] sm:$0xf]
    %v5162 = vld [vmem:[%s5121 + $0xa0] sm:$0xf]
    %v5163 = vld [vmem:[%s5121 + $0xa4] sm:$0xf]
    %v5164 = vld [vmem:[%s5121 + $0xa8] sm:$0xf]
    %v5165 = vld [vmem:[%s5121 + $0xac] sm:$0xf]
    %v5166 = vld [vmem:[%s5121 + $0xb0] sm:$0xf]
    %v5167 = vld [vmem:[%s5121 + $0xb4] sm:$0xf]
    %v5168 = vld [vmem:[%s5121 + $0xb8] sm:$0xf]
    %v5169 = vld [vmem:[%s5121 + $0xbc] sm:$0xf]
    %v5170 = vld [vmem:[%s5121 + $0xc0] sm:$0xf]
    %v5171 = vld [vmem:[%s5121 + $0xc4] sm:$0xf]
    %v5172 = vld [vmem:[%s5121 + $0xc8] sm:$0xf]
    %v5173 = vld [vmem:[%s5121 + $0xcc] sm:$0xf]
    %v5174 = vld [vmem:[%s5121 + $0xd0] sm:$0xf]
    %v5175 = vld [vmem:[%s5121 + $0xd4] sm:$0xf]
    %v5176 = vld [vmem:[%s5121 + $0xd8] sm:$0xf]
    %v5177 = vld [vmem:[%s5121 + $0xdc] sm:$0xf]
    %v5178 = vld [vmem:[%s5121 + $0xe0] sm:$0xf]
    %v5179 = vld [vmem:[%s5121 + $0xe4] sm:$0xf]
    %v5180 = vld [vmem:[%s5121 + $0xe8] sm:$0xf]
    %v5181 = vld [vmem:[%s5121 + $0xec] sm:$0xf]
    %v5182 = vld [vmem:[%s5121 + $0xf0] sm:$0xf]
    %v5183 = vld [vmem:[%s5121 + $0xf4] sm:$0xf]
    %v5184 = vld [vmem:[%s5121 + $0xf8] sm:$0xf]
    %v5185 = vld [vmem:[%s5121 + $0xfc] sm:$0xf]
    %v5250 = vunpack.c.l.b16 %v5122
    %v5251 = vunpack.c.l.b16 %v5123
    %v5252 = vunpack.c.l.b16 %v5124
    %v5253 = vunpack.c.l.b16 %v5125
    %v5254 = vunpack.c.l.b16 %v5126
    %v5255 = vunpack.c.l.b16 %v5127
    %v5256 = vunpack.c.l.b16 %v5128
    %v5257 = vunpack.c.l.b16 %v5129
    %v5258 = vunpack.c.l.b16 %v5130
    %v5259 = vunpack.c.l.b16 %v5131
    %v5260 = vunpack.c.l.b16 %v5132
    %v5261 = vunpack.c.l.b16 %v5133
    %v5262 = vunpack.c.l.b16 %v5134
    %v5263 = vunpack.c.l.b16 %v5135
    %v5264 = vunpack.c.l.b16 %v5136
    %v5265 = vunpack.c.l.b16 %v5137
    %v5266 = vunpack.c.l.b16 %v5138
    %v5267 = vunpack.c.l.b16 %v5139
    %v5268 = vunpack.c.l.b16 %v5140
    %v5269 = vunpack.c.l.b16 %v5141
    %v5270 = vunpack.c.l.b16 %v5142
    %v5271 = vunpack.c.l.b16 %v5143
    %v5272 = vunpack.c.l.b16 %v5144
    %v5273 = vunpack.c.l.b16 %v5145
    %v5274 = vunpack.c.l.b16 %v5146
    %v5275 = vunpack.c.l.b16 %v5147
    %v5276 = vunpack.c.l.b16 %v5148
    %v5277 = vunpack.c.l.b16 %v5149
    %v5278 = vunpack.c.l.b16 %v5150
    %v5279 = vunpack.c.l.b16 %v5151
    %v5280 = vunpack.c.l.b16 %v5152
    %v5281 = vunpack.c.l.b16 %v5153
    %v5282 = vunpack.c.l.b16 %v5154
    %v5283 = vunpack.c.l.b16 %v5155
    %v5284 = vunpack.c.l.b16 %v5156
    %v5285 = vunpack.c.l.b16 %v5157
    %v5286 = vunpack.c.l.b16 %v5158
    %v5287 = vunpack.c.l.b16 %v5159
    %v5288 = vunpack.c.l.b16 %v5160
    %v5289 = vunpack.c.l.b16 %v5161
    %v5290 = vunpack.c.l.b16 %v5162
    %v5291 = vunpack.c.l.b16 %v5163
    %v5292 = vunpack.c.l.b16 %v5164
    %v5293 = vunpack.c.l.b16 %v5165
    %v5294 = vunpack.c.l.b16 %v5166
    %v5295 = vunpack.c.l.b16 %v5167
    %v5296 = vunpack.c.l.b16 %v5168
    %v5297 = vunpack.c.l.b16 %v5169
    %v5298 = vunpack.c.l.b16 %v5170
    %v5299 = vunpack.c.l.b16 %v5171
    %v5300 = vunpack.c.l.b16 %v5172
    %v5301 = vunpack.c.l.b16 %v5173
    %v5302 = vunpack.c.l.b16 %v5174
    %v5303 = vunpack.c.l.b16 %v5175
    %v5304 = vunpack.c.l.b16 %v5176
    %v5305 = vunpack.c.l.b16 %v5177
    %v5306 = vunpack.c.l.b16 %v5178
    %v5307 = vunpack.c.l.b16 %v5179
    %v5308 = vunpack.c.l.b16 %v5180
    %v5309 = vunpack.c.l.b16 %v5181
    %v5310 = vunpack.c.l.b16 %v5182
    %v5311 = vunpack.c.l.b16 %v5183
    %v5312 = vunpack.c.l.b16 %v5184
    %v5313 = vunpack.c.l.b16 %v5185
    %v5314 = vpack.c.b16 %v5251, %v5250
    %v5315 = vpack.c.b16 %v5253, %v5252
    %v5316 = vpack.c.b16 %v5255, %v5254
    %v5317 = vpack.c.b16 %v5257, %v5256
    %v5318 = vpack.c.b16 %v5259, %v5258
    %v5319 = vpack.c.b16 %v5261, %v5260
    %v5320 = vpack.c.b16 %v5263, %v5262
    %v5321 = vpack.c.b16 %v5265, %v5264
    %v5322 = vpack.c.b16 %v5267, %v5266
    %v5323 = vpack.c.b16 %v5269, %v5268
    %v5324 = vpack.c.b16 %v5271, %v5270
    %v5325 = vpack.c.b16 %v5273, %v5272
    %v5326 = vpack.c.b16 %v5275, %v5274
    %v5327 = vpack.c.b16 %v5277, %v5276
    %v5328 = vpack.c.b16 %v5279, %v5278
    %v5329 = vpack.c.b16 %v5281, %v5280
    %v5330 = vpack.c.b16 %v5283, %v5282
    %v5331 = vpack.c.b16 %v5285, %v5284
    %v5332 = vpack.c.b16 %v5287, %v5286
    %v5333 = vpack.c.b16 %v5289, %v5288
    %v5334 = vpack.c.b16 %v5291, %v5290
    %v5335 = vpack.c.b16 %v5293, %v5292
    %v5336 = vpack.c.b16 %v5295, %v5294
    %v5337 = vpack.c.b16 %v5297, %v5296
    %v5338 = vpack.c.b16 %v5299, %v5298
    %v5339 = vpack.c.b16 %v5301, %v5300
    %v5340 = vpack.c.b16 %v5303, %v5302
    %v5341 = vpack.c.b16 %v5305, %v5304
    %v5342 = vpack.c.b16 %v5307, %v5306
    %v5343 = vpack.c.b16 %v5309, %v5308
    %v5344 = vpack.c.b16 %v5311, %v5310
    %v5345 = vpack.c.b16 %v5313, %v5312
    %5378 = vmatpush.bf16.msra.mxu0 %v5321
    %5379 = vmatpush.bf16.msra.mxu0 %v5320
    %5380 = vmatpush.bf16.msra.mxu0 %v5319
    %5381 = vmatpush.bf16.msra.mxu0 %v5318
    %5382 = vmatpush.bf16.msra.mxu0 %v5317
    %5383 = vmatpush.bf16.msra.mxu0 %v5316
    %5384 = vmatpush.bf16.msra.mxu0 %v5315
    %5385 = vmatpush.bf16.msra.mxu0 %v5314
    %5386 = vmatmul.bf16.gmra.mxu0 %v4961
    %v5387 = vpop.f32.mrf.mxu0
    %v5388 = vadd.f32 0.0, %v5387
    %v5389 = vpop.f32.mrf.mxu0
    %v5390 = vadd.f32 0.0, %v5389
    %5391 = vmatmul.bf16.gmra.mxu0 %v4962
    %v5392 = vpop.f32.mrf.mxu0
    %v5393 = vadd.f32 0.0, %v5392
    %v5394 = vpop.f32.mrf.mxu0
    %v5395 = vadd.f32 0.0, %v5394
    %5396 = vmatmul.bf16.gmra.mxu0 %v4963
    %v5397 = vpop.f32.mrf.mxu0
    %v5398 = vadd.f32 0.0, %v5397
    %v5399 = vpop.f32.mrf.mxu0
    %v5400 = vadd.f32 0.0, %v5399
    %5401 = vmatmul.bf16.gmra.mxu0 %v4964
    %v5402 = vpop.f32.mrf.mxu0
    %v5403 = vadd.f32 0.0, %v5402
    %v5404 = vpop.f32.mrf.mxu0
    %v5405 = vadd.f32 0.0, %v5404
    %5406 = vmatmul.bf16.gmra.mxu0 %v4965
    %v5407 = vpop.f32.mrf.mxu0
    %v5408 = vadd.f32 0.0, %v5407
    %v5409 = vpop.f32.mrf.mxu0
    %v5410 = vadd.f32 0.0, %v5409
    %5411 = vmatmul.bf16.gmra.mxu0 %v4966
    %v5412 = vpop.f32.mrf.mxu0
    %v5413 = vadd.f32 0.0, %v5412
    %v5414 = vpop.f32.mrf.mxu0
    %v5415 = vadd.f32 0.0, %v5414
    %5416 = vmatmul.bf16.gmra.mxu0 %v4967
    %v5417 = vpop.f32.mrf.mxu0
    %v5418 = vadd.f32 0.0, %v5417
    %v5419 = vpop.f32.mrf.mxu0
    %v5420 = vadd.f32 0.0, %v5419
    %5421 = vmatmul.bf16.gmra.mxu0 %v4968
    %v5422 = vpop.f32.mrf.mxu0
    %v5423 = vadd.f32 0.0, %v5422
    %v5424 = vpop.f32.mrf.mxu0
    %v5425 = vadd.f32 0.0, %v5424
    %5426 = vdwg.mxu0
    %5427 = vmatpush.bf16.msra.mxu0 %v5329
    %5428 = vmatpush.bf16.msra.mxu0 %v5328
    %5429 = vmatpush.bf16.msra.mxu0 %v5327
    %5430 = vmatpush.bf16.msra.mxu0 %v5326
    %5431 = vmatpush.bf16.msra.mxu0 %v5325
    %5432 = vmatpush.bf16.msra.mxu0 %v5324
    %5433 = vmatpush.bf16.msra.mxu0 %v5323
    %5434 = vmatpush.bf16.msra.mxu0 %v5322
    %5435 = vmatmul.bf16.gmra.mxu0 %v5009
    %v5436 = vpop.f32.mrf.mxu0
    %v5437 = vadd.f32 %v5388, %v5436
    %v5438 = vpop.f32.mrf.mxu0
    %v5439 = vadd.f32 %v5390, %v5438
    %5440 = vmatmul.bf16.gmra.mxu0 %v5010
    %v5441 = vpop.f32.mrf.mxu0
    %v5442 = vadd.f32 %v5393, %v5441
    %v5443 = vpop.f32.mrf.mxu0
    %v5444 = vadd.f32 %v5395, %v5443
    %5445 = vmatmul.bf16.gmra.mxu0 %v5011
    %v5446 = vpop.f32.mrf.mxu0
    %v5447 = vadd.f32 %v5398, %v5446
    %v5448 = vpop.f32.mrf.mxu0
    %v5449 = vadd.f32 %v5400, %v5448
    %5450 = vmatmul.bf16.gmra.mxu0 %v5012
    %v5451 = vpop.f32.mrf.mxu0
    %v5452 = vadd.f32 %v5403, %v5451
    %v5453 = vpop.f32.mrf.mxu0
    %v5454 = vadd.f32 %v5405, %v5453
    %5455 = vmatmul.bf16.gmra.mxu0 %v5013
    %v5456 = vpop.f32.mrf.mxu0
    %v5457 = vadd.f32 %v5408, %v5456
    %v5458 = vpop.f32.mrf.mxu0
    %v5459 = vadd.f32 %v5410, %v5458
    %5460 = vmatmul.bf16.gmra.mxu0 %v5014
    %v5461 = vpop.f32.mrf.mxu0
    %v5462 = vadd.f32 %v5413, %v5461
    %v5463 = vpop.f32.mrf.mxu0
    %v5464 = vadd.f32 %v5415, %v5463
    %5465 = vmatmul.bf16.gmra.mxu0 %v5015
    %v5466 = vpop.f32.mrf.mxu0
    %v5467 = vadd.f32 %v5418, %v5466
    %v5468 = vpop.f32.mrf.mxu0
    %v5469 = vadd.f32 %v5420, %v5468
    %5470 = vmatmul.bf16.gmra.mxu0 %v5016
    %v5471 = vpop.f32.mrf.mxu0
    %v5472 = vadd.f32 %v5423, %v5471
    %v5473 = vpop.f32.mrf.mxu0
    %v5474 = vadd.f32 %v5425, %v5473
    %5475 = vdwg.mxu0
    %5476 = vmatpush.bf16.msra.mxu0 %v5337
    %5477 = vmatpush.bf16.msra.mxu0 %v5336
    %5478 = vmatpush.bf16.msra.mxu0 %v5335
    %5479 = vmatpush.bf16.msra.mxu0 %v5334
    %5480 = vmatpush.bf16.msra.mxu0 %v5333
    %5481 = vmatpush.bf16.msra.mxu0 %v5332
    %5482 = vmatpush.bf16.msra.mxu0 %v5331
    %5483 = vmatpush.bf16.msra.mxu0 %v5330
    %5484 = vmatmul.bf16.gmra.mxu0 %v5057
    %v5485 = vpop.f32.mrf.mxu0
    %v5486 = vadd.f32 %v5437, %v5485
    %v5487 = vpop.f32.mrf.mxu0
    %v5488 = vadd.f32 %v5439, %v5487
    %5489 = vmatmul.bf16.gmra.mxu0 %v5058
    %v5490 = vpop.f32.mrf.mxu0
    %v5491 = vadd.f32 %v5442, %v5490
    %v5492 = vpop.f32.mrf.mxu0
    %v5493 = vadd.f32 %v5444, %v5492
    %5494 = vmatmul.bf16.gmra.mxu0 %v5059
    %v5495 = vpop.f32.mrf.mxu0
    %v5496 = vadd.f32 %v5447, %v5495
    %v5497 = vpop.f32.mrf.mxu0
    %v5498 = vadd.f32 %v5449, %v5497
    %5499 = vmatmul.bf16.gmra.mxu0 %v5060
    %v5500 = vpop.f32.mrf.mxu0
    %v5501 = vadd.f32 %v5452, %v5500
    %v5502 = vpop.f32.mrf.mxu0
    %v5503 = vadd.f32 %v5454, %v5502
    %5504 = vmatmul.bf16.gmra.mxu0 %v5061
    %v5505 = vpop.f32.mrf.mxu0
    %v5506 = vadd.f32 %v5457, %v5505
    %v5507 = vpop.f32.mrf.mxu0
    %v5508 = vadd.f32 %v5459, %v5507
    %5509 = vmatmul.bf16.gmra.mxu0 %v5062
    %v5510 = vpop.f32.mrf.mxu0
    %v5511 = vadd.f32 %v5462, %v5510
    %v5512 = vpop.f32.mrf.mxu0
    %v5513 = vadd.f32 %v5464, %v5512
    %5514 = vmatmul.bf16.gmra.mxu0 %v5063
    %v5515 = vpop.f32.mrf.mxu0
    %v5516 = vadd.f32 %v5467, %v5515
    %v5517 = vpop.f32.mrf.mxu0
    %v5518 = vadd.f32 %v5469, %v5517
    %5519 = vmatmul.bf16.gmra.mxu0 %v5064
    %v5520 = vpop.f32.mrf.mxu0
    %v5521 = vadd.f32 %v5472, %v5520
    %v5522 = vpop.f32.mrf.mxu0
    %v5523 = vadd.f32 %v5474, %v5522
    %5524 = vdwg.mxu0
    %5525 = vmatpush.bf16.msra.mxu0 %v5345
    %5526 = vmatpush.bf16.msra.mxu0 %v5344
    %5527 = vmatpush.bf16.msra.mxu0 %v5343
    %5528 = vmatpush.bf16.msra.mxu0 %v5342
    %5529 = vmatpush.bf16.msra.mxu0 %v5341
    %5530 = vmatpush.bf16.msra.mxu0 %v5340
    %5531 = vmatpush.bf16.msra.mxu0 %v5339
    %5532 = vmatpush.bf16.msra.mxu0 %v5338
    %5533 = vmatmul.bf16.gmra.mxu0 %v5105
    %v5534 = vpop.f32.mrf.mxu0
    %v5535 = vadd.f32 %v5486, %v5534
    %v5536 = vpop.f32.mrf.mxu0
    %v5537 = vadd.f32 %v5488, %v5536
    %5538 = vmatmul.bf16.gmra.mxu0 %v5106
    %v5539 = vpop.f32.mrf.mxu0
    %v5540 = vadd.f32 %v5491, %v5539
    %v5541 = vpop.f32.mrf.mxu0
    %v5542 = vadd.f32 %v5493, %v5541
    %5543 = vmatmul.bf16.gmra.mxu0 %v5107
    %v5544 = vpop.f32.mrf.mxu0
    %v5545 = vadd.f32 %v5496, %v5544
    %v5546 = vpop.f32.mrf.mxu0
    %v5547 = vadd.f32 %v5498, %v5546
    %5548 = vmatmul.bf16.gmra.mxu0 %v5108
    %v5549 = vpop.f32.mrf.mxu0
    %v5550 = vadd.f32 %v5501, %v5549
    %v5551 = vpop.f32.mrf.mxu0
    %v5552 = vadd.f32 %v5503, %v5551
    %5553 = vmatmul.bf16.gmra.mxu0 %v5109
    %v5554 = vpop.f32.mrf.mxu0
    %v5555 = vadd.f32 %v5506, %v5554
    %v5556 = vpop.f32.mrf.mxu0
    %v5557 = vadd.f32 %v5508, %v5556
    %5558 = vmatmul.bf16.gmra.mxu0 %v5110
    %v5559 = vpop.f32.mrf.mxu0
    %v5560 = vadd.f32 %v5511, %v5559
    %v5561 = vpop.f32.mrf.mxu0
    %v5562 = vadd.f32 %v5513, %v5561
    %5563 = vmatmul.bf16.gmra.mxu0 %v5111
    %v5564 = vpop.f32.mrf.mxu0
    %v5565 = vadd.f32 %v5516, %v5564
    %v5566 = vpop.f32.mrf.mxu0
    %v5567 = vadd.f32 %v5518, %v5566
    %5568 = vmatmul.bf16.gmra.mxu0 %v5112
    %v5569 = vpop.f32.mrf.mxu0
    %v5570 = vadd.f32 %v5521, %v5569
    %v5571 = vpop.f32.mrf.mxu0
    %v5572 = vadd.f32 %v5523, %v5571
    %5573 = vdwg.mxu0
    %v5574 = vadd.f32 %v4784, %v5535
    %v5575 = vadd.f32 %v4785, %v5537
    %v5576 = vadd.f32 %v4786, %v5540
    %v5577 = vadd.f32 %v4787, %v5542
    %v5578 = vadd.f32 %v4788, %v5545
    %v5579 = vadd.f32 %v4789, %v5547
    %v5580 = vadd.f32 %v4790, %v5550
    %v5581 = vadd.f32 %v4791, %v5552
    %v5582 = vadd.f32 %v4792, %v5555
    %v5583 = vadd.f32 %v4793, %v5557
    %v5584 = vadd.f32 %v4794, %v5560
    %v5585 = vadd.f32 %v4795, %v5562
    %v5586 = vadd.f32 %v4796, %v5565
    %v5587 = vadd.f32 %v4797, %v5567
    %v5588 = vadd.f32 %v4798, %v5570
    %v5589 = vadd.f32 %v4799, %v5572
    %v5590 = vld [vmem:[#allocation19] sm:$0x1]
    %v5592 = vperm.slane %v5590, 0
    %v5594 = vadd.f32 %v5574, %v5592
    %v5595 = vadd.f32 %v5575, %v5592
    %v5596 = vadd.f32 %v5576, %v5592
    %v5597 = vadd.f32 %v5577, %v5592
    %v5598 = vadd.f32 %v5578, %v5592
    %v5599 = vadd.f32 %v5579, %v5592
    %v5600 = vadd.f32 %v5580, %v5592
    %v5601 = vadd.f32 %v5581, %v5592
    %v5602 = vadd.f32 %v5582, %v5592
    %v5603 = vadd.f32 %v5583, %v5592
    %v5604 = vadd.f32 %v5584, %v5592
    %v5605 = vadd.f32 %v5585, %v5592
    %v5606 = vadd.f32 %v5586, %v5592
    %v5607 = vadd.f32 %v5587, %v5592
    %v5608 = vadd.f32 %v5588, %v5592
    %v5609 = vadd.f32 %v5589, %v5592
    %v5610 = vmax.f32 %v5594, 0.0
    %v5611 = vmax.f32 %v5595, 0.0
    %v5612 = vmax.f32 %v5596, 0.0
    %v5613 = vmax.f32 %v5597, 0.0
    %v5614 = vmax.f32 %v5598, 0.0
    %v5615 = vmax.f32 %v5599, 0.0
    %v5616 = vmax.f32 %v5600, 0.0
    %v5617 = vmax.f32 %v5601, 0.0
    %v5618 = vmax.f32 %v5602, 0.0
    %v5619 = vmax.f32 %v5603, 0.0
    %v5620 = vmax.f32 %v5604, 0.0
    %v5621 = vmax.f32 %v5605, 0.0
    %v5622 = vmax.f32 %v5606, 0.0
    %v5623 = vmax.f32 %v5607, 0.0
    %v5624 = vmax.f32 %v5608, 0.0
    %v5625 = vmax.f32 %v5609, 0.0
    %v5626 = vld [vmem:[#allocation21] sm:$0x1]
    %v5627 = vld [vmem:[#allocation22] sm:$0x1]
    %v5628 = vadd.f32 %v5610, %v5611
    %v5629 = vadd.f32 %v5628, %v5612
    %v5630 = vadd.f32 %v5629, %v5613
    %v5631 = vadd.f32 %v5630, %v5614
    %v5632 = vadd.f32 %v5631, %v5615
    %v5633 = vadd.f32 %v5632, %v5616
    %v5634 = vadd.f32 %v5633, %v5617
    %v5635 = vadd.f32 %v5634, %v5618
    %v5636 = vadd.f32 %v5635, %v5619
    %v5637 = vadd.f32 %v5636, %v5620
    %v5638 = vadd.f32 %v5637, %v5621
    %v5639 = vadd.f32 %v5638, %v5622
    %v5640 = vadd.f32 %v5639, %v5623
    %v5641 = vadd.f32 %v5640, %v5624
    %v5642 = vadd.f32 %v5641, %v5625
    %v5643 = vrot.slane %v5642, 4
    %v5644 = vadd.f32 %v5642, %v5643
    %v5645 = vrot.slane %v5644, 2
    %v5646 = vadd.f32 %v5644, %v5645
    %v5647 = vrot.slane %v5646, 1
    %v5648 = vadd.f32 %v5646, %v5647
    %v5649 = vmul.f32 %v5648, 0.0078125
    %v5650 = vsub.f32 %v5610, %v5649
    %v5651 = vsub.f32 %v5611, %v5649
    %v5652 = vsub.f32 %v5612, %v5649
    %v5653 = vsub.f32 %v5613, %v5649
    %v5654 = vsub.f32 %v5614, %v5649
    %v5655 = vsub.f32 %v5615, %v5649
    %v5656 = vsub.f32 %v5616, %v5649
    %v5657 = vsub.f32 %v5617, %v5649
    %v5658 = vsub.f32 %v5618, %v5649
    %v5659 = vsub.f32 %v5619, %v5649
    %v5660 = vsub.f32 %v5620, %v5649
    %v5661 = vsub.f32 %v5621, %v5649
    %v5662 = vsub.f32 %v5622, %v5649
    %v5663 = vsub.f32 %v5623, %v5649
    %v5664 = vsub.f32 %v5624, %v5649
    %v5665 = vsub.f32 %v5625, %v5649
    %v5666 = vmul.f32 %v5650, %v5650
    %v5667 = vmul.f32 %v5651, %v5651
    %v5668 = vmul.f32 %v5652, %v5652
    %v5669 = vmul.f32 %v5653, %v5653
    %v5670 = vmul.f32 %v5654, %v5654
    %v5671 = vmul.f32 %v5655, %v5655
    %v5672 = vmul.f32 %v5656, %v5656
    %v5673 = vmul.f32 %v5657, %v5657
    %v5674 = vmul.f32 %v5658, %v5658
    %v5675 = vmul.f32 %v5659, %v5659
    %v5676 = vmul.f32 %v5660, %v5660
    %v5677 = vmul.f32 %v5661, %v5661
    %v5678 = vmul.f32 %v5662, %v5662
    %v5679 = vmul.f32 %v5663, %v5663
    %v5680 = vmul.f32 %v5664, %v5664
    %v5681 = vmul.f32 %v5665, %v5665
    %v5682 = vadd.f32 %v5666, %v5667
    %v5683 = vadd.f32 %v5682, %v5668
    %v5684 = vadd.f32 %v5683, %v5669
    %v5685 = vadd.f32 %v5684, %v5670
    %v5686 = vadd.f32 %v5685, %v5671
    %v5687 = vadd.f32 %v5686, %v5672
    %v5688 = vadd.f32 %v5687, %v5673
    %v5689 = vadd.f32 %v5688, %v5674
    %v5690 = vadd.f32 %v5689, %v5675
    %v5691 = vadd.f32 %v5690, %v5676
    %v5692 = vadd.f32 %v5691, %v5677
    %v5693 = vadd.f32 %v5692, %v5678
    %v5694 = vadd.f32 %v5693, %v5679
    %v5695 = vadd.f32 %v5694, %v5680
    %v5696 = vadd.f32 %v5695, %v5681
    %v5697 = vrot.slane %v5696, 4
    %v5698 = vadd.f32 %v5696, %v5697
    %v5699 = vrot.slane %v5698, 2
    %v5700 = vadd.f32 %v5698, %v5699
    %v5701 = vrot.slane %v5700, 1
    %v5702 = vadd.f32 %v5700, %v5701
    %v5703 = vmul.f32 %v5702, 0.0078125
    %v5704 = vadd.f32 %v5703, 1e-05
    %v5705 = vrsqrt.pop %v5704
    %v5706 = vmul.f32 %v5705, %v5704
    %v5707 = vmul.f32 %v5706, %v5705
    %v5708 = vmul.f32 0.5, %v5707
    %v5709 = vsub.f32 1.5, %v5708
    %v5710 = vmul.f32 %v5705, %v5709
    %vm5711 = vweird.f32 %v5704
    %vm5712 = vweird.f32 %v5705
    %vm5713 = vmor %vm5711, %vm5712
    %v5714 = vsel %vm5713, %v5705, %v5710
    %v5715 = vmul.f32 %v5650, %v5714
    %v5716 = vmul.f32 %v5651, %v5714
    %v5717 = vmul.f32 %v5652, %v5714
    %v5718 = vmul.f32 %v5653, %v5714
    %v5719 = vmul.f32 %v5654, %v5714
    %v5720 = vmul.f32 %v5655, %v5714
    %v5721 = vmul.f32 %v5656, %v5714
    %v5722 = vmul.f32 %v5657, %v5714
    %v5723 = vmul.f32 %v5658, %v5714
    %v5724 = vmul.f32 %v5659, %v5714
    %v5725 = vmul.f32 %v5660, %v5714
    %v5726 = vmul.f32 %v5661, %v5714
    %v5727 = vmul.f32 %v5662, %v5714
    %v5728 = vmul.f32 %v5663, %v5714
    %v5729 = vmul.f32 %v5664, %v5714
    %v5730 = vmul.f32 %v5665, %v5714
    %v5732 = vperm.slane %v5626, 0
    %v5734 = vmul.f32 %v5715, %v5732
    %v5735 = vmul.f32 %v5716, %v5732
    %v5736 = vmul.f32 %v5717, %v5732
    %v5737 = vmul.f32 %v5718, %v5732
    %v5738 = vmul.f32 %v5719, %v5732
    %v5739 = vmul.f32 %v5720, %v5732
    %v5740 = vmul.f32 %v5721, %v5732
    %v5741 = vmul.f32 %v5722, %v5732
    %v5742 = vmul.f32 %v5723, %v5732
    %v5743 = vmul.f32 %v5724, %v5732
    %v5744 = vmul.f32 %v5725, %v5732
    %v5745 = vmul.f32 %v5726, %v5732
    %v5746 = vmul.f32 %v5727, %v5732
    %v5747 = vmul.f32 %v5728, %v5732
    %v5748 = vmul.f32 %v5729, %v5732
    %v5749 = vmul.f32 %v5730, %v5732
    %v5751 = vperm.slane %v5627, 0
    %v5753 = vadd.f32 %v5734, %v5751
    %v5754 = vadd.f32 %v5735, %v5751
    %v5755 = vadd.f32 %v5736, %v5751
    %v5756 = vadd.f32 %v5737, %v5751
    %v5757 = vadd.f32 %v5738, %v5751
    %v5758 = vadd.f32 %v5739, %v5751
    %v5759 = vadd.f32 %v5740, %v5751
    %v5760 = vadd.f32 %v5741, %v5751
    %v5761 = vadd.f32 %v5742, %v5751
    %v5762 = vadd.f32 %v5743, %v5751
    %v5763 = vadd.f32 %v5744, %v5751
    %v5764 = vadd.f32 %v5745, %v5751
    %v5765 = vadd.f32 %v5746, %v5751
    %v5766 = vadd.f32 %v5747, %v5751
    %v5767 = vadd.f32 %v5748, %v5751
    %v5768 = vadd.f32 %v5749, %v5751
    %v5769 = vpack.c.bf16 %v5753, %v5753
    %v5770 = vpack.c.bf16 %v5754, %v5754
    %v5771 = vpack.c.bf16 %v5755, %v5755
    %v5772 = vpack.c.bf16 %v5756, %v5756
    %v5773 = vpack.c.bf16 %v5757, %v5757
    %v5774 = vpack.c.bf16 %v5758, %v5758
    %v5775 = vpack.c.bf16 %v5759, %v5759
    %v5776 = vpack.c.bf16 %v5760, %v5760
    %v5777 = vpack.c.bf16 %v5761, %v5761
    %v5778 = vpack.c.bf16 %v5762, %v5762
    %v5779 = vpack.c.bf16 %v5763, %v5763
    %v5780 = vpack.c.bf16 %v5764, %v5764
    %v5781 = vpack.c.bf16 %v5765, %v5765
    %v5782 = vpack.c.bf16 %v5766, %v5766
    %v5783 = vpack.c.bf16 %v5767, %v5767
    %v5784 = vpack.c.bf16 %v5768, %v5768
    %5785 = vst [vmem:[%s13] sm:$0xf] %v5769
    %5786 = vst [vmem:[%s13 + $0x4] sm:$0xf] %v5770
    %5787 = vst [vmem:[%s13 + $0x8] sm:$0xf] %v5771
    %5788 = vst [vmem:[%s13 + $0xc] sm:$0xf] %v5772
    %5789 = vst [vmem:[%s13 + $0x10] sm:$0xf] %v5773
    %5790 = vst [vmem:[%s13 + $0x14] sm:$0xf] %v5774
    %5791 = vst [vmem:[%s13 + $0x18] sm:$0xf] %v5775
    %5792 = vst [vmem:[%s13 + $0x1c] sm:$0xf] %v5776
    %5793 = vst [vmem:[%s13 + $0x20] sm:$0xf] %v5777
    %5794 = vst [vmem:[%s13 + $0x24] sm:$0xf] %v5778
    %5795 = vst [vmem:[%s13 + $0x28] sm:$0xf] %v5779
    %5796 = vst [vmem:[%s13 + $0x2c] sm:$0xf] %v5780
    %5797 = vst [vmem:[%s13 + $0x30] sm:$0xf] %v5781
    %5798 = vst [vmem:[%s13 + $0x34] sm:$0xf] %v5782
    %5799 = vst [vmem:[%s13 + $0x38] sm:$0xf] %v5783
    %5800 = vst [vmem:[%s13 + $0x3c] sm:$0xf] %v5784
    // Predicated region
    $region102: #{model_forward.2} parent=1 // pred_check
      _
    $region103: #{model_forward.2} parent=1 // pred_check_branch
      %5802 = sbr.rel (0) target = $region105
    $region104: #{model_forward.2} parent=1 // pred_region
      _
    $region105: #{model_forward.2} parent=1 // pred_fallthru
      _
    // Predicated region
    $region106: #{model_forward.2} parent=1 // pred_check
      _
    $region107: #{model_forward.2} parent=1 // pred_check_branch
      %5804 = sbr.rel (0) target = $region109
    $region108: #{model_forward.2} parent=1 // pred_region
      _
    $region109: #{model_forward.2} parent=1 // pred_fallthru
      _
    %5805 = vsyncpa [#allocation6], 1
    %5806 = vsyncpa [#allocation8], 1
    %5807 = vsyncpa [#allocation11], 1
    %5808 = vsyncpa [#allocation14], 1
    %5809 = vsyncpa [#allocation17], 1
    %5810 = vsyncpa [#allocation20], 1
    %5811 = vsyncpa [#allocation23], 1

</llo_original>
